<compile_context>
chip_gen: v7x
topology: tpu7x:2x2x1
jax: 0.10.0
libtpu: 0.0.40
codegen_flags: <defaults>
</compile_context>

<pallas_src>
import math

import jax
import jax.numpy as jnp
from jax.experimental import pallas as pl
from jax.experimental.pallas import tpu as pltpu

FEAT_DIM = 2048          # GTAD.feat_dim
H1D = 256                # GTAD.h_dim_1d
K_NEIGH = 3              # knn k
GROUPS_BB1 = 4           # backbone1 Conv1d groups
GROUPS_GCN = 32          # GCNeXt groups
WIDTH_GROUP = 4          # GCNeXt width_group -> width = 128
WIDTH = WIDTH_GROUP * GROUPS_GCN

GCN_KEYS = ("w1a", "w1b", "b1", "w2", "b2", "w3", "b3", "wa", "ba")


# --------------------------------------------------------------------------
# Shared math (pure jnp).  Used both inside the Pallas kernel and by the
# plain-XLA reference check, so the two paths run the identical expression.
# --------------------------------------------------------------------------
def _mxu_transpose(m):
    """m.T computed on the MXU as I . m^T (A.B^T contraction).

    Exact: every output element is a single 1.0 * x product accumulated in
    f32.  Avoids relying on an XLU relayout for awkward (wide, narrow) shapes.
    Operands go through bf16 (the result only ever feeds bf16 matmuls here).
    """
    n = m.shape[1]
    r = jax.lax.broadcasted_iota(jnp.int32, (n, n), 0)
    c = jax.lax.broadcasted_iota(jnp.int32, (n, n), 1)
    eye = (r == c).astype(jnp.bfloat16)
    return jax.lax.dot_general(eye, m.astype(jnp.bfloat16),
                               (((1,), (1,)), ((), ())),
                               preferred_element_type=jnp.float32)


def _backbone1_conv(x_cw, wc, bias):
    """Grouped Conv1d(2048->256, k=3, pad=1, groups=4) + ReLU.

    x_cw : (Cin, T) f32 - raw NCW slice straight from HBM.
    wc   : (G, 3*Cin/G, Cout/G) bf16 - tap-fused group-compact weights.
    bias : (1, Cout) f32.
    Returns (T, Cout) f32, channels-last.
    """
    cin, t = x_cw.shape
    g_cnt, _, out_pg = wc.shape
    in_pg = cin // g_cnt
    xT = _mxu_transpose(x_cw)                               # (T, Cin) f32
    zrow = jnp.zeros((1, cin), jnp.float32)
    xTp = jnp.concatenate([zrow, xT, zrow], axis=0)         # (T+2, Cin): pad=1
    xs = [xTp[d:d + t, :].astype(jnp.bfloat16) for d in range(3)]  # 3 taps
    parts = []
    for g in range(g_cnt):                                  # one matmul / group
        sl = slice(g * in_pg, (g + 1) * in_pg)              # lane-aligned (512)
        xwin = jnp.concatenate([xs[0][:, sl], xs[1][:, sl], xs[2][:, sl]],
                               axis=1)                      # (T, 3*in_pg)
        parts.append(jnp.dot(xwin, wc[g],
                             preferred_element_type=jnp.float32))
    out = jnp.concatenate(parts, axis=-1) + bias            # (T, Cout)
    return jnp.maximum(out, 0.0)


def _gcnext_block(x, w1a, w1b, b1, w2, b2, w3, b3, wa, ba, transpose_out):
    """One GCNeXt block on a (T, C) f32 activation.

    Weights are bf16: w1a/w1b/w2/w3 pre-transposed to (in, out); wa stays in
    torch (out, in) orientation (used via A.B^T contractions).  Biases f32.
    If transpose_out, the result is emitted in (C, T) = NCW orientation.
    """
    t, c = x.shape
    xb = x.astype(jnp.bfloat16)

    # knn scores.  torch: pd[m,n] = -||x_m||^2 + 2 x_m.x_n - ||x_n||^2 ; the
    # -||x_m||^2 term is constant per row m -> cannot change per-row top-k ->
    # dropped on purpose.  ||x_n||^2 is the gram diagonal (XLU reduction).
    gram = jax.lax.dot_general(xb, xb, (((1,), (1,)), ((), ())),
                               preferred_element_type=jnp.float32)      # (T,T)
    r_ids = jax.lax.broadcasted_iota(jnp.int32, (t, t), 0)
    c_ids = jax.lax.broadcasted_iota(jnp.int32, (t, t), 1)
    sq_n = jnp.sum(jnp.where(r_ids == c_ids, gram, 0.0),
                   axis=0, keepdims=True)                               # (1,T)
    score = 2.0 * gram - sq_n

    # sconv layer 1, hoisted through the gather:
    #   relu(W1a.feat_nbr + W1b.x + b1), with onehot@(x@W1a) == (onehot@x)@W1a.
    xw1a = jnp.dot(xb, w1a, preferred_element_type=jnp.float32)         # (T,W)
    xpart = jnp.dot(xb, w1b, preferred_element_type=jnp.float32) + b1   # (T,W)

    # Iterative top-3.  Ties -> lowest column index; removed columns masked
    # with -inf so they can never re-enter.
    work = score
    onehots = []
    for _ in range(K_NEIGH):
        row_max = jnp.max(work, axis=-1, keepdims=True)
        sel = work == row_max
        idx = jnp.min(jnp.where(sel, c_ids, t), axis=-1, keepdims=True)
        oh = c_ids == idx
        onehots.append(oh.astype(jnp.float32))
        work = jnp.where(oh, -jnp.inf, work)
    onehot_all = jnp.concatenate(onehots, axis=0)                       # (3T,T)

    # All three neighbor branches stacked -> one tall matmul per sconv layer.
    gath = jnp.dot(onehot_all.astype(jnp.bfloat16), xw1a.astype(jnp.bfloat16),
                   preferred_element_type=jnp.float32)                  # (3T,W)
    h1 = jnp.maximum(gath + jnp.concatenate([xpart] * K_NEIGH, axis=0), 0.0)
    h2 = jnp.maximum(jnp.dot(h1.astype(jnp.bfloat16), w2,
                             preferred_element_type=jnp.float32) + b2, 0.0)
    h3 = jnp.maximum(jnp.dot(h2.astype(jnp.bfloat16), w3,
                             preferred_element_type=jnp.float32) + b3, 0.0)
    sout = jnp.maximum(jnp.maximum(h3[:t], h3[t:2 * t]), h3[2 * t:])    # max over k

    res = (x + sout).astype(jnp.bfloat16)                               # (T,C)
    if transpose_out:
        # aconv emitted directly in NCW orientation -> kernel stores without a
        # transpose.  ba is (C, 1) here.
        out = jax.lax.dot_general(wa, res, (((1,), (1,)), ((), ())),
                                  preferred_element_type=jnp.float32) + ba
    else:
        out = jax.lax.dot_general(res, wa, (((1,), (1,)), ((), ())),
                                  preferred_element_type=jnp.float32) + ba
    return jnp.maximum(out, 0.0)


# --------------------------------------------------------------------------
# Fused Pallas kernel: one batch element per grid step.
# --------------------------------------------------------------------------
def _gtad_kernel(x_ref, wbb_ref, bbb_ref, *rest):
    g1_refs, g2_refs, o_ref = rest[0:9], rest[9:18], rest[18]
    h = _backbone1_conv(x_ref[0], wbb_ref[...], bbb_ref[...])          # (T,256)
    h = _gcnext_block(h, *(r[...] for r in g1_refs), transpose_out=False)
    h = _gcnext_block(h, *(r[...] for r in g2_refs), transpose_out=True)
    o_ref[0] = h                                                       # (256,T)


def gtad_forward(fused_fea, params):
    """fused_fea: (B, 2048, T) f32 (torch NCW).  Returns (B, 256, T) f32."""
    B, cin, t = fused_fea.shape
    weights = ([params["bb1_w"], params["bb1_b"]]
               + [params["gcn1"][k] for k in GCN_KEYS]
               + [params["gcn2"][k] for k in GCN_KEYS])

    def _const_spec(a):                      # whole-array block, fetched once
        return pl.BlockSpec(a.shape, lambda b: (0,) * a.ndim)

    return pl.pallas_call(
        _gtad_kernel,
        out_shape=jax.ShapeDtypeStruct((B, H1D, t), jnp.float32),
        grid=(B,),                           # one batch element per step; B>=2
                                             # keeps both v7x TCs busy.
        in_specs=([pl.BlockSpec((1, cin, t), lambda b: (b, 0, 0))]
                  + [_const_spec(a) for a in weights]),
        out_specs=pl.BlockSpec((1, H1D, t), lambda b: (b, 0, 0)),
        compiler_params=pltpu.CompilerParams(
            dimension_semantics=("parallel",),
            vmem_limit_bytes=32 * 1024 * 1024),
    )(fused_fea, *weights)


# --------------------------------------------------------------------------
# Deterministic synthetic parameters (torch shapes respected).
# --------------------------------------------------------------------------
def init_backbone1_conv(key, cin=FEAT_DIM, cout=H1D, groups=GROUPS_BB1):
    k1, k2 = jax.random.split(key)
    in_pg, out_pg = cin // groups, cout // groups
    # torch Conv1d weight: (cout, cin/groups, 3), bias (cout,)
    w = jax.random.normal(k1, (cout, in_pg, 3), jnp.float32) / math.sqrt(in_pg * 3)
    b = jax.random.normal(k2, (cout,), jnp.float32) * 0.01
    # tap-fused group-compact layout: wc[g, d*in_pg + ci, co] = w[g*out_pg+co, ci, d]
    wc = jnp.transpose(w, (2, 1, 0)).reshape(3, in_pg, groups, out_pg)  # (3,ci,g,co)
    wc = jnp.transpose(wc, (2, 0, 1, 3)).reshape(groups, 3 * in_pg, out_pg)
    return wc.astype(jnp.bfloat16), b.reshape(1, cout)


def init_gcnext(key, C=H1D, groups=GROUPS_GCN, width_group=WIDTH_GROUP,
                transpose_out=False):
    W = width_group * groups                                  # 128
    ks = jax.random.split(key, 8)
    # sconvs[0]: Conv2d(2C, W, 1) -> weight (W, 2C); style=1: cat(neighbor, self)
    w1 = jax.random.normal(ks[0], (W, 2 * C), jnp.float32) / math.sqrt(2 * C)
    w1_t = w1.T                                               # (2C, W) = (in,out)
    w1a, w1b = w1_t[:C], w1_t[C:]
    b1 = jax.random.normal(ks[1], (W,), jnp.float32) * 0.01
    # sconvs[2]: Conv2d(W, W, 1, groups=32) -> weight (W, W/groups); exact
    # block-diagonal expansion in (in, out) orientation (only 32 KiB in bf16).
    cpg = W // groups
    w2 = jax.random.normal(ks[2], (W, cpg), jnp.float32) / math.sqrt(cpg)
    w2d = jnp.zeros((W, W), jnp.float32)
    for g in range(groups):
        w2d = w2d.at[g * cpg:(g + 1) * cpg,
                     g * cpg:(g + 1) * cpg].set(w2[g * cpg:(g + 1) * cpg].T)
    b2 = jax.random.normal(ks[3], (W,), jnp.float32) * 0.01
    # sconvs[4]: Conv2d(W, C, 1) -> weight (C, W)
    w3 = jax.random.normal(ks[4], (C, W), jnp.float32) / math.sqrt(W)
    b3 = jax.random.normal(ks[5], (C,), jnp.float32) * 0.01
    # aconvs: Conv1d(C, C, 1) -> weight (C, C), kept in torch (out, in) form
    wa = jax.random.normal(ks[6], (C, C), jnp.float32) / math.sqrt(C)
    ba = jax.random.normal(ks[7], (C,), jnp.float32) * 0.01
    ba2d = ba.reshape(C, 1) if transpose_out else ba.reshape(1, C)
    return dict(w1a=w1a.astype(jnp.bfloat16), w1b=w1b.astype(jnp.bfloat16),
                b1=b1.reshape(1, W),
                w2=w2d.astype(jnp.bfloat16), b2=b2.reshape(1, W),
                w3=w3.T.astype(jnp.bfloat16), b3=b3.reshape(1, C),
                wa=wa.astype(jnp.bfloat16), ba=ba2d)


# --------------------------------------------------------------------------
# Plain-XLA reference (same helpers -> identical math expression).
# --------------------------------------------------------------------------
def gtad_reference(fused_fea, params):
    g1 = [params["gcn1"][k] for k in GCN_KEYS]
    g2 = [params["gcn2"][k] for k in GCN_KEYS]
    outs = []
    for b in range(fused_fea.shape[0]):
        h = _backbone1_conv(fused_fea[b], params["bb1_w"], params["bb1_b"])
        h = _gcnext_block(h, *g1, transpose_out=False)
        h = _gcnext_block(h, *g2, transpose_out=True)
        outs.append(h)
    return jnp.stack(outs, axis=0)


if __name__ == "__main__":
    B, T = 2, 16
    key = jax.random.PRNGKey(0)
    kx, kc, kg1, kg2 = jax.random.split(key, 4)

    fused_fea = jax.random.normal(kx, (B, FEAT_DIM, T), jnp.float32)
    bb1_w, bb1_b = init_backbone1_conv(kc)
    params = dict(bb1_w=bb1_w, bb1_b=bb1_b,
                  gcn1=init_gcnext(kg1, transpose_out=False),
                  gcn2=init_gcnext(kg2, transpose_out=True))

    out = jax.block_until_ready(gtad_forward(fused_fea, params))
    assert out.shape == (B, H1D, T) and out.dtype == jnp.float32
    assert bool(jnp.all(jnp.isfinite(out)))

    ref = jax.block_until_ready(jax.jit(gtad_reference)(fused_fea, params))
    max_err = float(jnp.max(jnp.abs(out - ref)))
    assert max_err < 2e-2, f"kernel vs XLA reference mismatch: {max_err}"
    print("KERNEL_OK")
</pallas_src>

<mosaic_0001>
module attributes {stable_mosaic.version = 11 : i64} {
  func.func @_gtad_kernel(%arg0: i32, %arg1: memref<1x2048x16xf32, #tpu.memory_space<vmem>>, %arg2: memref<4x1536x64xbf16, #tpu.memory_space<vmem>>, %arg3: memref<1x256xf32, #tpu.memory_space<vmem>>, %arg4: memref<256x128xbf16, #tpu.memory_space<vmem>>, %arg5: memref<256x128xbf16, #tpu.memory_space<vmem>>, %arg6: memref<1x128xf32, #tpu.memory_space<vmem>>, %arg7: memref<128x128xbf16, #tpu.memory_space<vmem>>, %arg8: memref<1x128xf32, #tpu.memory_space<vmem>>, %arg9: memref<128x256xbf16, #tpu.memory_space<vmem>>, %arg10: memref<1x256xf32, #tpu.memory_space<vmem>>, %arg11: memref<256x256xbf16, #tpu.memory_space<vmem>>, %arg12: memref<1x256xf32, #tpu.memory_space<vmem>>, %arg13: memref<256x128xbf16, #tpu.memory_space<vmem>>, %arg14: memref<256x128xbf16, #tpu.memory_space<vmem>>, %arg15: memref<1x128xf32, #tpu.memory_space<vmem>>, %arg16: memref<128x128xbf16, #tpu.memory_space<vmem>>, %arg17: memref<1x128xf32, #tpu.memory_space<vmem>>, %arg18: memref<128x256xbf16, #tpu.memory_space<vmem>>, %arg19: memref<1x256xf32, #tpu.memory_space<vmem>>, %arg20: memref<256x256xbf16, #tpu.memory_space<vmem>>, %arg21: memref<256x1xf32, #tpu.memory_space<vmem>>, %arg22: memref<1x256x16xf32, #tpu.memory_space<vmem>>) attributes {dimension_semantics = [#tpu.dimension_semantics<parallel>], iteration_bounds = array<i64: 2>, scalar_prefetch = 0 : i64, scratch_operands = 0 : i64, tpu.core_type = #tpu.core_type<tc>, window_params = [{transform_indices = @transform_0, window_bounds = array<i64: 1, 2048, 16>}, {pipeline_mode = #tpu.pipeline_mode<synchronous>, transform_indices = @transform_1, window_bounds = array<i64: 4, 1536, 64>}, {pipeline_mode = #tpu.pipeline_mode<synchronous>, transform_indices = @transform_2, window_bounds = array<i64: 1, 256>}, {pipeline_mode = #tpu.pipeline_mode<synchronous>, transform_indices = @transform_3, window_bounds = array<i64: 256, 128>}, {pipeline_mode = #tpu.pipeline_mode<synchronous>, transform_indices = @transform_4, window_bounds = array<i64: 256, 128>}, {pipeline_mode = #tpu.pipeline_mode<synchronous>, transform_indices = @transform_5, window_bounds = array<i64: 1, 128>}, {pipeline_mode = #tpu.pipeline_mode<synchronous>, transform_indices = @transform_6, window_bounds = array<i64: 128, 128>}, {pipeline_mode = #tpu.pipeline_mode<synchronous>, transform_indices = @transform_7, window_bounds = array<i64: 1, 128>}, {pipeline_mode = #tpu.pipeline_mode<synchronous>, transform_indices = @transform_8, window_bounds = array<i64: 128, 256>}, {pipeline_mode = #tpu.pipeline_mode<synchronous>, transform_indices = @transform_9, window_bounds = array<i64: 1, 256>}, {pipeline_mode = #tpu.pipeline_mode<synchronous>, transform_indices = @transform_10, window_bounds = array<i64: 256, 256>}, {pipeline_mode = #tpu.pipeline_mode<synchronous>, transform_indices = @transform_11, window_bounds = array<i64: 1, 256>}, {pipeline_mode = #tpu.pipeline_mode<synchronous>, transform_indices = @transform_12, window_bounds = array<i64: 256, 128>}, {pipeline_mode = #tpu.pipeline_mode<synchronous>, transform_indices = @transform_13, window_bounds = array<i64: 256, 128>}, {pipeline_mode = #tpu.pipeline_mode<synchronous>, transform_indices = @transform_14, window_bounds = array<i64: 1, 128>}, {pipeline_mode = #tpu.pipeline_mode<synchronous>, transform_indices = @transform_15, window_bounds = array<i64: 128, 128>}, {pipeline_mode = #tpu.pipeline_mode<synchronous>, transform_indices = @transform_16, window_bounds = array<i64: 1, 128>}, {pipeline_mode = #tpu.pipeline_mode<synchronous>, transform_indices = @transform_17, window_bounds = array<i64: 128, 256>}, {pipeline_mode = #tpu.pipeline_mode<synchronous>, transform_indices = @transform_18, window_bounds = array<i64: 1, 256>}, {pipeline_mode = #tpu.pipeline_mode<synchronous>, transform_indices = @transform_19, window_bounds = array<i64: 256, 256>}, {pipeline_mode = #tpu.pipeline_mode<synchronous>, transform_indices = @transform_20, window_bounds = array<i64: 256, 1>}, {transform_indices = @transform_21, window_bounds = array<i64: 1, 256, 16>}]} {
    %c0 = arith.constant 0 : index
    %c0_0 = arith.constant 0 : index
    %c0_1 = arith.constant 0 : index
    %0 = vector.load %arg1[%c0, %c0_0, %c0_1] : memref<1x2048x16xf32, #tpu.memory_space<vmem>>, vector<1x2048x16xf32>
    %1 = vector.shape_cast %0 : vector<1x2048x16xf32> to vector<2048x16xf32>
    %c0_2 = arith.constant 0 : index
    %c0_3 = arith.constant 0 : index
    %c0_4 = arith.constant 0 : index
    %2 = vector.load %arg2[%c0_2, %c0_3, %c0_4] : memref<4x1536x64xbf16, #tpu.memory_space<vmem>>, vector<4x1536x64xbf16>
    %c0_5 = arith.constant 0 : index
    %c0_6 = arith.constant 0 : index
    %3 = vector.load %arg3[%c0_5, %c0_6] : memref<1x256xf32, #tpu.memory_space<vmem>>, vector<1x256xf32>
    %4 = tpu.iota {dimensions = array<i32: 0>} : vector<16x16xi32>
    %5 = tpu.iota {dimensions = array<i32: 1>} : vector<16x16xi32>
    %6 = arith.cmpi eq, %4, %5 : vector<16x16xi32>
    %7 = arith.extui %6 : vector<16x16xi1> to vector<16x16xi32>
    %8 = arith.sitofp %7 : vector<16x16xi32> to vector<16x16xf32>
    %9 = arith.truncf %8 : vector<16x16xf32> to vector<16x16xbf16>
    %10 = arith.truncf %1 : vector<2048x16xf32> to vector<2048x16xbf16>
    %cst = arith.constant dense<0.000000e+00> : vector<16x2048xf32>
    %11 = tpu.matmul %9, %10, %cst {dimension_numbers = #tpu.dot_dimension_numbers<[1], [1], [0], [0], [0, 0, 1, 0], [], []>} : vector<16x16xbf16>, vector<2048x16xbf16>, vector<16x2048xf32> -> vector<16x2048xf32>
    %cst_7 = arith.constant 0.000000e+00 : f32
    %12 = vector.broadcast %cst_7 : f32 to vector<1x2048xf32>
    %13 = tpu.concatenate %12, %11, %12 in 0 : vector<1x2048xf32>, vector<16x2048xf32>, vector<1x2048xf32> -> vector<18x2048xf32>
    %14 = vector.extract_strided_slice %13 {offsets = [0, 0], sizes = [16, 2048], strides = [1, 1]} : vector<18x2048xf32> to vector<16x2048xf32>
    %15 = arith.truncf %14 : vector<16x2048xf32> to vector<16x2048xbf16>
    %16 = vector.extract_strided_slice %13 {offsets = [1, 0], sizes = [16, 2048], strides = [1, 1]} : vector<18x2048xf32> to vector<16x2048xf32>
    %17 = arith.truncf %16 : vector<16x2048xf32> to vector<16x2048xbf16>
    %18 = vector.extract_strided_slice %13 {offsets = [2, 0], sizes = [16, 2048], strides = [1, 1]} : vector<18x2048xf32> to vector<16x2048xf32>
    %19 = arith.truncf %18 : vector<16x2048xf32> to vector<16x2048xbf16>
    %20 = vector.extract_strided_slice %15 {offsets = [0, 0], sizes = [16, 512], strides = [1, 1]} : vector<16x2048xbf16> to vector<16x512xbf16>
    %21 = vector.extract_strided_slice %17 {offsets = [0, 0], sizes = [16, 512], strides = [1, 1]} : vector<16x2048xbf16> to vector<16x512xbf16>
    %22 = vector.extract_strided_slice %19 {offsets = [0, 0], sizes = [16, 512], strides = [1, 1]} : vector<16x2048xbf16> to vector<16x512xbf16>
    %23 = tpu.concatenate %20, %21, %22 in 1 : vector<16x512xbf16>, vector<16x512xbf16>, vector<16x512xbf16> -> vector<16x1536xbf16>
    %24 = vector.extract_strided_slice %2 {offsets = [0, 0, 0], sizes = [1, 1536, 64], strides = [1, 1, 1]} : vector<4x1536x64xbf16> to vector<1x1536x64xbf16>
    %25 = vector.shape_cast %24 : vector<1x1536x64xbf16> to vector<1536x64xbf16>
    %cst_8 = arith.constant dense<0.000000e+00> : vector<16x64xf32>
    %26 = tpu.matmul %23, %25, %cst_8 {dimension_numbers = #tpu.dot_dimension_numbers<[1], [0], [0], [1], [0, 0, 1, 1], [], []>} : vector<16x1536xbf16>, vector<1536x64xbf16>, vector<16x64xf32> -> vector<16x64xf32>
    %27 = vector.extract_strided_slice %15 {offsets = [0, 512], sizes = [16, 512], strides = [1, 1]} : vector<16x2048xbf16> to vector<16x512xbf16>
    %28 = vector.extract_strided_slice %17 {offsets = [0, 512], sizes = [16, 512], strides = [1, 1]} : vector<16x2048xbf16> to vector<16x512xbf16>
    %29 = vector.extract_strided_slice %19 {offsets = [0, 512], sizes = [16, 512], strides = [1, 1]} : vector<16x2048xbf16> to vector<16x512xbf16>
    %30 = tpu.concatenate %27, %28, %29 in 1 : vector<16x512xbf16>, vector<16x512xbf16>, vector<16x512xbf16> -> vector<16x1536xbf16>
    %31 = vector.extract_strided_slice %2 {offsets = [1, 0, 0], sizes = [1, 1536, 64], strides = [1, 1, 1]} : vector<4x1536x64xbf16> to vector<1x1536x64xbf16>
    %32 = vector.shape_cast %31 : vector<1x1536x64xbf16> to vector<1536x64xbf16>
    %cst_9 = arith.constant dense<0.000000e+00> : vector<16x64xf32>
    %33 = tpu.matmul %30, %32, %cst_9 {dimension_numbers = #tpu.dot_dimension_numbers<[1], [0], [0], [1], [0, 0, 1, 1], [], []>} : vector<16x1536xbf16>, vector<1536x64xbf16>, vector<16x64xf32> -> vector<16x64xf32>
    %34 = vector.extract_strided_slice %15 {offsets = [0, 1024], sizes = [16, 512], strides = [1, 1]} : vector<16x2048xbf16> to vector<16x512xbf16>
    %35 = vector.extract_strided_slice %17 {offsets = [0, 1024], sizes = [16, 512], strides = [1, 1]} : vector<16x2048xbf16> to vector<16x512xbf16>
    %36 = vector.extract_strided_slice %19 {offsets = [0, 1024], sizes = [16, 512], strides = [1, 1]} : vector<16x2048xbf16> to vector<16x512xbf16>
    %37 = tpu.concatenate %34, %35, %36 in 1 : vector<16x512xbf16>, vector<16x512xbf16>, vector<16x512xbf16> -> vector<16x1536xbf16>
    %38 = vector.extract_strided_slice %2 {offsets = [2, 0, 0], sizes = [1, 1536, 64], strides = [1, 1, 1]} : vector<4x1536x64xbf16> to vector<1x1536x64xbf16>
    %39 = vector.shape_cast %38 : vector<1x1536x64xbf16> to vector<1536x64xbf16>
    %cst_10 = arith.constant dense<0.000000e+00> : vector<16x64xf32>
    %40 = tpu.matmul %37, %39, %cst_10 {dimension_numbers = #tpu.dot_dimension_numbers<[1], [0], [0], [1], [0, 0, 1, 1], [], []>} : vector<16x1536xbf16>, vector<1536x64xbf16>, vector<16x64xf32> -> vector<16x64xf32>
    %41 = vector.extract_strided_slice %15 {offsets = [0, 1536], sizes = [16, 512], strides = [1, 1]} : vector<16x2048xbf16> to vector<16x512xbf16>
    %42 = vector.extract_strided_slice %17 {offsets = [0, 1536], sizes = [16, 512], strides = [1, 1]} : vector<16x2048xbf16> to vector<16x512xbf16>
    %43 = vector.extract_strided_slice %19 {offsets = [0, 1536], sizes = [16, 512], strides = [1, 1]} : vector<16x2048xbf16> to vector<16x512xbf16>
    %44 = tpu.concatenate %41, %42, %43 in 1 : vector<16x512xbf16>, vector<16x512xbf16>, vector<16x512xbf16> -> vector<16x1536xbf16>
    %45 = vector.extract_strided_slice %2 {offsets = [3, 0, 0], sizes = [1, 1536, 64], strides = [1, 1, 1]} : vector<4x1536x64xbf16> to vector<1x1536x64xbf16>
    %46 = vector.shape_cast %45 : vector<1x1536x64xbf16> to vector<1536x64xbf16>
    %cst_11 = arith.constant dense<0.000000e+00> : vector<16x64xf32>
    %47 = tpu.matmul %44, %46, %cst_11 {dimension_numbers = #tpu.dot_dimension_numbers<[1], [0], [0], [1], [0, 0, 1, 1], [], []>} : vector<16x1536xbf16>, vector<1536x64xbf16>, vector<16x64xf32> -> vector<16x64xf32>
    %48 = tpu.concatenate %26, %33, %40, %47 in 1 : vector<16x64xf32>, vector<16x64xf32>, vector<16x64xf32>, vector<16x64xf32> -> vector<16x256xf32>
    %49 = vector.broadcast %3 : vector<1x256xf32> to vector<16x256xf32>
    %50 = arith.addf %48, %49 : vector<16x256xf32>
    %cst_12 = arith.constant 0.000000e+00 : f32
    %51 = vector.broadcast %cst_12 : f32 to vector<16x256xf32>
    %52 = arith.maximumf %50, %51 : vector<16x256xf32>
    %c0_13 = arith.constant 0 : index
    %c0_14 = arith.constant 0 : index
    %53 = vector.load %arg4[%c0_13, %c0_14] : memref<256x128xbf16, #tpu.memory_space<vmem>>, vector<256x128xbf16>
    %c0_15 = arith.constant 0 : index
    %c0_16 = arith.constant 0 : index
    %54 = vector.load %arg5[%c0_15, %c0_16] : memref<256x128xbf16, #tpu.memory_space<vmem>>, vector<256x128xbf16>
    %c0_17 = arith.constant 0 : index
    %c0_18 = arith.constant 0 : index
    %55 = vector.load %arg6[%c0_17, %c0_18] : memref<1x128xf32, #tpu.memory_space<vmem>>, vector<1x128xf32>
    %c0_19 = arith.constant 0 : index
    %c0_20 = arith.constant 0 : index
    %56 = vector.load %arg7[%c0_19, %c0_20] : memref<128x128xbf16, #tpu.memory_space<vmem>>, vector<128x128xbf16>
    %c0_21 = arith.constant 0 : index
    %c0_22 = arith.constant 0 : index
    %57 = vector.load %arg8[%c0_21, %c0_22] : memref<1x128xf32, #tpu.memory_space<vmem>>, vector<1x128xf32>
    %c0_23 = arith.constant 0 : index
    %c0_24 = arith.constant 0 : index
    %58 = vector.load %arg9[%c0_23, %c0_24] : memref<128x256xbf16, #tpu.memory_space<vmem>>, vector<128x256xbf16>
    %c0_25 = arith.constant 0 : index
    %c0_26 = arith.constant 0 : index
    %59 = vector.load %arg10[%c0_25, %c0_26] : memref<1x256xf32, #tpu.memory_space<vmem>>, vector<1x256xf32>
    %c0_27 = arith.constant 0 : index
    %c0_28 = arith.constant 0 : index
    %60 = vector.load %arg11[%c0_27, %c0_28] : memref<256x256xbf16, #tpu.memory_space<vmem>>, vector<256x256xbf16>
    %c0_29 = arith.constant 0 : index
    %c0_30 = arith.constant 0 : index
    %61 = vector.load %arg12[%c0_29, %c0_30] : memref<1x256xf32, #tpu.memory_space<vmem>>, vector<1x256xf32>
    %62 = arith.truncf %52 : vector<16x256xf32> to vector<16x256xbf16>
    %cst_31 = arith.constant dense<0.000000e+00> : vector<16x16xf32>
    %63 = tpu.matmul %62, %62, %cst_31 {dimension_numbers = #tpu.dot_dimension_numbers<[1], [1], [0], [0], [0, 0, 1, 0], [], []>} : vector<16x256xbf16>, vector<16x256xbf16>, vector<16x16xf32> -> vector<16x16xf32>
    %64 = tpu.iota {dimensions = array<i32: 0>} : vector<16x16xi32>
    %65 = tpu.iota {dimensions = array<i32: 1>} : vector<16x16xi32>
    %66 = arith.cmpi eq, %64, %65 : vector<16x16xi32>
    %cst_32 = arith.constant 0.000000e+00 : f32
    %67 = vector.broadcast %cst_32 : f32 to vector<16x16xf32>
    %68 = arith.select %66, %63, %67 : vector<16x16xi1>, vector<16x16xf32>
    %cst_33 = arith.constant dense<0.000000e+00> : vector<16xf32>
    %69 = vector.multi_reduction <add>, %68, %cst_33 [0] : vector<16x16xf32> to vector<16xf32>
    %70 = vector.shape_cast %69 : vector<16xf32> to vector<1x16xf32>
    %cst_34 = arith.constant 2.000000e+00 : f32
    %71 = vector.broadcast %cst_34 : f32 to vector<16x16xf32>
    %72 = arith.mulf %71, %63 : vector<16x16xf32>
    %73 = vector.broadcast %70 : vector<1x16xf32> to vector<16x16xf32>
    %74 = arith.subf %72, %73 : vector<16x16xf32>
    %cst_35 = arith.constant dense<0.000000e+00> : vector<16x128xf32>
    %75 = tpu.matmul %62, %53, %cst_35 {dimension_numbers = #tpu.dot_dimension_numbers<[1], [0], [0], [1], [0, 0, 1, 1], [], []>} : vector<16x256xbf16>, vector<256x128xbf16>, vector<16x128xf32> -> vector<16x128xf32>
    %cst_36 = arith.constant dense<0.000000e+00> : vector<16x128xf32>
    %76 = tpu.matmul %62, %54, %cst_36 {dimension_numbers = #tpu.dot_dimension_numbers<[1], [0], [0], [1], [0, 0, 1, 1], [], []>} : vector<16x256xbf16>, vector<256x128xbf16>, vector<16x128xf32> -> vector<16x128xf32>
    %77 = vector.broadcast %55 : vector<1x128xf32> to vector<16x128xf32>
    %78 = arith.addf %76, %77 : vector<16x128xf32>
    %cst_37 = arith.constant dense<0xFF800000> : vector<16xf32>
    %79 = vector.multi_reduction <maximumf>, %74, %cst_37 [1] : vector<16x16xf32> to vector<16xf32>
    %80 = vector.shape_cast %79 : vector<16xf32> to vector<16x1xf32>
    %81 = vector.broadcast %80 : vector<16x1xf32> to vector<16x16xf32>
    %82 = arith.cmpf oeq, %74, %81 : vector<16x16xf32>
    %c16_i32 = arith.constant 16 : i32
    %83 = vector.broadcast %c16_i32 : i32 to vector<16x16xi32>
    %84 = arith.select %82, %65, %83 : vector<16x16xi1>, vector<16x16xi32>
    %cst_38 = arith.constant dense<2147483647> : vector<16xi32>
    %85 = vector.multi_reduction <minsi>, %84, %cst_38 [1] : vector<16x16xi32> to vector<16xi32>
    %86 = vector.shape_cast %85 : vector<16xi32> to vector<16x1xi32>
    %87 = vector.broadcast %86 : vector<16x1xi32> to vector<16x16xi32>
    %88 = arith.cmpi eq, %65, %87 : vector<16x16xi32>
    %89 = arith.extui %88 : vector<16x16xi1> to vector<16x16xi32>
    %90 = arith.sitofp %89 : vector<16x16xi32> to vector<16x16xf32>
    %cst_39 = arith.constant 0xFF800000 : f32
    %91 = vector.broadcast %cst_39 : f32 to vector<16x16xf32>
    %92 = arith.select %88, %91, %74 : vector<16x16xi1>, vector<16x16xf32>
    %cst_40 = arith.constant dense<0xFF800000> : vector<16xf32>
    %93 = vector.multi_reduction <maximumf>, %92, %cst_40 [1] : vector<16x16xf32> to vector<16xf32>
    %94 = vector.shape_cast %93 : vector<16xf32> to vector<16x1xf32>
    %95 = vector.broadcast %94 : vector<16x1xf32> to vector<16x16xf32>
    %96 = arith.cmpf oeq, %92, %95 : vector<16x16xf32>
    %c16_i32_41 = arith.constant 16 : i32
    %97 = vector.broadcast %c16_i32_41 : i32 to vector<16x16xi32>
    %98 = arith.select %96, %65, %97 : vector<16x16xi1>, vector<16x16xi32>
    %cst_42 = arith.constant dense<2147483647> : vector<16xi32>
    %99 = vector.multi_reduction <minsi>, %98, %cst_42 [1] : vector<16x16xi32> to vector<16xi32>
    %100 = vector.shape_cast %99 : vector<16xi32> to vector<16x1xi32>
    %101 = vector.broadcast %100 : vector<16x1xi32> to vector<16x16xi32>
    %102 = arith.cmpi eq, %65, %101 : vector<16x16xi32>
    %103 = arith.extui %102 : vector<16x16xi1> to vector<16x16xi32>
    %104 = arith.sitofp %103 : vector<16x16xi32> to vector<16x16xf32>
    %cst_43 = arith.constant 0xFF800000 : f32
    %105 = vector.broadcast %cst_43 : f32 to vector<16x16xf32>
    %106 = arith.select %102, %105, %92 : vector<16x16xi1>, vector<16x16xf32>
    %cst_44 = arith.constant dense<0xFF800000> : vector<16xf32>
    %107 = vector.multi_reduction <maximumf>, %106, %cst_44 [1] : vector<16x16xf32> to vector<16xf32>
    %108 = vector.shape_cast %107 : vector<16xf32> to vector<16x1xf32>
    %109 = vector.broadcast %108 : vector<16x1xf32> to vector<16x16xf32>
    %110 = arith.cmpf oeq, %106, %109 : vector<16x16xf32>
    %c16_i32_45 = arith.constant 16 : i32
    %111 = vector.broadcast %c16_i32_45 : i32 to vector<16x16xi32>
    %112 = arith.select %110, %65, %111 : vector<16x16xi1>, vector<16x16xi32>
    %cst_46 = arith.constant dense<2147483647> : vector<16xi32>
    %113 = vector.multi_reduction <minsi>, %112, %cst_46 [1] : vector<16x16xi32> to vector<16xi32>
    %114 = vector.shape_cast %113 : vector<16xi32> to vector<16x1xi32>
    %115 = vector.broadcast %114 : vector<16x1xi32> to vector<16x16xi32>
    %116 = arith.cmpi eq, %65, %115 : vector<16x16xi32>
    %117 = arith.extui %116 : vector<16x16xi1> to vector<16x16xi32>
    %118 = arith.sitofp %117 : vector<16x16xi32> to vector<16x16xf32>
    %119 = tpu.concatenate %90, %104, %118 in 0 : vector<16x16xf32>, vector<16x16xf32>, vector<16x16xf32> -> vector<48x16xf32>
    %120 = arith.truncf %119 : vector<48x16xf32> to vector<48x16xbf16>
    %121 = arith.truncf %75 : vector<16x128xf32> to vector<16x128xbf16>
    %cst_47 = arith.constant dense<0.000000e+00> : vector<48x128xf32>
    %122 = tpu.matmul %120, %121, %cst_47 {dimension_numbers = #tpu.dot_dimension_numbers<[1], [0], [0], [1], [0, 0, 1, 1], [], []>} : vector<48x16xbf16>, vector<16x128xbf16>, vector<48x128xf32> -> vector<48x128xf32>
    %123 = tpu.concatenate %78, %78, %78 in 0 : vector<16x128xf32>, vector<16x128xf32>, vector<16x128xf32> -> vector<48x128xf32>
    %124 = arith.addf %122, %123 : vector<48x128xf32>
    %cst_48 = arith.constant 0.000000e+00 : f32
    %125 = vector.broadcast %cst_48 : f32 to vector<48x128xf32>
    %126 = arith.maximumf %124, %125 : vector<48x128xf32>
    %127 = arith.truncf %126 : vector<48x128xf32> to vector<48x128xbf16>
    %cst_49 = arith.constant dense<0.000000e+00> : vector<48x128xf32>
    %128 = tpu.matmul %127, %56, %cst_49 {dimension_numbers = #tpu.dot_dimension_numbers<[1], [0], [0], [1], [0, 0, 1, 1], [], []>} : vector<48x128xbf16>, vector<128x128xbf16>, vector<48x128xf32> -> vector<48x128xf32>
    %129 = vector.broadcast %57 : vector<1x128xf32> to vector<48x128xf32>
    %130 = arith.addf %128, %129 : vector<48x128xf32>
    %cst_50 = arith.constant 0.000000e+00 : f32
    %131 = vector.broadcast %cst_50 : f32 to vector<48x128xf32>
    %132 = arith.maximumf %130, %131 : vector<48x128xf32>
    %133 = arith.truncf %132 : vector<48x128xf32> to vector<48x128xbf16>
    %cst_51 = arith.constant dense<0.000000e+00> : vector<48x256xf32>
    %134 = tpu.matmul %133, %58, %cst_51 {dimension_numbers = #tpu.dot_dimension_numbers<[1], [0], [0], [1], [0, 0, 1, 1], [], []>} : vector<48x128xbf16>, vector<128x256xbf16>, vector<48x256xf32> -> vector<48x256xf32>
    %135 = vector.broadcast %59 : vector<1x256xf32> to vector<48x256xf32>
    %136 = arith.addf %134, %135 : vector<48x256xf32>
    %cst_52 = arith.constant 0.000000e+00 : f32
    %137 = vector.broadcast %cst_52 : f32 to vector<48x256xf32>
    %138 = arith.maximumf %136, %137 : vector<48x256xf32>
    %139 = vector.extract_strided_slice %138 {offsets = [0, 0], sizes = [16, 256], strides = [1, 1]} : vector<48x256xf32> to vector<16x256xf32>
    %140 = vector.extract_strided_slice %138 {offsets = [16, 0], sizes = [16, 256], strides = [1, 1]} : vector<48x256xf32> to vector<16x256xf32>
    %141 = arith.maximumf %139, %140 : vector<16x256xf32>
    %142 = vector.extract_strided_slice %138 {offsets = [32, 0], sizes = [16, 256], strides = [1, 1]} : vector<48x256xf32> to vector<16x256xf32>
    %143 = arith.maximumf %141, %142 : vector<16x256xf32>
    %144 = arith.addf %52, %143 : vector<16x256xf32>
    %145 = arith.truncf %144 : vector<16x256xf32> to vector<16x256xbf16>
    %cst_53 = arith.constant dense<0.000000e+00> : vector<16x256xf32>
    %146 = tpu.matmul %145, %60, %cst_53 {dimension_numbers = #tpu.dot_dimension_numbers<[1], [1], [0], [0], [0, 0, 1, 0], [], []>} : vector<16x256xbf16>, vector<256x256xbf16>, vector<16x256xf32> -> vector<16x256xf32>
    %147 = vector.broadcast %61 : vector<1x256xf32> to vector<16x256xf32>
    %148 = arith.addf %146, %147 : vector<16x256xf32>
    %cst_54 = arith.constant 0.000000e+00 : f32
    %149 = vector.broadcast %cst_54 : f32 to vector<16x256xf32>
    %150 = arith.maximumf %148, %149 : vector<16x256xf32>
    %c0_55 = arith.constant 0 : index
    %c0_56 = arith.constant 0 : index
    %151 = vector.load %arg13[%c0_55, %c0_56] : memref<256x128xbf16, #tpu.memory_space<vmem>>, vector<256x128xbf16>
    %c0_57 = arith.constant 0 : index
    %c0_58 = arith.constant 0 : index
    %152 = vector.load %arg14[%c0_57, %c0_58] : memref<256x128xbf16, #tpu.memory_space<vmem>>, vector<256x128xbf16>
    %c0_59 = arith.constant 0 : index
    %c0_60 = arith.constant 0 : index
    %153 = vector.load %arg15[%c0_59, %c0_60] : memref<1x128xf32, #tpu.memory_space<vmem>>, vector<1x128xf32>
    %c0_61 = arith.constant 0 : index
    %c0_62 = arith.constant 0 : index
    %154 = vector.load %arg16[%c0_61, %c0_62] : memref<128x128xbf16, #tpu.memory_space<vmem>>, vector<128x128xbf16>
    %c0_63 = arith.constant 0 : index
    %c0_64 = arith.constant 0 : index
    %155 = vector.load %arg17[%c0_63, %c0_64] : memref<1x128xf32, #tpu.memory_space<vmem>>, vector<1x128xf32>
    %c0_65 = arith.constant 0 : index
    %c0_66 = arith.constant 0 : index
    %156 = vector.load %arg18[%c0_65, %c0_66] : memref<128x256xbf16, #tpu.memory_space<vmem>>, vector<128x256xbf16>
    %c0_67 = arith.constant 0 : index
    %c0_68 = arith.constant 0 : index
    %157 = vector.load %arg19[%c0_67, %c0_68] : memref<1x256xf32, #tpu.memory_space<vmem>>, vector<1x256xf32>
    %c0_69 = arith.constant 0 : index
    %c0_70 = arith.constant 0 : index
    %158 = vector.load %arg20[%c0_69, %c0_70] : memref<256x256xbf16, #tpu.memory_space<vmem>>, vector<256x256xbf16>
    %c0_71 = arith.constant 0 : index
    %c0_72 = arith.constant 0 : index
    %159 = vector.load %arg21[%c0_71, %c0_72] : memref<256x1xf32, #tpu.memory_space<vmem>>, vector<256x1xf32>
    %160 = arith.truncf %150 : vector<16x256xf32> to vector<16x256xbf16>
    %cst_73 = arith.constant dense<0.000000e+00> : vector<16x16xf32>
    %161 = tpu.matmul %160, %160, %cst_73 {dimension_numbers = #tpu.dot_dimension_numbers<[1], [1], [0], [0], [0, 0, 1, 0], [], []>} : vector<16x256xbf16>, vector<16x256xbf16>, vector<16x16xf32> -> vector<16x16xf32>
    %162 = tpu.iota {dimensions = array<i32: 0>} : vector<16x16xi32>
    %163 = tpu.iota {dimensions = array<i32: 1>} : vector<16x16xi32>
    %164 = arith.cmpi eq, %162, %163 : vector<16x16xi32>
    %cst_74 = arith.constant 0.000000e+00 : f32
    %165 = vector.broadcast %cst_74 : f32 to vector<16x16xf32>
    %166 = arith.select %164, %161, %165 : vector<16x16xi1>, vector<16x16xf32>
    %cst_75 = arith.constant dense<0.000000e+00> : vector<16xf32>
    %167 = vector.multi_reduction <add>, %166, %cst_75 [0] : vector<16x16xf32> to vector<16xf32>
    %168 = vector.shape_cast %167 : vector<16xf32> to vector<1x16xf32>
    %cst_76 = arith.constant 2.000000e+00 : f32
    %169 = vector.broadcast %cst_76 : f32 to vector<16x16xf32>
    %170 = arith.mulf %169, %161 : vector<16x16xf32>
    %171 = vector.broadcast %168 : vector<1x16xf32> to vector<16x16xf32>
    %172 = arith.subf %170, %171 : vector<16x16xf32>
    %cst_77 = arith.constant dense<0.000000e+00> : vector<16x128xf32>
    %173 = tpu.matmul %160, %151, %cst_77 {dimension_numbers = #tpu.dot_dimension_numbers<[1], [0], [0], [1], [0, 0, 1, 1], [], []>} : vector<16x256xbf16>, vector<256x128xbf16>, vector<16x128xf32> -> vector<16x128xf32>
    %cst_78 = arith.constant dense<0.000000e+00> : vector<16x128xf32>
    %174 = tpu.matmul %160, %152, %cst_78 {dimension_numbers = #tpu.dot_dimension_numbers<[1], [0], [0], [1], [0, 0, 1, 1], [], []>} : vector<16x256xbf16>, vector<256x128xbf16>, vector<16x128xf32> -> vector<16x128xf32>
    %175 = vector.broadcast %153 : vector<1x128xf32> to vector<16x128xf32>
    %176 = arith.addf %174, %175 : vector<16x128xf32>
    %cst_79 = arith.constant dense<0xFF800000> : vector<16xf32>
    %177 = vector.multi_reduction <maximumf>, %172, %cst_79 [1] : vector<16x16xf32> to vector<16xf32>
    %178 = vector.shape_cast %177 : vector<16xf32> to vector<16x1xf32>
    %179 = vector.broadcast %178 : vector<16x1xf32> to vector<16x16xf32>
    %180 = arith.cmpf oeq, %172, %179 : vector<16x16xf32>
    %c16_i32_80 = arith.constant 16 : i32
    %181 = vector.broadcast %c16_i32_80 : i32 to vector<16x16xi32>
    %182 = arith.select %180, %163, %181 : vector<16x16xi1>, vector<16x16xi32>
    %cst_81 = arith.constant dense<2147483647> : vector<16xi32>
    %183 = vector.multi_reduction <minsi>, %182, %cst_81 [1] : vector<16x16xi32> to vector<16xi32>
    %184 = vector.shape_cast %183 : vector<16xi32> to vector<16x1xi32>
    %185 = vector.broadcast %184 : vector<16x1xi32> to vector<16x16xi32>
    %186 = arith.cmpi eq, %163, %185 : vector<16x16xi32>
    %187 = arith.extui %186 : vector<16x16xi1> to vector<16x16xi32>
    %188 = arith.sitofp %187 : vector<16x16xi32> to vector<16x16xf32>
    %cst_82 = arith.constant 0xFF800000 : f32
    %189 = vector.broadcast %cst_82 : f32 to vector<16x16xf32>
    %190 = arith.select %186, %189, %172 : vector<16x16xi1>, vector<16x16xf32>
    %cst_83 = arith.constant dense<0xFF800000> : vector<16xf32>
    %191 = vector.multi_reduction <maximumf>, %190, %cst_83 [1] : vector<16x16xf32> to vector<16xf32>
    %192 = vector.shape_cast %191 : vector<16xf32> to vector<16x1xf32>
    %193 = vector.broadcast %192 : vector<16x1xf32> to vector<16x16xf32>
    %194 = arith.cmpf oeq, %190, %193 : vector<16x16xf32>
    %c16_i32_84 = arith.constant 16 : i32
    %195 = vector.broadcast %c16_i32_84 : i32 to vector<16x16xi32>
    %196 = arith.select %194, %163, %195 : vector<16x16xi1>, vector<16x16xi32>
    %cst_85 = arith.constant dense<2147483647> : vector<16xi32>
    %197 = vector.multi_reduction <minsi>, %196, %cst_85 [1] : vector<16x16xi32> to vector<16xi32>
    %198 = vector.shape_cast %197 : vector<16xi32> to vector<16x1xi32>
    %199 = vector.broadcast %198 : vector<16x1xi32> to vector<16x16xi32>
    %200 = arith.cmpi eq, %163, %199 : vector<16x16xi32>
    %201 = arith.extui %200 : vector<16x16xi1> to vector<16x16xi32>
    %202 = arith.sitofp %201 : vector<16x16xi32> to vector<16x16xf32>
    %cst_86 = arith.constant 0xFF800000 : f32
    %203 = vector.broadcast %cst_86 : f32 to vector<16x16xf32>
    %204 = arith.select %200, %203, %190 : vector<16x16xi1>, vector<16x16xf32>
    %cst_87 = arith.constant dense<0xFF800000> : vector<16xf32>
    %205 = vector.multi_reduction <maximumf>, %204, %cst_87 [1] : vector<16x16xf32> to vector<16xf32>
    %206 = vector.shape_cast %205 : vector<16xf32> to vector<16x1xf32>
    %207 = vector.broadcast %206 : vector<16x1xf32> to vector<16x16xf32>
    %208 = arith.cmpf oeq, %204, %207 : vector<16x16xf32>
    %c16_i32_88 = arith.constant 16 : i32
    %209 = vector.broadcast %c16_i32_88 : i32 to vector<16x16xi32>
    %210 = arith.select %208, %163, %209 : vector<16x16xi1>, vector<16x16xi32>
    %cst_89 = arith.constant dense<2147483647> : vector<16xi32>
    %211 = vector.multi_reduction <minsi>, %210, %cst_89 [1] : vector<16x16xi32> to vector<16xi32>
    %212 = vector.shape_cast %211 : vector<16xi32> to vector<16x1xi32>
    %213 = vector.broadcast %212 : vector<16x1xi32> to vector<16x16xi32>
    %214 = arith.cmpi eq, %163, %213 : vector<16x16xi32>
    %215 = arith.extui %214 : vector<16x16xi1> to vector<16x16xi32>
    %216 = arith.sitofp %215 : vector<16x16xi32> to vector<16x16xf32>
    %217 = tpu.concatenate %188, %202, %216 in 0 : vector<16x16xf32>, vector<16x16xf32>, vector<16x16xf32> -> vector<48x16xf32>
    %218 = arith.truncf %217 : vector<48x16xf32> to vector<48x16xbf16>
    %219 = arith.truncf %173 : vector<16x128xf32> to vector<16x128xbf16>
    %cst_90 = arith.constant dense<0.000000e+00> : vector<48x128xf32>
    %220 = tpu.matmul %218, %219, %cst_90 {dimension_numbers = #tpu.dot_dimension_numbers<[1], [0], [0], [1], [0, 0, 1, 1], [], []>} : vector<48x16xbf16>, vector<16x128xbf16>, vector<48x128xf32> -> vector<48x128xf32>
    %221 = tpu.concatenate %176, %176, %176 in 0 : vector<16x128xf32>, vector<16x128xf32>, vector<16x128xf32> -> vector<48x128xf32>
    %222 = arith.addf %220, %221 : vector<48x128xf32>
    %cst_91 = arith.constant 0.000000e+00 : f32
    %223 = vector.broadcast %cst_91 : f32 to vector<48x128xf32>
    %224 = arith.maximumf %222, %223 : vector<48x128xf32>
    %225 = arith.truncf %224 : vector<48x128xf32> to vector<48x128xbf16>
    %cst_92 = arith.constant dense<0.000000e+00> : vector<48x128xf32>
    %226 = tpu.matmul %225, %154, %cst_92 {dimension_numbers = #tpu.dot_dimension_numbers<[1], [0], [0], [1], [0, 0, 1, 1], [], []>} : vector<48x128xbf16>, vector<128x128xbf16>, vector<48x128xf32> -> vector<48x128xf32>
    %227 = vector.broadcast %155 : vector<1x128xf32> to vector<48x128xf32>
    %228 = arith.addf %226, %227 : vector<48x128xf32>
    %cst_93 = arith.constant 0.000000e+00 : f32
    %229 = vector.broadcast %cst_93 : f32 to vector<48x128xf32>
    %230 = arith.maximumf %228, %229 : vector<48x128xf32>
    %231 = arith.truncf %230 : vector<48x128xf32> to vector<48x128xbf16>
    %cst_94 = arith.constant dense<0.000000e+00> : vector<48x256xf32>
    %232 = tpu.matmul %231, %156, %cst_94 {dimension_numbers = #tpu.dot_dimension_numbers<[1], [0], [0], [1], [0, 0, 1, 1], [], []>} : vector<48x128xbf16>, vector<128x256xbf16>, vector<48x256xf32> -> vector<48x256xf32>
    %233 = vector.broadcast %157 : vector<1x256xf32> to vector<48x256xf32>
    %234 = arith.addf %232, %233 : vector<48x256xf32>
    %cst_95 = arith.constant 0.000000e+00 : f32
    %235 = vector.broadcast %cst_95 : f32 to vector<48x256xf32>
    %236 = arith.maximumf %234, %235 : vector<48x256xf32>
    %237 = vector.extract_strided_slice %236 {offsets = [0, 0], sizes = [16, 256], strides = [1, 1]} : vector<48x256xf32> to vector<16x256xf32>
    %238 = vector.extract_strided_slice %236 {offsets = [16, 0], sizes = [16, 256], strides = [1, 1]} : vector<48x256xf32> to vector<16x256xf32>
    %239 = arith.maximumf %237, %238 : vector<16x256xf32>
    %240 = vector.extract_strided_slice %236 {offsets = [32, 0], sizes = [16, 256], strides = [1, 1]} : vector<48x256xf32> to vector<16x256xf32>
    %241 = arith.maximumf %239, %240 : vector<16x256xf32>
    %242 = arith.addf %150, %241 : vector<16x256xf32>
    %243 = arith.truncf %242 : vector<16x256xf32> to vector<16x256xbf16>
    %cst_96 = arith.constant dense<0.000000e+00> : vector<256x16xf32>
    %244 = tpu.matmul %158, %243, %cst_96 {dimension_numbers = #tpu.dot_dimension_numbers<[1], [1], [0], [0], [0, 0, 1, 0], [], []>} : vector<256x256xbf16>, vector<16x256xbf16>, vector<256x16xf32> -> vector<256x16xf32>
    %245 = vector.broadcast %159 : vector<256x1xf32> to vector<256x16xf32>
    %246 = arith.addf %244, %245 : vector<256x16xf32>
    %cst_97 = arith.constant 0.000000e+00 : f32
    %247 = vector.broadcast %cst_97 : f32 to vector<256x16xf32>
    %248 = arith.maximumf %246, %247 : vector<256x16xf32>
    %c0_98 = arith.constant 0 : index
    %c0_99 = arith.constant 0 : index
    %c0_100 = arith.constant 0 : index
    %249 = vector.load %arg22[%c0_98, %c0_99, %c0_100] : memref<1x256x16xf32, #tpu.memory_space<vmem>>, vector<1x256x16xf32>
    %250 = vector.shape_cast %249 : vector<1x256x16xf32> to vector<256x16xf32>
    %251 = vector.shape_cast %248 : vector<256x16xf32> to vector<1x256x16xf32>
    tpu.vector_store %arg22[%c0_98, %c0_99, %c0_100], %251 {strides = array<i32>} : memref<1x256x16xf32, #tpu.memory_space<vmem>>, vector<1x256x16xf32>,
    return
  }
  func.func @transform_0(%arg0: i32) -> (i32, i32, i32) {
    %c0_i32 = arith.constant 0 : i32
    %c0_i32_0 = arith.constant 0 : i32
    %c0_i32_1 = arith.constant 0 : i32
    return %arg0, %c0_i32, %c0_i32_0 : i32, i32, i32
  }
  func.func @transform_1(%arg0: i32) -> (i32, i32, i32) {
    %c0_i32 = arith.constant 0 : i32
    %c0_i32_0 = arith.constant 0 : i32
    %c0_i32_1 = arith.constant 0 : i32
    %c0_i32_2 = arith.constant 0 : i32
    return %c0_i32, %c0_i32_0, %c0_i32_1 : i32, i32, i32
  }
  func.func @transform_2(%arg0: i32) -> (i32, i32) {
    %c0_i32 = arith.constant 0 : i32
    %c0_i32_0 = arith.constant 0 : i32
    %c0_i32_1 = arith.constant 0 : i32
    return %c0_i32, %c0_i32_0 : i32, i32
  }
  func.func @transform_3(%arg0: i32) -> (i32, i32) {
    %c0_i32 = arith.constant 0 : i32
    %c0_i32_0 = arith.constant 0 : i32
    %c0_i32_1 = arith.constant 0 : i32
    return %c0_i32, %c0_i32_0 : i32, i32
  }
  func.func @transform_4(%arg0: i32) -> (i32, i32) {
    %c0_i32 = arith.constant 0 : i32
    %c0_i32_0 = arith.constant 0 : i32
    %c0_i32_1 = arith.constant 0 : i32
    return %c0_i32, %c0_i32_0 : i32, i32
  }
  func.func @transform_5(%arg0: i32) -> (i32, i32) {
    %c0_i32 = arith.constant 0 : i32
    %c0_i32_0 = arith.constant 0 : i32
    %c0_i32_1 = arith.constant 0 : i32
    return %c0_i32, %c0_i32_0 : i32, i32
  }
  func.func @transform_6(%arg0: i32) -> (i32, i32) {
    %c0_i32 = arith.constant 0 : i32
    %c0_i32_0 = arith.constant 0 : i32
    %c0_i32_1 = arith.constant 0 : i32
    return %c0_i32, %c0_i32_0 : i32, i32
  }
  func.func @transform_7(%arg0: i32) -> (i32, i32) {
    %c0_i32 = arith.constant 0 : i32
    %c0_i32_0 = arith.constant 0 : i32
    %c0_i32_1 = arith.constant 0 : i32
    return %c0_i32, %c0_i32_0 : i32, i32
  }
  func.func @transform_8(%arg0: i32) -> (i32, i32) {
    %c0_i32 = arith.constant 0 : i32
    %c0_i32_0 = arith.constant 0 : i32
    %c0_i32_1 = arith.constant 0 : i32
    return %c0_i32, %c0_i32_0 : i32, i32
  }
  func.func @transform_9(%arg0: i32) -> (i32, i32) {
    %c0_i32 = arith.constant 0 : i32
    %c0_i32_0 = arith.constant 0 : i32
    %c0_i32_1 = arith.constant 0 : i32
    return %c0_i32, %c0_i32_0 : i32, i32
  }
  func.func @transform_10(%arg0: i32) -> (i32, i32) {
    %c0_i32 = arith.constant 0 : i32
    %c0_i32_0 = arith.constant 0 : i32
    %c0_i32_1 = arith.constant 0 : i32
    return %c0_i32, %c0_i32_0 : i32, i32
  }
  func.func @transform_11(%arg0: i32) -> (i32, i32) {
    %c0_i32 = arith.constant 0 : i32
    %c0_i32_0 = arith.constant 0 : i32
    %c0_i32_1 = arith.constant 0 : i32
    return %c0_i32, %c0_i32_0 : i32, i32
  }
  func.func @transform_12(%arg0: i32) -> (i32, i32) {
    %c0_i32 = arith.constant 0 : i32
    %c0_i32_0 = arith.constant 0 : i32
    %c0_i32_1 = arith.constant 0 : i32
    return %c0_i32, %c0_i32_0 : i32, i32
  }
  func.func @transform_13(%arg0: i32) -> (i32, i32) {
    %c0_i32 = arith.constant 0 : i32
    %c0_i32_0 = arith.constant 0 : i32
    %c0_i32_1 = arith.constant 0 : i32
    return %c0_i32, %c0_i32_0 : i32, i32
  }
  func.func @transform_14(%arg0: i32) -> (i32, i32) {
    %c0_i32 = arith.constant 0 : i32
    %c0_i32_0 = arith.constant 0 : i32
    %c0_i32_1 = arith.constant 0 : i32
    return %c0_i32, %c0_i32_0 : i32, i32
  }
  func.func @transform_15(%arg0: i32) -> (i32, i32) {
    %c0_i32 = arith.constant 0 : i32
    %c0_i32_0 = arith.constant 0 : i32
    %c0_i32_1 = arith.constant 0 : i32
    return %c0_i32, %c0_i32_0 : i32, i32
  }
  func.func @transform_16(%arg0: i32) -> (i32, i32) {
    %c0_i32 = arith.constant 0 : i32
    %c0_i32_0 = arith.constant 0 : i32
    %c0_i32_1 = arith.constant 0 : i32
    return %c0_i32, %c0_i32_0 : i32, i32
  }
  func.func @transform_17(%arg0: i32) -> (i32, i32) {
    %c0_i32 = arith.constant 0 : i32
    %c0_i32_0 = arith.constant 0 : i32
    %c0_i32_1 = arith.constant 0 : i32
    return %c0_i32, %c0_i32_0 : i32, i32
  }
  func.func @transform_18(%arg0: i32) -> (i32, i32) {
    %c0_i32 = arith.constant 0 : i32
    %c0_i32_0 = arith.constant 0 : i32
    %c0_i32_1 = arith.constant 0 : i32
    return %c0_i32, %c0_i32_0 : i32, i32
  }
  func.func @transform_19(%arg0: i32) -> (i32, i32) {
    %c0_i32 = arith.constant 0 : i32
    %c0_i32_0 = arith.constant 0 : i32
    %c0_i32_1 = arith.constant 0 : i32
    return %c0_i32, %c0_i32_0 : i32, i32
  }
  func.func @transform_20(%arg0: i32) -> (i32, i32) {
    %c0_i32 = arith.constant 0 : i32
    %c0_i32_0 = arith.constant 0 : i32
    %c0_i32_1 = arith.constant 0 : i32
    return %c0_i32, %c0_i32_0 : i32, i32
  }
  func.func @transform_21(%arg0: i32) -> (i32, i32, i32) {
    %c0_i32 = arith.constant 0 : i32
    %c0_i32_0 = arith.constant 0 : i32
    %c0_i32_1 = arith.constant 0 : i32
    return %arg0, %c0_i32, %c0_i32_0 : i32, i32, i32
  }
}

</mosaic_0001>

<llo_original>
// kernel: tpu_custom_call.1
$region0: #{tpu_custom_call.1}
  #allocation0 [shape = 'u32[]', space=smem, size = 0x4, offset = 0x4, fixed_abs, tag = 'smem constant byte address 0x4 - core index']
  #allocation1 [shape = 'u32[144,128]{1,0:T(1,128)}', space=vmem, size = 0x12000, scoped, tag = 'internal scratch']
  %s0 = inlined_call_operand.vmem [shape: f32[2,2048,16], index: 0, kind: input, shape index: {}]
  %s1 = inlined_call_operand.vmem [shape: bf16[4,1536,64], index: 1, kind: input, shape index: {}]
  %s2 = inlined_call_operand.vmem [shape: f32[1,256], index: 2, kind: input, shape index: {}]
  %s3 = inlined_call_operand.vmem [shape: bf16[256,128], index: 3, kind: input, shape index: {}]
  %s4 = inlined_call_operand.vmem [shape: bf16[256,128], index: 4, kind: input, shape index: {}]
  %s5 = inlined_call_operand.vmem [shape: f32[1,128], index: 5, kind: input, shape index: {}]
  %s6 = inlined_call_operand.vmem [shape: bf16[128,128], index: 6, kind: input, shape index: {}]
  %s7 = inlined_call_operand.vmem [shape: f32[1,128], index: 7, kind: input, shape index: {}]
  %s8 = inlined_call_operand.vmem [shape: bf16[128,256], index: 8, kind: input, shape index: {}]
  %s9 = inlined_call_operand.vmem [shape: f32[1,256], index: 9, kind: input, shape index: {}]
  %s10 = inlined_call_operand.vmem [shape: bf16[256,256], index: 10, kind: input, shape index: {}]
  %s11 = inlined_call_operand.vmem [shape: f32[1,256], index: 11, kind: input, shape index: {}]
  %s12 = inlined_call_operand.vmem [shape: bf16[256,128], index: 12, kind: input, shape index: {}]
  %s13 = inlined_call_operand.vmem [shape: bf16[256,128], index: 13, kind: input, shape index: {}]
  %s14 = inlined_call_operand.vmem [shape: f32[1,128], index: 14, kind: input, shape index: {}]
  %s15 = inlined_call_operand.vmem [shape: bf16[128,128], index: 15, kind: input, shape index: {}]
  %s16 = inlined_call_operand.vmem [shape: f32[1,128], index: 16, kind: input, shape index: {}]
  %s17 = inlined_call_operand.vmem [shape: bf16[128,256], index: 17, kind: input, shape index: {}]
  %s18 = inlined_call_operand.vmem [shape: f32[1,256], index: 18, kind: input, shape index: {}]
  %s19 = inlined_call_operand.vmem [shape: bf16[256,256], index: 19, kind: input, shape index: {}]
  %s20 = inlined_call_operand.vmem [shape: f32[256,1], index: 20, kind: input, shape index: {}]
  %s21 = inlined_call_operand.vmem [shape: f32[2,256,16], index: 21, kind: output, shape index: {}]
  %s22 = sld [smem:[#allocation0]]
  $region117: #{tpu_custom_call.1} parent=0
    _
  %s24 = ssub.s32 1, %s22
  %s25 = scalar_select 0, %s24, %s22
  loop: start=0, step=1, limit=4
  $region2: #{tpu_custom_call.1} parent=0 // loop_pre_header
    _
  $region3: #{tpu_custom_call.1} parent=0 // loop_header
    %s27 = sphi 0, %s31
    %p28 = scmp.ge.s32.totalorder %s27, 4
    %s37 = sphi 0, %s39
    %s40 = sphi 0, %s37
    %s41 = sphi 0, %s40
    %s57 = sphi 0, %s41
    %s61 = sphi 0, %s61
    %s63 = sphi 0, %s61
    %s64 = sphi 0, %s63
    %s78 = sphi 0, %s64
    %s82 = sphi 0, %s82
    %s84 = sphi 0, %s82
    %s85 = sphi 0, %s84
    %s99 = sphi 0, %s85
    %s103 = sphi 0, %s103
    %s105 = sphi 0, %s103
    %s106 = sphi 0, %s105
    %s120 = sphi 0, %s106
    %s124 = sphi 0, %s124
    %s126 = sphi 0, %s124
    %s127 = sphi 0, %s126
    %s141 = sphi 0, %s127
    %s145 = sphi 0, %s145
    %s147 = sphi 0, %s145
    %s148 = sphi 0, %s147
    %s162 = sphi 0, %s148
    %s166 = sphi 0, %s166
    %s168 = sphi 0, %s166
    %s169 = sphi 0, %s168
    %s183 = sphi 0, %s169
    %s187 = sphi 0, %s187
    %s189 = sphi 0, %s187
    %s190 = sphi 0, %s189
    %s204 = sphi 0, %s190
    %s208 = sphi 0, %s208
    %s210 = sphi 0, %s208
    %s211 = sphi 0, %s210
    %s225 = sphi 0, %s211
    %s229 = sphi 0, %s229
    %s231 = sphi 0, %s229
    %s232 = sphi 0, %s231
    %s246 = sphi 0, %s232
    %s250 = sphi 0, %s250
    %s252 = sphi 0, %s250
    %s253 = sphi 0, %s252
    %s267 = sphi 0, %s253
    %s271 = sphi 0, %s271
    %s273 = sphi 0, %s271
    %s274 = sphi 0, %s273
    %s288 = sphi 0, %s274
    %s292 = sphi 0, %s292
    %s294 = sphi 0, %s292
    %s295 = sphi 0, %s294
    %s309 = sphi 0, %s295
    %s313 = sphi 0, %s313
    %s315 = sphi 0, %s313
    %s316 = sphi 0, %s315
    %s330 = sphi 0, %s316
    %s334 = sphi 0, %s334
    %s336 = sphi 0, %s334
    %s337 = sphi 0, %s336
    %s351 = sphi 0, %s337
    %s355 = sphi 0, %s355
    %s357 = sphi 0, %s355
    %s358 = sphi 0, %s357
    %s372 = sphi 0, %s358
    %s376 = sphi 0, %s376
    %s378 = sphi 0, %s376
    %s379 = sphi 0, %s378
    %s393 = sphi 0, %s379
    %s397 = sphi 0, %s397
    %s399 = sphi 0, %s397
    %s400 = sphi 0, %s399
    %s414 = sphi 0, %s400
    %s418 = sphi 0, %s418
    %s420 = sphi 0, %s418
    %s421 = sphi 0, %s420
    %s435 = sphi 0, %s421
    %s439 = sphi 0, %s439
    %s441 = sphi 0, %s439
    %s442 = sphi 0, %s441
    %s456 = sphi 0, %s442
    %s460 = sphi 0, %s460
    %s462 = sphi 0, %s460
    %s463 = sphi 0, %s462
    %s477 = sphi 0, %s463
    %s483 = sphi 0, %s485
    %s486 = sphi 0, %s483
    %s487 = sphi 0, %s486
    %s503 = sphi 0, %s487
  $region4: #{tpu_custom_call.1} parent=0 // loop_header_branch
    %30 = sbr.rel (%p28) target = $region8
  $region5: #{tpu_custom_call.1} parent=0 // loop_body
    %s32 = ssub.s32 %s27, 1
    %s33 = ssub.s32 %s27, 2
    %s34 = sadd.s32 %s27, 1
    %s35 = ssub.s32 %s27, %s34
    %p36 = scmp.eq.s32.totalorder %s35, 0
    %s38 = sadd.s32 %s37, 1
    %s39 = scalar_select %p36, %s37, %s38
    %p42 = pneg %p36
    %p43 = scmp.eq.s32.totalorder %s27, 1
    %p44 = por %p42, %p43
    %p45 = scmp.ne.s32.totalorder %s37, %s40
    %p46 = scmp.eq.s32.totalorder %s27, 0
    %p47 = por %p45, %p46
    %p48 = scmp.ne.s32.totalorder %s37, %s40
    %p49 = scmp.eq.s32.totalorder %s32, 1
    %p50 = por %p48, %p49
    %p51 = scmp.ne.s32.totalorder %s40, %s41
    %p52 = scmp.eq.s32.totalorder %s32, 0
    %p53 = por %p51, %p52
    %p54 = scmp.ne.s32.totalorder %s40, %s41
    %p55 = scmp.eq.s32.totalorder %s33, 1
    %p56 = por %p54, %p55
    %p58 = scmp.ne.s32.totalorder %s41, %s57
    %p59 = scmp.eq.s32.totalorder %s33, 0
    %p60 = por %p58, %p59
    %s62 = sadd.s32 %s61, 1
    %p65 = scmp.eq.s32.totalorder %s27, 1
    %p66 = scmp.ne.s32.totalorder %s61, %s63
    %p67 = scmp.eq.s32.totalorder %s27, 0
    %p68 = por %p66, %p67
    %p69 = scmp.ne.s32.totalorder %s61, %s63
    %p70 = scmp.eq.s32.totalorder %s32, 1
    %p71 = por %p69, %p70
    %p72 = scmp.ne.s32.totalorder %s63, %s64
    %p73 = scmp.eq.s32.totalorder %s32, 0
    %p74 = por %p72, %p73
    %p75 = scmp.ne.s32.totalorder %s63, %s64
    %p76 = scmp.eq.s32.totalorder %s33, 1
    %p77 = por %p75, %p76
    %p79 = scmp.ne.s32.totalorder %s64, %s78
    %p80 = scmp.eq.s32.totalorder %s33, 0
    %p81 = por %p79, %p80
    %s83 = sadd.s32 %s82, 1
    %p86 = scmp.eq.s32.totalorder %s27, 1
    %p87 = scmp.ne.s32.totalorder %s82, %s84
    %p88 = scmp.eq.s32.totalorder %s27, 0
    %p89 = por %p87, %p88
    %p90 = scmp.ne.s32.totalorder %s82, %s84
    %p91 = scmp.eq.s32.totalorder %s32, 1
    %p92 = por %p90, %p91
    %p93 = scmp.ne.s32.totalorder %s84, %s85
    %p94 = scmp.eq.s32.totalorder %s32, 0
    %p95 = por %p93, %p94
    %p96 = scmp.ne.s32.totalorder %s84, %s85
    %p97 = scmp.eq.s32.totalorder %s33, 1
    %p98 = por %p96, %p97
    %p100 = scmp.ne.s32.totalorder %s85, %s99
    %p101 = scmp.eq.s32.totalorder %s33, 0
    %p102 = por %p100, %p101
    %s104 = sadd.s32 %s103, 1
    %p107 = scmp.eq.s32.totalorder %s27, 1
    %p108 = scmp.ne.s32.totalorder %s103, %s105
    %p109 = scmp.eq.s32.totalorder %s27, 0
    %p110 = por %p108, %p109
    %p111 = scmp.ne.s32.totalorder %s103, %s105
    %p112 = scmp.eq.s32.totalorder %s32, 1
    %p113 = por %p111, %p112
    %p114 = scmp.ne.s32.totalorder %s105, %s106
    %p115 = scmp.eq.s32.totalorder %s32, 0
    %p116 = por %p114, %p115
    %p117 = scmp.ne.s32.totalorder %s105, %s106
    %p118 = scmp.eq.s32.totalorder %s33, 1
    %p119 = por %p117, %p118
    %p121 = scmp.ne.s32.totalorder %s106, %s120
    %p122 = scmp.eq.s32.totalorder %s33, 0
    %p123 = por %p121, %p122
    %s125 = sadd.s32 %s124, 1
    %p128 = scmp.eq.s32.totalorder %s27, 1
    %p129 = scmp.ne.s32.totalorder %s124, %s126
    %p130 = scmp.eq.s32.totalorder %s27, 0
    %p131 = por %p129, %p130
    %p132 = scmp.ne.s32.totalorder %s124, %s126
    %p133 = scmp.eq.s32.totalorder %s32, 1
    %p134 = por %p132, %p133
    %p135 = scmp.ne.s32.totalorder %s126, %s127
    %p136 = scmp.eq.s32.totalorder %s32, 0
    %p137 = por %p135, %p136
    %p138 = scmp.ne.s32.totalorder %s126, %s127
    %p139 = scmp.eq.s32.totalorder %s33, 1
    %p140 = por %p138, %p139
    %p142 = scmp.ne.s32.totalorder %s127, %s141
    %p143 = scmp.eq.s32.totalorder %s33, 0
    %p144 = por %p142, %p143
    %s146 = sadd.s32 %s145, 1
    %p149 = scmp.eq.s32.totalorder %s27, 1
    %p150 = scmp.ne.s32.totalorder %s145, %s147
    %p151 = scmp.eq.s32.totalorder %s27, 0
    %p152 = por %p150, %p151
    %p153 = scmp.ne.s32.totalorder %s145, %s147
    %p154 = scmp.eq.s32.totalorder %s32, 1
    %p155 = por %p153, %p154
    %p156 = scmp.ne.s32.totalorder %s147, %s148
    %p157 = scmp.eq.s32.totalorder %s32, 0
    %p158 = por %p156, %p157
    %p159 = scmp.ne.s32.totalorder %s147, %s148
    %p160 = scmp.eq.s32.totalorder %s33, 1
    %p161 = por %p159, %p160
    %p163 = scmp.ne.s32.totalorder %s148, %s162
    %p164 = scmp.eq.s32.totalorder %s33, 0
    %p165 = por %p163, %p164
    %s167 = sadd.s32 %s166, 1
    %p170 = scmp.eq.s32.totalorder %s27, 1
    %p171 = scmp.ne.s32.totalorder %s166, %s168
    %p172 = scmp.eq.s32.totalorder %s27, 0
    %p173 = por %p171, %p172
    %p174 = scmp.ne.s32.totalorder %s166, %s168
    %p175 = scmp.eq.s32.totalorder %s32, 1
    %p176 = por %p174, %p175
    %p177 = scmp.ne.s32.totalorder %s168, %s169
    %p178 = scmp.eq.s32.totalorder %s32, 0
    %p179 = por %p177, %p178
    %p180 = scmp.ne.s32.totalorder %s168, %s169
    %p181 = scmp.eq.s32.totalorder %s33, 1
    %p182 = por %p180, %p181
    %p184 = scmp.ne.s32.totalorder %s169, %s183
    %p185 = scmp.eq.s32.totalorder %s33, 0
    %p186 = por %p184, %p185
    %s188 = sadd.s32 %s187, 1
    %p191 = scmp.eq.s32.totalorder %s27, 1
    %p192 = scmp.ne.s32.totalorder %s187, %s189
    %p193 = scmp.eq.s32.totalorder %s27, 0
    %p194 = por %p192, %p193
    %p195 = scmp.ne.s32.totalorder %s187, %s189
    %p196 = scmp.eq.s32.totalorder %s32, 1
    %p197 = por %p195, %p196
    %p198 = scmp.ne.s32.totalorder %s189, %s190
    %p199 = scmp.eq.s32.totalorder %s32, 0
    %p200 = por %p198, %p199
    %p201 = scmp.ne.s32.totalorder %s189, %s190
    %p202 = scmp.eq.s32.totalorder %s33, 1
    %p203 = por %p201, %p202
    %p205 = scmp.ne.s32.totalorder %s190, %s204
    %p206 = scmp.eq.s32.totalorder %s33, 0
    %p207 = por %p205, %p206
    %s209 = sadd.s32 %s208, 1
    %p212 = scmp.eq.s32.totalorder %s27, 1
    %p213 = scmp.ne.s32.totalorder %s208, %s210
    %p214 = scmp.eq.s32.totalorder %s27, 0
    %p215 = por %p213, %p214
    %p216 = scmp.ne.s32.totalorder %s208, %s210
    %p217 = scmp.eq.s32.totalorder %s32, 1
    %p218 = por %p216, %p217
    %p219 = scmp.ne.s32.totalorder %s210, %s211
    %p220 = scmp.eq.s32.totalorder %s32, 0
    %p221 = por %p219, %p220
    %p222 = scmp.ne.s32.totalorder %s210, %s211
    %p223 = scmp.eq.s32.totalorder %s33, 1
    %p224 = por %p222, %p223
    %p226 = scmp.ne.s32.totalorder %s211, %s225
    %p227 = scmp.eq.s32.totalorder %s33, 0
    %p228 = por %p226, %p227
    %s230 = sadd.s32 %s229, 1
    %p233 = scmp.eq.s32.totalorder %s27, 1
    %p234 = scmp.ne.s32.totalorder %s229, %s231
    %p235 = scmp.eq.s32.totalorder %s27, 0
    %p236 = por %p234, %p235
    %p237 = scmp.ne.s32.totalorder %s229, %s231
    %p238 = scmp.eq.s32.totalorder %s32, 1
    %p239 = por %p237, %p238
    %p240 = scmp.ne.s32.totalorder %s231, %s232
    %p241 = scmp.eq.s32.totalorder %s32, 0
    %p242 = por %p240, %p241
    %p243 = scmp.ne.s32.totalorder %s231, %s232
    %p244 = scmp.eq.s32.totalorder %s33, 1
    %p245 = por %p243, %p244
    %p247 = scmp.ne.s32.totalorder %s232, %s246
    %p248 = scmp.eq.s32.totalorder %s33, 0
    %p249 = por %p247, %p248
    %s251 = sadd.s32 %s250, 1
    %p254 = scmp.eq.s32.totalorder %s27, 1
    %p255 = scmp.ne.s32.totalorder %s250, %s252
    %p256 = scmp.eq.s32.totalorder %s27, 0
    %p257 = por %p255, %p256
    %p258 = scmp.ne.s32.totalorder %s250, %s252
    %p259 = scmp.eq.s32.totalorder %s32, 1
    %p260 = por %p258, %p259
    %p261 = scmp.ne.s32.totalorder %s252, %s253
    %p262 = scmp.eq.s32.totalorder %s32, 0
    %p263 = por %p261, %p262
    %p264 = scmp.ne.s32.totalorder %s252, %s253
    %p265 = scmp.eq.s32.totalorder %s33, 1
    %p266 = por %p264, %p265
    %p268 = scmp.ne.s32.totalorder %s253, %s267
    %p269 = scmp.eq.s32.totalorder %s33, 0
    %p270 = por %p268, %p269
    %s272 = sadd.s32 %s271, 1
    %p275 = scmp.eq.s32.totalorder %s27, 1
    %p276 = scmp.ne.s32.totalorder %s271, %s273
    %p277 = scmp.eq.s32.totalorder %s27, 0
    %p278 = por %p276, %p277
    %p279 = scmp.ne.s32.totalorder %s271, %s273
    %p280 = scmp.eq.s32.totalorder %s32, 1
    %p281 = por %p279, %p280
    %p282 = scmp.ne.s32.totalorder %s273, %s274
    %p283 = scmp.eq.s32.totalorder %s32, 0
    %p284 = por %p282, %p283
    %p285 = scmp.ne.s32.totalorder %s273, %s274
    %p286 = scmp.eq.s32.totalorder %s33, 1
    %p287 = por %p285, %p286
    %p289 = scmp.ne.s32.totalorder %s274, %s288
    %p290 = scmp.eq.s32.totalorder %s33, 0
    %p291 = por %p289, %p290
    %s293 = sadd.s32 %s292, 1
    %p296 = scmp.eq.s32.totalorder %s27, 1
    %p297 = scmp.ne.s32.totalorder %s292, %s294
    %p298 = scmp.eq.s32.totalorder %s27, 0
    %p299 = por %p297, %p298
    %p300 = scmp.ne.s32.totalorder %s292, %s294
    %p301 = scmp.eq.s32.totalorder %s32, 1
    %p302 = por %p300, %p301
    %p303 = scmp.ne.s32.totalorder %s294, %s295
    %p304 = scmp.eq.s32.totalorder %s32, 0
    %p305 = por %p303, %p304
    %p306 = scmp.ne.s32.totalorder %s294, %s295
    %p307 = scmp.eq.s32.totalorder %s33, 1
    %p308 = por %p306, %p307
    %p310 = scmp.ne.s32.totalorder %s295, %s309
    %p311 = scmp.eq.s32.totalorder %s33, 0
    %p312 = por %p310, %p311
    %s314 = sadd.s32 %s313, 1
    %p317 = scmp.eq.s32.totalorder %s27, 1
    %p318 = scmp.ne.s32.totalorder %s313, %s315
    %p319 = scmp.eq.s32.totalorder %s27, 0
    %p320 = por %p318, %p319
    %p321 = scmp.ne.s32.totalorder %s313, %s315
    %p322 = scmp.eq.s32.totalorder %s32, 1
    %p323 = por %p321, %p322
    %p324 = scmp.ne.s32.totalorder %s315, %s316
    %p325 = scmp.eq.s32.totalorder %s32, 0
    %p326 = por %p324, %p325
    %p327 = scmp.ne.s32.totalorder %s315, %s316
    %p328 = scmp.eq.s32.totalorder %s33, 1
    %p329 = por %p327, %p328
    %p331 = scmp.ne.s32.totalorder %s316, %s330
    %p332 = scmp.eq.s32.totalorder %s33, 0
    %p333 = por %p331, %p332
    %s335 = sadd.s32 %s334, 1
    %p338 = scmp.eq.s32.totalorder %s27, 1
    %p339 = scmp.ne.s32.totalorder %s334, %s336
    %p340 = scmp.eq.s32.totalorder %s27, 0
    %p341 = por %p339, %p340
    %p342 = scmp.ne.s32.totalorder %s334, %s336
    %p343 = scmp.eq.s32.totalorder %s32, 1
    %p344 = por %p342, %p343
    %p345 = scmp.ne.s32.totalorder %s336, %s337
    %p346 = scmp.eq.s32.totalorder %s32, 0
    %p347 = por %p345, %p346
    %p348 = scmp.ne.s32.totalorder %s336, %s337
    %p349 = scmp.eq.s32.totalorder %s33, 1
    %p350 = por %p348, %p349
    %p352 = scmp.ne.s32.totalorder %s337, %s351
    %p353 = scmp.eq.s32.totalorder %s33, 0
    %p354 = por %p352, %p353
    %s356 = sadd.s32 %s355, 1
    %p359 = scmp.eq.s32.totalorder %s27, 1
    %p360 = scmp.ne.s32.totalorder %s355, %s357
    %p361 = scmp.eq.s32.totalorder %s27, 0
    %p362 = por %p360, %p361
    %p363 = scmp.ne.s32.totalorder %s355, %s357
    %p364 = scmp.eq.s32.totalorder %s32, 1
    %p365 = por %p363, %p364
    %p366 = scmp.ne.s32.totalorder %s357, %s358
    %p367 = scmp.eq.s32.totalorder %s32, 0
    %p368 = por %p366, %p367
    %p369 = scmp.ne.s32.totalorder %s357, %s358
    %p370 = scmp.eq.s32.totalorder %s33, 1
    %p371 = por %p369, %p370
    %p373 = scmp.ne.s32.totalorder %s358, %s372
    %p374 = scmp.eq.s32.totalorder %s33, 0
    %p375 = por %p373, %p374
    %s377 = sadd.s32 %s376, 1
    %p380 = scmp.eq.s32.totalorder %s27, 1
    %p381 = scmp.ne.s32.totalorder %s376, %s378
    %p382 = scmp.eq.s32.totalorder %s27, 0
    %p383 = por %p381, %p382
    %p384 = scmp.ne.s32.totalorder %s376, %s378
    %p385 = scmp.eq.s32.totalorder %s32, 1
    %p386 = por %p384, %p385
    %p387 = scmp.ne.s32.totalorder %s378, %s379
    %p388 = scmp.eq.s32.totalorder %s32, 0
    %p389 = por %p387, %p388
    %p390 = scmp.ne.s32.totalorder %s378, %s379
    %p391 = scmp.eq.s32.totalorder %s33, 1
    %p392 = por %p390, %p391
    %p394 = scmp.ne.s32.totalorder %s379, %s393
    %p395 = scmp.eq.s32.totalorder %s33, 0
    %p396 = por %p394, %p395
    %s398 = sadd.s32 %s397, 1
    %p401 = scmp.eq.s32.totalorder %s27, 1
    %p402 = scmp.ne.s32.totalorder %s397, %s399
    %p403 = scmp.eq.s32.totalorder %s27, 0
    %p404 = por %p402, %p403
    %p405 = scmp.ne.s32.totalorder %s397, %s399
    %p406 = scmp.eq.s32.totalorder %s32, 1
    %p407 = por %p405, %p406
    %p408 = scmp.ne.s32.totalorder %s399, %s400
    %p409 = scmp.eq.s32.totalorder %s32, 0
    %p410 = por %p408, %p409
    %p411 = scmp.ne.s32.totalorder %s399, %s400
    %p412 = scmp.eq.s32.totalorder %s33, 1
    %p413 = por %p411, %p412
    %p415 = scmp.ne.s32.totalorder %s400, %s414
    %p416 = scmp.eq.s32.totalorder %s33, 0
    %p417 = por %p415, %p416
    %s419 = sadd.s32 %s418, 1
    %p422 = scmp.eq.s32.totalorder %s27, 1
    %p423 = scmp.ne.s32.totalorder %s418, %s420
    %p424 = scmp.eq.s32.totalorder %s27, 0
    %p425 = por %p423, %p424
    %p426 = scmp.ne.s32.totalorder %s418, %s420
    %p427 = scmp.eq.s32.totalorder %s32, 1
    %p428 = por %p426, %p427
    %p429 = scmp.ne.s32.totalorder %s420, %s421
    %p430 = scmp.eq.s32.totalorder %s32, 0
    %p431 = por %p429, %p430
    %p432 = scmp.ne.s32.totalorder %s420, %s421
    %p433 = scmp.eq.s32.totalorder %s33, 1
    %p434 = por %p432, %p433
    %p436 = scmp.ne.s32.totalorder %s421, %s435
    %p437 = scmp.eq.s32.totalorder %s33, 0
    %p438 = por %p436, %p437
    %s440 = sadd.s32 %s439, 1
    %p443 = scmp.eq.s32.totalorder %s27, 1
    %p444 = scmp.ne.s32.totalorder %s439, %s441
    %p445 = scmp.eq.s32.totalorder %s27, 0
    %p446 = por %p444, %p445
    %p447 = scmp.ne.s32.totalorder %s439, %s441
    %p448 = scmp.eq.s32.totalorder %s32, 1
    %p449 = por %p447, %p448
    %p450 = scmp.ne.s32.totalorder %s441, %s442
    %p451 = scmp.eq.s32.totalorder %s32, 0
    %p452 = por %p450, %p451
    %p453 = scmp.ne.s32.totalorder %s441, %s442
    %p454 = scmp.eq.s32.totalorder %s33, 1
    %p455 = por %p453, %p454
    %p457 = scmp.ne.s32.totalorder %s442, %s456
    %p458 = scmp.eq.s32.totalorder %s33, 0
    %p459 = por %p457, %p458
    %s461 = sadd.s32 %s460, 1
    %p464 = scmp.eq.s32.totalorder %s27, 1
    %p465 = scmp.ne.s32.totalorder %s460, %s462
    %p466 = scmp.eq.s32.totalorder %s27, 0
    %p467 = por %p465, %p466
    %p468 = scmp.ne.s32.totalorder %s460, %s462
    %p469 = scmp.eq.s32.totalorder %s32, 1
    %p470 = por %p468, %p469
    %p471 = scmp.ne.s32.totalorder %s462, %s463
    %p472 = scmp.eq.s32.totalorder %s32, 0
    %p473 = por %p471, %p472
    %p474 = scmp.ne.s32.totalorder %s462, %s463
    %p475 = scmp.eq.s32.totalorder %s33, 1
    %p476 = por %p474, %p475
    %p478 = scmp.ne.s32.totalorder %s463, %s477
    %p479 = scmp.eq.s32.totalorder %s33, 0
    %p480 = por %p478, %p479
    %s481 = ssub.s32 %s27, %s34
    %p482 = scmp.eq.s32.totalorder %s481, 0
    %s484 = sadd.s32 %s483, 1
    %s485 = scalar_select %p482, %s483, %s484
    %p488 = pneg %p482
    %p489 = scmp.eq.s32.totalorder %s27, 1
    %p490 = por %p488, %p489
    %p491 = scmp.ne.s32.totalorder %s483, %s486
    %p492 = scmp.eq.s32.totalorder %s27, 0
    %p493 = por %p491, %p492
    %p494 = scmp.ne.s32.totalorder %s483, %s486
    %p495 = scmp.eq.s32.totalorder %s32, 1
    %p496 = por %p494, %p495
    %p497 = scmp.ne.s32.totalorder %s486, %s487
    %p498 = scmp.eq.s32.totalorder %s32, 0
    %p499 = por %p497, %p498
    %p500 = scmp.ne.s32.totalorder %s486, %s487
    %p501 = scmp.eq.s32.totalorder %s33, 1
    %p502 = por %p500, %p501
    %p504 = scmp.ne.s32.totalorder %s487, %s503
    %p505 = scmp.eq.s32.totalorder %s33, 0
    %p506 = por %p504, %p505
    %p507 = scmp.le.s32.totalorder 1, %s27
    %p508 = scmp.lt.s32.totalorder %s27, 3
    %p509 = pnand %p507, %p508
    %p510 = pneg %p509
    // Predicated region
    $region9: #{tpu_custom_call.1} parent=5 // pred_check
      _
    $region10: #{tpu_custom_call.1} parent=5 // pred_check_branch
      %512 = sbr.rel (%p509) target = $region12
    $region11: #{tpu_custom_call.1} parent=5 // pred_region
      %s513 = ssub.s32 %s27, 1
      // Predicated region
      $region13: #{tpu_custom_call.1} parent=11 // pred_check
        %p514 = pneg %p74
      $region14: #{tpu_custom_call.1} parent=11 // pred_check_branch
        %516 = sbr.rel (%p514) target = $region16
      $region15: #{tpu_custom_call.1} parent=11 // pred_region
        _
      $region16: #{tpu_custom_call.1} parent=11 // pred_fallthru
        _
      // Predicated region
      $region17: #{tpu_custom_call.1} parent=11 // pred_check
        %p517 = pneg %p95
      $region18: #{tpu_custom_call.1} parent=11 // pred_check_branch
        %519 = sbr.rel (%p517) target = $region20
      $region19: #{tpu_custom_call.1} parent=11 // pred_region
        _
      $region20: #{tpu_custom_call.1} parent=11 // pred_fallthru
        _
      // Predicated region
      $region21: #{tpu_custom_call.1} parent=11 // pred_check
        %p520 = pneg %p116
      $region22: #{tpu_custom_call.1} parent=11 // pred_check_branch
        %522 = sbr.rel (%p520) target = $region24
      $region23: #{tpu_custom_call.1} parent=11 // pred_region
        _
      $region24: #{tpu_custom_call.1} parent=11 // pred_fallthru
        _
      // Predicated region
      $region25: #{tpu_custom_call.1} parent=11 // pred_check
        %p523 = pneg %p137
      $region26: #{tpu_custom_call.1} parent=11 // pred_check_branch
        %525 = sbr.rel (%p523) target = $region28
      $region27: #{tpu_custom_call.1} parent=11 // pred_region
        _
      $region28: #{tpu_custom_call.1} parent=11 // pred_fallthru
        _
      // Predicated region
      $region29: #{tpu_custom_call.1} parent=11 // pred_check
        %p526 = pneg %p158
      $region30: #{tpu_custom_call.1} parent=11 // pred_check_branch
        %528 = sbr.rel (%p526) target = $region32
      $region31: #{tpu_custom_call.1} parent=11 // pred_region
        _
      $region32: #{tpu_custom_call.1} parent=11 // pred_fallthru
        _
      // Predicated region
      $region33: #{tpu_custom_call.1} parent=11 // pred_check
        %p529 = pneg %p179
      $region34: #{tpu_custom_call.1} parent=11 // pred_check_branch
        %531 = sbr.rel (%p529) target = $region36
      $region35: #{tpu_custom_call.1} parent=11 // pred_region
        _
      $region36: #{tpu_custom_call.1} parent=11 // pred_fallthru
        _
      // Predicated region
      $region37: #{tpu_custom_call.1} parent=11 // pred_check
        %p532 = pneg %p200
      $region38: #{tpu_custom_call.1} parent=11 // pred_check_branch
        %534 = sbr.rel (%p532) target = $region40
      $region39: #{tpu_custom_call.1} parent=11 // pred_region
        _
      $region40: #{tpu_custom_call.1} parent=11 // pred_fallthru
        _
      // Predicated region
      $region41: #{tpu_custom_call.1} parent=11 // pred_check
        %p535 = pneg %p221
      $region42: #{tpu_custom_call.1} parent=11 // pred_check_branch
        %537 = sbr.rel (%p535) target = $region44
      $region43: #{tpu_custom_call.1} parent=11 // pred_region
        _
      $region44: #{tpu_custom_call.1} parent=11 // pred_fallthru
        _
      // Predicated region
      $region45: #{tpu_custom_call.1} parent=11 // pred_check
        %p538 = pneg %p242
      $region46: #{tpu_custom_call.1} parent=11 // pred_check_branch
        %540 = sbr.rel (%p538) target = $region48
      $region47: #{tpu_custom_call.1} parent=11 // pred_region
        _
      $region48: #{tpu_custom_call.1} parent=11 // pred_fallthru
        _
      // Predicated region
      $region49: #{tpu_custom_call.1} parent=11 // pred_check
        %p541 = pneg %p263
      $region50: #{tpu_custom_call.1} parent=11 // pred_check_branch
        %543 = sbr.rel (%p541) target = $region52
      $region51: #{tpu_custom_call.1} parent=11 // pred_region
        _
      $region52: #{tpu_custom_call.1} parent=11 // pred_fallthru
        _
      // Predicated region
      $region53: #{tpu_custom_call.1} parent=11 // pred_check
        %p544 = pneg %p284
      $region54: #{tpu_custom_call.1} parent=11 // pred_check_branch
        %546 = sbr.rel (%p544) target = $region56
      $region55: #{tpu_custom_call.1} parent=11 // pred_region
        _
      $region56: #{tpu_custom_call.1} parent=11 // pred_fallthru
        _
      // Predicated region
      $region57: #{tpu_custom_call.1} parent=11 // pred_check
        %p547 = pneg %p305
      $region58: #{tpu_custom_call.1} parent=11 // pred_check_branch
        %549 = sbr.rel (%p547) target = $region60
      $region59: #{tpu_custom_call.1} parent=11 // pred_region
        _
      $region60: #{tpu_custom_call.1} parent=11 // pred_fallthru
        _
      // Predicated region
      $region61: #{tpu_custom_call.1} parent=11 // pred_check
        %p550 = pneg %p326
      $region62: #{tpu_custom_call.1} parent=11 // pred_check_branch
        %552 = sbr.rel (%p550) target = $region64
      $region63: #{tpu_custom_call.1} parent=11 // pred_region
        _
      $region64: #{tpu_custom_call.1} parent=11 // pred_fallthru
        _
      // Predicated region
      $region65: #{tpu_custom_call.1} parent=11 // pred_check
        %p553 = pneg %p347
      $region66: #{tpu_custom_call.1} parent=11 // pred_check_branch
        %555 = sbr.rel (%p553) target = $region68
      $region67: #{tpu_custom_call.1} parent=11 // pred_region
        _
      $region68: #{tpu_custom_call.1} parent=11 // pred_fallthru
        _
      // Predicated region
      $region69: #{tpu_custom_call.1} parent=11 // pred_check
        %p556 = pneg %p368
      $region70: #{tpu_custom_call.1} parent=11 // pred_check_branch
        %558 = sbr.rel (%p556) target = $region72
      $region71: #{tpu_custom_call.1} parent=11 // pred_region
        _
      $region72: #{tpu_custom_call.1} parent=11 // pred_fallthru
        _
      // Predicated region
      $region73: #{tpu_custom_call.1} parent=11 // pred_check
        %p559 = pneg %p389
      $region74: #{tpu_custom_call.1} parent=11 // pred_check_branch
        %561 = sbr.rel (%p559) target = $region76
      $region75: #{tpu_custom_call.1} parent=11 // pred_region
        _
      $region76: #{tpu_custom_call.1} parent=11 // pred_fallthru
        _
      // Predicated region
      $region77: #{tpu_custom_call.1} parent=11 // pred_check
        %p562 = pneg %p410
      $region78: #{tpu_custom_call.1} parent=11 // pred_check_branch
        %564 = sbr.rel (%p562) target = $region80
      $region79: #{tpu_custom_call.1} parent=11 // pred_region
        _
      $region80: #{tpu_custom_call.1} parent=11 // pred_fallthru
        _
      // Predicated region
      $region81: #{tpu_custom_call.1} parent=11 // pred_check
        %p565 = pneg %p431
      $region82: #{tpu_custom_call.1} parent=11 // pred_check_branch
        %567 = sbr.rel (%p565) target = $region84
      $region83: #{tpu_custom_call.1} parent=11 // pred_region
        _
      $region84: #{tpu_custom_call.1} parent=11 // pred_fallthru
        _
      // Predicated region
      $region85: #{tpu_custom_call.1} parent=11 // pred_check
        %p568 = pneg %p452
      $region86: #{tpu_custom_call.1} parent=11 // pred_check_branch
        %570 = sbr.rel (%p568) target = $region88
      $region87: #{tpu_custom_call.1} parent=11 // pred_region
        _
      $region88: #{tpu_custom_call.1} parent=11 // pred_fallthru
        _
      // Predicated region
      $region89: #{tpu_custom_call.1} parent=11 // pred_check
        %p571 = pneg %p473
      $region90: #{tpu_custom_call.1} parent=11 // pred_check_branch
        %573 = sbr.rel (%p571) target = $region92
      $region91: #{tpu_custom_call.1} parent=11 // pred_region
        _
      $region92: #{tpu_custom_call.1} parent=11 // pred_fallthru
        _
    $region12: #{tpu_custom_call.1} parent=5 // pred_fallthru
      _
    %p574 = scmp.lt.s32.totalorder %s27, 2
    // Predicated region
    $region93: #{tpu_custom_call.1} parent=5 // pred_check
      %p575 = pneg %p574
    $region94: #{tpu_custom_call.1} parent=5 // pred_check_branch
      %577 = sbr.rel (%p575) target = $region96
    $region95: #{tpu_custom_call.1} parent=5 // pred_region
      // Predicated region
      $region97: #{tpu_custom_call.1} parent=95 // pred_check
        %p578 = pneg %p47
      $region98: #{tpu_custom_call.1} parent=95 // pred_check_branch
        %580 = sbr.rel (%p578) target = $region100
      $region99: #{tpu_custom_call.1} parent=95 // pred_region
        %p581 = scmp.lt.s32.totalorder %s27, 1
        %s582 = scalar_select %p581, %s27, 1
        %s583 = smul.addr %s582, 256
        %s584 = smul.addr %s583, 8
        %s585 = scalar_lea.vmem %s0, %s584
      $region100: #{tpu_custom_call.1} parent=95 // pred_fallthru
        _
    $region96: #{tpu_custom_call.1} parent=5 // pred_fallthru
      _
    %p586 = scmp.le.s32.totalorder 1, %s27
    %p587 = scmp.lt.s32.totalorder %s27, 3
    %p588 = pnand %p586, %p587
    %p589 = pneg %p588
    // Predicated region
    $region101: #{tpu_custom_call.1} parent=5 // pred_check
      _
    $region102: #{tpu_custom_call.1} parent=5 // pred_check_branch
      %591 = sbr.rel (%p588) target = $region104
    $region103: #{tpu_custom_call.1} parent=5 // pred_region
      %s592 = ssub.s32 %s27, 1
      %p593 = scmp.lt.s32.totalorder %s32, 1
      %s594 = scalar_select %p593, %s32, 1
      %s595 = smul.addr %s594, 256
      %s596 = smul.addr %s595, 8
      %s597 = scalar_lea.vmem %s0, %s596
      %p598 = pneg %p53
      %p599 = pneg %p50
      %p600 = pneg %p74
      %p601 = pneg %p71
      %p602 = pneg %p95
      %p603 = pneg %p92
      %p604 = pneg %p116
      %p605 = pneg %p113
      %p606 = pneg %p137
      %p607 = pneg %p134
      %p608 = pneg %p158
      %p609 = pneg %p155
      %p610 = pneg %p179
      %p611 = pneg %p176
      %p612 = pneg %p200
      %p613 = pneg %p197
      %p614 = pneg %p221
      %p615 = pneg %p218
      %p616 = pneg %p242
      %p617 = pneg %p239
      %p618 = pneg %p263
      %p619 = pneg %p260
      %p620 = pneg %p284
      %p621 = pneg %p281
      %p622 = pneg %p305
      %p623 = pneg %p302
      %p624 = pneg %p326
      %p625 = pneg %p323
      %p626 = pneg %p347
      %p627 = pneg %p344
      %p628 = pneg %p368
      %p629 = pneg %p365
      %p630 = pneg %p389
      %p631 = pneg %p386
      %p632 = pneg %p410
      %p633 = pneg %p407
      %p634 = pneg %p431
      %p635 = pneg %p428
      %p636 = pneg %p452
      %p637 = pneg %p449
      %p638 = pneg %p473
      %p639 = pneg %p470
      %p640 = pneg %p499
      %p641 = pneg %p496
      %p642 = scmp.lt.s32.totalorder %s32, 1
      %s643 = scalar_select %p642, %s32, 1
      %s644 = smul.addr %s643, 32
      %s645 = smul.addr %s644, 8
      %s646 = scalar_lea.vmem %s21, %s645
      %p647 = scmp.lt.s32.totalorder %s32, 1
      %s648 = scalar_select %p647, %s32, 1
      %s649 = smul.addr %s648, 256
      %s650 = smul.addr %s649, 8
      %s651 = scalar_lea.vmem %s0, %s650
      %p652 = scmp.lt.s32.totalorder %s32, 1
      %s653 = scalar_select %p652, %s32, 1
      %s654 = smul.addr %s653, 32
      %s655 = smul.addr %s654, 8
      %s656 = scalar_lea.vmem %s21, %s655
      %v658 = vld [vmem:[%s651] sm:$0xff]
      %v659 = vld [vmem:[%s651 + $0x8] sm:$0xff]
      %v660 = vld [vmem:[%s651 + $0x10] sm:$0xff]
      %v661 = vld [vmem:[%s651 + $0x18] sm:$0xff]
      %v662 = vld [vmem:[%s651 + $0x20] sm:$0xff]
      %v663 = vld [vmem:[%s651 + $0x28] sm:$0xff]
      %v664 = vld [vmem:[%s651 + $0x30] sm:$0xff]
      %v665 = vld [vmem:[%s651 + $0x38] sm:$0xff]
      %v666 = vld [vmem:[%s651 + $0x40] sm:$0xff]
      %v667 = vld [vmem:[%s651 + $0x48] sm:$0xff]
      %v668 = vld [vmem:[%s651 + $0x50] sm:$0xff]
      %v669 = vld [vmem:[%s651 + $0x58] sm:$0xff]
      %v670 = vld [vmem:[%s651 + $0x60] sm:$0xff]
      %v671 = vld [vmem:[%s651 + $0x68] sm:$0xff]
      %v672 = vld [vmem:[%s651 + $0x70] sm:$0xff]
      %v673 = vld [vmem:[%s651 + $0x78] sm:$0xff]
      %v674 = vld [vmem:[%s651 + $0x80] sm:$0xff]
      %v675 = vld [vmem:[%s651 + $0x88] sm:$0xff]
      %v676 = vld [vmem:[%s651 + $0x90] sm:$0xff]
      %v677 = vld [vmem:[%s651 + $0x98] sm:$0xff]
      %v678 = vld [vmem:[%s651 + $0xa0] sm:$0xff]
      %v679 = vld [vmem:[%s651 + $0xa8] sm:$0xff]
      %v680 = vld [vmem:[%s651 + $0xb0] sm:$0xff]
      %v681 = vld [vmem:[%s651 + $0xb8] sm:$0xff]
      %v682 = vld [vmem:[%s651 + $0xc0] sm:$0xff]
      %v683 = vld [vmem:[%s651 + $0xc8] sm:$0xff]
      %v684 = vld [vmem:[%s651 + $0xd0] sm:$0xff]
      %v685 = vld [vmem:[%s651 + $0xd8] sm:$0xff]
      %v686 = vld [vmem:[%s651 + $0xe0] sm:$0xff]
      %v687 = vld [vmem:[%s651 + $0xe8] sm:$0xff]
      %v688 = vld [vmem:[%s651 + $0xf0] sm:$0xff]
      %v689 = vld [vmem:[%s651 + $0xf8] sm:$0xff]
      %v690 = vld [vmem:[%s651 + $0x100] sm:$0xff]
      %v691 = vld [vmem:[%s651 + $0x108] sm:$0xff]
      %v692 = vld [vmem:[%s651 + $0x110] sm:$0xff]
      %v693 = vld [vmem:[%s651 + $0x118] sm:$0xff]
      %v694 = vld [vmem:[%s651 + $0x120] sm:$0xff]
      %v695 = vld [vmem:[%s651 + $0x128] sm:$0xff]
      %v696 = vld [vmem:[%s651 + $0x130] sm:$0xff]
      %v697 = vld [vmem:[%s651 + $0x138] sm:$0xff]
      %v698 = vld [vmem:[%s651 + $0x140] sm:$0xff]
      %v699 = vld [vmem:[%s651 + $0x148] sm:$0xff]
      %v700 = vld [vmem:[%s651 + $0x150] sm:$0xff]
      %v701 = vld [vmem:[%s651 + $0x158] sm:$0xff]
      %v702 = vld [vmem:[%s651 + $0x160] sm:$0xff]
      %v703 = vld [vmem:[%s651 + $0x168] sm:$0xff]
      %v704 = vld [vmem:[%s651 + $0x170] sm:$0xff]
      %v705 = vld [vmem:[%s651 + $0x178] sm:$0xff]
      %v706 = vld [vmem:[%s651 + $0x180] sm:$0xff]
      %v707 = vld [vmem:[%s651 + $0x188] sm:$0xff]
      %v708 = vld [vmem:[%s651 + $0x190] sm:$0xff]
      %v709 = vld [vmem:[%s651 + $0x198] sm:$0xff]
      %v710 = vld [vmem:[%s651 + $0x1a0] sm:$0xff]
      %v711 = vld [vmem:[%s651 + $0x1a8] sm:$0xff]
      %v712 = vld [vmem:[%s651 + $0x1b0] sm:$0xff]
      %v713 = vld [vmem:[%s651 + $0x1b8] sm:$0xff]
      %v714 = vld [vmem:[%s651 + $0x1c0] sm:$0xff]
      %v715 = vld [vmem:[%s651 + $0x1c8] sm:$0xff]
      %v716 = vld [vmem:[%s651 + $0x1d0] sm:$0xff]
      %v717 = vld [vmem:[%s651 + $0x1d8] sm:$0xff]
      %v718 = vld [vmem:[%s651 + $0x1e0] sm:$0xff]
      %v719 = vld [vmem:[%s651 + $0x1e8] sm:$0xff]
      %v720 = vld [vmem:[%s651 + $0x1f0] sm:$0xff]
      %v721 = vld [vmem:[%s651 + $0x1f8] sm:$0xff]
      %v722 = vld [vmem:[%s651 + $0x200] sm:$0xff]
      %v723 = vld [vmem:[%s651 + $0x208] sm:$0xff]
      %v724 = vld [vmem:[%s651 + $0x210] sm:$0xff]
      %v725 = vld [vmem:[%s651 + $0x218] sm:$0xff]
      %v726 = vld [vmem:[%s651 + $0x220] sm:$0xff]
      %v727 = vld [vmem:[%s651 + $0x228] sm:$0xff]
      %v728 = vld [vmem:[%s651 + $0x230] sm:$0xff]
      %v729 = vld [vmem:[%s651 + $0x238] sm:$0xff]
      %v730 = vld [vmem:[%s651 + $0x240] sm:$0xff]
      %v731 = vld [vmem:[%s651 + $0x248] sm:$0xff]
      %v732 = vld [vmem:[%s651 + $0x250] sm:$0xff]
      %v733 = vld [vmem:[%s651 + $0x258] sm:$0xff]
      %v734 = vld [vmem:[%s651 + $0x260] sm:$0xff]
      %v735 = vld [vmem:[%s651 + $0x268] sm:$0xff]
      %v736 = vld [vmem:[%s651 + $0x270] sm:$0xff]
      %v737 = vld [vmem:[%s651 + $0x278] sm:$0xff]
      %v738 = vld [vmem:[%s651 + $0x280] sm:$0xff]
      %v739 = vld [vmem:[%s651 + $0x288] sm:$0xff]
      %v740 = vld [vmem:[%s651 + $0x290] sm:$0xff]
      %v741 = vld [vmem:[%s651 + $0x298] sm:$0xff]
      %v742 = vld [vmem:[%s651 + $0x2a0] sm:$0xff]
      %v743 = vld [vmem:[%s651 + $0x2a8] sm:$0xff]
      %v744 = vld [vmem:[%s651 + $0x2b0] sm:$0xff]
      %v745 = vld [vmem:[%s651 + $0x2b8] sm:$0xff]
      %v746 = vld [vmem:[%s651 + $0x2c0] sm:$0xff]
      %v747 = vld [vmem:[%s651 + $0x2c8] sm:$0xff]
      %v748 = vld [vmem:[%s651 + $0x2d0] sm:$0xff]
      %v749 = vld [vmem:[%s651 + $0x2d8] sm:$0xff]
      %v750 = vld [vmem:[%s651 + $0x2e0] sm:$0xff]
      %v751 = vld [vmem:[%s651 + $0x2e8] sm:$0xff]
      %v752 = vld [vmem:[%s651 + $0x2f0] sm:$0xff]
      %v753 = vld [vmem:[%s651 + $0x2f8] sm:$0xff]
      %v754 = vld [vmem:[%s651 + $0x300] sm:$0xff]
      %v755 = vld [vmem:[%s651 + $0x308] sm:$0xff]
      %v756 = vld [vmem:[%s651 + $0x310] sm:$0xff]
      %v757 = vld [vmem:[%s651 + $0x318] sm:$0xff]
      %v758 = vld [vmem:[%s651 + $0x320] sm:$0xff]
      %v759 = vld [vmem:[%s651 + $0x328] sm:$0xff]
      %v760 = vld [vmem:[%s651 + $0x330] sm:$0xff]
      %v761 = vld [vmem:[%s651 + $0x338] sm:$0xff]
      %v762 = vld [vmem:[%s651 + $0x340] sm:$0xff]
      %v763 = vld [vmem:[%s651 + $0x348] sm:$0xff]
      %v764 = vld [vmem:[%s651 + $0x350] sm:$0xff]
      %v765 = vld [vmem:[%s651 + $0x358] sm:$0xff]
      %v766 = vld [vmem:[%s651 + $0x360] sm:$0xff]
      %v767 = vld [vmem:[%s651 + $0x368] sm:$0xff]
      %v768 = vld [vmem:[%s651 + $0x370] sm:$0xff]
      %v769 = vld [vmem:[%s651 + $0x378] sm:$0xff]
      %v770 = vld [vmem:[%s651 + $0x380] sm:$0xff]
      %v771 = vld [vmem:[%s651 + $0x388] sm:$0xff]
      %v772 = vld [vmem:[%s651 + $0x390] sm:$0xff]
      %v773 = vld [vmem:[%s651 + $0x398] sm:$0xff]
      %v774 = vld [vmem:[%s651 + $0x3a0] sm:$0xff]
      %v775 = vld [vmem:[%s651 + $0x3a8] sm:$0xff]
      %v776 = vld [vmem:[%s651 + $0x3b0] sm:$0xff]
      %v777 = vld [vmem:[%s651 + $0x3b8] sm:$0xff]
      %v778 = vld [vmem:[%s651 + $0x3c0] sm:$0xff]
      %v779 = vld [vmem:[%s651 + $0x3c8] sm:$0xff]
      %v780 = vld [vmem:[%s651 + $0x3d0] sm:$0xff]
      %v781 = vld [vmem:[%s651 + $0x3d8] sm:$0xff]
      %v782 = vld [vmem:[%s651 + $0x3e0] sm:$0xff]
      %v783 = vld [vmem:[%s651 + $0x3e8] sm:$0xff]
      %v784 = vld [vmem:[%s651 + $0x3f0] sm:$0xff]
      %v785 = vld [vmem:[%s651 + $0x3f8] sm:$0xff]
      %v786 = vld [vmem:[%s651 + $0x400] sm:$0xff]
      %v787 = vld [vmem:[%s651 + $0x408] sm:$0xff]
      %v788 = vld [vmem:[%s651 + $0x410] sm:$0xff]
      %v789 = vld [vmem:[%s651 + $0x418] sm:$0xff]
      %v790 = vld [vmem:[%s651 + $0x420] sm:$0xff]
      %v791 = vld [vmem:[%s651 + $0x428] sm:$0xff]
      %v792 = vld [vmem:[%s651 + $0x430] sm:$0xff]
      %v793 = vld [vmem:[%s651 + $0x438] sm:$0xff]
      %v794 = vld [vmem:[%s651 + $0x440] sm:$0xff]
      %v795 = vld [vmem:[%s651 + $0x448] sm:$0xff]
      %v796 = vld [vmem:[%s651 + $0x450] sm:$0xff]
      %v797 = vld [vmem:[%s651 + $0x458] sm:$0xff]
      %v798 = vld [vmem:[%s651 + $0x460] sm:$0xff]
      %v799 = vld [vmem:[%s651 + $0x468] sm:$0xff]
      %v800 = vld [vmem:[%s651 + $0x470] sm:$0xff]
      %v801 = vld [vmem:[%s651 + $0x478] sm:$0xff]
      %v802 = vld [vmem:[%s651 + $0x480] sm:$0xff]
      %v803 = vld [vmem:[%s651 + $0x488] sm:$0xff]
      %v804 = vld [vmem:[%s651 + $0x490] sm:$0xff]
      %v805 = vld [vmem:[%s651 + $0x498] sm:$0xff]
      %v806 = vld [vmem:[%s651 + $0x4a0] sm:$0xff]
      %v807 = vld [vmem:[%s651 + $0x4a8] sm:$0xff]
      %v808 = vld [vmem:[%s651 + $0x4b0] sm:$0xff]
      %v809 = vld [vmem:[%s651 + $0x4b8] sm:$0xff]
      %v810 = vld [vmem:[%s651 + $0x4c0] sm:$0xff]
      %v811 = vld [vmem:[%s651 + $0x4c8] sm:$0xff]
      %v812 = vld [vmem:[%s651 + $0x4d0] sm:$0xff]
      %v813 = vld [vmem:[%s651 + $0x4d8] sm:$0xff]
      %v814 = vld [vmem:[%s651 + $0x4e0] sm:$0xff]
      %v815 = vld [vmem:[%s651 + $0x4e8] sm:$0xff]
      %v816 = vld [vmem:[%s651 + $0x4f0] sm:$0xff]
      %v817 = vld [vmem:[%s651 + $0x4f8] sm:$0xff]
      %v818 = vld [vmem:[%s651 + $0x500] sm:$0xff]
      %v819 = vld [vmem:[%s651 + $0x508] sm:$0xff]
      %v820 = vld [vmem:[%s651 + $0x510] sm:$0xff]
      %v821 = vld [vmem:[%s651 + $0x518] sm:$0xff]
      %v822 = vld [vmem:[%s651 + $0x520] sm:$0xff]
      %v823 = vld [vmem:[%s651 + $0x528] sm:$0xff]
      %v824 = vld [vmem:[%s651 + $0x530] sm:$0xff]
      %v825 = vld [vmem:[%s651 + $0x538] sm:$0xff]
      %v826 = vld [vmem:[%s651 + $0x540] sm:$0xff]
      %v827 = vld [vmem:[%s651 + $0x548] sm:$0xff]
      %v828 = vld [vmem:[%s651 + $0x550] sm:$0xff]
      %v829 = vld [vmem:[%s651 + $0x558] sm:$0xff]
      %v830 = vld [vmem:[%s651 + $0x560] sm:$0xff]
      %v831 = vld [vmem:[%s651 + $0x568] sm:$0xff]
      %v832 = vld [vmem:[%s651 + $0x570] sm:$0xff]
      %v833 = vld [vmem:[%s651 + $0x578] sm:$0xff]
      %v834 = vld [vmem:[%s651 + $0x580] sm:$0xff]
      %v835 = vld [vmem:[%s651 + $0x588] sm:$0xff]
      %v836 = vld [vmem:[%s651 + $0x590] sm:$0xff]
      %v837 = vld [vmem:[%s651 + $0x598] sm:$0xff]
      %v838 = vld [vmem:[%s651 + $0x5a0] sm:$0xff]
      %v839 = vld [vmem:[%s651 + $0x5a8] sm:$0xff]
      %v840 = vld [vmem:[%s651 + $0x5b0] sm:$0xff]
      %v841 = vld [vmem:[%s651 + $0x5b8] sm:$0xff]
      %v842 = vld [vmem:[%s651 + $0x5c0] sm:$0xff]
      %v843 = vld [vmem:[%s651 + $0x5c8] sm:$0xff]
      %v844 = vld [vmem:[%s651 + $0x5d0] sm:$0xff]
      %v845 = vld [vmem:[%s651 + $0x5d8] sm:$0xff]
      %v846 = vld [vmem:[%s651 + $0x5e0] sm:$0xff]
      %v847 = vld [vmem:[%s651 + $0x5e8] sm:$0xff]
      %v848 = vld [vmem:[%s651 + $0x5f0] sm:$0xff]
      %v849 = vld [vmem:[%s651 + $0x5f8] sm:$0xff]
      %v850 = vld [vmem:[%s651 + $0x600] sm:$0xff]
      %v851 = vld [vmem:[%s651 + $0x608] sm:$0xff]
      %v852 = vld [vmem:[%s651 + $0x610] sm:$0xff]
      %v853 = vld [vmem:[%s651 + $0x618] sm:$0xff]
      %v854 = vld [vmem:[%s651 + $0x620] sm:$0xff]
      %v855 = vld [vmem:[%s651 + $0x628] sm:$0xff]
      %v856 = vld [vmem:[%s651 + $0x630] sm:$0xff]
      %v857 = vld [vmem:[%s651 + $0x638] sm:$0xff]
      %v858 = vld [vmem:[%s651 + $0x640] sm:$0xff]
      %v859 = vld [vmem:[%s651 + $0x648] sm:$0xff]
      %v860 = vld [vmem:[%s651 + $0x650] sm:$0xff]
      %v861 = vld [vmem:[%s651 + $0x658] sm:$0xff]
      %v862 = vld [vmem:[%s651 + $0x660] sm:$0xff]
      %v863 = vld [vmem:[%s651 + $0x668] sm:$0xff]
      %v864 = vld [vmem:[%s651 + $0x670] sm:$0xff]
      %v865 = vld [vmem:[%s651 + $0x678] sm:$0xff]
      %v866 = vld [vmem:[%s651 + $0x680] sm:$0xff]
      %v867 = vld [vmem:[%s651 + $0x688] sm:$0xff]
      %v868 = vld [vmem:[%s651 + $0x690] sm:$0xff]
      %v869 = vld [vmem:[%s651 + $0x698] sm:$0xff]
      %v870 = vld [vmem:[%s651 + $0x6a0] sm:$0xff]
      %v871 = vld [vmem:[%s651 + $0x6a8] sm:$0xff]
      %v872 = vld [vmem:[%s651 + $0x6b0] sm:$0xff]
      %v873 = vld [vmem:[%s651 + $0x6b8] sm:$0xff]
      %v874 = vld [vmem:[%s651 + $0x6c0] sm:$0xff]
      %v875 = vld [vmem:[%s651 + $0x6c8] sm:$0xff]
      %v876 = vld [vmem:[%s651 + $0x6d0] sm:$0xff]
      %v877 = vld [vmem:[%s651 + $0x6d8] sm:$0xff]
      %v878 = vld [vmem:[%s651 + $0x6e0] sm:$0xff]
      %v879 = vld [vmem:[%s651 + $0x6e8] sm:$0xff]
      %v880 = vld [vmem:[%s651 + $0x6f0] sm:$0xff]
      %v881 = vld [vmem:[%s651 + $0x6f8] sm:$0xff]
      %v882 = vld [vmem:[%s651 + $0x700] sm:$0xff]
      %v883 = vld [vmem:[%s651 + $0x708] sm:$0xff]
      %v884 = vld [vmem:[%s651 + $0x710] sm:$0xff]
      %v885 = vld [vmem:[%s651 + $0x718] sm:$0xff]
      %v886 = vld [vmem:[%s651 + $0x720] sm:$0xff]
      %v887 = vld [vmem:[%s651 + $0x728] sm:$0xff]
      %v888 = vld [vmem:[%s651 + $0x730] sm:$0xff]
      %v889 = vld [vmem:[%s651 + $0x738] sm:$0xff]
      %v890 = vld [vmem:[%s651 + $0x740] sm:$0xff]
      %v891 = vld [vmem:[%s651 + $0x748] sm:$0xff]
      %v892 = vld [vmem:[%s651 + $0x750] sm:$0xff]
      %v893 = vld [vmem:[%s651 + $0x758] sm:$0xff]
      %v894 = vld [vmem:[%s651 + $0x760] sm:$0xff]
      %v895 = vld [vmem:[%s651 + $0x768] sm:$0xff]
      %v896 = vld [vmem:[%s651 + $0x770] sm:$0xff]
      %v897 = vld [vmem:[%s651 + $0x778] sm:$0xff]
      %v898 = vld [vmem:[%s651 + $0x780] sm:$0xff]
      %v899 = vld [vmem:[%s651 + $0x788] sm:$0xff]
      %v900 = vld [vmem:[%s651 + $0x790] sm:$0xff]
      %v901 = vld [vmem:[%s651 + $0x798] sm:$0xff]
      %v902 = vld [vmem:[%s651 + $0x7a0] sm:$0xff]
      %v903 = vld [vmem:[%s651 + $0x7a8] sm:$0xff]
      %v904 = vld [vmem:[%s651 + $0x7b0] sm:$0xff]
      %v905 = vld [vmem:[%s651 + $0x7b8] sm:$0xff]
      %v906 = vld [vmem:[%s651 + $0x7c0] sm:$0xff]
      %v907 = vld [vmem:[%s651 + $0x7c8] sm:$0xff]
      %v908 = vld [vmem:[%s651 + $0x7d0] sm:$0xff]
      %v909 = vld [vmem:[%s651 + $0x7d8] sm:$0xff]
      %v910 = vld [vmem:[%s651 + $0x7e0] sm:$0xff]
      %v911 = vld [vmem:[%s651 + $0x7e8] sm:$0xff]
      %v912 = vld [vmem:[%s651 + $0x7f0] sm:$0xff]
      %v913 = vld [vmem:[%s651 + $0x7f8] sm:$0xff]
      %v914 = vld [vmem:[%s1] sm:$0xf]
      %v915 = vld [vmem:[%s1 + $0x4] sm:$0xf]
      %v916 = vld [vmem:[%s1 + $0x8] sm:$0xf]
      %v917 = vld [vmem:[%s1 + $0xc] sm:$0xf]
      %v918 = vld [vmem:[%s1 + $0x10] sm:$0xf]
      %v919 = vld [vmem:[%s1 + $0x14] sm:$0xf]
      %v920 = vld [vmem:[%s1 + $0x18] sm:$0xf]
      %v921 = vld [vmem:[%s1 + $0x1c] sm:$0xf]
      %v922 = vld [vmem:[%s1 + $0x20] sm:$0xf]
      %v923 = vld [vmem:[%s1 + $0x24] sm:$0xf]
      %v924 = vld [vmem:[%s1 + $0x28] sm:$0xf]
      %v925 = vld [vmem:[%s1 + $0x2c] sm:$0xf]
      %v926 = vld [vmem:[%s1 + $0x30] sm:$0xf]
      %v927 = vld [vmem:[%s1 + $0x34] sm:$0xf]
      %v928 = vld [vmem:[%s1 + $0x38] sm:$0xf]
      %v929 = vld [vmem:[%s1 + $0x3c] sm:$0xf]
      %v930 = vld [vmem:[%s1 + $0x40] sm:$0xf]
      %v931 = vld [vmem:[%s1 + $0x44] sm:$0xf]
      %v932 = vld [vmem:[%s1 + $0x48] sm:$0xf]
      %v933 = vld [vmem:[%s1 + $0x4c] sm:$0xf]
      %v934 = vld [vmem:[%s1 + $0x50] sm:$0xf]
      %v935 = vld [vmem:[%s1 + $0x54] sm:$0xf]
      %v936 = vld [vmem:[%s1 + $0x58] sm:$0xf]
      %v937 = vld [vmem:[%s1 + $0x5c] sm:$0xf]
      %v938 = vld [vmem:[%s1 + $0x60] sm:$0xf]
      %v939 = vld [vmem:[%s1 + $0x64] sm:$0xf]
      %v940 = vld [vmem:[%s1 + $0x68] sm:$0xf]
      %v941 = vld [vmem:[%s1 + $0x6c] sm:$0xf]
      %v942 = vld [vmem:[%s1 + $0x70] sm:$0xf]
      %v943 = vld [vmem:[%s1 + $0x74] sm:$0xf]
      %v944 = vld [vmem:[%s1 + $0x78] sm:$0xf]
      %v945 = vld [vmem:[%s1 + $0x7c] sm:$0xf]
      %v946 = vld [vmem:[%s1 + $0x80] sm:$0xf]
      %v947 = vld [vmem:[%s1 + $0x84] sm:$0xf]
      %v948 = vld [vmem:[%s1 + $0x88] sm:$0xf]
      %v949 = vld [vmem:[%s1 + $0x8c] sm:$0xf]
      %v950 = vld [vmem:[%s1 + $0x90] sm:$0xf]
      %v951 = vld [vmem:[%s1 + $0x94] sm:$0xf]
      %v952 = vld [vmem:[%s1 + $0x98] sm:$0xf]
      %v953 = vld [vmem:[%s1 + $0x9c] sm:$0xf]
      %v954 = vld [vmem:[%s1 + $0xa0] sm:$0xf]
      %v955 = vld [vmem:[%s1 + $0xa4] sm:$0xf]
      %v956 = vld [vmem:[%s1 + $0xa8] sm:$0xf]
      %v957 = vld [vmem:[%s1 + $0xac] sm:$0xf]
      %v958 = vld [vmem:[%s1 + $0xb0] sm:$0xf]
      %v959 = vld [vmem:[%s1 + $0xb4] sm:$0xf]
      %v960 = vld [vmem:[%s1 + $0xb8] sm:$0xf]
      %v961 = vld [vmem:[%s1 + $0xbc] sm:$0xf]
      %v962 = vld [vmem:[%s1 + $0xc0] sm:$0xf]
      %v963 = vld [vmem:[%s1 + $0xc4] sm:$0xf]
      %v964 = vld [vmem:[%s1 + $0xc8] sm:$0xf]
      %v965 = vld [vmem:[%s1 + $0xcc] sm:$0xf]
      %v966 = vld [vmem:[%s1 + $0xd0] sm:$0xf]
      %v967 = vld [vmem:[%s1 + $0xd4] sm:$0xf]
      %v968 = vld [vmem:[%s1 + $0xd8] sm:$0xf]
      %v969 = vld [vmem:[%s1 + $0xdc] sm:$0xf]
      %v970 = vld [vmem:[%s1 + $0xe0] sm:$0xf]
      %v971 = vld [vmem:[%s1 + $0xe4] sm:$0xf]
      %v972 = vld [vmem:[%s1 + $0xe8] sm:$0xf]
      %v973 = vld [vmem:[%s1 + $0xec] sm:$0xf]
      %v974 = vld [vmem:[%s1 + $0xf0] sm:$0xf]
      %v975 = vld [vmem:[%s1 + $0xf4] sm:$0xf]
      %v976 = vld [vmem:[%s1 + $0xf8] sm:$0xf]
      %v977 = vld [vmem:[%s1 + $0xfc] sm:$0xf]
      %v978 = vld [vmem:[%s1 + $0x100] sm:$0xf]
      %v979 = vld [vmem:[%s1 + $0x104] sm:$0xf]
      %v980 = vld [vmem:[%s1 + $0x108] sm:$0xf]
      %v981 = vld [vmem:[%s1 + $0x10c] sm:$0xf]
      %v982 = vld [vmem:[%s1 + $0x110] sm:$0xf]
      %v983 = vld [vmem:[%s1 + $0x114] sm:$0xf]
      %v984 = vld [vmem:[%s1 + $0x118] sm:$0xf]
      %v985 = vld [vmem:[%s1 + $0x11c] sm:$0xf]
      %v986 = vld [vmem:[%s1 + $0x120] sm:$0xf]
      %v987 = vld [vmem:[%s1 + $0x124] sm:$0xf]
      %v988 = vld [vmem:[%s1 + $0x128] sm:$0xf]
      %v989 = vld [vmem:[%s1 + $0x12c] sm:$0xf]
      %v990 = vld [vmem:[%s1 + $0x130] sm:$0xf]
      %v991 = vld [vmem:[%s1 + $0x134] sm:$0xf]
      %v992 = vld [vmem:[%s1 + $0x138] sm:$0xf]
      %v993 = vld [vmem:[%s1 + $0x13c] sm:$0xf]
      %v994 = vld [vmem:[%s1 + $0x140] sm:$0xf]
      %v995 = vld [vmem:[%s1 + $0x144] sm:$0xf]
      %v996 = vld [vmem:[%s1 + $0x148] sm:$0xf]
      %v997 = vld [vmem:[%s1 + $0x14c] sm:$0xf]
      %v998 = vld [vmem:[%s1 + $0x150] sm:$0xf]
      %v999 = vld [vmem:[%s1 + $0x154] sm:$0xf]
      %v1000 = vld [vmem:[%s1 + $0x158] sm:$0xf]
      %v1001 = vld [vmem:[%s1 + $0x15c] sm:$0xf]
      %v1002 = vld [vmem:[%s1 + $0x160] sm:$0xf]
      %v1003 = vld [vmem:[%s1 + $0x164] sm:$0xf]
      %v1004 = vld [vmem:[%s1 + $0x168] sm:$0xf]
      %v1005 = vld [vmem:[%s1 + $0x16c] sm:$0xf]
      %v1006 = vld [vmem:[%s1 + $0x170] sm:$0xf]
      %v1007 = vld [vmem:[%s1 + $0x174] sm:$0xf]
      %v1008 = vld [vmem:[%s1 + $0x178] sm:$0xf]
      %v1009 = vld [vmem:[%s1 + $0x17c] sm:$0xf]
      %v1010 = vld [vmem:[%s1 + $0x180] sm:$0xf]
      %v1011 = vld [vmem:[%s1 + $0x184] sm:$0xf]
      %v1012 = vld [vmem:[%s1 + $0x188] sm:$0xf]
      %v1013 = vld [vmem:[%s1 + $0x18c] sm:$0xf]
      %v1014 = vld [vmem:[%s1 + $0x190] sm:$0xf]
      %v1015 = vld [vmem:[%s1 + $0x194] sm:$0xf]
      %v1016 = vld [vmem:[%s1 + $0x198] sm:$0xf]
      %v1017 = vld [vmem:[%s1 + $0x19c] sm:$0xf]
      %v1018 = vld [vmem:[%s1 + $0x1a0] sm:$0xf]
      %v1019 = vld [vmem:[%s1 + $0x1a4] sm:$0xf]
      %v1020 = vld [vmem:[%s1 + $0x1a8] sm:$0xf]
      %v1021 = vld [vmem:[%s1 + $0x1ac] sm:$0xf]
      %v1022 = vld [vmem:[%s1 + $0x1b0] sm:$0xf]
      %v1023 = vld [vmem:[%s1 + $0x1b4] sm:$0xf]
      %v1024 = vld [vmem:[%s1 + $0x1b8] sm:$0xf]
      %v1025 = vld [vmem:[%s1 + $0x1bc] sm:$0xf]
      %v1026 = vld [vmem:[%s1 + $0x1c0] sm:$0xf]
      %v1027 = vld [vmem:[%s1 + $0x1c4] sm:$0xf]
      %v1028 = vld [vmem:[%s1 + $0x1c8] sm:$0xf]
      %v1029 = vld [vmem:[%s1 + $0x1cc] sm:$0xf]
      %v1030 = vld [vmem:[%s1 + $0x1d0] sm:$0xf]
      %v1031 = vld [vmem:[%s1 + $0x1d4] sm:$0xf]
      %v1032 = vld [vmem:[%s1 + $0x1d8] sm:$0xf]
      %v1033 = vld [vmem:[%s1 + $0x1dc] sm:$0xf]
      %v1034 = vld [vmem:[%s1 + $0x1e0] sm:$0xf]
      %v1035 = vld [vmem:[%s1 + $0x1e4] sm:$0xf]
      %v1036 = vld [vmem:[%s1 + $0x1e8] sm:$0xf]
      %v1037 = vld [vmem:[%s1 + $0x1ec] sm:$0xf]
      %v1038 = vld [vmem:[%s1 + $0x1f0] sm:$0xf]
      %v1039 = vld [vmem:[%s1 + $0x1f4] sm:$0xf]
      %v1040 = vld [vmem:[%s1 + $0x1f8] sm:$0xf]
      %v1041 = vld [vmem:[%s1 + $0x1fc] sm:$0xf]
      %v1042 = vld [vmem:[%s1 + $0x200] sm:$0xf]
      %v1043 = vld [vmem:[%s1 + $0x204] sm:$0xf]
      %v1044 = vld [vmem:[%s1 + $0x208] sm:$0xf]
      %v1045 = vld [vmem:[%s1 + $0x20c] sm:$0xf]
      %v1046 = vld [vmem:[%s1 + $0x210] sm:$0xf]
      %v1047 = vld [vmem:[%s1 + $0x214] sm:$0xf]
      %v1048 = vld [vmem:[%s1 + $0x218] sm:$0xf]
      %v1049 = vld [vmem:[%s1 + $0x21c] sm:$0xf]
      %v1050 = vld [vmem:[%s1 + $0x220] sm:$0xf]
      %v1051 = vld [vmem:[%s1 + $0x224] sm:$0xf]
      %v1052 = vld [vmem:[%s1 + $0x228] sm:$0xf]
      %v1053 = vld [vmem:[%s1 + $0x22c] sm:$0xf]
      %v1054 = vld [vmem:[%s1 + $0x230] sm:$0xf]
      %v1055 = vld [vmem:[%s1 + $0x234] sm:$0xf]
      %v1056 = vld [vmem:[%s1 + $0x238] sm:$0xf]
      %v1057 = vld [vmem:[%s1 + $0x23c] sm:$0xf]
      %v1058 = vld [vmem:[%s1 + $0x240] sm:$0xf]
      %v1059 = vld [vmem:[%s1 + $0x244] sm:$0xf]
      %v1060 = vld [vmem:[%s1 + $0x248] sm:$0xf]
      %v1061 = vld [vmem:[%s1 + $0x24c] sm:$0xf]
      %v1062 = vld [vmem:[%s1 + $0x250] sm:$0xf]
      %v1063 = vld [vmem:[%s1 + $0x254] sm:$0xf]
      %v1064 = vld [vmem:[%s1 + $0x258] sm:$0xf]
      %v1065 = vld [vmem:[%s1 + $0x25c] sm:$0xf]
      %v1066 = vld [vmem:[%s1 + $0x260] sm:$0xf]
      %v1067 = vld [vmem:[%s1 + $0x264] sm:$0xf]
      %v1068 = vld [vmem:[%s1 + $0x268] sm:$0xf]
      %v1069 = vld [vmem:[%s1 + $0x26c] sm:$0xf]
      %v1070 = vld [vmem:[%s1 + $0x270] sm:$0xf]
      %v1071 = vld [vmem:[%s1 + $0x274] sm:$0xf]
      %v1072 = vld [vmem:[%s1 + $0x278] sm:$0xf]
      %v1073 = vld [vmem:[%s1 + $0x27c] sm:$0xf]
      %v1074 = vld [vmem:[%s1 + $0x280] sm:$0xf]
      %v1075 = vld [vmem:[%s1 + $0x284] sm:$0xf]
      %v1076 = vld [vmem:[%s1 + $0x288] sm:$0xf]
      %v1077 = vld [vmem:[%s1 + $0x28c] sm:$0xf]
      %v1078 = vld [vmem:[%s1 + $0x290] sm:$0xf]
      %v1079 = vld [vmem:[%s1 + $0x294] sm:$0xf]
      %v1080 = vld [vmem:[%s1 + $0x298] sm:$0xf]
      %v1081 = vld [vmem:[%s1 + $0x29c] sm:$0xf]
      %v1082 = vld [vmem:[%s1 + $0x2a0] sm:$0xf]
      %v1083 = vld [vmem:[%s1 + $0x2a4] sm:$0xf]
      %v1084 = vld [vmem:[%s1 + $0x2a8] sm:$0xf]
      %v1085 = vld [vmem:[%s1 + $0x2ac] sm:$0xf]
      %v1086 = vld [vmem:[%s1 + $0x2b0] sm:$0xf]
      %v1087 = vld [vmem:[%s1 + $0x2b4] sm:$0xf]
      %v1088 = vld [vmem:[%s1 + $0x2b8] sm:$0xf]
      %v1089 = vld [vmem:[%s1 + $0x2bc] sm:$0xf]
      %v1090 = vld [vmem:[%s1 + $0x2c0] sm:$0xf]
      %v1091 = vld [vmem:[%s1 + $0x2c4] sm:$0xf]
      %v1092 = vld [vmem:[%s1 + $0x2c8] sm:$0xf]
      %v1093 = vld [vmem:[%s1 + $0x2cc] sm:$0xf]
      %v1094 = vld [vmem:[%s1 + $0x2d0] sm:$0xf]
      %v1095 = vld [vmem:[%s1 + $0x2d4] sm:$0xf]
      %v1096 = vld [vmem:[%s1 + $0x2d8] sm:$0xf]
      %v1097 = vld [vmem:[%s1 + $0x2dc] sm:$0xf]
      %v1098 = vld [vmem:[%s1 + $0x2e0] sm:$0xf]
      %v1099 = vld [vmem:[%s1 + $0x2e4] sm:$0xf]
      %v1100 = vld [vmem:[%s1 + $0x2e8] sm:$0xf]
      %v1101 = vld [vmem:[%s1 + $0x2ec] sm:$0xf]
      %v1102 = vld [vmem:[%s1 + $0x2f0] sm:$0xf]
      %v1103 = vld [vmem:[%s1 + $0x2f4] sm:$0xf]
      %v1104 = vld [vmem:[%s1 + $0x2f8] sm:$0xf]
      %v1105 = vld [vmem:[%s1 + $0x2fc] sm:$0xf]
      %v1106 = vld [vmem:[%s1 + $0x300] sm:$0xf]
      %v1107 = vld [vmem:[%s1 + $0x304] sm:$0xf]
      %v1108 = vld [vmem:[%s1 + $0x308] sm:$0xf]
      %v1109 = vld [vmem:[%s1 + $0x30c] sm:$0xf]
      %v1110 = vld [vmem:[%s1 + $0x310] sm:$0xf]
      %v1111 = vld [vmem:[%s1 + $0x314] sm:$0xf]
      %v1112 = vld [vmem:[%s1 + $0x318] sm:$0xf]
      %v1113 = vld [vmem:[%s1 + $0x31c] sm:$0xf]
      %v1114 = vld [vmem:[%s1 + $0x320] sm:$0xf]
      %v1115 = vld [vmem:[%s1 + $0x324] sm:$0xf]
      %v1116 = vld [vmem:[%s1 + $0x328] sm:$0xf]
      %v1117 = vld [vmem:[%s1 + $0x32c] sm:$0xf]
      %v1118 = vld [vmem:[%s1 + $0x330] sm:$0xf]
      %v1119 = vld [vmem:[%s1 + $0x334] sm:$0xf]
      %v1120 = vld [vmem:[%s1 + $0x338] sm:$0xf]
      %v1121 = vld [vmem:[%s1 + $0x33c] sm:$0xf]
      %v1122 = vld [vmem:[%s1 + $0x340] sm:$0xf]
      %v1123 = vld [vmem:[%s1 + $0x344] sm:$0xf]
      %v1124 = vld [vmem:[%s1 + $0x348] sm:$0xf]
      %v1125 = vld [vmem:[%s1 + $0x34c] sm:$0xf]
      %v1126 = vld [vmem:[%s1 + $0x350] sm:$0xf]
      %v1127 = vld [vmem:[%s1 + $0x354] sm:$0xf]
      %v1128 = vld [vmem:[%s1 + $0x358] sm:$0xf]
      %v1129 = vld [vmem:[%s1 + $0x35c] sm:$0xf]
      %v1130 = vld [vmem:[%s1 + $0x360] sm:$0xf]
      %v1131 = vld [vmem:[%s1 + $0x364] sm:$0xf]
      %v1132 = vld [vmem:[%s1 + $0x368] sm:$0xf]
      %v1133 = vld [vmem:[%s1 + $0x36c] sm:$0xf]
      %v1134 = vld [vmem:[%s1 + $0x370] sm:$0xf]
      %v1135 = vld [vmem:[%s1 + $0x374] sm:$0xf]
      %v1136 = vld [vmem:[%s1 + $0x378] sm:$0xf]
      %v1137 = vld [vmem:[%s1 + $0x37c] sm:$0xf]
      %v1138 = vld [vmem:[%s1 + $0x380] sm:$0xf]
      %v1139 = vld [vmem:[%s1 + $0x384] sm:$0xf]
      %v1140 = vld [vmem:[%s1 + $0x388] sm:$0xf]
      %v1141 = vld [vmem:[%s1 + $0x38c] sm:$0xf]
      %v1142 = vld [vmem:[%s1 + $0x390] sm:$0xf]
      %v1143 = vld [vmem:[%s1 + $0x394] sm:$0xf]
      %v1144 = vld [vmem:[%s1 + $0x398] sm:$0xf]
      %v1145 = vld [vmem:[%s1 + $0x39c] sm:$0xf]
      %v1146 = vld [vmem:[%s1 + $0x3a0] sm:$0xf]
      %v1147 = vld [vmem:[%s1 + $0x3a4] sm:$0xf]
      %v1148 = vld [vmem:[%s1 + $0x3a8] sm:$0xf]
      %v1149 = vld [vmem:[%s1 + $0x3ac] sm:$0xf]
      %v1150 = vld [vmem:[%s1 + $0x3b0] sm:$0xf]
      %v1151 = vld [vmem:[%s1 + $0x3b4] sm:$0xf]
      %v1152 = vld [vmem:[%s1 + $0x3b8] sm:$0xf]
      %v1153 = vld [vmem:[%s1 + $0x3bc] sm:$0xf]
      %v1154 = vld [vmem:[%s1 + $0x3c0] sm:$0xf]
      %v1155 = vld [vmem:[%s1 + $0x3c4] sm:$0xf]
      %v1156 = vld [vmem:[%s1 + $0x3c8] sm:$0xf]
      %v1157 = vld [vmem:[%s1 + $0x3cc] sm:$0xf]
      %v1158 = vld [vmem:[%s1 + $0x3d0] sm:$0xf]
      %v1159 = vld [vmem:[%s1 + $0x3d4] sm:$0xf]
      %v1160 = vld [vmem:[%s1 + $0x3d8] sm:$0xf]
      %v1161 = vld [vmem:[%s1 + $0x3dc] sm:$0xf]
      %v1162 = vld [vmem:[%s1 + $0x3e0] sm:$0xf]
      %v1163 = vld [vmem:[%s1 + $0x3e4] sm:$0xf]
      %v1164 = vld [vmem:[%s1 + $0x3e8] sm:$0xf]
      %v1165 = vld [vmem:[%s1 + $0x3ec] sm:$0xf]
      %v1166 = vld [vmem:[%s1 + $0x3f0] sm:$0xf]
      %v1167 = vld [vmem:[%s1 + $0x3f4] sm:$0xf]
      %v1168 = vld [vmem:[%s1 + $0x3f8] sm:$0xf]
      %v1169 = vld [vmem:[%s1 + $0x3fc] sm:$0xf]
      %v1170 = vld [vmem:[%s1 + $0x400] sm:$0xf]
      %v1171 = vld [vmem:[%s1 + $0x404] sm:$0xf]
      %v1172 = vld [vmem:[%s1 + $0x408] sm:$0xf]
      %v1173 = vld [vmem:[%s1 + $0x40c] sm:$0xf]
      %v1174 = vld [vmem:[%s1 + $0x410] sm:$0xf]
      %v1175 = vld [vmem:[%s1 + $0x414] sm:$0xf]
      %v1176 = vld [vmem:[%s1 + $0x418] sm:$0xf]
      %v1177 = vld [vmem:[%s1 + $0x41c] sm:$0xf]
      %v1178 = vld [vmem:[%s1 + $0x420] sm:$0xf]
      %v1179 = vld [vmem:[%s1 + $0x424] sm:$0xf]
      %v1180 = vld [vmem:[%s1 + $0x428] sm:$0xf]
      %v1181 = vld [vmem:[%s1 + $0x42c] sm:$0xf]
      %v1182 = vld [vmem:[%s1 + $0x430] sm:$0xf]
      %v1183 = vld [vmem:[%s1 + $0x434] sm:$0xf]
      %v1184 = vld [vmem:[%s1 + $0x438] sm:$0xf]
      %v1185 = vld [vmem:[%s1 + $0x43c] sm:$0xf]
      %v1186 = vld [vmem:[%s1 + $0x440] sm:$0xf]
      %v1187 = vld [vmem:[%s1 + $0x444] sm:$0xf]
      %v1188 = vld [vmem:[%s1 + $0x448] sm:$0xf]
      %v1189 = vld [vmem:[%s1 + $0x44c] sm:$0xf]
      %v1190 = vld [vmem:[%s1 + $0x450] sm:$0xf]
      %v1191 = vld [vmem:[%s1 + $0x454] sm:$0xf]
      %v1192 = vld [vmem:[%s1 + $0x458] sm:$0xf]
      %v1193 = vld [vmem:[%s1 + $0x45c] sm:$0xf]
      %v1194 = vld [vmem:[%s1 + $0x460] sm:$0xf]
      %v1195 = vld [vmem:[%s1 + $0x464] sm:$0xf]
      %v1196 = vld [vmem:[%s1 + $0x468] sm:$0xf]
      %v1197 = vld [vmem:[%s1 + $0x46c] sm:$0xf]
      %v1198 = vld [vmem:[%s1 + $0x470] sm:$0xf]
      %v1199 = vld [vmem:[%s1 + $0x474] sm:$0xf]
      %v1200 = vld [vmem:[%s1 + $0x478] sm:$0xf]
      %v1201 = vld [vmem:[%s1 + $0x47c] sm:$0xf]
      %v1202 = vld [vmem:[%s1 + $0x480] sm:$0xf]
      %v1203 = vld [vmem:[%s1 + $0x484] sm:$0xf]
      %v1204 = vld [vmem:[%s1 + $0x488] sm:$0xf]
      %v1205 = vld [vmem:[%s1 + $0x48c] sm:$0xf]
      %v1206 = vld [vmem:[%s1 + $0x490] sm:$0xf]
      %v1207 = vld [vmem:[%s1 + $0x494] sm:$0xf]
      %v1208 = vld [vmem:[%s1 + $0x498] sm:$0xf]
      %v1209 = vld [vmem:[%s1 + $0x49c] sm:$0xf]
      %v1210 = vld [vmem:[%s1 + $0x4a0] sm:$0xf]
      %v1211 = vld [vmem:[%s1 + $0x4a4] sm:$0xf]
      %v1212 = vld [vmem:[%s1 + $0x4a8] sm:$0xf]
      %v1213 = vld [vmem:[%s1 + $0x4ac] sm:$0xf]
      %v1214 = vld [vmem:[%s1 + $0x4b0] sm:$0xf]
      %v1215 = vld [vmem:[%s1 + $0x4b4] sm:$0xf]
      %v1216 = vld [vmem:[%s1 + $0x4b8] sm:$0xf]
      %v1217 = vld [vmem:[%s1 + $0x4bc] sm:$0xf]
      %v1218 = vld [vmem:[%s1 + $0x4c0] sm:$0xf]
      %v1219 = vld [vmem:[%s1 + $0x4c4] sm:$0xf]
      %v1220 = vld [vmem:[%s1 + $0x4c8] sm:$0xf]
      %v1221 = vld [vmem:[%s1 + $0x4cc] sm:$0xf]
      %v1222 = vld [vmem:[%s1 + $0x4d0] sm:$0xf]
      %v1223 = vld [vmem:[%s1 + $0x4d4] sm:$0xf]
      %v1224 = vld [vmem:[%s1 + $0x4d8] sm:$0xf]
      %v1225 = vld [vmem:[%s1 + $0x4dc] sm:$0xf]
      %v1226 = vld [vmem:[%s1 + $0x4e0] sm:$0xf]
      %v1227 = vld [vmem:[%s1 + $0x4e4] sm:$0xf]
      %v1228 = vld [vmem:[%s1 + $0x4e8] sm:$0xf]
      %v1229 = vld [vmem:[%s1 + $0x4ec] sm:$0xf]
      %v1230 = vld [vmem:[%s1 + $0x4f0] sm:$0xf]
      %v1231 = vld [vmem:[%s1 + $0x4f4] sm:$0xf]
      %v1232 = vld [vmem:[%s1 + $0x4f8] sm:$0xf]
      %v1233 = vld [vmem:[%s1 + $0x4fc] sm:$0xf]
      %v1234 = vld [vmem:[%s1 + $0x500] sm:$0xf]
      %v1235 = vld [vmem:[%s1 + $0x504] sm:$0xf]
      %v1236 = vld [vmem:[%s1 + $0x508] sm:$0xf]
      %v1237 = vld [vmem:[%s1 + $0x50c] sm:$0xf]
      %v1238 = vld [vmem:[%s1 + $0x510] sm:$0xf]
      %v1239 = vld [vmem:[%s1 + $0x514] sm:$0xf]
      %v1240 = vld [vmem:[%s1 + $0x518] sm:$0xf]
      %v1241 = vld [vmem:[%s1 + $0x51c] sm:$0xf]
      %v1242 = vld [vmem:[%s1 + $0x520] sm:$0xf]
      %v1243 = vld [vmem:[%s1 + $0x524] sm:$0xf]
      %v1244 = vld [vmem:[%s1 + $0x528] sm:$0xf]
      %v1245 = vld [vmem:[%s1 + $0x52c] sm:$0xf]
      %v1246 = vld [vmem:[%s1 + $0x530] sm:$0xf]
      %v1247 = vld [vmem:[%s1 + $0x534] sm:$0xf]
      %v1248 = vld [vmem:[%s1 + $0x538] sm:$0xf]
      %v1249 = vld [vmem:[%s1 + $0x53c] sm:$0xf]
      %v1250 = vld [vmem:[%s1 + $0x540] sm:$0xf]
      %v1251 = vld [vmem:[%s1 + $0x544] sm:$0xf]
      %v1252 = vld [vmem:[%s1 + $0x548] sm:$0xf]
      %v1253 = vld [vmem:[%s1 + $0x54c] sm:$0xf]
      %v1254 = vld [vmem:[%s1 + $0x550] sm:$0xf]
      %v1255 = vld [vmem:[%s1 + $0x554] sm:$0xf]
      %v1256 = vld [vmem:[%s1 + $0x558] sm:$0xf]
      %v1257 = vld [vmem:[%s1 + $0x55c] sm:$0xf]
      %v1258 = vld [vmem:[%s1 + $0x560] sm:$0xf]
      %v1259 = vld [vmem:[%s1 + $0x564] sm:$0xf]
      %v1260 = vld [vmem:[%s1 + $0x568] sm:$0xf]
      %v1261 = vld [vmem:[%s1 + $0x56c] sm:$0xf]
      %v1262 = vld [vmem:[%s1 + $0x570] sm:$0xf]
      %v1263 = vld [vmem:[%s1 + $0x574] sm:$0xf]
      %v1264 = vld [vmem:[%s1 + $0x578] sm:$0xf]
      %v1265 = vld [vmem:[%s1 + $0x57c] sm:$0xf]
      %v1266 = vld [vmem:[%s1 + $0x580] sm:$0xf]
      %v1267 = vld [vmem:[%s1 + $0x584] sm:$0xf]
      %v1268 = vld [vmem:[%s1 + $0x588] sm:$0xf]
      %v1269 = vld [vmem:[%s1 + $0x58c] sm:$0xf]
      %v1270 = vld [vmem:[%s1 + $0x590] sm:$0xf]
      %v1271 = vld [vmem:[%s1 + $0x594] sm:$0xf]
      %v1272 = vld [vmem:[%s1 + $0x598] sm:$0xf]
      %v1273 = vld [vmem:[%s1 + $0x59c] sm:$0xf]
      %v1274 = vld [vmem:[%s1 + $0x5a0] sm:$0xf]
      %v1275 = vld [vmem:[%s1 + $0x5a4] sm:$0xf]
      %v1276 = vld [vmem:[%s1 + $0x5a8] sm:$0xf]
      %v1277 = vld [vmem:[%s1 + $0x5ac] sm:$0xf]
      %v1278 = vld [vmem:[%s1 + $0x5b0] sm:$0xf]
      %v1279 = vld [vmem:[%s1 + $0x5b4] sm:$0xf]
      %v1280 = vld [vmem:[%s1 + $0x5b8] sm:$0xf]
      %v1281 = vld [vmem:[%s1 + $0x5bc] sm:$0xf]
      %v1282 = vld [vmem:[%s1 + $0x5c0] sm:$0xf]
      %v1283 = vld [vmem:[%s1 + $0x5c4] sm:$0xf]
      %v1284 = vld [vmem:[%s1 + $0x5c8] sm:$0xf]
      %v1285 = vld [vmem:[%s1 + $0x5cc] sm:$0xf]
      %v1286 = vld [vmem:[%s1 + $0x5d0] sm:$0xf]
      %v1287 = vld [vmem:[%s1 + $0x5d4] sm:$0xf]
      %v1288 = vld [vmem:[%s1 + $0x5d8] sm:$0xf]
      %v1289 = vld [vmem:[%s1 + $0x5dc] sm:$0xf]
      %v1290 = vld [vmem:[%s1 + $0x5e0] sm:$0xf]
      %v1291 = vld [vmem:[%s1 + $0x5e4] sm:$0xf]
      %v1292 = vld [vmem:[%s1 + $0x5e8] sm:$0xf]
      %v1293 = vld [vmem:[%s1 + $0x5ec] sm:$0xf]
      %v1294 = vld [vmem:[%s1 + $0x5f0] sm:$0xf]
      %v1295 = vld [vmem:[%s1 + $0x5f4] sm:$0xf]
      %v1296 = vld [vmem:[%s1 + $0x5f8] sm:$0xf]
      %v1297 = vld [vmem:[%s1 + $0x5fc] sm:$0xf]
      %v1298 = vld [vmem:[%s1 + $0x600] sm:$0xf]
      %v1299 = vld [vmem:[%s1 + $0x604] sm:$0xf]
      %v1300 = vld [vmem:[%s1 + $0x608] sm:$0xf]
      %v1301 = vld [vmem:[%s1 + $0x60c] sm:$0xf]
      %v1302 = vld [vmem:[%s1 + $0x610] sm:$0xf]
      %v1303 = vld [vmem:[%s1 + $0x614] sm:$0xf]
      %v1304 = vld [vmem:[%s1 + $0x618] sm:$0xf]
      %v1305 = vld [vmem:[%s1 + $0x61c] sm:$0xf]
      %v1306 = vld [vmem:[%s1 + $0x620] sm:$0xf]
      %v1307 = vld [vmem:[%s1 + $0x624] sm:$0xf]
      %v1308 = vld [vmem:[%s1 + $0x628] sm:$0xf]
      %v1309 = vld [vmem:[%s1 + $0x62c] sm:$0xf]
      %v1310 = vld [vmem:[%s1 + $0x630] sm:$0xf]
      %v1311 = vld [vmem:[%s1 + $0x634] sm:$0xf]
      %v1312 = vld [vmem:[%s1 + $0x638] sm:$0xf]
      %v1313 = vld [vmem:[%s1 + $0x63c] sm:$0xf]
      %v1314 = vld [vmem:[%s1 + $0x640] sm:$0xf]
      %v1315 = vld [vmem:[%s1 + $0x644] sm:$0xf]
      %v1316 = vld [vmem:[%s1 + $0x648] sm:$0xf]
      %v1317 = vld [vmem:[%s1 + $0x64c] sm:$0xf]
      %v1318 = vld [vmem:[%s1 + $0x650] sm:$0xf]
      %v1319 = vld [vmem:[%s1 + $0x654] sm:$0xf]
      %v1320 = vld [vmem:[%s1 + $0x658] sm:$0xf]
      %v1321 = vld [vmem:[%s1 + $0x65c] sm:$0xf]
      %v1322 = vld [vmem:[%s1 + $0x660] sm:$0xf]
      %v1323 = vld [vmem:[%s1 + $0x664] sm:$0xf]
      %v1324 = vld [vmem:[%s1 + $0x668] sm:$0xf]
      %v1325 = vld [vmem:[%s1 + $0x66c] sm:$0xf]
      %v1326 = vld [vmem:[%s1 + $0x670] sm:$0xf]
      %v1327 = vld [vmem:[%s1 + $0x674] sm:$0xf]
      %v1328 = vld [vmem:[%s1 + $0x678] sm:$0xf]
      %v1329 = vld [vmem:[%s1 + $0x67c] sm:$0xf]
      %v1330 = vld [vmem:[%s1 + $0x680] sm:$0xf]
      %v1331 = vld [vmem:[%s1 + $0x684] sm:$0xf]
      %v1332 = vld [vmem:[%s1 + $0x688] sm:$0xf]
      %v1333 = vld [vmem:[%s1 + $0x68c] sm:$0xf]
      %v1334 = vld [vmem:[%s1 + $0x690] sm:$0xf]
      %v1335 = vld [vmem:[%s1 + $0x694] sm:$0xf]
      %v1336 = vld [vmem:[%s1 + $0x698] sm:$0xf]
      %v1337 = vld [vmem:[%s1 + $0x69c] sm:$0xf]
      %v1338 = vld [vmem:[%s1 + $0x6a0] sm:$0xf]
      %v1339 = vld [vmem:[%s1 + $0x6a4] sm:$0xf]
      %v1340 = vld [vmem:[%s1 + $0x6a8] sm:$0xf]
      %v1341 = vld [vmem:[%s1 + $0x6ac] sm:$0xf]
      %v1342 = vld [vmem:[%s1 + $0x6b0] sm:$0xf]
      %v1343 = vld [vmem:[%s1 + $0x6b4] sm:$0xf]
      %v1344 = vld [vmem:[%s1 + $0x6b8] sm:$0xf]
      %v1345 = vld [vmem:[%s1 + $0x6bc] sm:$0xf]
      %v1346 = vld [vmem:[%s1 + $0x6c0] sm:$0xf]
      %v1347 = vld [vmem:[%s1 + $0x6c4] sm:$0xf]
      %v1348 = vld [vmem:[%s1 + $0x6c8] sm:$0xf]
      %v1349 = vld [vmem:[%s1 + $0x6cc] sm:$0xf]
      %v1350 = vld [vmem:[%s1 + $0x6d0] sm:$0xf]
      %v1351 = vld [vmem:[%s1 + $0x6d4] sm:$0xf]
      %v1352 = vld [vmem:[%s1 + $0x6d8] sm:$0xf]
      %v1353 = vld [vmem:[%s1 + $0x6dc] sm:$0xf]
      %v1354 = vld [vmem:[%s1 + $0x6e0] sm:$0xf]
      %v1355 = vld [vmem:[%s1 + $0x6e4] sm:$0xf]
      %v1356 = vld [vmem:[%s1 + $0x6e8] sm:$0xf]
      %v1357 = vld [vmem:[%s1 + $0x6ec] sm:$0xf]
      %v1358 = vld [vmem:[%s1 + $0x6f0] sm:$0xf]
      %v1359 = vld [vmem:[%s1 + $0x6f4] sm:$0xf]
      %v1360 = vld [vmem:[%s1 + $0x6f8] sm:$0xf]
      %v1361 = vld [vmem:[%s1 + $0x6fc] sm:$0xf]
      %v1362 = vld [vmem:[%s1 + $0x700] sm:$0xf]
      %v1363 = vld [vmem:[%s1 + $0x704] sm:$0xf]
      %v1364 = vld [vmem:[%s1 + $0x708] sm:$0xf]
      %v1365 = vld [vmem:[%s1 + $0x70c] sm:$0xf]
      %v1366 = vld [vmem:[%s1 + $0x710] sm:$0xf]
      %v1367 = vld [vmem:[%s1 + $0x714] sm:$0xf]
      %v1368 = vld [vmem:[%s1 + $0x718] sm:$0xf]
      %v1369 = vld [vmem:[%s1 + $0x71c] sm:$0xf]
      %v1370 = vld [vmem:[%s1 + $0x720] sm:$0xf]
      %v1371 = vld [vmem:[%s1 + $0x724] sm:$0xf]
      %v1372 = vld [vmem:[%s1 + $0x728] sm:$0xf]
      %v1373 = vld [vmem:[%s1 + $0x72c] sm:$0xf]
      %v1374 = vld [vmem:[%s1 + $0x730] sm:$0xf]
      %v1375 = vld [vmem:[%s1 + $0x734] sm:$0xf]
      %v1376 = vld [vmem:[%s1 + $0x738] sm:$0xf]
      %v1377 = vld [vmem:[%s1 + $0x73c] sm:$0xf]
      %v1378 = vld [vmem:[%s1 + $0x740] sm:$0xf]
      %v1379 = vld [vmem:[%s1 + $0x744] sm:$0xf]
      %v1380 = vld [vmem:[%s1 + $0x748] sm:$0xf]
      %v1381 = vld [vmem:[%s1 + $0x74c] sm:$0xf]
      %v1382 = vld [vmem:[%s1 + $0x750] sm:$0xf]
      %v1383 = vld [vmem:[%s1 + $0x754] sm:$0xf]
      %v1384 = vld [vmem:[%s1 + $0x758] sm:$0xf]
      %v1385 = vld [vmem:[%s1 + $0x75c] sm:$0xf]
      %v1386 = vld [vmem:[%s1 + $0x760] sm:$0xf]
      %v1387 = vld [vmem:[%s1 + $0x764] sm:$0xf]
      %v1388 = vld [vmem:[%s1 + $0x768] sm:$0xf]
      %v1389 = vld [vmem:[%s1 + $0x76c] sm:$0xf]
      %v1390 = vld [vmem:[%s1 + $0x770] sm:$0xf]
      %v1391 = vld [vmem:[%s1 + $0x774] sm:$0xf]
      %v1392 = vld [vmem:[%s1 + $0x778] sm:$0xf]
      %v1393 = vld [vmem:[%s1 + $0x77c] sm:$0xf]
      %v1394 = vld [vmem:[%s1 + $0x780] sm:$0xf]
      %v1395 = vld [vmem:[%s1 + $0x784] sm:$0xf]
      %v1396 = vld [vmem:[%s1 + $0x788] sm:$0xf]
      %v1397 = vld [vmem:[%s1 + $0x78c] sm:$0xf]
      %v1398 = vld [vmem:[%s1 + $0x790] sm:$0xf]
      %v1399 = vld [vmem:[%s1 + $0x794] sm:$0xf]
      %v1400 = vld [vmem:[%s1 + $0x798] sm:$0xf]
      %v1401 = vld [vmem:[%s1 + $0x79c] sm:$0xf]
      %v1402 = vld [vmem:[%s1 + $0x7a0] sm:$0xf]
      %v1403 = vld [vmem:[%s1 + $0x7a4] sm:$0xf]
      %v1404 = vld [vmem:[%s1 + $0x7a8] sm:$0xf]
      %v1405 = vld [vmem:[%s1 + $0x7ac] sm:$0xf]
      %v1406 = vld [vmem:[%s1 + $0x7b0] sm:$0xf]
      %v1407 = vld [vmem:[%s1 + $0x7b4] sm:$0xf]
      %v1408 = vld [vmem:[%s1 + $0x7b8] sm:$0xf]
      %v1409 = vld [vmem:[%s1 + $0x7bc] sm:$0xf]
      %v1410 = vld [vmem:[%s1 + $0x7c0] sm:$0xf]
      %v1411 = vld [vmem:[%s1 + $0x7c4] sm:$0xf]
      %v1412 = vld [vmem:[%s1 + $0x7c8] sm:$0xf]
      %v1413 = vld [vmem:[%s1 + $0x7cc] sm:$0xf]
      %v1414 = vld [vmem:[%s1 + $0x7d0] sm:$0xf]
      %v1415 = vld [vmem:[%s1 + $0x7d4] sm:$0xf]
      %v1416 = vld [vmem:[%s1 + $0x7d8] sm:$0xf]
      %v1417 = vld [vmem:[%s1 + $0x7dc] sm:$0xf]
      %v1418 = vld [vmem:[%s1 + $0x7e0] sm:$0xf]
      %v1419 = vld [vmem:[%s1 + $0x7e4] sm:$0xf]
      %v1420 = vld [vmem:[%s1 + $0x7e8] sm:$0xf]
      %v1421 = vld [vmem:[%s1 + $0x7ec] sm:$0xf]
      %v1422 = vld [vmem:[%s1 + $0x7f0] sm:$0xf]
      %v1423 = vld [vmem:[%s1 + $0x7f4] sm:$0xf]
      %v1424 = vld [vmem:[%s1 + $0x7f8] sm:$0xf]
      %v1425 = vld [vmem:[%s1 + $0x7fc] sm:$0xf]
      %v1426 = vld [vmem:[%s1 + $0x800] sm:$0xf]
      %v1427 = vld [vmem:[%s1 + $0x804] sm:$0xf]
      %v1428 = vld [vmem:[%s1 + $0x808] sm:$0xf]
      %v1429 = vld [vmem:[%s1 + $0x80c] sm:$0xf]
      %v1430 = vld [vmem:[%s1 + $0x810] sm:$0xf]
      %v1431 = vld [vmem:[%s1 + $0x814] sm:$0xf]
      %v1432 = vld [vmem:[%s1 + $0x818] sm:$0xf]
      %v1433 = vld [vmem:[%s1 + $0x81c] sm:$0xf]
      %v1434 = vld [vmem:[%s1 + $0x820] sm:$0xf]
      %v1435 = vld [vmem:[%s1 + $0x824] sm:$0xf]
      %v1436 = vld [vmem:[%s1 + $0x828] sm:$0xf]
      %v1437 = vld [vmem:[%s1 + $0x82c] sm:$0xf]
      %v1438 = vld [vmem:[%s1 + $0x830] sm:$0xf]
      %v1439 = vld [vmem:[%s1 + $0x834] sm:$0xf]
      %v1440 = vld [vmem:[%s1 + $0x838] sm:$0xf]
      %v1441 = vld [vmem:[%s1 + $0x83c] sm:$0xf]
      %v1442 = vld [vmem:[%s1 + $0x840] sm:$0xf]
      %v1443 = vld [vmem:[%s1 + $0x844] sm:$0xf]
      %v1444 = vld [vmem:[%s1 + $0x848] sm:$0xf]
      %v1445 = vld [vmem:[%s1 + $0x84c] sm:$0xf]
      %v1446 = vld [vmem:[%s1 + $0x850] sm:$0xf]
      %v1447 = vld [vmem:[%s1 + $0x854] sm:$0xf]
      %v1448 = vld [vmem:[%s1 + $0x858] sm:$0xf]
      %v1449 = vld [vmem:[%s1 + $0x85c] sm:$0xf]
      %v1450 = vld [vmem:[%s1 + $0x860] sm:$0xf]
      %v1451 = vld [vmem:[%s1 + $0x864] sm:$0xf]
      %v1452 = vld [vmem:[%s1 + $0x868] sm:$0xf]
      %v1453 = vld [vmem:[%s1 + $0x86c] sm:$0xf]
      %v1454 = vld [vmem:[%s1 + $0x870] sm:$0xf]
      %v1455 = vld [vmem:[%s1 + $0x874] sm:$0xf]
      %v1456 = vld [vmem:[%s1 + $0x878] sm:$0xf]
      %v1457 = vld [vmem:[%s1 + $0x87c] sm:$0xf]
      %v1458 = vld [vmem:[%s1 + $0x880] sm:$0xf]
      %v1459 = vld [vmem:[%s1 + $0x884] sm:$0xf]
      %v1460 = vld [vmem:[%s1 + $0x888] sm:$0xf]
      %v1461 = vld [vmem:[%s1 + $0x88c] sm:$0xf]
      %v1462 = vld [vmem:[%s1 + $0x890] sm:$0xf]
      %v1463 = vld [vmem:[%s1 + $0x894] sm:$0xf]
      %v1464 = vld [vmem:[%s1 + $0x898] sm:$0xf]
      %v1465 = vld [vmem:[%s1 + $0x89c] sm:$0xf]
      %v1466 = vld [vmem:[%s1 + $0x8a0] sm:$0xf]
      %v1467 = vld [vmem:[%s1 + $0x8a4] sm:$0xf]
      %v1468 = vld [vmem:[%s1 + $0x8a8] sm:$0xf]
      %v1469 = vld [vmem:[%s1 + $0x8ac] sm:$0xf]
      %v1470 = vld [vmem:[%s1 + $0x8b0] sm:$0xf]
      %v1471 = vld [vmem:[%s1 + $0x8b4] sm:$0xf]
      %v1472 = vld [vmem:[%s1 + $0x8b8] sm:$0xf]
      %v1473 = vld [vmem:[%s1 + $0x8bc] sm:$0xf]
      %v1474 = vld [vmem:[%s1 + $0x8c0] sm:$0xf]
      %v1475 = vld [vmem:[%s1 + $0x8c4] sm:$0xf]
      %v1476 = vld [vmem:[%s1 + $0x8c8] sm:$0xf]
      %v1477 = vld [vmem:[%s1 + $0x8cc] sm:$0xf]
      %v1478 = vld [vmem:[%s1 + $0x8d0] sm:$0xf]
      %v1479 = vld [vmem:[%s1 + $0x8d4] sm:$0xf]
      %v1480 = vld [vmem:[%s1 + $0x8d8] sm:$0xf]
      %v1481 = vld [vmem:[%s1 + $0x8dc] sm:$0xf]
      %v1482 = vld [vmem:[%s1 + $0x8e0] sm:$0xf]
      %v1483 = vld [vmem:[%s1 + $0x8e4] sm:$0xf]
      %v1484 = vld [vmem:[%s1 + $0x8e8] sm:$0xf]
      %v1485 = vld [vmem:[%s1 + $0x8ec] sm:$0xf]
      %v1486 = vld [vmem:[%s1 + $0x8f0] sm:$0xf]
      %v1487 = vld [vmem:[%s1 + $0x8f4] sm:$0xf]
      %v1488 = vld [vmem:[%s1 + $0x8f8] sm:$0xf]
      %v1489 = vld [vmem:[%s1 + $0x8fc] sm:$0xf]
      %v1490 = vld [vmem:[%s1 + $0x900] sm:$0xf]
      %v1491 = vld [vmem:[%s1 + $0x904] sm:$0xf]
      %v1492 = vld [vmem:[%s1 + $0x908] sm:$0xf]
      %v1493 = vld [vmem:[%s1 + $0x90c] sm:$0xf]
      %v1494 = vld [vmem:[%s1 + $0x910] sm:$0xf]
      %v1495 = vld [vmem:[%s1 + $0x914] sm:$0xf]
      %v1496 = vld [vmem:[%s1 + $0x918] sm:$0xf]
      %v1497 = vld [vmem:[%s1 + $0x91c] sm:$0xf]
      %v1498 = vld [vmem:[%s1 + $0x920] sm:$0xf]
      %v1499 = vld [vmem:[%s1 + $0x924] sm:$0xf]
      %v1500 = vld [vmem:[%s1 + $0x928] sm:$0xf]
      %v1501 = vld [vmem:[%s1 + $0x92c] sm:$0xf]
      %v1502 = vld [vmem:[%s1 + $0x930] sm:$0xf]
      %v1503 = vld [vmem:[%s1 + $0x934] sm:$0xf]
      %v1504 = vld [vmem:[%s1 + $0x938] sm:$0xf]
      %v1505 = vld [vmem:[%s1 + $0x93c] sm:$0xf]
      %v1506 = vld [vmem:[%s1 + $0x940] sm:$0xf]
      %v1507 = vld [vmem:[%s1 + $0x944] sm:$0xf]
      %v1508 = vld [vmem:[%s1 + $0x948] sm:$0xf]
      %v1509 = vld [vmem:[%s1 + $0x94c] sm:$0xf]
      %v1510 = vld [vmem:[%s1 + $0x950] sm:$0xf]
      %v1511 = vld [vmem:[%s1 + $0x954] sm:$0xf]
      %v1512 = vld [vmem:[%s1 + $0x958] sm:$0xf]
      %v1513 = vld [vmem:[%s1 + $0x95c] sm:$0xf]
      %v1514 = vld [vmem:[%s1 + $0x960] sm:$0xf]
      %v1515 = vld [vmem:[%s1 + $0x964] sm:$0xf]
      %v1516 = vld [vmem:[%s1 + $0x968] sm:$0xf]
      %v1517 = vld [vmem:[%s1 + $0x96c] sm:$0xf]
      %v1518 = vld [vmem:[%s1 + $0x970] sm:$0xf]
      %v1519 = vld [vmem:[%s1 + $0x974] sm:$0xf]
      %v1520 = vld [vmem:[%s1 + $0x978] sm:$0xf]
      %v1521 = vld [vmem:[%s1 + $0x97c] sm:$0xf]
      %v1522 = vld [vmem:[%s1 + $0x980] sm:$0xf]
      %v1523 = vld [vmem:[%s1 + $0x984] sm:$0xf]
      %v1524 = vld [vmem:[%s1 + $0x988] sm:$0xf]
      %v1525 = vld [vmem:[%s1 + $0x98c] sm:$0xf]
      %v1526 = vld [vmem:[%s1 + $0x990] sm:$0xf]
      %v1527 = vld [vmem:[%s1 + $0x994] sm:$0xf]
      %v1528 = vld [vmem:[%s1 + $0x998] sm:$0xf]
      %v1529 = vld [vmem:[%s1 + $0x99c] sm:$0xf]
      %v1530 = vld [vmem:[%s1 + $0x9a0] sm:$0xf]
      %v1531 = vld [vmem:[%s1 + $0x9a4] sm:$0xf]
      %v1532 = vld [vmem:[%s1 + $0x9a8] sm:$0xf]
      %v1533 = vld [vmem:[%s1 + $0x9ac] sm:$0xf]
      %v1534 = vld [vmem:[%s1 + $0x9b0] sm:$0xf]
      %v1535 = vld [vmem:[%s1 + $0x9b4] sm:$0xf]
      %v1536 = vld [vmem:[%s1 + $0x9b8] sm:$0xf]
      %v1537 = vld [vmem:[%s1 + $0x9bc] sm:$0xf]
      %v1538 = vld [vmem:[%s1 + $0x9c0] sm:$0xf]
      %v1539 = vld [vmem:[%s1 + $0x9c4] sm:$0xf]
      %v1540 = vld [vmem:[%s1 + $0x9c8] sm:$0xf]
      %v1541 = vld [vmem:[%s1 + $0x9cc] sm:$0xf]
      %v1542 = vld [vmem:[%s1 + $0x9d0] sm:$0xf]
      %v1543 = vld [vmem:[%s1 + $0x9d4] sm:$0xf]
      %v1544 = vld [vmem:[%s1 + $0x9d8] sm:$0xf]
      %v1545 = vld [vmem:[%s1 + $0x9dc] sm:$0xf]
      %v1546 = vld [vmem:[%s1 + $0x9e0] sm:$0xf]
      %v1547 = vld [vmem:[%s1 + $0x9e4] sm:$0xf]
      %v1548 = vld [vmem:[%s1 + $0x9e8] sm:$0xf]
      %v1549 = vld [vmem:[%s1 + $0x9ec] sm:$0xf]
      %v1550 = vld [vmem:[%s1 + $0x9f0] sm:$0xf]
      %v1551 = vld [vmem:[%s1 + $0x9f4] sm:$0xf]
      %v1552 = vld [vmem:[%s1 + $0x9f8] sm:$0xf]
      %v1553 = vld [vmem:[%s1 + $0x9fc] sm:$0xf]
      %v1554 = vld [vmem:[%s1 + $0xa00] sm:$0xf]
      %v1555 = vld [vmem:[%s1 + $0xa04] sm:$0xf]
      %v1556 = vld [vmem:[%s1 + $0xa08] sm:$0xf]
      %v1557 = vld [vmem:[%s1 + $0xa0c] sm:$0xf]
      %v1558 = vld [vmem:[%s1 + $0xa10] sm:$0xf]
      %v1559 = vld [vmem:[%s1 + $0xa14] sm:$0xf]
      %v1560 = vld [vmem:[%s1 + $0xa18] sm:$0xf]
      %v1561 = vld [vmem:[%s1 + $0xa1c] sm:$0xf]
      %v1562 = vld [vmem:[%s1 + $0xa20] sm:$0xf]
      %v1563 = vld [vmem:[%s1 + $0xa24] sm:$0xf]
      %v1564 = vld [vmem:[%s1 + $0xa28] sm:$0xf]
      %v1565 = vld [vmem:[%s1 + $0xa2c] sm:$0xf]
      %v1566 = vld [vmem:[%s1 + $0xa30] sm:$0xf]
      %v1567 = vld [vmem:[%s1 + $0xa34] sm:$0xf]
      %v1568 = vld [vmem:[%s1 + $0xa38] sm:$0xf]
      %v1569 = vld [vmem:[%s1 + $0xa3c] sm:$0xf]
      %v1570 = vld [vmem:[%s1 + $0xa40] sm:$0xf]
      %v1571 = vld [vmem:[%s1 + $0xa44] sm:$0xf]
      %v1572 = vld [vmem:[%s1 + $0xa48] sm:$0xf]
      %v1573 = vld [vmem:[%s1 + $0xa4c] sm:$0xf]
      %v1574 = vld [vmem:[%s1 + $0xa50] sm:$0xf]
      %v1575 = vld [vmem:[%s1 + $0xa54] sm:$0xf]
      %v1576 = vld [vmem:[%s1 + $0xa58] sm:$0xf]
      %v1577 = vld [vmem:[%s1 + $0xa5c] sm:$0xf]
      %v1578 = vld [vmem:[%s1 + $0xa60] sm:$0xf]
      %v1579 = vld [vmem:[%s1 + $0xa64] sm:$0xf]
      %v1580 = vld [vmem:[%s1 + $0xa68] sm:$0xf]
      %v1581 = vld [vmem:[%s1 + $0xa6c] sm:$0xf]
      %v1582 = vld [vmem:[%s1 + $0xa70] sm:$0xf]
      %v1583 = vld [vmem:[%s1 + $0xa74] sm:$0xf]
      %v1584 = vld [vmem:[%s1 + $0xa78] sm:$0xf]
      %v1585 = vld [vmem:[%s1 + $0xa7c] sm:$0xf]
      %v1586 = vld [vmem:[%s1 + $0xa80] sm:$0xf]
      %v1587 = vld [vmem:[%s1 + $0xa84] sm:$0xf]
      %v1588 = vld [vmem:[%s1 + $0xa88] sm:$0xf]
      %v1589 = vld [vmem:[%s1 + $0xa8c] sm:$0xf]
      %v1590 = vld [vmem:[%s1 + $0xa90] sm:$0xf]
      %v1591 = vld [vmem:[%s1 + $0xa94] sm:$0xf]
      %v1592 = vld [vmem:[%s1 + $0xa98] sm:$0xf]
      %v1593 = vld [vmem:[%s1 + $0xa9c] sm:$0xf]
      %v1594 = vld [vmem:[%s1 + $0xaa0] sm:$0xf]
      %v1595 = vld [vmem:[%s1 + $0xaa4] sm:$0xf]
      %v1596 = vld [vmem:[%s1 + $0xaa8] sm:$0xf]
      %v1597 = vld [vmem:[%s1 + $0xaac] sm:$0xf]
      %v1598 = vld [vmem:[%s1 + $0xab0] sm:$0xf]
      %v1599 = vld [vmem:[%s1 + $0xab4] sm:$0xf]
      %v1600 = vld [vmem:[%s1 + $0xab8] sm:$0xf]
      %v1601 = vld [vmem:[%s1 + $0xabc] sm:$0xf]
      %v1602 = vld [vmem:[%s1 + $0xac0] sm:$0xf]
      %v1603 = vld [vmem:[%s1 + $0xac4] sm:$0xf]
      %v1604 = vld [vmem:[%s1 + $0xac8] sm:$0xf]
      %v1605 = vld [vmem:[%s1 + $0xacc] sm:$0xf]
      %v1606 = vld [vmem:[%s1 + $0xad0] sm:$0xf]
      %v1607 = vld [vmem:[%s1 + $0xad4] sm:$0xf]
      %v1608 = vld [vmem:[%s1 + $0xad8] sm:$0xf]
      %v1609 = vld [vmem:[%s1 + $0xadc] sm:$0xf]
      %v1610 = vld [vmem:[%s1 + $0xae0] sm:$0xf]
      %v1611 = vld [vmem:[%s1 + $0xae4] sm:$0xf]
      %v1612 = vld [vmem:[%s1 + $0xae8] sm:$0xf]
      %v1613 = vld [vmem:[%s1 + $0xaec] sm:$0xf]
      %v1614 = vld [vmem:[%s1 + $0xaf0] sm:$0xf]
      %v1615 = vld [vmem:[%s1 + $0xaf4] sm:$0xf]
      %v1616 = vld [vmem:[%s1 + $0xaf8] sm:$0xf]
      %v1617 = vld [vmem:[%s1 + $0xafc] sm:$0xf]
      %v1618 = vld [vmem:[%s1 + $0xb00] sm:$0xf]
      %v1619 = vld [vmem:[%s1 + $0xb04] sm:$0xf]
      %v1620 = vld [vmem:[%s1 + $0xb08] sm:$0xf]
      %v1621 = vld [vmem:[%s1 + $0xb0c] sm:$0xf]
      %v1622 = vld [vmem:[%s1 + $0xb10] sm:$0xf]
      %v1623 = vld [vmem:[%s1 + $0xb14] sm:$0xf]
      %v1624 = vld [vmem:[%s1 + $0xb18] sm:$0xf]
      %v1625 = vld [vmem:[%s1 + $0xb1c] sm:$0xf]
      %v1626 = vld [vmem:[%s1 + $0xb20] sm:$0xf]
      %v1627 = vld [vmem:[%s1 + $0xb24] sm:$0xf]
      %v1628 = vld [vmem:[%s1 + $0xb28] sm:$0xf]
      %v1629 = vld [vmem:[%s1 + $0xb2c] sm:$0xf]
      %v1630 = vld [vmem:[%s1 + $0xb30] sm:$0xf]
      %v1631 = vld [vmem:[%s1 + $0xb34] sm:$0xf]
      %v1632 = vld [vmem:[%s1 + $0xb38] sm:$0xf]
      %v1633 = vld [vmem:[%s1 + $0xb3c] sm:$0xf]
      %v1634 = vld [vmem:[%s1 + $0xb40] sm:$0xf]
      %v1635 = vld [vmem:[%s1 + $0xb44] sm:$0xf]
      %v1636 = vld [vmem:[%s1 + $0xb48] sm:$0xf]
      %v1637 = vld [vmem:[%s1 + $0xb4c] sm:$0xf]
      %v1638 = vld [vmem:[%s1 + $0xb50] sm:$0xf]
      %v1639 = vld [vmem:[%s1 + $0xb54] sm:$0xf]
      %v1640 = vld [vmem:[%s1 + $0xb58] sm:$0xf]
      %v1641 = vld [vmem:[%s1 + $0xb5c] sm:$0xf]
      %v1642 = vld [vmem:[%s1 + $0xb60] sm:$0xf]
      %v1643 = vld [vmem:[%s1 + $0xb64] sm:$0xf]
      %v1644 = vld [vmem:[%s1 + $0xb68] sm:$0xf]
      %v1645 = vld [vmem:[%s1 + $0xb6c] sm:$0xf]
      %v1646 = vld [vmem:[%s1 + $0xb70] sm:$0xf]
      %v1647 = vld [vmem:[%s1 + $0xb74] sm:$0xf]
      %v1648 = vld [vmem:[%s1 + $0xb78] sm:$0xf]
      %v1649 = vld [vmem:[%s1 + $0xb7c] sm:$0xf]
      %v1650 = vld [vmem:[%s1 + $0xb80] sm:$0xf]
      %v1651 = vld [vmem:[%s1 + $0xb84] sm:$0xf]
      %v1652 = vld [vmem:[%s1 + $0xb88] sm:$0xf]
      %v1653 = vld [vmem:[%s1 + $0xb8c] sm:$0xf]
      %v1654 = vld [vmem:[%s1 + $0xb90] sm:$0xf]
      %v1655 = vld [vmem:[%s1 + $0xb94] sm:$0xf]
      %v1656 = vld [vmem:[%s1 + $0xb98] sm:$0xf]
      %v1657 = vld [vmem:[%s1 + $0xb9c] sm:$0xf]
      %v1658 = vld [vmem:[%s1 + $0xba0] sm:$0xf]
      %v1659 = vld [vmem:[%s1 + $0xba4] sm:$0xf]
      %v1660 = vld [vmem:[%s1 + $0xba8] sm:$0xf]
      %v1661 = vld [vmem:[%s1 + $0xbac] sm:$0xf]
      %v1662 = vld [vmem:[%s1 + $0xbb0] sm:$0xf]
      %v1663 = vld [vmem:[%s1 + $0xbb4] sm:$0xf]
      %v1664 = vld [vmem:[%s1 + $0xbb8] sm:$0xf]
      %v1665 = vld [vmem:[%s1 + $0xbbc] sm:$0xf]
      %v1666 = vld [vmem:[%s1 + $0xbc0] sm:$0xf]
      %v1667 = vld [vmem:[%s1 + $0xbc4] sm:$0xf]
      %v1668 = vld [vmem:[%s1 + $0xbc8] sm:$0xf]
      %v1669 = vld [vmem:[%s1 + $0xbcc] sm:$0xf]
      %v1670 = vld [vmem:[%s1 + $0xbd0] sm:$0xf]
      %v1671 = vld [vmem:[%s1 + $0xbd4] sm:$0xf]
      %v1672 = vld [vmem:[%s1 + $0xbd8] sm:$0xf]
      %v1673 = vld [vmem:[%s1 + $0xbdc] sm:$0xf]
      %v1674 = vld [vmem:[%s1 + $0xbe0] sm:$0xf]
      %v1675 = vld [vmem:[%s1 + $0xbe4] sm:$0xf]
      %v1676 = vld [vmem:[%s1 + $0xbe8] sm:$0xf]
      %v1677 = vld [vmem:[%s1 + $0xbec] sm:$0xf]
      %v1678 = vld [vmem:[%s1 + $0xbf0] sm:$0xf]
      %v1679 = vld [vmem:[%s1 + $0xbf4] sm:$0xf]
      %v1680 = vld [vmem:[%s1 + $0xbf8] sm:$0xf]
      %v1681 = vld [vmem:[%s1 + $0xbfc] sm:$0xf]
      %v1682 = vld [vmem:[%s2] sm:$0x3]
      %v1683 = vlaneseq
      %v1684 = vshrl.u32 %v1683, 7
      %v1685 = vadd.s32 %v1684, 8
      %v1686 = vlaneseq
      %v1687 = vand.u32 %v1686, 127
      %vm1688 = vcmp.eq.s32.totalorder %v1684, %v1687
      %vm1689 = vcmp.eq.s32.totalorder %v1685, %v1687
      %v1690 = vsel %vm1688, 1, 0
      %v1691 = vsel %vm1689, 1, 0
      %v1692 = vcvt.s32.f32 %v1690
      %v1693 = vcvt.s32.f32 %v1691
      %v1694 = vpack.c.bf16 %v1693, %v1692
      %v1695 = vpack.c.bf16 %v659, %v658
      %v1696 = vpack.c.bf16 %v661, %v660
      %v1697 = vpack.c.bf16 %v663, %v662
      %v1698 = vpack.c.bf16 %v665, %v664
      %v1699 = vpack.c.bf16 %v667, %v666
      %v1700 = vpack.c.bf16 %v669, %v668
      %v1701 = vpack.c.bf16 %v671, %v670
      %v1702 = vpack.c.bf16 %v673, %v672
      %v1703 = vpack.c.bf16 %v675, %v674
      %v1704 = vpack.c.bf16 %v677, %v676
      %v1705 = vpack.c.bf16 %v679, %v678
      %v1706 = vpack.c.bf16 %v681, %v680
      %v1707 = vpack.c.bf16 %v683, %v682
      %v1708 = vpack.c.bf16 %v685, %v684
      %v1709 = vpack.c.bf16 %v687, %v686
      %v1710 = vpack.c.bf16 %v689, %v688
      %v1711 = vpack.c.bf16 %v691, %v690
      %v1712 = vpack.c.bf16 %v693, %v692
      %v1713 = vpack.c.bf16 %v695, %v694
      %v1714 = vpack.c.bf16 %v697, %v696
      %v1715 = vpack.c.bf16 %v699, %v698
      %v1716 = vpack.c.bf16 %v701, %v700
      %v1717 = vpack.c.bf16 %v703, %v702
      %v1718 = vpack.c.bf16 %v705, %v704
      %v1719 = vpack.c.bf16 %v707, %v706
      %v1720 = vpack.c.bf16 %v709, %v708
      %v1721 = vpack.c.bf16 %v711, %v710
      %v1722 = vpack.c.bf16 %v713, %v712
      %v1723 = vpack.c.bf16 %v715, %v714
      %v1724 = vpack.c.bf16 %v717, %v716
      %v1725 = vpack.c.bf16 %v719, %v718
      %v1726 = vpack.c.bf16 %v721, %v720
      %v1727 = vpack.c.bf16 %v723, %v722
      %v1728 = vpack.c.bf16 %v725, %v724
      %v1729 = vpack.c.bf16 %v727, %v726
      %v1730 = vpack.c.bf16 %v729, %v728
      %v1731 = vpack.c.bf16 %v731, %v730
      %v1732 = vpack.c.bf16 %v733, %v732
      %v1733 = vpack.c.bf16 %v735, %v734
      %v1734 = vpack.c.bf16 %v737, %v736
      %v1735 = vpack.c.bf16 %v739, %v738
      %v1736 = vpack.c.bf16 %v741, %v740
      %v1737 = vpack.c.bf16 %v743, %v742
      %v1738 = vpack.c.bf16 %v745, %v744
      %v1739 = vpack.c.bf16 %v747, %v746
      %v1740 = vpack.c.bf16 %v749, %v748
      %v1741 = vpack.c.bf16 %v751, %v750
      %v1742 = vpack.c.bf16 %v753, %v752
      %v1743 = vpack.c.bf16 %v755, %v754
      %v1744 = vpack.c.bf16 %v757, %v756
      %v1745 = vpack.c.bf16 %v759, %v758
      %v1746 = vpack.c.bf16 %v761, %v760
      %v1747 = vpack.c.bf16 %v763, %v762
      %v1748 = vpack.c.bf16 %v765, %v764
      %v1749 = vpack.c.bf16 %v767, %v766
      %v1750 = vpack.c.bf16 %v769, %v768
      %v1751 = vpack.c.bf16 %v771, %v770
      %v1752 = vpack.c.bf16 %v773, %v772
      %v1753 = vpack.c.bf16 %v775, %v774
      %v1754 = vpack.c.bf16 %v777, %v776
      %v1755 = vpack.c.bf16 %v779, %v778
      %v1756 = vpack.c.bf16 %v781, %v780
      %v1757 = vpack.c.bf16 %v783, %v782
      %v1758 = vpack.c.bf16 %v785, %v784
      %v1759 = vpack.c.bf16 %v787, %v786
      %v1760 = vpack.c.bf16 %v789, %v788
      %v1761 = vpack.c.bf16 %v791, %v790
      %v1762 = vpack.c.bf16 %v793, %v792
      %v1763 = vpack.c.bf16 %v795, %v794
      %v1764 = vpack.c.bf16 %v797, %v796
      %v1765 = vpack.c.bf16 %v799, %v798
      %v1766 = vpack.c.bf16 %v801, %v800
      %v1767 = vpack.c.bf16 %v803, %v802
      %v1768 = vpack.c.bf16 %v805, %v804
      %v1769 = vpack.c.bf16 %v807, %v806
      %v1770 = vpack.c.bf16 %v809, %v808
      %v1771 = vpack.c.bf16 %v811, %v810
      %v1772 = vpack.c.bf16 %v813, %v812
      %v1773 = vpack.c.bf16 %v815, %v814
      %v1774 = vpack.c.bf16 %v817, %v816
      %v1775 = vpack.c.bf16 %v819, %v818
      %v1776 = vpack.c.bf16 %v821, %v820
      %v1777 = vpack.c.bf16 %v823, %v822
      %v1778 = vpack.c.bf16 %v825, %v824
      %v1779 = vpack.c.bf16 %v827, %v826
      %v1780 = vpack.c.bf16 %v829, %v828
      %v1781 = vpack.c.bf16 %v831, %v830
      %v1782 = vpack.c.bf16 %v833, %v832
      %v1783 = vpack.c.bf16 %v835, %v834
      %v1784 = vpack.c.bf16 %v837, %v836
      %v1785 = vpack.c.bf16 %v839, %v838
      %v1786 = vpack.c.bf16 %v841, %v840
      %v1787 = vpack.c.bf16 %v843, %v842
      %v1788 = vpack.c.bf16 %v845, %v844
      %v1789 = vpack.c.bf16 %v847, %v846
      %v1790 = vpack.c.bf16 %v849, %v848
      %v1791 = vpack.c.bf16 %v851, %v850
      %v1792 = vpack.c.bf16 %v853, %v852
      %v1793 = vpack.c.bf16 %v855, %v854
      %v1794 = vpack.c.bf16 %v857, %v856
      %v1795 = vpack.c.bf16 %v859, %v858
      %v1796 = vpack.c.bf16 %v861, %v860
      %v1797 = vpack.c.bf16 %v863, %v862
      %v1798 = vpack.c.bf16 %v865, %v864
      %v1799 = vpack.c.bf16 %v867, %v866
      %v1800 = vpack.c.bf16 %v869, %v868
      %v1801 = vpack.c.bf16 %v871, %v870
      %v1802 = vpack.c.bf16 %v873, %v872
      %v1803 = vpack.c.bf16 %v875, %v874
      %v1804 = vpack.c.bf16 %v877, %v876
      %v1805 = vpack.c.bf16 %v879, %v878
      %v1806 = vpack.c.bf16 %v881, %v880
      %v1807 = vpack.c.bf16 %v883, %v882
      %v1808 = vpack.c.bf16 %v885, %v884
      %v1809 = vpack.c.bf16 %v887, %v886
      %v1810 = vpack.c.bf16 %v889, %v888
      %v1811 = vpack.c.bf16 %v891, %v890
      %v1812 = vpack.c.bf16 %v893, %v892
      %v1813 = vpack.c.bf16 %v895, %v894
      %v1814 = vpack.c.bf16 %v897, %v896
      %v1815 = vpack.c.bf16 %v899, %v898
      %v1816 = vpack.c.bf16 %v901, %v900
      %v1817 = vpack.c.bf16 %v903, %v902
      %v1818 = vpack.c.bf16 %v905, %v904
      %v1819 = vpack.c.bf16 %v907, %v906
      %v1820 = vpack.c.bf16 %v909, %v908
      %v1821 = vpack.c.bf16 %v911, %v910
      %v1822 = vpack.c.bf16 %v913, %v912
      %vm1823 = vcmask 130048
      %v1825 = vsel %vm1823, %v1694, 0
      %v1828 = vsel %vm1823, %v1695, 0
      %v1831 = vsel %vm1823, %v1696, 0
      %v1834 = vsel %vm1823, %v1697, 0
      %v1837 = vsel %vm1823, %v1698, 0
      %v1840 = vsel %vm1823, %v1699, 0
      %v1843 = vsel %vm1823, %v1700, 0
      %v1846 = vsel %vm1823, %v1701, 0
      %v1849 = vsel %vm1823, %v1702, 0
      %v1852 = vsel %vm1823, %v1703, 0
      %v1855 = vsel %vm1823, %v1704, 0
      %v1858 = vsel %vm1823, %v1705, 0
      %v1861 = vsel %vm1823, %v1706, 0
      %v1864 = vsel %vm1823, %v1707, 0
      %v1867 = vsel %vm1823, %v1708, 0
      %v1870 = vsel %vm1823, %v1709, 0
      %v1873 = vsel %vm1823, %v1710, 0
      %v1876 = vsel %vm1823, %v1711, 0
      %v1879 = vsel %vm1823, %v1712, 0
      %v1882 = vsel %vm1823, %v1713, 0
      %v1885 = vsel %vm1823, %v1714, 0
      %v1888 = vsel %vm1823, %v1715, 0
      %v1891 = vsel %vm1823, %v1716, 0
      %v1894 = vsel %vm1823, %v1717, 0
      %v1897 = vsel %vm1823, %v1718, 0
      %v1900 = vsel %vm1823, %v1719, 0
      %v1903 = vsel %vm1823, %v1720, 0
      %v1906 = vsel %vm1823, %v1721, 0
      %v1909 = vsel %vm1823, %v1722, 0
      %v1912 = vsel %vm1823, %v1723, 0
      %v1915 = vsel %vm1823, %v1724, 0
      %v1918 = vsel %vm1823, %v1725, 0
      %v1921 = vsel %vm1823, %v1726, 0
      %v1924 = vsel %vm1823, %v1727, 0
      %v1927 = vsel %vm1823, %v1728, 0
      %v1930 = vsel %vm1823, %v1729, 0
      %v1933 = vsel %vm1823, %v1730, 0
      %v1936 = vsel %vm1823, %v1731, 0
      %v1939 = vsel %vm1823, %v1732, 0
      %v1942 = vsel %vm1823, %v1733, 0
      %v1945 = vsel %vm1823, %v1734, 0
      %v1948 = vsel %vm1823, %v1735, 0
      %v1951 = vsel %vm1823, %v1736, 0
      %v1954 = vsel %vm1823, %v1737, 0
      %v1957 = vsel %vm1823, %v1738, 0
      %v1960 = vsel %vm1823, %v1739, 0
      %v1963 = vsel %vm1823, %v1740, 0
      %v1966 = vsel %vm1823, %v1741, 0
      %v1969 = vsel %vm1823, %v1742, 0
      %v1972 = vsel %vm1823, %v1743, 0
      %v1975 = vsel %vm1823, %v1744, 0
      %v1978 = vsel %vm1823, %v1745, 0
      %v1981 = vsel %vm1823, %v1746, 0
      %v1984 = vsel %vm1823, %v1747, 0
      %v1987 = vsel %vm1823, %v1748, 0
      %v1990 = vsel %vm1823, %v1749, 0
      %v1993 = vsel %vm1823, %v1750, 0
      %v1996 = vsel %vm1823, %v1751, 0
      %v1999 = vsel %vm1823, %v1752, 0
      %v2002 = vsel %vm1823, %v1753, 0
      %v2005 = vsel %vm1823, %v1754, 0
      %v2008 = vsel %vm1823, %v1755, 0
      %v2011 = vsel %vm1823, %v1756, 0
      %v2014 = vsel %vm1823, %v1757, 0
      %v2017 = vsel %vm1823, %v1758, 0
      %v2020 = vsel %vm1823, %v1759, 0
      %v2023 = vsel %vm1823, %v1760, 0
      %v2026 = vsel %vm1823, %v1761, 0
      %v2029 = vsel %vm1823, %v1762, 0
      %v2032 = vsel %vm1823, %v1763, 0
      %v2035 = vsel %vm1823, %v1764, 0
      %v2038 = vsel %vm1823, %v1765, 0
      %v2041 = vsel %vm1823, %v1766, 0
      %v2044 = vsel %vm1823, %v1767, 0
      %v2047 = vsel %vm1823, %v1768, 0
      %v2050 = vsel %vm1823, %v1769, 0
      %v2053 = vsel %vm1823, %v1770, 0
      %v2056 = vsel %vm1823, %v1771, 0
      %v2059 = vsel %vm1823, %v1772, 0
      %v2062 = vsel %vm1823, %v1773, 0
      %v2065 = vsel %vm1823, %v1774, 0
      %v2068 = vsel %vm1823, %v1775, 0
      %v2071 = vsel %vm1823, %v1776, 0
      %v2074 = vsel %vm1823, %v1777, 0
      %v2077 = vsel %vm1823, %v1778, 0
      %v2080 = vsel %vm1823, %v1779, 0
      %v2083 = vsel %vm1823, %v1780, 0
      %v2086 = vsel %vm1823, %v1781, 0
      %v2089 = vsel %vm1823, %v1782, 0
      %v2092 = vsel %vm1823, %v1783, 0
      %v2095 = vsel %vm1823, %v1784, 0
      %v2098 = vsel %vm1823, %v1785, 0
      %v2101 = vsel %vm1823, %v1786, 0
      %v2104 = vsel %vm1823, %v1787, 0
      %v2107 = vsel %vm1823, %v1788, 0
      %v2110 = vsel %vm1823, %v1789, 0
      %v2113 = vsel %vm1823, %v1790, 0
      %v2116 = vsel %vm1823, %v1791, 0
      %v2119 = vsel %vm1823, %v1792, 0
      %v2122 = vsel %vm1823, %v1793, 0
      %v2125 = vsel %vm1823, %v1794, 0
      %v2128 = vsel %vm1823, %v1795, 0
      %v2131 = vsel %vm1823, %v1796, 0
      %v2134 = vsel %vm1823, %v1797, 0
      %v2137 = vsel %vm1823, %v1798, 0
      %v2140 = vsel %vm1823, %v1799, 0
      %v2143 = vsel %vm1823, %v1800, 0
      %v2146 = vsel %vm1823, %v1801, 0
      %v2149 = vsel %vm1823, %v1802, 0
      %v2152 = vsel %vm1823, %v1803, 0
      %v2155 = vsel %vm1823, %v1804, 0
      %v2158 = vsel %vm1823, %v1805, 0
      %v2161 = vsel %vm1823, %v1806, 0
      %v2164 = vsel %vm1823, %v1807, 0
      %v2167 = vsel %vm1823, %v1808, 0
      %v2170 = vsel %vm1823, %v1809, 0
      %v2173 = vsel %vm1823, %v1810, 0
      %v2176 = vsel %vm1823, %v1811, 0
      %v2179 = vsel %vm1823, %v1812, 0
      %v2182 = vsel %vm1823, %v1813, 0
      %v2185 = vsel %vm1823, %v1814, 0
      %v2188 = vsel %vm1823, %v1815, 0
      %v2191 = vsel %vm1823, %v1816, 0
      %v2194 = vsel %vm1823, %v1817, 0
      %v2197 = vsel %vm1823, %v1818, 0
      %v2200 = vsel %vm1823, %v1819, 0
      %v2203 = vsel %vm1823, %v1820, 0
      %v2206 = vsel %vm1823, %v1821, 0
      %v2209 = vsel %vm1823, %v1822, 0
      %2211 = vmatprep.subr.bf16.mxu0 0
      %2212 = vmatpush1.bf16.xpose.msra.mxu0 %v1828
      %2213 = vmatprep.subr.bf16.mxu0 0
      %2214 = vmatpush1.bf16.xpose.msra.mxu0 %v1831
      %2215 = vmatprep.subr.bf16.mxu0 0
      %2216 = vmatpush1.bf16.xpose.msra.mxu0 %v1834
      %2217 = vmatprep.subr.bf16.mxu0 0
      %2218 = vmatpush1.bf16.xpose.msra.mxu0 %v1837
      %2219 = vmatprep.subr.bf16.mxu0 0
      %2220 = vmatpush1.bf16.xpose.msra.mxu0 %v1840
      %2221 = vmatprep.subr.bf16.mxu0 0
      %2222 = vmatpush1.bf16.xpose.msra.mxu0 %v1843
      %2223 = vmatprep.subr.bf16.mxu0 0
      %2224 = vmatpush1.bf16.xpose.msra.mxu0 %v1846
      %2225 = vmatprep.subr.bf16.mxu0 0
      %2226 = vmatpush1.bf16.xpose.msra.mxu0 %v1849
      %2227 = vmatprep.subr.bf16.mxu0 0
      %2228 = vmatpush1.bf16.xpose.msra.mxu0 %v1852
      %2229 = vmatprep.subr.bf16.mxu0 0
      %2230 = vmatpush1.bf16.xpose.msra.mxu0 %v1855
      %2231 = vmatprep.subr.bf16.mxu0 0
      %2232 = vmatpush1.bf16.xpose.msra.mxu0 %v1858
      %2233 = vmatprep.subr.bf16.mxu0 0
      %2234 = vmatpush1.bf16.xpose.msra.mxu0 %v1861
      %2235 = vmatprep.subr.bf16.mxu0 0
      %2236 = vmatpush1.bf16.xpose.msra.mxu0 %v1864
      %2237 = vmatprep.subr.bf16.mxu0 0
      %2238 = vmatpush1.bf16.xpose.msra.mxu0 %v1867
      %2239 = vmatprep.subr.bf16.mxu0 0
      %2240 = vmatpush1.bf16.xpose.msra.mxu0 %v1870
      %2241 = vmatprep.subr.bf16.mxu0 0
      %2242 = vmatpush1.bf16.xpose.msra.mxu0 %v1873
      %2243 = vmatprep.mubr.bf16.mxu0 0
      %2244 = vmatmul.mubr.bf16.gmra.mrb[0].mxu0 %v1825
      %v2245 = vpop.f32.mrb[0].mxu0
      %v2246 = vadd.f32 0.0, %v2245
      %v2247 = vpop.f32.mrb[0].mxu0
      %v2248 = vadd.f32 0.0, %v2247
      %v2249 = vpop.f32.mrb[0].mxu0
      %v2250 = vadd.f32 0.0, %v2249
      %v2251 = vpop.f32.mrb[0].mxu0
      %v2252 = vadd.f32 0.0, %v2251
      %2253 = vdwg.mxu0
      %2254 = vmatprep.subr.bf16.mxu0 0
      %2255 = vmatpush1.bf16.xpose.msra.mxu0 %v1876
      %2256 = vmatprep.subr.bf16.mxu0 0
      %2257 = vmatpush1.bf16.xpose.msra.mxu0 %v1879
      %2258 = vmatprep.subr.bf16.mxu0 0
      %2259 = vmatpush1.bf16.xpose.msra.mxu0 %v1882
      %2260 = vmatprep.subr.bf16.mxu0 0
      %2261 = vmatpush1.bf16.xpose.msra.mxu0 %v1885
      %2262 = vmatprep.subr.bf16.mxu0 0
      %2263 = vmatpush1.bf16.xpose.msra.mxu0 %v1888
      %2264 = vmatprep.subr.bf16.mxu0 0
      %2265 = vmatpush1.bf16.xpose.msra.mxu0 %v1891
      %2266 = vmatprep.subr.bf16.mxu0 0
      %2267 = vmatpush1.bf16.xpose.msra.mxu0 %v1894
      %2268 = vmatprep.subr.bf16.mxu0 0
      %2269 = vmatpush1.bf16.xpose.msra.mxu0 %v1897
      %2270 = vmatprep.subr.bf16.mxu0 0
      %2271 = vmatpush1.bf16.xpose.msra.mxu0 %v1900
      %2272 = vmatprep.subr.bf16.mxu0 0
      %2273 = vmatpush1.bf16.xpose.msra.mxu0 %v1903
      %2274 = vmatprep.subr.bf16.mxu0 0
      %2275 = vmatpush1.bf16.xpose.msra.mxu0 %v1906
      %2276 = vmatprep.subr.bf16.mxu0 0
      %2277 = vmatpush1.bf16.xpose.msra.mxu0 %v1909
      %2278 = vmatprep.subr.bf16.mxu0 0
      %2279 = vmatpush1.bf16.xpose.msra.mxu0 %v1912
      %2280 = vmatprep.subr.bf16.mxu0 0
      %2281 = vmatpush1.bf16.xpose.msra.mxu0 %v1915
      %2282 = vmatprep.subr.bf16.mxu0 0
      %2283 = vmatpush1.bf16.xpose.msra.mxu0 %v1918
      %2284 = vmatprep.subr.bf16.mxu0 0
      %2285 = vmatpush1.bf16.xpose.msra.mxu0 %v1921
      %2286 = vmatprep.mubr.bf16.mxu0 0
      %2287 = vmatmul.mubr.bf16.gmra.mrb[0].mxu0 %v1825
      %v2288 = vpop.f32.mrb[0].mxu0
      %v2289 = vadd.f32 0.0, %v2288
      %v2290 = vpop.f32.mrb[0].mxu0
      %v2291 = vadd.f32 0.0, %v2290
      %v2292 = vpop.f32.mrb[0].mxu0
      %v2293 = vadd.f32 0.0, %v2292
      %v2294 = vpop.f32.mrb[0].mxu0
      %v2295 = vadd.f32 0.0, %v2294
      %2296 = vdwg.mxu0
      %2297 = vmatprep.subr.bf16.mxu0 0
      %2298 = vmatpush1.bf16.xpose.msra.mxu0 %v1924
      %2299 = vmatprep.subr.bf16.mxu0 0
      %2300 = vmatpush1.bf16.xpose.msra.mxu0 %v1927
      %2301 = vmatprep.subr.bf16.mxu0 0
      %2302 = vmatpush1.bf16.xpose.msra.mxu0 %v1930
      %2303 = vmatprep.subr.bf16.mxu0 0
      %2304 = vmatpush1.bf16.xpose.msra.mxu0 %v1933
      %2305 = vmatprep.subr.bf16.mxu0 0
      %2306 = vmatpush1.bf16.xpose.msra.mxu0 %v1936
      %2307 = vmatprep.subr.bf16.mxu0 0
      %2308 = vmatpush1.bf16.xpose.msra.mxu0 %v1939
      %2309 = vmatprep.subr.bf16.mxu0 0
      %2310 = vmatpush1.bf16.xpose.msra.mxu0 %v1942
      %2311 = vmatprep.subr.bf16.mxu0 0
      %2312 = vmatpush1.bf16.xpose.msra.mxu0 %v1945
      %2313 = vmatprep.subr.bf16.mxu0 0
      %2314 = vmatpush1.bf16.xpose.msra.mxu0 %v1948
      %2315 = vmatprep.subr.bf16.mxu0 0
      %2316 = vmatpush1.bf16.xpose.msra.mxu0 %v1951
      %2317 = vmatprep.subr.bf16.mxu0 0
      %2318 = vmatpush1.bf16.xpose.msra.mxu0 %v1954
      %2319 = vmatprep.subr.bf16.mxu0 0
      %2320 = vmatpush1.bf16.xpose.msra.mxu0 %v1957
      %2321 = vmatprep.subr.bf16.mxu0 0
      %2322 = vmatpush1.bf16.xpose.msra.mxu0 %v1960
      %2323 = vmatprep.subr.bf16.mxu0 0
      %2324 = vmatpush1.bf16.xpose.msra.mxu0 %v1963
      %2325 = vmatprep.subr.bf16.mxu0 0
      %2326 = vmatpush1.bf16.xpose.msra.mxu0 %v1966
      %2327 = vmatprep.subr.bf16.mxu0 0
      %2328 = vmatpush1.bf16.xpose.msra.mxu0 %v1969
      %2329 = vmatprep.mubr.bf16.mxu0 0
      %2330 = vmatmul.mubr.bf16.gmra.mrb[0].mxu0 %v1825
      %v2331 = vpop.f32.mrb[0].mxu0
      %v2332 = vadd.f32 0.0, %v2331
      %v2333 = vpop.f32.mrb[0].mxu0
      %v2334 = vadd.f32 0.0, %v2333
      %v2335 = vpop.f32.mrb[0].mxu0
      %v2336 = vadd.f32 0.0, %v2335
      %v2337 = vpop.f32.mrb[0].mxu0
      %v2338 = vadd.f32 0.0, %v2337
      %2339 = vdwg.mxu0
      %2340 = vmatprep.subr.bf16.mxu0 0
      %2341 = vmatpush1.bf16.xpose.msra.mxu0 %v1972
      %2342 = vmatprep.subr.bf16.mxu0 0
      %2343 = vmatpush1.bf16.xpose.msra.mxu0 %v1975
      %2344 = vmatprep.subr.bf16.mxu0 0
      %2345 = vmatpush1.bf16.xpose.msra.mxu0 %v1978
      %2346 = vmatprep.subr.bf16.mxu0 0
      %2347 = vmatpush1.bf16.xpose.msra.mxu0 %v1981
      %2348 = vmatprep.subr.bf16.mxu0 0
      %2349 = vmatpush1.bf16.xpose.msra.mxu0 %v1984
      %2350 = vmatprep.subr.bf16.mxu0 0
      %2351 = vmatpush1.bf16.xpose.msra.mxu0 %v1987
      %2352 = vmatprep.subr.bf16.mxu0 0
      %2353 = vmatpush1.bf16.xpose.msra.mxu0 %v1990
      %2354 = vmatprep.subr.bf16.mxu0 0
      %2355 = vmatpush1.bf16.xpose.msra.mxu0 %v1993
      %2356 = vmatprep.subr.bf16.mxu0 0
      %2357 = vmatpush1.bf16.xpose.msra.mxu0 %v1996
      %2358 = vmatprep.subr.bf16.mxu0 0
      %2359 = vmatpush1.bf16.xpose.msra.mxu0 %v1999
      %2360 = vmatprep.subr.bf16.mxu0 0
      %2361 = vmatpush1.bf16.xpose.msra.mxu0 %v2002
      %2362 = vmatprep.subr.bf16.mxu0 0
      %2363 = vmatpush1.bf16.xpose.msra.mxu0 %v2005
      %2364 = vmatprep.subr.bf16.mxu0 0
      %2365 = vmatpush1.bf16.xpose.msra.mxu0 %v2008
      %2366 = vmatprep.subr.bf16.mxu0 0
      %2367 = vmatpush1.bf16.xpose.msra.mxu0 %v2011
      %2368 = vmatprep.subr.bf16.mxu0 0
      %2369 = vmatpush1.bf16.xpose.msra.mxu0 %v2014
      %2370 = vmatprep.subr.bf16.mxu0 0
      %2371 = vmatpush1.bf16.xpose.msra.mxu0 %v2017
      %2372 = vmatprep.mubr.bf16.mxu0 0
      %2373 = vmatmul.mubr.bf16.gmra.mrb[0].mxu0 %v1825
      %v2374 = vpop.f32.mrb[0].mxu0
      %v2375 = vadd.f32 0.0, %v2374
      %v2376 = vpop.f32.mrb[0].mxu0
      %v2377 = vadd.f32 0.0, %v2376
      %v2378 = vpop.f32.mrb[0].mxu0
      %v2379 = vadd.f32 0.0, %v2378
      %v2380 = vpop.f32.mrb[0].mxu0
      %v2381 = vadd.f32 0.0, %v2380
      %2382 = vdwg.mxu0
      %2383 = vmatprep.subr.bf16.mxu0 0
      %2384 = vmatpush1.bf16.xpose.msra.mxu0 %v2020
      %2385 = vmatprep.subr.bf16.mxu0 0
      %2386 = vmatpush1.bf16.xpose.msra.mxu0 %v2023
      %2387 = vmatprep.subr.bf16.mxu0 0
      %2388 = vmatpush1.bf16.xpose.msra.mxu0 %v2026
      %2389 = vmatprep.subr.bf16.mxu0 0
      %2390 = vmatpush1.bf16.xpose.msra.mxu0 %v2029
      %2391 = vmatprep.subr.bf16.mxu0 0
      %2392 = vmatpush1.bf16.xpose.msra.mxu0 %v2032
      %2393 = vmatprep.subr.bf16.mxu0 0
      %2394 = vmatpush1.bf16.xpose.msra.mxu0 %v2035
      %2395 = vmatprep.subr.bf16.mxu0 0
      %2396 = vmatpush1.bf16.xpose.msra.mxu0 %v2038
      %2397 = vmatprep.subr.bf16.mxu0 0
      %2398 = vmatpush1.bf16.xpose.msra.mxu0 %v2041
      %2399 = vmatprep.subr.bf16.mxu0 0
      %2400 = vmatpush1.bf16.xpose.msra.mxu0 %v2044
      %2401 = vmatprep.subr.bf16.mxu0 0
      %2402 = vmatpush1.bf16.xpose.msra.mxu0 %v2047
      %2403 = vmatprep.subr.bf16.mxu0 0
      %2404 = vmatpush1.bf16.xpose.msra.mxu0 %v2050
      %2405 = vmatprep.subr.bf16.mxu0 0
      %2406 = vmatpush1.bf16.xpose.msra.mxu0 %v2053
      %2407 = vmatprep.subr.bf16.mxu0 0
      %2408 = vmatpush1.bf16.xpose.msra.mxu0 %v2056
      %2409 = vmatprep.subr.bf16.mxu0 0
      %2410 = vmatpush1.bf16.xpose.msra.mxu0 %v2059
      %2411 = vmatprep.subr.bf16.mxu0 0
      %2412 = vmatpush1.bf16.xpose.msra.mxu0 %v2062
      %2413 = vmatprep.subr.bf16.mxu0 0
      %2414 = vmatpush1.bf16.xpose.msra.mxu0 %v2065
      %2415 = vmatprep.mubr.bf16.mxu0 0
      %2416 = vmatmul.mubr.bf16.gmra.mrb[0].mxu0 %v1825
      %v2417 = vpop.f32.mrb[0].mxu0
      %v2418 = vadd.f32 0.0, %v2417
      %v2419 = vpop.f32.mrb[0].mxu0
      %v2420 = vadd.f32 0.0, %v2419
      %v2421 = vpop.f32.mrb[0].mxu0
      %v2422 = vadd.f32 0.0, %v2421
      %v2423 = vpop.f32.mrb[0].mxu0
      %v2424 = vadd.f32 0.0, %v2423
      %2425 = vdwg.mxu0
      %2426 = vmatprep.subr.bf16.mxu0 0
      %2427 = vmatpush1.bf16.xpose.msra.mxu0 %v2068
      %2428 = vmatprep.subr.bf16.mxu0 0
      %2429 = vmatpush1.bf16.xpose.msra.mxu0 %v2071
      %2430 = vmatprep.subr.bf16.mxu0 0
      %2431 = vmatpush1.bf16.xpose.msra.mxu0 %v2074
      %2432 = vmatprep.subr.bf16.mxu0 0
      %2433 = vmatpush1.bf16.xpose.msra.mxu0 %v2077
      %2434 = vmatprep.subr.bf16.mxu0 0
      %2435 = vmatpush1.bf16.xpose.msra.mxu0 %v2080
      %2436 = vmatprep.subr.bf16.mxu0 0
      %2437 = vmatpush1.bf16.xpose.msra.mxu0 %v2083
      %2438 = vmatprep.subr.bf16.mxu0 0
      %2439 = vmatpush1.bf16.xpose.msra.mxu0 %v2086
      %2440 = vmatprep.subr.bf16.mxu0 0
      %2441 = vmatpush1.bf16.xpose.msra.mxu0 %v2089
      %2442 = vmatprep.subr.bf16.mxu0 0
      %2443 = vmatpush1.bf16.xpose.msra.mxu0 %v2092
      %2444 = vmatprep.subr.bf16.mxu0 0
      %2445 = vmatpush1.bf16.xpose.msra.mxu0 %v2095
      %2446 = vmatprep.subr.bf16.mxu0 0
      %2447 = vmatpush1.bf16.xpose.msra.mxu0 %v2098
      %2448 = vmatprep.subr.bf16.mxu0 0
      %2449 = vmatpush1.bf16.xpose.msra.mxu0 %v2101
      %2450 = vmatprep.subr.bf16.mxu0 0
      %2451 = vmatpush1.bf16.xpose.msra.mxu0 %v2104
      %2452 = vmatprep.subr.bf16.mxu0 0
      %2453 = vmatpush1.bf16.xpose.msra.mxu0 %v2107
      %2454 = vmatprep.subr.bf16.mxu0 0
      %2455 = vmatpush1.bf16.xpose.msra.mxu0 %v2110
      %2456 = vmatprep.subr.bf16.mxu0 0
      %2457 = vmatpush1.bf16.xpose.msra.mxu0 %v2113
      %2458 = vmatprep.mubr.bf16.mxu0 0
      %2459 = vmatmul.mubr.bf16.gmra.mrb[0].mxu0 %v1825
      %v2460 = vpop.f32.mrb[0].mxu0
      %v2461 = vadd.f32 0.0, %v2460
      %v2462 = vpop.f32.mrb[0].mxu0
      %v2463 = vadd.f32 0.0, %v2462
      %v2464 = vpop.f32.mrb[0].mxu0
      %v2465 = vadd.f32 0.0, %v2464
      %v2466 = vpop.f32.mrb[0].mxu0
      %v2467 = vadd.f32 0.0, %v2466
      %2468 = vdwg.mxu0
      %2469 = vmatprep.subr.bf16.mxu0 0
      %2470 = vmatpush1.bf16.xpose.msra.mxu0 %v2116
      %2471 = vmatprep.subr.bf16.mxu0 0
      %2472 = vmatpush1.bf16.xpose.msra.mxu0 %v2119
      %2473 = vmatprep.subr.bf16.mxu0 0
      %2474 = vmatpush1.bf16.xpose.msra.mxu0 %v2122
      %2475 = vmatprep.subr.bf16.mxu0 0
      %2476 = vmatpush1.bf16.xpose.msra.mxu0 %v2125
      %2477 = vmatprep.subr.bf16.mxu0 0
      %2478 = vmatpush1.bf16.xpose.msra.mxu0 %v2128
      %2479 = vmatprep.subr.bf16.mxu0 0
      %2480 = vmatpush1.bf16.xpose.msra.mxu0 %v2131
      %2481 = vmatprep.subr.bf16.mxu0 0
      %2482 = vmatpush1.bf16.xpose.msra.mxu0 %v2134
      %2483 = vmatprep.subr.bf16.mxu0 0
      %2484 = vmatpush1.bf16.xpose.msra.mxu0 %v2137
      %2485 = vmatprep.subr.bf16.mxu0 0
      %2486 = vmatpush1.bf16.xpose.msra.mxu0 %v2140
      %2487 = vmatprep.subr.bf16.mxu0 0
      %2488 = vmatpush1.bf16.xpose.msra.mxu0 %v2143
      %2489 = vmatprep.subr.bf16.mxu0 0
      %2490 = vmatpush1.bf16.xpose.msra.mxu0 %v2146
      %2491 = vmatprep.subr.bf16.mxu0 0
      %2492 = vmatpush1.bf16.xpose.msra.mxu0 %v2149
      %2493 = vmatprep.subr.bf16.mxu0 0
      %2494 = vmatpush1.bf16.xpose.msra.mxu0 %v2152
      %2495 = vmatprep.subr.bf16.mxu0 0
      %2496 = vmatpush1.bf16.xpose.msra.mxu0 %v2155
      %2497 = vmatprep.subr.bf16.mxu0 0
      %2498 = vmatpush1.bf16.xpose.msra.mxu0 %v2158
      %2499 = vmatprep.subr.bf16.mxu0 0
      %2500 = vmatpush1.bf16.xpose.msra.mxu0 %v2161
      %2501 = vmatprep.mubr.bf16.mxu0 0
      %2502 = vmatmul.mubr.bf16.gmra.mrb[0].mxu0 %v1825
      %v2503 = vpop.f32.mrb[0].mxu0
      %v2504 = vadd.f32 0.0, %v2503
      %v2505 = vpop.f32.mrb[0].mxu0
      %v2506 = vadd.f32 0.0, %v2505
      %v2507 = vpop.f32.mrb[0].mxu0
      %v2508 = vadd.f32 0.0, %v2507
      %v2509 = vpop.f32.mrb[0].mxu0
      %v2510 = vadd.f32 0.0, %v2509
      %2511 = vdwg.mxu0
      %2512 = vmatprep.subr.bf16.mxu0 0
      %2513 = vmatpush1.bf16.xpose.msra.mxu0 %v2164
      %2514 = vmatprep.subr.bf16.mxu0 0
      %2515 = vmatpush1.bf16.xpose.msra.mxu0 %v2167
      %2516 = vmatprep.subr.bf16.mxu0 0
      %2517 = vmatpush1.bf16.xpose.msra.mxu0 %v2170
      %2518 = vmatprep.subr.bf16.mxu0 0
      %2519 = vmatpush1.bf16.xpose.msra.mxu0 %v2173
      %2520 = vmatprep.subr.bf16.mxu0 0
      %2521 = vmatpush1.bf16.xpose.msra.mxu0 %v2176
      %2522 = vmatprep.subr.bf16.mxu0 0
      %2523 = vmatpush1.bf16.xpose.msra.mxu0 %v2179
      %2524 = vmatprep.subr.bf16.mxu0 0
      %2525 = vmatpush1.bf16.xpose.msra.mxu0 %v2182
      %2526 = vmatprep.subr.bf16.mxu0 0
      %2527 = vmatpush1.bf16.xpose.msra.mxu0 %v2185
      %2528 = vmatprep.subr.bf16.mxu0 0
      %2529 = vmatpush1.bf16.xpose.msra.mxu0 %v2188
      %2530 = vmatprep.subr.bf16.mxu0 0
      %2531 = vmatpush1.bf16.xpose.msra.mxu0 %v2191
      %2532 = vmatprep.subr.bf16.mxu0 0
      %2533 = vmatpush1.bf16.xpose.msra.mxu0 %v2194
      %2534 = vmatprep.subr.bf16.mxu0 0
      %2535 = vmatpush1.bf16.xpose.msra.mxu0 %v2197
      %2536 = vmatprep.subr.bf16.mxu0 0
      %2537 = vmatpush1.bf16.xpose.msra.mxu0 %v2200
      %2538 = vmatprep.subr.bf16.mxu0 0
      %2539 = vmatpush1.bf16.xpose.msra.mxu0 %v2203
      %2540 = vmatprep.subr.bf16.mxu0 0
      %2541 = vmatpush1.bf16.xpose.msra.mxu0 %v2206
      %2542 = vmatprep.subr.bf16.mxu0 0
      %2543 = vmatpush1.bf16.xpose.msra.mxu0 %v2209
      %2544 = vmatprep.mubr.bf16.mxu0 0
      %2545 = vmatmul.mubr.bf16.gmra.mrb[0].mxu0 %v1825
      %v2546 = vpop.f32.mrb[0].mxu0
      %v2547 = vadd.f32 0.0, %v2546
      %v2548 = vpop.f32.mrb[0].mxu0
      %v2549 = vadd.f32 0.0, %v2548
      %v2550 = vpop.f32.mrb[0].mxu0
      %v2551 = vadd.f32 0.0, %v2550
      %v2552 = vpop.f32.mrb[0].mxu0
      %v2553 = vadd.f32 0.0, %v2552
      %2554 = vdwg.mxu0
      %vm2587 = vcmask 1040384
      %v2588 = vrot.slane %v2246, 7
      %v2589 = vrot.slane %v2248, 7
      %v2590 = vrot.slane %v2289, 7
      %v2591 = vrot.slane %v2291, 7
      %v2592 = vrot.slane %v2332, 7
      %v2593 = vrot.slane %v2334, 7
      %v2594 = vrot.slane %v2375, 7
      %v2595 = vrot.slane %v2377, 7
      %v2596 = vrot.slane %v2418, 7
      %v2597 = vrot.slane %v2420, 7
      %v2598 = vrot.slane %v2461, 7
      %v2599 = vrot.slane %v2463, 7
      %v2600 = vrot.slane %v2504, 7
      %v2601 = vrot.slane %v2506, 7
      %v2602 = vrot.slane %v2547, 7
      %v2603 = vrot.slane %v2549, 7
      %v2604 = vrot.slane %v2250, 7
      %v2605 = vsel %vm2587, %v2588, %v2604
      %v2606 = vrot.slane %v2252, 7
      %v2607 = vsel %vm2587, %v2589, %v2606
      %v2608 = vrot.slane %v2293, 7
      %v2609 = vsel %vm2587, %v2590, %v2608
      %v2610 = vrot.slane %v2295, 7
      %v2611 = vsel %vm2587, %v2591, %v2610
      %v2612 = vrot.slane %v2336, 7
      %v2613 = vsel %vm2587, %v2592, %v2612
      %v2614 = vrot.slane %v2338, 7
      %v2615 = vsel %vm2587, %v2593, %v2614
      %v2616 = vrot.slane %v2379, 7
      %v2617 = vsel %vm2587, %v2594, %v2616
      %v2618 = vrot.slane %v2381, 7
      %v2619 = vsel %vm2587, %v2595, %v2618
      %v2620 = vrot.slane %v2422, 7
      %v2621 = vsel %vm2587, %v2596, %v2620
      %v2622 = vrot.slane %v2424, 7
      %v2623 = vsel %vm2587, %v2597, %v2622
      %v2624 = vrot.slane %v2465, 7
      %v2625 = vsel %vm2587, %v2598, %v2624
      %v2626 = vrot.slane %v2467, 7
      %v2627 = vsel %vm2587, %v2599, %v2626
      %v2628 = vrot.slane %v2508, 7
      %v2629 = vsel %vm2587, %v2600, %v2628
      %v2630 = vrot.slane %v2510, 7
      %v2631 = vsel %vm2587, %v2601, %v2630
      %v2632 = vrot.slane %v2551, 7
      %v2633 = vsel %vm2587, %v2602, %v2632
      %v2634 = vrot.slane %v2553, 7
      %v2635 = vsel %vm2587, %v2603, %v2634
      %v2684 = vsel %vm2587, 0.0, %v2588
      %v2685 = vsel %vm2587, 0.0, %v2589
      %v2686 = vsel %vm2587, 0.0, %v2590
      %v2687 = vsel %vm2587, 0.0, %v2591
      %v2688 = vsel %vm2587, 0.0, %v2592
      %v2689 = vsel %vm2587, 0.0, %v2593
      %v2690 = vsel %vm2587, 0.0, %v2594
      %v2691 = vsel %vm2587, 0.0, %v2595
      %v2692 = vsel %vm2587, 0.0, %v2596
      %v2693 = vsel %vm2587, 0.0, %v2597
      %v2694 = vsel %vm2587, 0.0, %v2598
      %v2695 = vsel %vm2587, 0.0, %v2599
      %v2696 = vsel %vm2587, 0.0, %v2600
      %v2697 = vsel %vm2587, 0.0, %v2601
      %v2698 = vsel %vm2587, 0.0, %v2602
      %v2699 = vsel %vm2587, 0.0, %v2603
      %v2700 = vsel %vm2587, %v2604, 0.0
      %v2701 = vsel %vm2587, %v2606, 0.0
      %v2702 = vsel %vm2587, %v2608, 0.0
      %v2703 = vsel %vm2587, %v2610, 0.0
      %v2704 = vsel %vm2587, %v2612, 0.0
      %v2705 = vsel %vm2587, %v2614, 0.0
      %v2706 = vsel %vm2587, %v2616, 0.0
      %v2707 = vsel %vm2587, %v2618, 0.0
      %v2708 = vsel %vm2587, %v2620, 0.0
      %v2709 = vsel %vm2587, %v2622, 0.0
      %v2710 = vsel %vm2587, %v2624, 0.0
      %v2711 = vsel %vm2587, %v2626, 0.0
      %v2712 = vsel %vm2587, %v2628, 0.0
      %v2713 = vsel %vm2587, %v2630, 0.0
      %v2714 = vsel %vm2587, %v2632, 0.0
      %v2715 = vsel %vm2587, %v2634, 0.0
      %v2716 = vpack.c.bf16 %v2605, %v2684
      %v2717 = vpack.c.bf16 %v2607, %v2685
      %v2718 = vpack.c.bf16 %v2609, %v2686
      %v2719 = vpack.c.bf16 %v2611, %v2687
      %v2720 = vpack.c.bf16 %v2613, %v2688
      %v2721 = vpack.c.bf16 %v2615, %v2689
      %v2722 = vpack.c.bf16 %v2617, %v2690
      %v2723 = vpack.c.bf16 %v2619, %v2691
      %v2724 = vpack.c.bf16 %v2621, %v2692
      %v2725 = vpack.c.bf16 %v2623, %v2693
      %v2726 = vpack.c.bf16 %v2625, %v2694
      %v2727 = vpack.c.bf16 %v2627, %v2695
      %v2728 = vpack.c.bf16 %v2629, %v2696
      %v2729 = vpack.c.bf16 %v2631, %v2697
      %v2730 = vpack.c.bf16 %v2633, %v2698
      %v2731 = vpack.c.bf16 %v2635, %v2699
      %v2732 = vpack.c.bf16 %v2700, %v2700
      %v2733 = vpack.c.bf16 %v2701, %v2701
      %v2734 = vpack.c.bf16 %v2702, %v2702
      %v2735 = vpack.c.bf16 %v2703, %v2703
      %v2736 = vpack.c.bf16 %v2704, %v2704
      %v2737 = vpack.c.bf16 %v2705, %v2705
      %v2738 = vpack.c.bf16 %v2706, %v2706
      %v2739 = vpack.c.bf16 %v2707, %v2707
      %v2740 = vpack.c.bf16 %v2708, %v2708
      %v2741 = vpack.c.bf16 %v2709, %v2709
      %v2742 = vpack.c.bf16 %v2710, %v2710
      %v2743 = vpack.c.bf16 %v2711, %v2711
      %v2744 = vpack.c.bf16 %v2712, %v2712
      %v2745 = vpack.c.bf16 %v2713, %v2713
      %v2746 = vpack.c.bf16 %v2714, %v2714
      %v2747 = vpack.c.bf16 %v2715, %v2715
      %vm2748 = vsmask.f32 7424
      %v2750 = vshrl.u32 %v2716, 16
      %v2752 = vshll.u32 %v2716, 16
      %v2754 = vrot.slane %v2752, 1
      %v2755 = vor.u32 %v2750, %v2754
      %v2757 = vshll.u32 %v2732, 16
      %v2759 = vrot.slane %v2757, 1
      %v2760 = vsel %vm2748, %v2755, %v2759
      %v2762 = vshrl.u32 %v2717, 16
      %v2764 = vshll.u32 %v2717, 16
      %v2766 = vrot.slane %v2764, 1
      %v2767 = vor.u32 %v2762, %v2766
      %v2769 = vshll.u32 %v2733, 16
      %v2771 = vrot.slane %v2769, 1
      %v2772 = vsel %vm2748, %v2767, %v2771
      %v2774 = vshrl.u32 %v2718, 16
      %v2776 = vshll.u32 %v2718, 16
      %v2778 = vrot.slane %v2776, 1
      %v2779 = vor.u32 %v2774, %v2778
      %v2781 = vshll.u32 %v2734, 16
      %v2783 = vrot.slane %v2781, 1
      %v2784 = vsel %vm2748, %v2779, %v2783
      %v2786 = vshrl.u32 %v2719, 16
      %v2788 = vshll.u32 %v2719, 16
      %v2790 = vrot.slane %v2788, 1
      %v2791 = vor.u32 %v2786, %v2790
      %v2793 = vshll.u32 %v2735, 16
      %v2795 = vrot.slane %v2793, 1
      %v2796 = vsel %vm2748, %v2791, %v2795
      %vm2809 = vcmask 1046528
      %v2810 = vrot.slane %v2716, 1
      %v2811 = vrot.slane %v2732, 1
      %v2812 = vsel %vm2809, %v2810, %v2811
      %v2813 = vrot.slane %v2717, 1
      %v2814 = vrot.slane %v2733, 1
      %v2815 = vsel %vm2809, %v2813, %v2814
      %v2816 = vrot.slane %v2718, 1
      %v2817 = vrot.slane %v2734, 1
      %v2818 = vsel %vm2809, %v2816, %v2817
      %v2819 = vrot.slane %v2719, 1
      %v2820 = vrot.slane %v2735, 1
      %v2821 = vsel %vm2809, %v2819, %v2820
      %v3018 = vunpack.c.l.b16 %v914
      %v3019 = vunpack.c.l.b16 %v915
      %v3020 = vunpack.c.l.b16 %v916
      %v3021 = vunpack.c.l.b16 %v917
      %v3022 = vunpack.c.l.b16 %v918
      %v3023 = vunpack.c.l.b16 %v919
      %v3024 = vunpack.c.l.b16 %v920
      %v3025 = vunpack.c.l.b16 %v921
      %v3026 = vunpack.c.l.b16 %v922
      %v3027 = vunpack.c.l.b16 %v923
      %v3028 = vunpack.c.l.b16 %v924
      %v3029 = vunpack.c.l.b16 %v925
      %v3030 = vunpack.c.l.b16 %v926
      %v3031 = vunpack.c.l.b16 %v927
      %v3032 = vunpack.c.l.b16 %v928
      %v3033 = vunpack.c.l.b16 %v929
      %v3034 = vunpack.c.l.b16 %v930
      %v3035 = vunpack.c.l.b16 %v931
      %v3036 = vunpack.c.l.b16 %v932
      %v3037 = vunpack.c.l.b16 %v933
      %v3038 = vunpack.c.l.b16 %v934
      %v3039 = vunpack.c.l.b16 %v935
      %v3040 = vunpack.c.l.b16 %v936
      %v3041 = vunpack.c.l.b16 %v937
      %v3042 = vunpack.c.l.b16 %v938
      %v3043 = vunpack.c.l.b16 %v939
      %v3044 = vunpack.c.l.b16 %v940
      %v3045 = vunpack.c.l.b16 %v941
      %v3046 = vunpack.c.l.b16 %v942
      %v3047 = vunpack.c.l.b16 %v943
      %v3048 = vunpack.c.l.b16 %v944
      %v3049 = vunpack.c.l.b16 %v945
      %v3050 = vunpack.c.l.b16 %v946
      %v3051 = vunpack.c.l.b16 %v947
      %v3052 = vunpack.c.l.b16 %v948
      %v3053 = vunpack.c.l.b16 %v949
      %v3054 = vunpack.c.l.b16 %v950
      %v3055 = vunpack.c.l.b16 %v951
      %v3056 = vunpack.c.l.b16 %v952
      %v3057 = vunpack.c.l.b16 %v953
      %v3058 = vunpack.c.l.b16 %v954
      %v3059 = vunpack.c.l.b16 %v955
      %v3060 = vunpack.c.l.b16 %v956
      %v3061 = vunpack.c.l.b16 %v957
      %v3062 = vunpack.c.l.b16 %v958
      %v3063 = vunpack.c.l.b16 %v959
      %v3064 = vunpack.c.l.b16 %v960
      %v3065 = vunpack.c.l.b16 %v961
      %v3066 = vunpack.c.l.b16 %v962
      %v3067 = vunpack.c.l.b16 %v963
      %v3068 = vunpack.c.l.b16 %v964
      %v3069 = vunpack.c.l.b16 %v965
      %v3070 = vunpack.c.l.b16 %v966
      %v3071 = vunpack.c.l.b16 %v967
      %v3072 = vunpack.c.l.b16 %v968
      %v3073 = vunpack.c.l.b16 %v969
      %v3074 = vunpack.c.l.b16 %v970
      %v3075 = vunpack.c.l.b16 %v971
      %v3076 = vunpack.c.l.b16 %v972
      %v3077 = vunpack.c.l.b16 %v973
      %v3078 = vunpack.c.l.b16 %v974
      %v3079 = vunpack.c.l.b16 %v975
      %v3080 = vunpack.c.l.b16 %v976
      %v3081 = vunpack.c.l.b16 %v977
      %v3082 = vunpack.c.l.b16 %v978
      %v3083 = vunpack.c.l.b16 %v979
      %v3084 = vunpack.c.l.b16 %v980
      %v3085 = vunpack.c.l.b16 %v981
      %v3086 = vunpack.c.l.b16 %v982
      %v3087 = vunpack.c.l.b16 %v983
      %v3088 = vunpack.c.l.b16 %v984
      %v3089 = vunpack.c.l.b16 %v985
      %v3090 = vunpack.c.l.b16 %v986
      %v3091 = vunpack.c.l.b16 %v987
      %v3092 = vunpack.c.l.b16 %v988
      %v3093 = vunpack.c.l.b16 %v989
      %v3094 = vunpack.c.l.b16 %v990
      %v3095 = vunpack.c.l.b16 %v991
      %v3096 = vunpack.c.l.b16 %v992
      %v3097 = vunpack.c.l.b16 %v993
      %v3098 = vunpack.c.l.b16 %v994
      %v3099 = vunpack.c.l.b16 %v995
      %v3100 = vunpack.c.l.b16 %v996
      %v3101 = vunpack.c.l.b16 %v997
      %v3102 = vunpack.c.l.b16 %v998
      %v3103 = vunpack.c.l.b16 %v999
      %v3104 = vunpack.c.l.b16 %v1000
      %v3105 = vunpack.c.l.b16 %v1001
      %v3106 = vunpack.c.l.b16 %v1002
      %v3107 = vunpack.c.l.b16 %v1003
      %v3108 = vunpack.c.l.b16 %v1004
      %v3109 = vunpack.c.l.b16 %v1005
      %v3110 = vunpack.c.l.b16 %v1006
      %v3111 = vunpack.c.l.b16 %v1007
      %v3112 = vunpack.c.l.b16 %v1008
      %v3113 = vunpack.c.l.b16 %v1009
      %v3114 = vunpack.c.l.b16 %v1010
      %v3115 = vunpack.c.l.b16 %v1011
      %v3116 = vunpack.c.l.b16 %v1012
      %v3117 = vunpack.c.l.b16 %v1013
      %v3118 = vunpack.c.l.b16 %v1014
      %v3119 = vunpack.c.l.b16 %v1015
      %v3120 = vunpack.c.l.b16 %v1016
      %v3121 = vunpack.c.l.b16 %v1017
      %v3122 = vunpack.c.l.b16 %v1018
      %v3123 = vunpack.c.l.b16 %v1019
      %v3124 = vunpack.c.l.b16 %v1020
      %v3125 = vunpack.c.l.b16 %v1021
      %v3126 = vunpack.c.l.b16 %v1022
      %v3127 = vunpack.c.l.b16 %v1023
      %v3128 = vunpack.c.l.b16 %v1024
      %v3129 = vunpack.c.l.b16 %v1025
      %v3130 = vunpack.c.l.b16 %v1026
      %v3131 = vunpack.c.l.b16 %v1027
      %v3132 = vunpack.c.l.b16 %v1028
      %v3133 = vunpack.c.l.b16 %v1029
      %v3134 = vunpack.c.l.b16 %v1030
      %v3135 = vunpack.c.l.b16 %v1031
      %v3136 = vunpack.c.l.b16 %v1032
      %v3137 = vunpack.c.l.b16 %v1033
      %v3138 = vunpack.c.l.b16 %v1034
      %v3139 = vunpack.c.l.b16 %v1035
      %v3140 = vunpack.c.l.b16 %v1036
      %v3141 = vunpack.c.l.b16 %v1037
      %v3142 = vunpack.c.l.b16 %v1038
      %v3143 = vunpack.c.l.b16 %v1039
      %v3144 = vunpack.c.l.b16 %v1040
      %v3145 = vunpack.c.l.b16 %v1041
      %v3146 = vunpack.c.l.b16 %v1042
      %v3147 = vunpack.c.l.b16 %v1043
      %v3148 = vunpack.c.l.b16 %v1044
      %v3149 = vunpack.c.l.b16 %v1045
      %v3150 = vunpack.c.l.b16 %v1046
      %v3151 = vunpack.c.l.b16 %v1047
      %v3152 = vunpack.c.l.b16 %v1048
      %v3153 = vunpack.c.l.b16 %v1049
      %v3154 = vunpack.c.l.b16 %v1050
      %v3155 = vunpack.c.l.b16 %v1051
      %v3156 = vunpack.c.l.b16 %v1052
      %v3157 = vunpack.c.l.b16 %v1053
      %v3158 = vunpack.c.l.b16 %v1054
      %v3159 = vunpack.c.l.b16 %v1055
      %v3160 = vunpack.c.l.b16 %v1056
      %v3161 = vunpack.c.l.b16 %v1057
      %v3162 = vunpack.c.l.b16 %v1058
      %v3163 = vunpack.c.l.b16 %v1059
      %v3164 = vunpack.c.l.b16 %v1060
      %v3165 = vunpack.c.l.b16 %v1061
      %v3166 = vunpack.c.l.b16 %v1062
      %v3167 = vunpack.c.l.b16 %v1063
      %v3168 = vunpack.c.l.b16 %v1064
      %v3169 = vunpack.c.l.b16 %v1065
      %v3170 = vunpack.c.l.b16 %v1066
      %v3171 = vunpack.c.l.b16 %v1067
      %v3172 = vunpack.c.l.b16 %v1068
      %v3173 = vunpack.c.l.b16 %v1069
      %v3174 = vunpack.c.l.b16 %v1070
      %v3175 = vunpack.c.l.b16 %v1071
      %v3176 = vunpack.c.l.b16 %v1072
      %v3177 = vunpack.c.l.b16 %v1073
      %v3178 = vunpack.c.l.b16 %v1074
      %v3179 = vunpack.c.l.b16 %v1075
      %v3180 = vunpack.c.l.b16 %v1076
      %v3181 = vunpack.c.l.b16 %v1077
      %v3182 = vunpack.c.l.b16 %v1078
      %v3183 = vunpack.c.l.b16 %v1079
      %v3184 = vunpack.c.l.b16 %v1080
      %v3185 = vunpack.c.l.b16 %v1081
      %v3186 = vunpack.c.l.b16 %v1082
      %v3187 = vunpack.c.l.b16 %v1083
      %v3188 = vunpack.c.l.b16 %v1084
      %v3189 = vunpack.c.l.b16 %v1085
      %v3190 = vunpack.c.l.b16 %v1086
      %v3191 = vunpack.c.l.b16 %v1087
      %v3192 = vunpack.c.l.b16 %v1088
      %v3193 = vunpack.c.l.b16 %v1089
      %v3194 = vunpack.c.l.b16 %v1090
      %v3195 = vunpack.c.l.b16 %v1091
      %v3196 = vunpack.c.l.b16 %v1092
      %v3197 = vunpack.c.l.b16 %v1093
      %v3198 = vunpack.c.l.b16 %v1094
      %v3199 = vunpack.c.l.b16 %v1095
      %v3200 = vunpack.c.l.b16 %v1096
      %v3201 = vunpack.c.l.b16 %v1097
      %v3202 = vunpack.c.l.b16 %v1098
      %v3203 = vunpack.c.l.b16 %v1099
      %v3204 = vunpack.c.l.b16 %v1100
      %v3205 = vunpack.c.l.b16 %v1101
      %v3206 = vunpack.c.l.b16 %v1102
      %v3207 = vunpack.c.l.b16 %v1103
      %v3208 = vunpack.c.l.b16 %v1104
      %v3209 = vunpack.c.l.b16 %v1105
      %v3210 = vpack.c.b16 %v3019, %v3018
      %v3211 = vpack.c.b16 %v3021, %v3020
      %v3212 = vpack.c.b16 %v3023, %v3022
      %v3213 = vpack.c.b16 %v3025, %v3024
      %v3214 = vpack.c.b16 %v3027, %v3026
      %v3215 = vpack.c.b16 %v3029, %v3028
      %v3216 = vpack.c.b16 %v3031, %v3030
      %v3217 = vpack.c.b16 %v3033, %v3032
      %v3218 = vpack.c.b16 %v3035, %v3034
      %v3219 = vpack.c.b16 %v3037, %v3036
      %v3220 = vpack.c.b16 %v3039, %v3038
      %v3221 = vpack.c.b16 %v3041, %v3040
      %v3222 = vpack.c.b16 %v3043, %v3042
      %v3223 = vpack.c.b16 %v3045, %v3044
      %v3224 = vpack.c.b16 %v3047, %v3046
      %v3225 = vpack.c.b16 %v3049, %v3048
      %v3226 = vpack.c.b16 %v3051, %v3050
      %v3227 = vpack.c.b16 %v3053, %v3052
      %v3228 = vpack.c.b16 %v3055, %v3054
      %v3229 = vpack.c.b16 %v3057, %v3056
      %v3230 = vpack.c.b16 %v3059, %v3058
      %v3231 = vpack.c.b16 %v3061, %v3060
      %v3232 = vpack.c.b16 %v3063, %v3062
      %v3233 = vpack.c.b16 %v3065, %v3064
      %v3234 = vpack.c.b16 %v3067, %v3066
      %v3235 = vpack.c.b16 %v3069, %v3068
      %v3236 = vpack.c.b16 %v3071, %v3070
      %v3237 = vpack.c.b16 %v3073, %v3072
      %v3238 = vpack.c.b16 %v3075, %v3074
      %v3239 = vpack.c.b16 %v3077, %v3076
      %v3240 = vpack.c.b16 %v3079, %v3078
      %v3241 = vpack.c.b16 %v3081, %v3080
      %v3242 = vpack.c.b16 %v3083, %v3082
      %v3243 = vpack.c.b16 %v3085, %v3084
      %v3244 = vpack.c.b16 %v3087, %v3086
      %v3245 = vpack.c.b16 %v3089, %v3088
      %v3246 = vpack.c.b16 %v3091, %v3090
      %v3247 = vpack.c.b16 %v3093, %v3092
      %v3248 = vpack.c.b16 %v3095, %v3094
      %v3249 = vpack.c.b16 %v3097, %v3096
      %v3250 = vpack.c.b16 %v3099, %v3098
      %v3251 = vpack.c.b16 %v3101, %v3100
      %v3252 = vpack.c.b16 %v3103, %v3102
      %v3253 = vpack.c.b16 %v3105, %v3104
      %v3254 = vpack.c.b16 %v3107, %v3106
      %v3255 = vpack.c.b16 %v3109, %v3108
      %v3256 = vpack.c.b16 %v3111, %v3110
      %v3257 = vpack.c.b16 %v3113, %v3112
      %v3258 = vpack.c.b16 %v3115, %v3114
      %v3259 = vpack.c.b16 %v3117, %v3116
      %v3260 = vpack.c.b16 %v3119, %v3118
      %v3261 = vpack.c.b16 %v3121, %v3120
      %v3262 = vpack.c.b16 %v3123, %v3122
      %v3263 = vpack.c.b16 %v3125, %v3124
      %v3264 = vpack.c.b16 %v3127, %v3126
      %v3265 = vpack.c.b16 %v3129, %v3128
      %v3266 = vpack.c.b16 %v3131, %v3130
      %v3267 = vpack.c.b16 %v3133, %v3132
      %v3268 = vpack.c.b16 %v3135, %v3134
      %v3269 = vpack.c.b16 %v3137, %v3136
      %v3270 = vpack.c.b16 %v3139, %v3138
      %v3271 = vpack.c.b16 %v3141, %v3140
      %v3272 = vpack.c.b16 %v3143, %v3142
      %v3273 = vpack.c.b16 %v3145, %v3144
      %v3274 = vpack.c.b16 %v3147, %v3146
      %v3275 = vpack.c.b16 %v3149, %v3148
      %v3276 = vpack.c.b16 %v3151, %v3150
      %v3277 = vpack.c.b16 %v3153, %v3152
      %v3278 = vpack.c.b16 %v3155, %v3154
      %v3279 = vpack.c.b16 %v3157, %v3156
      %v3280 = vpack.c.b16 %v3159, %v3158
      %v3281 = vpack.c.b16 %v3161, %v3160
      %v3282 = vpack.c.b16 %v3163, %v3162
      %v3283 = vpack.c.b16 %v3165, %v3164
      %v3284 = vpack.c.b16 %v3167, %v3166
      %v3285 = vpack.c.b16 %v3169, %v3168
      %v3286 = vpack.c.b16 %v3171, %v3170
      %v3287 = vpack.c.b16 %v3173, %v3172
      %v3288 = vpack.c.b16 %v3175, %v3174
      %v3289 = vpack.c.b16 %v3177, %v3176
      %v3290 = vpack.c.b16 %v3179, %v3178
      %v3291 = vpack.c.b16 %v3181, %v3180
      %v3292 = vpack.c.b16 %v3183, %v3182
      %v3293 = vpack.c.b16 %v3185, %v3184
      %v3294 = vpack.c.b16 %v3187, %v3186
      %v3295 = vpack.c.b16 %v3189, %v3188
      %v3296 = vpack.c.b16 %v3191, %v3190
      %v3297 = vpack.c.b16 %v3193, %v3192
      %v3298 = vpack.c.b16 %v3195, %v3194
      %v3299 = vpack.c.b16 %v3197, %v3196
      %v3300 = vpack.c.b16 %v3199, %v3198
      %v3301 = vpack.c.b16 %v3201, %v3200
      %v3302 = vpack.c.b16 %v3203, %v3202
      %v3303 = vpack.c.b16 %v3205, %v3204
      %v3304 = vpack.c.b16 %v3207, %v3206
      %v3305 = vpack.c.b16 %v3209, %v3208
      %3402 = vmatprep.subr.bf16.mxu0 0
      %3403 = vmatpush1.bf16.msra.mxu0 %v3210
      %3404 = vmatprep.subr.bf16.mxu0 0
      %3405 = vmatpush1.bf16.msra.mxu0 %v3211
      %3406 = vmatprep.subr.bf16.mxu0 0
      %3407 = vmatpush1.bf16.msra.mxu0 %v3212
      %3408 = vmatprep.subr.bf16.mxu0 0
      %3409 = vmatpush1.bf16.msra.mxu0 %v3213
      %3410 = vmatprep.subr.bf16.mxu0 0
      %3411 = vmatpush1.bf16.msra.mxu0 %v3214
      %3412 = vmatprep.subr.bf16.mxu0 0
      %3413 = vmatpush1.bf16.msra.mxu0 %v3215
      %3414 = vmatprep.subr.bf16.mxu0 0
      %3415 = vmatpush1.bf16.msra.mxu0 %v3216
      %3416 = vmatprep.subr.bf16.mxu0 0
      %3417 = vmatpush1.bf16.msra.mxu0 %v3217
      %3418 = vmatprep.subr.bf16.mxu0 0
      %3419 = vmatpush1.bf16.msra.mxu0 %v3218
      %3420 = vmatprep.subr.bf16.mxu0 0
      %3421 = vmatpush1.bf16.msra.mxu0 %v3219
      %3422 = vmatprep.subr.bf16.mxu0 0
      %3423 = vmatpush1.bf16.msra.mxu0 %v3220
      %3424 = vmatprep.subr.bf16.mxu0 0
      %3425 = vmatpush1.bf16.msra.mxu0 %v3221
      %3426 = vmatprep.subr.bf16.mxu0 0
      %3427 = vmatpush1.bf16.msra.mxu0 %v3222
      %3428 = vmatprep.subr.bf16.mxu0 0
      %3429 = vmatpush1.bf16.msra.mxu0 %v3223
      %3430 = vmatprep.subr.bf16.mxu0 0
      %3431 = vmatpush1.bf16.msra.mxu0 %v3224
      %3432 = vmatprep.subr.bf16.mxu0 0
      %3433 = vmatpush1.bf16.msra.mxu0 %v3225
      %3434 = vmatprep.mubr.bf16.mxu0 %v2717
      %3435 = vmatmul.mubr.bf16.gmra.mrb[0].mxu0 %v2716
      %v3436 = vpop.f32.mrb[0].mxu0
      %v3437 = vadd.f32 0.0, %v3436
      %v3438 = vpop.f32.mrb[0].mxu0
      %v3439 = vpop.f32.mrb[0].mxu0
      %v3440 = vadd.f32 0.0, %v3439
      %v3441 = vpop.f32.mrb[0].mxu0
      %3442 = vdwg.mxu0
      %3443 = vmatprep.subr.bf16.mxu0 0
      %3444 = vmatpush1.bf16.msra.mxu0 %v3226
      %3445 = vmatprep.subr.bf16.mxu0 0
      %3446 = vmatpush1.bf16.msra.mxu0 %v3227
      %3447 = vmatprep.subr.bf16.mxu0 0
      %3448 = vmatpush1.bf16.msra.mxu0 %v3228
      %3449 = vmatprep.subr.bf16.mxu0 0
      %3450 = vmatpush1.bf16.msra.mxu0 %v3229
      %3451 = vmatprep.subr.bf16.mxu0 0
      %3452 = vmatpush1.bf16.msra.mxu0 %v3230
      %3453 = vmatprep.subr.bf16.mxu0 0
      %3454 = vmatpush1.bf16.msra.mxu0 %v3231
      %3455 = vmatprep.subr.bf16.mxu0 0
      %3456 = vmatpush1.bf16.msra.mxu0 %v3232
      %3457 = vmatprep.subr.bf16.mxu0 0
      %3458 = vmatpush1.bf16.msra.mxu0 %v3233
      %3459 = vmatprep.subr.bf16.mxu0 0
      %3460 = vmatpush1.bf16.msra.mxu0 %v3234
      %3461 = vmatprep.subr.bf16.mxu0 0
      %3462 = vmatpush1.bf16.msra.mxu0 %v3235
      %3463 = vmatprep.subr.bf16.mxu0 0
      %3464 = vmatpush1.bf16.msra.mxu0 %v3236
      %3465 = vmatprep.subr.bf16.mxu0 0
      %3466 = vmatpush1.bf16.msra.mxu0 %v3237
      %3467 = vmatprep.subr.bf16.mxu0 0
      %3468 = vmatpush1.bf16.msra.mxu0 %v3238
      %3469 = vmatprep.subr.bf16.mxu0 0
      %3470 = vmatpush1.bf16.msra.mxu0 %v3239
      %3471 = vmatprep.subr.bf16.mxu0 0
      %3472 = vmatpush1.bf16.msra.mxu0 %v3240
      %3473 = vmatprep.subr.bf16.mxu0 0
      %3474 = vmatpush1.bf16.msra.mxu0 %v3241
      %3475 = vmatprep.mubr.bf16.mxu0 %v2719
      %3476 = vmatmul.mubr.bf16.gmra.mrb[0].mxu0 %v2718
      %v3477 = vpop.f32.mrb[0].mxu0
      %v3478 = vadd.f32 %v3437, %v3477
      %v3479 = vpop.f32.mrb[0].mxu0
      %v3480 = vpop.f32.mrb[0].mxu0
      %v3481 = vadd.f32 %v3440, %v3480
      %v3482 = vpop.f32.mrb[0].mxu0
      %3483 = vdwg.mxu0
      %3484 = vmatprep.subr.bf16.mxu0 0
      %3485 = vmatpush1.bf16.msra.mxu0 %v3242
      %3486 = vmatprep.subr.bf16.mxu0 0
      %3487 = vmatpush1.bf16.msra.mxu0 %v3243
      %3488 = vmatprep.subr.bf16.mxu0 0
      %3489 = vmatpush1.bf16.msra.mxu0 %v3244
      %3490 = vmatprep.subr.bf16.mxu0 0
      %3491 = vmatpush1.bf16.msra.mxu0 %v3245
      %3492 = vmatprep.subr.bf16.mxu0 0
      %3493 = vmatpush1.bf16.msra.mxu0 %v3246
      %3494 = vmatprep.subr.bf16.mxu0 0
      %3495 = vmatpush1.bf16.msra.mxu0 %v3247
      %3496 = vmatprep.subr.bf16.mxu0 0
      %3497 = vmatpush1.bf16.msra.mxu0 %v3248
      %3498 = vmatprep.subr.bf16.mxu0 0
      %3499 = vmatpush1.bf16.msra.mxu0 %v3249
      %3500 = vmatprep.subr.bf16.mxu0 0
      %3501 = vmatpush1.bf16.msra.mxu0 %v3250
      %3502 = vmatprep.subr.bf16.mxu0 0
      %3503 = vmatpush1.bf16.msra.mxu0 %v3251
      %3504 = vmatprep.subr.bf16.mxu0 0
      %3505 = vmatpush1.bf16.msra.mxu0 %v3252
      %3506 = vmatprep.subr.bf16.mxu0 0
      %3507 = vmatpush1.bf16.msra.mxu0 %v3253
      %3508 = vmatprep.subr.bf16.mxu0 0
      %3509 = vmatpush1.bf16.msra.mxu0 %v3254
      %3510 = vmatprep.subr.bf16.mxu0 0
      %3511 = vmatpush1.bf16.msra.mxu0 %v3255
      %3512 = vmatprep.subr.bf16.mxu0 0
      %3513 = vmatpush1.bf16.msra.mxu0 %v3256
      %3514 = vmatprep.subr.bf16.mxu0 0
      %3515 = vmatpush1.bf16.msra.mxu0 %v3257
      %3516 = vmatprep.mubr.bf16.mxu0 %v2772
      %3517 = vmatmul.mubr.bf16.gmra.mrb[0].mxu0 %v2760
      %v3518 = vpop.f32.mrb[0].mxu0
      %v3519 = vadd.f32 %v3478, %v3518
      %v3520 = vpop.f32.mrb[0].mxu0
      %v3521 = vpop.f32.mrb[0].mxu0
      %v3522 = vadd.f32 %v3481, %v3521
      %v3523 = vpop.f32.mrb[0].mxu0
      %3524 = vdwg.mxu0
      %3525 = vmatprep.subr.bf16.mxu0 0
      %3526 = vmatpush1.bf16.msra.mxu0 %v3258
      %3527 = vmatprep.subr.bf16.mxu0 0
      %3528 = vmatpush1.bf16.msra.mxu0 %v3259
      %3529 = vmatprep.subr.bf16.mxu0 0
      %3530 = vmatpush1.bf16.msra.mxu0 %v3260
      %3531 = vmatprep.subr.bf16.mxu0 0
      %3532 = vmatpush1.bf16.msra.mxu0 %v3261
      %3533 = vmatprep.subr.bf16.mxu0 0
      %3534 = vmatpush1.bf16.msra.mxu0 %v3262
      %3535 = vmatprep.subr.bf16.mxu0 0
      %3536 = vmatpush1.bf16.msra.mxu0 %v3263
      %3537 = vmatprep.subr.bf16.mxu0 0
      %3538 = vmatpush1.bf16.msra.mxu0 %v3264
      %3539 = vmatprep.subr.bf16.mxu0 0
      %3540 = vmatpush1.bf16.msra.mxu0 %v3265
      %3541 = vmatprep.subr.bf16.mxu0 0
      %3542 = vmatpush1.bf16.msra.mxu0 %v3266
      %3543 = vmatprep.subr.bf16.mxu0 0
      %3544 = vmatpush1.bf16.msra.mxu0 %v3267
      %3545 = vmatprep.subr.bf16.mxu0 0
      %3546 = vmatpush1.bf16.msra.mxu0 %v3268
      %3547 = vmatprep.subr.bf16.mxu0 0
      %3548 = vmatpush1.bf16.msra.mxu0 %v3269
      %3549 = vmatprep.subr.bf16.mxu0 0
      %3550 = vmatpush1.bf16.msra.mxu0 %v3270
      %3551 = vmatprep.subr.bf16.mxu0 0
      %3552 = vmatpush1.bf16.msra.mxu0 %v3271
      %3553 = vmatprep.subr.bf16.mxu0 0
      %3554 = vmatpush1.bf16.msra.mxu0 %v3272
      %3555 = vmatprep.subr.bf16.mxu0 0
      %3556 = vmatpush1.bf16.msra.mxu0 %v3273
      %3557 = vmatprep.mubr.bf16.mxu0 %v2796
      %3558 = vmatmul.mubr.bf16.gmra.mrb[0].mxu0 %v2784
      %v3559 = vpop.f32.mrb[0].mxu0
      %v3560 = vadd.f32 %v3519, %v3559
      %v3561 = vpop.f32.mrb[0].mxu0
      %v3562 = vpop.f32.mrb[0].mxu0
      %v3563 = vadd.f32 %v3522, %v3562
      %v3564 = vpop.f32.mrb[0].mxu0
      %3565 = vdwg.mxu0
      %3566 = vmatprep.subr.bf16.mxu0 0
      %3567 = vmatpush1.bf16.msra.mxu0 %v3274
      %3568 = vmatprep.subr.bf16.mxu0 0
      %3569 = vmatpush1.bf16.msra.mxu0 %v3275
      %3570 = vmatprep.subr.bf16.mxu0 0
      %3571 = vmatpush1.bf16.msra.mxu0 %v3276
      %3572 = vmatprep.subr.bf16.mxu0 0
      %3573 = vmatpush1.bf16.msra.mxu0 %v3277
      %3574 = vmatprep.subr.bf16.mxu0 0
      %3575 = vmatpush1.bf16.msra.mxu0 %v3278
      %3576 = vmatprep.subr.bf16.mxu0 0
      %3577 = vmatpush1.bf16.msra.mxu0 %v3279
      %3578 = vmatprep.subr.bf16.mxu0 0
      %3579 = vmatpush1.bf16.msra.mxu0 %v3280
      %3580 = vmatprep.subr.bf16.mxu0 0
      %3581 = vmatpush1.bf16.msra.mxu0 %v3281
      %3582 = vmatprep.subr.bf16.mxu0 0
      %3583 = vmatpush1.bf16.msra.mxu0 %v3282
      %3584 = vmatprep.subr.bf16.mxu0 0
      %3585 = vmatpush1.bf16.msra.mxu0 %v3283
      %3586 = vmatprep.subr.bf16.mxu0 0
      %3587 = vmatpush1.bf16.msra.mxu0 %v3284
      %3588 = vmatprep.subr.bf16.mxu0 0
      %3589 = vmatpush1.bf16.msra.mxu0 %v3285
      %3590 = vmatprep.subr.bf16.mxu0 0
      %3591 = vmatpush1.bf16.msra.mxu0 %v3286
      %3592 = vmatprep.subr.bf16.mxu0 0
      %3593 = vmatpush1.bf16.msra.mxu0 %v3287
      %3594 = vmatprep.subr.bf16.mxu0 0
      %3595 = vmatpush1.bf16.msra.mxu0 %v3288
      %3596 = vmatprep.subr.bf16.mxu0 0
      %3597 = vmatpush1.bf16.msra.mxu0 %v3289
      %3598 = vmatprep.mubr.bf16.mxu0 %v2815
      %3599 = vmatmul.mubr.bf16.gmra.mrb[0].mxu0 %v2812
      %v3600 = vpop.f32.mrb[0].mxu0
      %v3601 = vadd.f32 %v3560, %v3600
      %v3602 = vpop.f32.mrb[0].mxu0
      %v3603 = vpop.f32.mrb[0].mxu0
      %v3604 = vadd.f32 %v3563, %v3603
      %v3605 = vpop.f32.mrb[0].mxu0
      %3606 = vdwg.mxu0
      %3607 = vmatprep.subr.bf16.mxu0 0
      %3608 = vmatpush1.bf16.msra.mxu0 %v3290
      %3609 = vmatprep.subr.bf16.mxu0 0
      %3610 = vmatpush1.bf16.msra.mxu0 %v3291
      %3611 = vmatprep.subr.bf16.mxu0 0
      %3612 = vmatpush1.bf16.msra.mxu0 %v3292
      %3613 = vmatprep.subr.bf16.mxu0 0
      %3614 = vmatpush1.bf16.msra.mxu0 %v3293
      %3615 = vmatprep.subr.bf16.mxu0 0
      %3616 = vmatpush1.bf16.msra.mxu0 %v3294
      %3617 = vmatprep.subr.bf16.mxu0 0
      %3618 = vmatpush1.bf16.msra.mxu0 %v3295
      %3619 = vmatprep.subr.bf16.mxu0 0
      %3620 = vmatpush1.bf16.msra.mxu0 %v3296
      %3621 = vmatprep.subr.bf16.mxu0 0
      %3622 = vmatpush1.bf16.msra.mxu0 %v3297
      %3623 = vmatprep.subr.bf16.mxu0 0
      %3624 = vmatpush1.bf16.msra.mxu0 %v3298
      %3625 = vmatprep.subr.bf16.mxu0 0
      %3626 = vmatpush1.bf16.msra.mxu0 %v3299
      %3627 = vmatprep.subr.bf16.mxu0 0
      %3628 = vmatpush1.bf16.msra.mxu0 %v3300
      %3629 = vmatprep.subr.bf16.mxu0 0
      %3630 = vmatpush1.bf16.msra.mxu0 %v3301
      %3631 = vmatprep.subr.bf16.mxu0 0
      %3632 = vmatpush1.bf16.msra.mxu0 %v3302
      %3633 = vmatprep.subr.bf16.mxu0 0
      %3634 = vmatpush1.bf16.msra.mxu0 %v3303
      %3635 = vmatprep.subr.bf16.mxu0 0
      %3636 = vmatpush1.bf16.msra.mxu0 %v3304
      %3637 = vmatprep.subr.bf16.mxu0 0
      %3638 = vmatpush1.bf16.msra.mxu0 %v3305
      %3639 = vmatprep.mubr.bf16.mxu0 %v2821
      %3640 = vmatmul.mubr.bf16.gmra.mrb[0].mxu0 %v2818
      %v3641 = vpop.f32.mrb[0].mxu0
      %v3642 = vadd.f32 %v3601, %v3641
      %v3643 = vpop.f32.mrb[0].mxu0
      %v3644 = vpop.f32.mrb[0].mxu0
      %v3645 = vadd.f32 %v3604, %v3644
      %v3646 = vpop.f32.mrb[0].mxu0
      %3647 = vdwg.mxu0
      %v3649 = vshrl.u32 %v2720, 16
      %v3651 = vshll.u32 %v2720, 16
      %v3653 = vrot.slane %v3651, 1
      %v3654 = vor.u32 %v3649, %v3653
      %v3656 = vshll.u32 %v2736, 16
      %v3658 = vrot.slane %v3656, 1
      %v3659 = vsel %vm2748, %v3654, %v3658
      %v3661 = vshrl.u32 %v2721, 16
      %v3663 = vshll.u32 %v2721, 16
      %v3665 = vrot.slane %v3663, 1
      %v3666 = vor.u32 %v3661, %v3665
      %v3668 = vshll.u32 %v2737, 16
      %v3670 = vrot.slane %v3668, 1
      %v3671 = vsel %vm2748, %v3666, %v3670
      %v3673 = vshrl.u32 %v2722, 16
      %v3675 = vshll.u32 %v2722, 16
      %v3677 = vrot.slane %v3675, 1
      %v3678 = vor.u32 %v3673, %v3677
      %v3680 = vshll.u32 %v2738, 16
      %v3682 = vrot.slane %v3680, 1
      %v3683 = vsel %vm2748, %v3678, %v3682
      %v3685 = vshrl.u32 %v2723, 16
      %v3687 = vshll.u32 %v2723, 16
      %v3689 = vrot.slane %v3687, 1
      %v3690 = vor.u32 %v3685, %v3689
      %v3692 = vshll.u32 %v2739, 16
      %v3694 = vrot.slane %v3692, 1
      %v3695 = vsel %vm2748, %v3690, %v3694
      %v3708 = vrot.slane %v2720, 1
      %v3709 = vrot.slane %v2736, 1
      %v3710 = vsel %vm2809, %v3708, %v3709
      %v3711 = vrot.slane %v2721, 1
      %v3712 = vrot.slane %v2737, 1
      %v3713 = vsel %vm2809, %v3711, %v3712
      %v3714 = vrot.slane %v2722, 1
      %v3715 = vrot.slane %v2738, 1
      %v3716 = vsel %vm2809, %v3714, %v3715
      %v3717 = vrot.slane %v2723, 1
      %v3718 = vrot.slane %v2739, 1
      %v3719 = vsel %vm2809, %v3717, %v3718
      %v3916 = vunpack.c.l.b16 %v1106
      %v3917 = vunpack.c.l.b16 %v1107
      %v3918 = vunpack.c.l.b16 %v1108
      %v3919 = vunpack.c.l.b16 %v1109
      %v3920 = vunpack.c.l.b16 %v1110
      %v3921 = vunpack.c.l.b16 %v1111
      %v3922 = vunpack.c.l.b16 %v1112
      %v3923 = vunpack.c.l.b16 %v1113
      %v3924 = vunpack.c.l.b16 %v1114
      %v3925 = vunpack.c.l.b16 %v1115
      %v3926 = vunpack.c.l.b16 %v1116
      %v3927 = vunpack.c.l.b16 %v1117
      %v3928 = vunpack.c.l.b16 %v1118
      %v3929 = vunpack.c.l.b16 %v1119
      %v3930 = vunpack.c.l.b16 %v1120
      %v3931 = vunpack.c.l.b16 %v1121
      %v3932 = vunpack.c.l.b16 %v1122
      %v3933 = vunpack.c.l.b16 %v1123
      %v3934 = vunpack.c.l.b16 %v1124
      %v3935 = vunpack.c.l.b16 %v1125
      %v3936 = vunpack.c.l.b16 %v1126
      %v3937 = vunpack.c.l.b16 %v1127
      %v3938 = vunpack.c.l.b16 %v1128
      %v3939 = vunpack.c.l.b16 %v1129
      %v3940 = vunpack.c.l.b16 %v1130
      %v3941 = vunpack.c.l.b16 %v1131
      %v3942 = vunpack.c.l.b16 %v1132
      %v3943 = vunpack.c.l.b16 %v1133
      %v3944 = vunpack.c.l.b16 %v1134
      %v3945 = vunpack.c.l.b16 %v1135
      %v3946 = vunpack.c.l.b16 %v1136
      %v3947 = vunpack.c.l.b16 %v1137
      %v3948 = vunpack.c.l.b16 %v1138
      %v3949 = vunpack.c.l.b16 %v1139
      %v3950 = vunpack.c.l.b16 %v1140
      %v3951 = vunpack.c.l.b16 %v1141
      %v3952 = vunpack.c.l.b16 %v1142
      %v3953 = vunpack.c.l.b16 %v1143
      %v3954 = vunpack.c.l.b16 %v1144
      %v3955 = vunpack.c.l.b16 %v1145
      %v3956 = vunpack.c.l.b16 %v1146
      %v3957 = vunpack.c.l.b16 %v1147
      %v3958 = vunpack.c.l.b16 %v1148
      %v3959 = vunpack.c.l.b16 %v1149
      %v3960 = vunpack.c.l.b16 %v1150
      %v3961 = vunpack.c.l.b16 %v1151
      %v3962 = vunpack.c.l.b16 %v1152
      %v3963 = vunpack.c.l.b16 %v1153
      %v3964 = vunpack.c.l.b16 %v1154
      %v3965 = vunpack.c.l.b16 %v1155
      %v3966 = vunpack.c.l.b16 %v1156
      %v3967 = vunpack.c.l.b16 %v1157
      %v3968 = vunpack.c.l.b16 %v1158
      %v3969 = vunpack.c.l.b16 %v1159
      %v3970 = vunpack.c.l.b16 %v1160
      %v3971 = vunpack.c.l.b16 %v1161
      %v3972 = vunpack.c.l.b16 %v1162
      %v3973 = vunpack.c.l.b16 %v1163
      %v3974 = vunpack.c.l.b16 %v1164
      %v3975 = vunpack.c.l.b16 %v1165
      %v3976 = vunpack.c.l.b16 %v1166
      %v3977 = vunpack.c.l.b16 %v1167
      %v3978 = vunpack.c.l.b16 %v1168
      %v3979 = vunpack.c.l.b16 %v1169
      %v3980 = vunpack.c.l.b16 %v1170
      %v3981 = vunpack.c.l.b16 %v1171
      %v3982 = vunpack.c.l.b16 %v1172
      %v3983 = vunpack.c.l.b16 %v1173
      %v3984 = vunpack.c.l.b16 %v1174
      %v3985 = vunpack.c.l.b16 %v1175
      %v3986 = vunpack.c.l.b16 %v1176
      %v3987 = vunpack.c.l.b16 %v1177
      %v3988 = vunpack.c.l.b16 %v1178
      %v3989 = vunpack.c.l.b16 %v1179
      %v3990 = vunpack.c.l.b16 %v1180
      %v3991 = vunpack.c.l.b16 %v1181
      %v3992 = vunpack.c.l.b16 %v1182
      %v3993 = vunpack.c.l.b16 %v1183
      %v3994 = vunpack.c.l.b16 %v1184
      %v3995 = vunpack.c.l.b16 %v1185
      %v3996 = vunpack.c.l.b16 %v1186
      %v3997 = vunpack.c.l.b16 %v1187
      %v3998 = vunpack.c.l.b16 %v1188
      %v3999 = vunpack.c.l.b16 %v1189
      %v4000 = vunpack.c.l.b16 %v1190
      %v4001 = vunpack.c.l.b16 %v1191
      %v4002 = vunpack.c.l.b16 %v1192
      %v4003 = vunpack.c.l.b16 %v1193
      %v4004 = vunpack.c.l.b16 %v1194
      %v4005 = vunpack.c.l.b16 %v1195
      %v4006 = vunpack.c.l.b16 %v1196
      %v4007 = vunpack.c.l.b16 %v1197
      %v4008 = vunpack.c.l.b16 %v1198
      %v4009 = vunpack.c.l.b16 %v1199
      %v4010 = vunpack.c.l.b16 %v1200
      %v4011 = vunpack.c.l.b16 %v1201
      %v4012 = vunpack.c.l.b16 %v1202
      %v4013 = vunpack.c.l.b16 %v1203
      %v4014 = vunpack.c.l.b16 %v1204
      %v4015 = vunpack.c.l.b16 %v1205
      %v4016 = vunpack.c.l.b16 %v1206
      %v4017 = vunpack.c.l.b16 %v1207
      %v4018 = vunpack.c.l.b16 %v1208
      %v4019 = vunpack.c.l.b16 %v1209
      %v4020 = vunpack.c.l.b16 %v1210
      %v4021 = vunpack.c.l.b16 %v1211
      %v4022 = vunpack.c.l.b16 %v1212
      %v4023 = vunpack.c.l.b16 %v1213
      %v4024 = vunpack.c.l.b16 %v1214
      %v4025 = vunpack.c.l.b16 %v1215
      %v4026 = vunpack.c.l.b16 %v1216
      %v4027 = vunpack.c.l.b16 %v1217
      %v4028 = vunpack.c.l.b16 %v1218
      %v4029 = vunpack.c.l.b16 %v1219
      %v4030 = vunpack.c.l.b16 %v1220
      %v4031 = vunpack.c.l.b16 %v1221
      %v4032 = vunpack.c.l.b16 %v1222
      %v4033 = vunpack.c.l.b16 %v1223
      %v4034 = vunpack.c.l.b16 %v1224
      %v4035 = vunpack.c.l.b16 %v1225
      %v4036 = vunpack.c.l.b16 %v1226
      %v4037 = vunpack.c.l.b16 %v1227
      %v4038 = vunpack.c.l.b16 %v1228
      %v4039 = vunpack.c.l.b16 %v1229
      %v4040 = vunpack.c.l.b16 %v1230
      %v4041 = vunpack.c.l.b16 %v1231
      %v4042 = vunpack.c.l.b16 %v1232
      %v4043 = vunpack.c.l.b16 %v1233
      %v4044 = vunpack.c.l.b16 %v1234
      %v4045 = vunpack.c.l.b16 %v1235
      %v4046 = vunpack.c.l.b16 %v1236
      %v4047 = vunpack.c.l.b16 %v1237
      %v4048 = vunpack.c.l.b16 %v1238
      %v4049 = vunpack.c.l.b16 %v1239
      %v4050 = vunpack.c.l.b16 %v1240
      %v4051 = vunpack.c.l.b16 %v1241
      %v4052 = vunpack.c.l.b16 %v1242
      %v4053 = vunpack.c.l.b16 %v1243
      %v4054 = vunpack.c.l.b16 %v1244
      %v4055 = vunpack.c.l.b16 %v1245
      %v4056 = vunpack.c.l.b16 %v1246
      %v4057 = vunpack.c.l.b16 %v1247
      %v4058 = vunpack.c.l.b16 %v1248
      %v4059 = vunpack.c.l.b16 %v1249
      %v4060 = vunpack.c.l.b16 %v1250
      %v4061 = vunpack.c.l.b16 %v1251
      %v4062 = vunpack.c.l.b16 %v1252
      %v4063 = vunpack.c.l.b16 %v1253
      %v4064 = vunpack.c.l.b16 %v1254
      %v4065 = vunpack.c.l.b16 %v1255
      %v4066 = vunpack.c.l.b16 %v1256
      %v4067 = vunpack.c.l.b16 %v1257
      %v4068 = vunpack.c.l.b16 %v1258
      %v4069 = vunpack.c.l.b16 %v1259
      %v4070 = vunpack.c.l.b16 %v1260
      %v4071 = vunpack.c.l.b16 %v1261
      %v4072 = vunpack.c.l.b16 %v1262
      %v4073 = vunpack.c.l.b16 %v1263
      %v4074 = vunpack.c.l.b16 %v1264
      %v4075 = vunpack.c.l.b16 %v1265
      %v4076 = vunpack.c.l.b16 %v1266
      %v4077 = vunpack.c.l.b16 %v1267
      %v4078 = vunpack.c.l.b16 %v1268
      %v4079 = vunpack.c.l.b16 %v1269
      %v4080 = vunpack.c.l.b16 %v1270
      %v4081 = vunpack.c.l.b16 %v1271
      %v4082 = vunpack.c.l.b16 %v1272
      %v4083 = vunpack.c.l.b16 %v1273
      %v4084 = vunpack.c.l.b16 %v1274
      %v4085 = vunpack.c.l.b16 %v1275
      %v4086 = vunpack.c.l.b16 %v1276
      %v4087 = vunpack.c.l.b16 %v1277
      %v4088 = vunpack.c.l.b16 %v1278
      %v4089 = vunpack.c.l.b16 %v1279
      %v4090 = vunpack.c.l.b16 %v1280
      %v4091 = vunpack.c.l.b16 %v1281
      %v4092 = vunpack.c.l.b16 %v1282
      %v4093 = vunpack.c.l.b16 %v1283
      %v4094 = vunpack.c.l.b16 %v1284
      %v4095 = vunpack.c.l.b16 %v1285
      %v4096 = vunpack.c.l.b16 %v1286
      %v4097 = vunpack.c.l.b16 %v1287
      %v4098 = vunpack.c.l.b16 %v1288
      %v4099 = vunpack.c.l.b16 %v1289
      %v4100 = vunpack.c.l.b16 %v1290
      %v4101 = vunpack.c.l.b16 %v1291
      %v4102 = vunpack.c.l.b16 %v1292
      %v4103 = vunpack.c.l.b16 %v1293
      %v4104 = vunpack.c.l.b16 %v1294
      %v4105 = vunpack.c.l.b16 %v1295
      %v4106 = vunpack.c.l.b16 %v1296
      %v4107 = vunpack.c.l.b16 %v1297
      %v4108 = vpack.c.b16 %v3917, %v3916
      %v4109 = vpack.c.b16 %v3919, %v3918
      %v4110 = vpack.c.b16 %v3921, %v3920
      %v4111 = vpack.c.b16 %v3923, %v3922
      %v4112 = vpack.c.b16 %v3925, %v3924
      %v4113 = vpack.c.b16 %v3927, %v3926
      %v4114 = vpack.c.b16 %v3929, %v3928
      %v4115 = vpack.c.b16 %v3931, %v3930
      %v4116 = vpack.c.b16 %v3933, %v3932
      %v4117 = vpack.c.b16 %v3935, %v3934
      %v4118 = vpack.c.b16 %v3937, %v3936
      %v4119 = vpack.c.b16 %v3939, %v3938
      %v4120 = vpack.c.b16 %v3941, %v3940
      %v4121 = vpack.c.b16 %v3943, %v3942
      %v4122 = vpack.c.b16 %v3945, %v3944
      %v4123 = vpack.c.b16 %v3947, %v3946
      %v4124 = vpack.c.b16 %v3949, %v3948
      %v4125 = vpack.c.b16 %v3951, %v3950
      %v4126 = vpack.c.b16 %v3953, %v3952
      %v4127 = vpack.c.b16 %v3955, %v3954
      %v4128 = vpack.c.b16 %v3957, %v3956
      %v4129 = vpack.c.b16 %v3959, %v3958
      %v4130 = vpack.c.b16 %v3961, %v3960
      %v4131 = vpack.c.b16 %v3963, %v3962
      %v4132 = vpack.c.b16 %v3965, %v3964
      %v4133 = vpack.c.b16 %v3967, %v3966
      %v4134 = vpack.c.b16 %v3969, %v3968
      %v4135 = vpack.c.b16 %v3971, %v3970
      %v4136 = vpack.c.b16 %v3973, %v3972
      %v4137 = vpack.c.b16 %v3975, %v3974
      %v4138 = vpack.c.b16 %v3977, %v3976
      %v4139 = vpack.c.b16 %v3979, %v3978
      %v4140 = vpack.c.b16 %v3981, %v3980
      %v4141 = vpack.c.b16 %v3983, %v3982
      %v4142 = vpack.c.b16 %v3985, %v3984
      %v4143 = vpack.c.b16 %v3987, %v3986
      %v4144 = vpack.c.b16 %v3989, %v3988
      %v4145 = vpack.c.b16 %v3991, %v3990
      %v4146 = vpack.c.b16 %v3993, %v3992
      %v4147 = vpack.c.b16 %v3995, %v3994
      %v4148 = vpack.c.b16 %v3997, %v3996
      %v4149 = vpack.c.b16 %v3999, %v3998
      %v4150 = vpack.c.b16 %v4001, %v4000
      %v4151 = vpack.c.b16 %v4003, %v4002
      %v4152 = vpack.c.b16 %v4005, %v4004
      %v4153 = vpack.c.b16 %v4007, %v4006
      %v4154 = vpack.c.b16 %v4009, %v4008
      %v4155 = vpack.c.b16 %v4011, %v4010
      %v4156 = vpack.c.b16 %v4013, %v4012
      %v4157 = vpack.c.b16 %v4015, %v4014
      %v4158 = vpack.c.b16 %v4017, %v4016
      %v4159 = vpack.c.b16 %v4019, %v4018
      %v4160 = vpack.c.b16 %v4021, %v4020
      %v4161 = vpack.c.b16 %v4023, %v4022
      %v4162 = vpack.c.b16 %v4025, %v4024
      %v4163 = vpack.c.b16 %v4027, %v4026
      %v4164 = vpack.c.b16 %v4029, %v4028
      %v4165 = vpack.c.b16 %v4031, %v4030
      %v4166 = vpack.c.b16 %v4033, %v4032
      %v4167 = vpack.c.b16 %v4035, %v4034
      %v4168 = vpack.c.b16 %v4037, %v4036
      %v4169 = vpack.c.b16 %v4039, %v4038
      %v4170 = vpack.c.b16 %v4041, %v4040
      %v4171 = vpack.c.b16 %v4043, %v4042
      %v4172 = vpack.c.b16 %v4045, %v4044
      %v4173 = vpack.c.b16 %v4047, %v4046
      %v4174 = vpack.c.b16 %v4049, %v4048
      %v4175 = vpack.c.b16 %v4051, %v4050
      %v4176 = vpack.c.b16 %v4053, %v4052
      %v4177 = vpack.c.b16 %v4055, %v4054
      %v4178 = vpack.c.b16 %v4057, %v4056
      %v4179 = vpack.c.b16 %v4059, %v4058
      %v4180 = vpack.c.b16 %v4061, %v4060
      %v4181 = vpack.c.b16 %v4063, %v4062
      %v4182 = vpack.c.b16 %v4065, %v4064
      %v4183 = vpack.c.b16 %v4067, %v4066
      %v4184 = vpack.c.b16 %v4069, %v4068
      %v4185 = vpack.c.b16 %v4071, %v4070
      %v4186 = vpack.c.b16 %v4073, %v4072
      %v4187 = vpack.c.b16 %v4075, %v4074
      %v4188 = vpack.c.b16 %v4077, %v4076
      %v4189 = vpack.c.b16 %v4079, %v4078
      %v4190 = vpack.c.b16 %v4081, %v4080
      %v4191 = vpack.c.b16 %v4083, %v4082
      %v4192 = vpack.c.b16 %v4085, %v4084
      %v4193 = vpack.c.b16 %v4087, %v4086
      %v4194 = vpack.c.b16 %v4089, %v4088
      %v4195 = vpack.c.b16 %v4091, %v4090
      %v4196 = vpack.c.b16 %v4093, %v4092
      %v4197 = vpack.c.b16 %v4095, %v4094
      %v4198 = vpack.c.b16 %v4097, %v4096
      %v4199 = vpack.c.b16 %v4099, %v4098
      %v4200 = vpack.c.b16 %v4101, %v4100
      %v4201 = vpack.c.b16 %v4103, %v4102
      %v4202 = vpack.c.b16 %v4105, %v4104
      %v4203 = vpack.c.b16 %v4107, %v4106
      %4300 = vmatprep.subr.bf16.mxu0 0
      %4301 = vmatpush1.bf16.msra.mxu0 %v4108
      %4302 = vmatprep.subr.bf16.mxu0 0
      %4303 = vmatpush1.bf16.msra.mxu0 %v4109
      %4304 = vmatprep.subr.bf16.mxu0 0
      %4305 = vmatpush1.bf16.msra.mxu0 %v4110
      %4306 = vmatprep.subr.bf16.mxu0 0
      %4307 = vmatpush1.bf16.msra.mxu0 %v4111
      %4308 = vmatprep.subr.bf16.mxu0 0
      %4309 = vmatpush1.bf16.msra.mxu0 %v4112
      %4310 = vmatprep.subr.bf16.mxu0 0
      %4311 = vmatpush1.bf16.msra.mxu0 %v4113
      %4312 = vmatprep.subr.bf16.mxu0 0
      %4313 = vmatpush1.bf16.msra.mxu0 %v4114
      %4314 = vmatprep.subr.bf16.mxu0 0
      %4315 = vmatpush1.bf16.msra.mxu0 %v4115
      %4316 = vmatprep.subr.bf16.mxu0 0
      %4317 = vmatpush1.bf16.msra.mxu0 %v4116
      %4318 = vmatprep.subr.bf16.mxu0 0
      %4319 = vmatpush1.bf16.msra.mxu0 %v4117
      %4320 = vmatprep.subr.bf16.mxu0 0
      %4321 = vmatpush1.bf16.msra.mxu0 %v4118
      %4322 = vmatprep.subr.bf16.mxu0 0
      %4323 = vmatpush1.bf16.msra.mxu0 %v4119
      %4324 = vmatprep.subr.bf16.mxu0 0
      %4325 = vmatpush1.bf16.msra.mxu0 %v4120
      %4326 = vmatprep.subr.bf16.mxu0 0
      %4327 = vmatpush1.bf16.msra.mxu0 %v4121
      %4328 = vmatprep.subr.bf16.mxu0 0
      %4329 = vmatpush1.bf16.msra.mxu0 %v4122
      %4330 = vmatprep.subr.bf16.mxu0 0
      %4331 = vmatpush1.bf16.msra.mxu0 %v4123
      %4332 = vmatprep.mubr.bf16.mxu0 %v2721
      %4333 = vmatmul.mubr.bf16.gmra.mrb[0].mxu0 %v2720
      %v4334 = vpop.f32.mrb[0].mxu0
      %v4335 = vadd.f32 0.0, %v4334
      %v4336 = vpop.f32.mrb[0].mxu0
      %v4337 = vpop.f32.mrb[0].mxu0
      %v4338 = vadd.f32 0.0, %v4337
      %v4339 = vpop.f32.mrb[0].mxu0
      %4340 = vdwg.mxu0
      %4341 = vmatprep.subr.bf16.mxu0 0
      %4342 = vmatpush1.bf16.msra.mxu0 %v4124
      %4343 = vmatprep.subr.bf16.mxu0 0
      %4344 = vmatpush1.bf16.msra.mxu0 %v4125
      %4345 = vmatprep.subr.bf16.mxu0 0
      %4346 = vmatpush1.bf16.msra.mxu0 %v4126
      %4347 = vmatprep.subr.bf16.mxu0 0
      %4348 = vmatpush1.bf16.msra.mxu0 %v4127
      %4349 = vmatprep.subr.bf16.mxu0 0
      %4350 = vmatpush1.bf16.msra.mxu0 %v4128
      %4351 = vmatprep.subr.bf16.mxu0 0
      %4352 = vmatpush1.bf16.msra.mxu0 %v4129
      %4353 = vmatprep.subr.bf16.mxu0 0
      %4354 = vmatpush1.bf16.msra.mxu0 %v4130
      %4355 = vmatprep.subr.bf16.mxu0 0
      %4356 = vmatpush1.bf16.msra.mxu0 %v4131
      %4357 = vmatprep.subr.bf16.mxu0 0
      %4358 = vmatpush1.bf16.msra.mxu0 %v4132
      %4359 = vmatprep.subr.bf16.mxu0 0
      %4360 = vmatpush1.bf16.msra.mxu0 %v4133
      %4361 = vmatprep.subr.bf16.mxu0 0
      %4362 = vmatpush1.bf16.msra.mxu0 %v4134
      %4363 = vmatprep.subr.bf16.mxu0 0
      %4364 = vmatpush1.bf16.msra.mxu0 %v4135
      %4365 = vmatprep.subr.bf16.mxu0 0
      %4366 = vmatpush1.bf16.msra.mxu0 %v4136
      %4367 = vmatprep.subr.bf16.mxu0 0
      %4368 = vmatpush1.bf16.msra.mxu0 %v4137
      %4369 = vmatprep.subr.bf16.mxu0 0
      %4370 = vmatpush1.bf16.msra.mxu0 %v4138
      %4371 = vmatprep.subr.bf16.mxu0 0
      %4372 = vmatpush1.bf16.msra.mxu0 %v4139
      %4373 = vmatprep.mubr.bf16.mxu0 %v2723
      %4374 = vmatmul.mubr.bf16.gmra.mrb[0].mxu0 %v2722
      %v4375 = vpop.f32.mrb[0].mxu0
      %v4376 = vadd.f32 %v4335, %v4375
      %v4377 = vpop.f32.mrb[0].mxu0
      %v4378 = vpop.f32.mrb[0].mxu0
      %v4379 = vadd.f32 %v4338, %v4378
      %v4380 = vpop.f32.mrb[0].mxu0
      %4381 = vdwg.mxu0
      %4382 = vmatprep.subr.bf16.mxu0 0
      %4383 = vmatpush1.bf16.msra.mxu0 %v4140
      %4384 = vmatprep.subr.bf16.mxu0 0
      %4385 = vmatpush1.bf16.msra.mxu0 %v4141
      %4386 = vmatprep.subr.bf16.mxu0 0
      %4387 = vmatpush1.bf16.msra.mxu0 %v4142
      %4388 = vmatprep.subr.bf16.mxu0 0
      %4389 = vmatpush1.bf16.msra.mxu0 %v4143
      %4390 = vmatprep.subr.bf16.mxu0 0
      %4391 = vmatpush1.bf16.msra.mxu0 %v4144
      %4392 = vmatprep.subr.bf16.mxu0 0
      %4393 = vmatpush1.bf16.msra.mxu0 %v4145
      %4394 = vmatprep.subr.bf16.mxu0 0
      %4395 = vmatpush1.bf16.msra.mxu0 %v4146
      %4396 = vmatprep.subr.bf16.mxu0 0
      %4397 = vmatpush1.bf16.msra.mxu0 %v4147
      %4398 = vmatprep.subr.bf16.mxu0 0
      %4399 = vmatpush1.bf16.msra.mxu0 %v4148
      %4400 = vmatprep.subr.bf16.mxu0 0
      %4401 = vmatpush1.bf16.msra.mxu0 %v4149
      %4402 = vmatprep.subr.bf16.mxu0 0
      %4403 = vmatpush1.bf16.msra.mxu0 %v4150
      %4404 = vmatprep.subr.bf16.mxu0 0
      %4405 = vmatpush1.bf16.msra.mxu0 %v4151
      %4406 = vmatprep.subr.bf16.mxu0 0
      %4407 = vmatpush1.bf16.msra.mxu0 %v4152
      %4408 = vmatprep.subr.bf16.mxu0 0
      %4409 = vmatpush1.bf16.msra.mxu0 %v4153
      %4410 = vmatprep.subr.bf16.mxu0 0
      %4411 = vmatpush1.bf16.msra.mxu0 %v4154
      %4412 = vmatprep.subr.bf16.mxu0 0
      %4413 = vmatpush1.bf16.msra.mxu0 %v4155
      %4414 = vmatprep.mubr.bf16.mxu0 %v3671
      %4415 = vmatmul.mubr.bf16.gmra.mrb[0].mxu0 %v3659
      %v4416 = vpop.f32.mrb[0].mxu0
      %v4417 = vadd.f32 %v4376, %v4416
      %v4418 = vpop.f32.mrb[0].mxu0
      %v4419 = vpop.f32.mrb[0].mxu0
      %v4420 = vadd.f32 %v4379, %v4419
      %v4421 = vpop.f32.mrb[0].mxu0
      %4422 = vdwg.mxu0
      %4423 = vmatprep.subr.bf16.mxu0 0
      %4424 = vmatpush1.bf16.msra.mxu0 %v4156
      %4425 = vmatprep.subr.bf16.mxu0 0
      %4426 = vmatpush1.bf16.msra.mxu0 %v4157
      %4427 = vmatprep.subr.bf16.mxu0 0
      %4428 = vmatpush1.bf16.msra.mxu0 %v4158
      %4429 = vmatprep.subr.bf16.mxu0 0
      %4430 = vmatpush1.bf16.msra.mxu0 %v4159
      %4431 = vmatprep.subr.bf16.mxu0 0
      %4432 = vmatpush1.bf16.msra.mxu0 %v4160
      %4433 = vmatprep.subr.bf16.mxu0 0
      %4434 = vmatpush1.bf16.msra.mxu0 %v4161
      %4435 = vmatprep.subr.bf16.mxu0 0
      %4436 = vmatpush1.bf16.msra.mxu0 %v4162
      %4437 = vmatprep.subr.bf16.mxu0 0
      %4438 = vmatpush1.bf16.msra.mxu0 %v4163
      %4439 = vmatprep.subr.bf16.mxu0 0
      %4440 = vmatpush1.bf16.msra.mxu0 %v4164
      %4441 = vmatprep.subr.bf16.mxu0 0
      %4442 = vmatpush1.bf16.msra.mxu0 %v4165
      %4443 = vmatprep.subr.bf16.mxu0 0
      %4444 = vmatpush1.bf16.msra.mxu0 %v4166
      %4445 = vmatprep.subr.bf16.mxu0 0
      %4446 = vmatpush1.bf16.msra.mxu0 %v4167
      %4447 = vmatprep.subr.bf16.mxu0 0
      %4448 = vmatpush1.bf16.msra.mxu0 %v4168
      %4449 = vmatprep.subr.bf16.mxu0 0
      %4450 = vmatpush1.bf16.msra.mxu0 %v4169
      %4451 = vmatprep.subr.bf16.mxu0 0
      %4452 = vmatpush1.bf16.msra.mxu0 %v4170
      %4453 = vmatprep.subr.bf16.mxu0 0
      %4454 = vmatpush1.bf16.msra.mxu0 %v4171
      %4455 = vmatprep.mubr.bf16.mxu0 %v3695
      %4456 = vmatmul.mubr.bf16.gmra.mrb[0].mxu0 %v3683
      %v4457 = vpop.f32.mrb[0].mxu0
      %v4458 = vadd.f32 %v4417, %v4457
      %v4459 = vpop.f32.mrb[0].mxu0
      %v4460 = vpop.f32.mrb[0].mxu0
      %v4461 = vadd.f32 %v4420, %v4460
      %v4462 = vpop.f32.mrb[0].mxu0
      %4463 = vdwg.mxu0
      %4464 = vmatprep.subr.bf16.mxu0 0
      %4465 = vmatpush1.bf16.msra.mxu0 %v4172
      %4466 = vmatprep.subr.bf16.mxu0 0
      %4467 = vmatpush1.bf16.msra.mxu0 %v4173
      %4468 = vmatprep.subr.bf16.mxu0 0
      %4469 = vmatpush1.bf16.msra.mxu0 %v4174
      %4470 = vmatprep.subr.bf16.mxu0 0
      %4471 = vmatpush1.bf16.msra.mxu0 %v4175
      %4472 = vmatprep.subr.bf16.mxu0 0
      %4473 = vmatpush1.bf16.msra.mxu0 %v4176
      %4474 = vmatprep.subr.bf16.mxu0 0
      %4475 = vmatpush1.bf16.msra.mxu0 %v4177
      %4476 = vmatprep.subr.bf16.mxu0 0
      %4477 = vmatpush1.bf16.msra.mxu0 %v4178
      %4478 = vmatprep.subr.bf16.mxu0 0
      %4479 = vmatpush1.bf16.msra.mxu0 %v4179
      %4480 = vmatprep.subr.bf16.mxu0 0
      %4481 = vmatpush1.bf16.msra.mxu0 %v4180
      %4482 = vmatprep.subr.bf16.mxu0 0
      %4483 = vmatpush1.bf16.msra.mxu0 %v4181
      %4484 = vmatprep.subr.bf16.mxu0 0
      %4485 = vmatpush1.bf16.msra.mxu0 %v4182
      %4486 = vmatprep.subr.bf16.mxu0 0
      %4487 = vmatpush1.bf16.msra.mxu0 %v4183
      %4488 = vmatprep.subr.bf16.mxu0 0
      %4489 = vmatpush1.bf16.msra.mxu0 %v4184
      %4490 = vmatprep.subr.bf16.mxu0 0
      %4491 = vmatpush1.bf16.msra.mxu0 %v4185
      %4492 = vmatprep.subr.bf16.mxu0 0
      %4493 = vmatpush1.bf16.msra.mxu0 %v4186
      %4494 = vmatprep.subr.bf16.mxu0 0
      %4495 = vmatpush1.bf16.msra.mxu0 %v4187
      %4496 = vmatprep.mubr.bf16.mxu0 %v3713
      %4497 = vmatmul.mubr.bf16.gmra.mrb[0].mxu0 %v3710
      %v4498 = vpop.f32.mrb[0].mxu0
      %v4499 = vadd.f32 %v4458, %v4498
      %v4500 = vpop.f32.mrb[0].mxu0
      %v4501 = vpop.f32.mrb[0].mxu0
      %v4502 = vadd.f32 %v4461, %v4501
      %v4503 = vpop.f32.mrb[0].mxu0
      %4504 = vdwg.mxu0
      %4505 = vmatprep.subr.bf16.mxu0 0
      %4506 = vmatpush1.bf16.msra.mxu0 %v4188
      %4507 = vmatprep.subr.bf16.mxu0 0
      %4508 = vmatpush1.bf16.msra.mxu0 %v4189
      %4509 = vmatprep.subr.bf16.mxu0 0
      %4510 = vmatpush1.bf16.msra.mxu0 %v4190
      %4511 = vmatprep.subr.bf16.mxu0 0
      %4512 = vmatpush1.bf16.msra.mxu0 %v4191
      %4513 = vmatprep.subr.bf16.mxu0 0
      %4514 = vmatpush1.bf16.msra.mxu0 %v4192
      %4515 = vmatprep.subr.bf16.mxu0 0
      %4516 = vmatpush1.bf16.msra.mxu0 %v4193
      %4517 = vmatprep.subr.bf16.mxu0 0
      %4518 = vmatpush1.bf16.msra.mxu0 %v4194
      %4519 = vmatprep.subr.bf16.mxu0 0
      %4520 = vmatpush1.bf16.msra.mxu0 %v4195
      %4521 = vmatprep.subr.bf16.mxu0 0
      %4522 = vmatpush1.bf16.msra.mxu0 %v4196
      %4523 = vmatprep.subr.bf16.mxu0 0
      %4524 = vmatpush1.bf16.msra.mxu0 %v4197
      %4525 = vmatprep.subr.bf16.mxu0 0
      %4526 = vmatpush1.bf16.msra.mxu0 %v4198
      %4527 = vmatprep.subr.bf16.mxu0 0
      %4528 = vmatpush1.bf16.msra.mxu0 %v4199
      %4529 = vmatprep.subr.bf16.mxu0 0
      %4530 = vmatpush1.bf16.msra.mxu0 %v4200
      %4531 = vmatprep.subr.bf16.mxu0 0
      %4532 = vmatpush1.bf16.msra.mxu0 %v4201
      %4533 = vmatprep.subr.bf16.mxu0 0
      %4534 = vmatpush1.bf16.msra.mxu0 %v4202
      %4535 = vmatprep.subr.bf16.mxu0 0
      %4536 = vmatpush1.bf16.msra.mxu0 %v4203
      %4537 = vmatprep.mubr.bf16.mxu0 %v3719
      %4538 = vmatmul.mubr.bf16.gmra.mrb[0].mxu0 %v3716
      %v4539 = vpop.f32.mrb[0].mxu0
      %v4540 = vadd.f32 %v4499, %v4539
      %v4541 = vpop.f32.mrb[0].mxu0
      %v4542 = vpop.f32.mrb[0].mxu0
      %v4543 = vadd.f32 %v4502, %v4542
      %v4544 = vpop.f32.mrb[0].mxu0
      %4545 = vdwg.mxu0
      %v4547 = vshrl.u32 %v2724, 16
      %v4549 = vshll.u32 %v2724, 16
      %v4551 = vrot.slane %v4549, 1
      %v4552 = vor.u32 %v4547, %v4551
      %v4554 = vshll.u32 %v2740, 16
      %v4556 = vrot.slane %v4554, 1
      %v4557 = vsel %vm2748, %v4552, %v4556
      %v4559 = vshrl.u32 %v2725, 16
      %v4561 = vshll.u32 %v2725, 16
      %v4563 = vrot.slane %v4561, 1
      %v4564 = vor.u32 %v4559, %v4563
      %v4566 = vshll.u32 %v2741, 16
      %v4568 = vrot.slane %v4566, 1
      %v4569 = vsel %vm2748, %v4564, %v4568
      %v4571 = vshrl.u32 %v2726, 16
      %v4573 = vshll.u32 %v2726, 16
      %v4575 = vrot.slane %v4573, 1
      %v4576 = vor.u32 %v4571, %v4575
      %v4578 = vshll.u32 %v2742, 16
      %v4580 = vrot.slane %v4578, 1
      %v4581 = vsel %vm2748, %v4576, %v4580
      %v4583 = vshrl.u32 %v2727, 16
      %v4585 = vshll.u32 %v2727, 16
      %v4587 = vrot.slane %v4585, 1
      %v4588 = vor.u32 %v4583, %v4587
      %v4590 = vshll.u32 %v2743, 16
      %v4592 = vrot.slane %v4590, 1
      %v4593 = vsel %vm2748, %v4588, %v4592
      %v4606 = vrot.slane %v2724, 1
      %v4607 = vrot.slane %v2740, 1
      %v4608 = vsel %vm2809, %v4606, %v4607
      %v4609 = vrot.slane %v2725, 1
      %v4610 = vrot.slane %v2741, 1
      %v4611 = vsel %vm2809, %v4609, %v4610
      %v4612 = vrot.slane %v2726, 1
      %v4613 = vrot.slane %v2742, 1
      %v4614 = vsel %vm2809, %v4612, %v4613
      %v4615 = vrot.slane %v2727, 1
      %v4616 = vrot.slane %v2743, 1
      %v4617 = vsel %vm2809, %v4615, %v4616
      %v4814 = vunpack.c.l.b16 %v1298
      %v4815 = vunpack.c.l.b16 %v1299
      %v4816 = vunpack.c.l.b16 %v1300
      %v4817 = vunpack.c.l.b16 %v1301
      %v4818 = vunpack.c.l.b16 %v1302
      %v4819 = vunpack.c.l.b16 %v1303
      %v4820 = vunpack.c.l.b16 %v1304
      %v4821 = vunpack.c.l.b16 %v1305
      %v4822 = vunpack.c.l.b16 %v1306
      %v4823 = vunpack.c.l.b16 %v1307
      %v4824 = vunpack.c.l.b16 %v1308
      %v4825 = vunpack.c.l.b16 %v1309
      %v4826 = vunpack.c.l.b16 %v1310
      %v4827 = vunpack.c.l.b16 %v1311
      %v4828 = vunpack.c.l.b16 %v1312
      %v4829 = vunpack.c.l.b16 %v1313
      %v4830 = vunpack.c.l.b16 %v1314
      %v4831 = vunpack.c.l.b16 %v1315
      %v4832 = vunpack.c.l.b16 %v1316
      %v4833 = vunpack.c.l.b16 %v1317
      %v4834 = vunpack.c.l.b16 %v1318
      %v4835 = vunpack.c.l.b16 %v1319
      %v4836 = vunpack.c.l.b16 %v1320
      %v4837 = vunpack.c.l.b16 %v1321
      %v4838 = vunpack.c.l.b16 %v1322
      %v4839 = vunpack.c.l.b16 %v1323
      %v4840 = vunpack.c.l.b16 %v1324
      %v4841 = vunpack.c.l.b16 %v1325
      %v4842 = vunpack.c.l.b16 %v1326
      %v4843 = vunpack.c.l.b16 %v1327
      %v4844 = vunpack.c.l.b16 %v1328
      %v4845 = vunpack.c.l.b16 %v1329
      %v4846 = vunpack.c.l.b16 %v1330
      %v4847 = vunpack.c.l.b16 %v1331
      %v4848 = vunpack.c.l.b16 %v1332
      %v4849 = vunpack.c.l.b16 %v1333
      %v4850 = vunpack.c.l.b16 %v1334
      %v4851 = vunpack.c.l.b16 %v1335
      %v4852 = vunpack.c.l.b16 %v1336
      %v4853 = vunpack.c.l.b16 %v1337
      %v4854 = vunpack.c.l.b16 %v1338
      %v4855 = vunpack.c.l.b16 %v1339
      %v4856 = vunpack.c.l.b16 %v1340
      %v4857 = vunpack.c.l.b16 %v1341
      %v4858 = vunpack.c.l.b16 %v1342
      %v4859 = vunpack.c.l.b16 %v1343
      %v4860 = vunpack.c.l.b16 %v1344
      %v4861 = vunpack.c.l.b16 %v1345
      %v4862 = vunpack.c.l.b16 %v1346
      %v4863 = vunpack.c.l.b16 %v1347
      %v4864 = vunpack.c.l.b16 %v1348
      %v4865 = vunpack.c.l.b16 %v1349
      %v4866 = vunpack.c.l.b16 %v1350
      %v4867 = vunpack.c.l.b16 %v1351
      %v4868 = vunpack.c.l.b16 %v1352
      %v4869 = vunpack.c.l.b16 %v1353
      %v4870 = vunpack.c.l.b16 %v1354
      %v4871 = vunpack.c.l.b16 %v1355
      %v4872 = vunpack.c.l.b16 %v1356
      %v4873 = vunpack.c.l.b16 %v1357
      %v4874 = vunpack.c.l.b16 %v1358
      %v4875 = vunpack.c.l.b16 %v1359
      %v4876 = vunpack.c.l.b16 %v1360
      %v4877 = vunpack.c.l.b16 %v1361
      %v4878 = vunpack.c.l.b16 %v1362
      %v4879 = vunpack.c.l.b16 %v1363
      %v4880 = vunpack.c.l.b16 %v1364
      %v4881 = vunpack.c.l.b16 %v1365
      %v4882 = vunpack.c.l.b16 %v1366
      %v4883 = vunpack.c.l.b16 %v1367
      %v4884 = vunpack.c.l.b16 %v1368
      %v4885 = vunpack.c.l.b16 %v1369
      %v4886 = vunpack.c.l.b16 %v1370
      %v4887 = vunpack.c.l.b16 %v1371
      %v4888 = vunpack.c.l.b16 %v1372
      %v4889 = vunpack.c.l.b16 %v1373
      %v4890 = vunpack.c.l.b16 %v1374
      %v4891 = vunpack.c.l.b16 %v1375
      %v4892 = vunpack.c.l.b16 %v1376
      %v4893 = vunpack.c.l.b16 %v1377
      %v4894 = vunpack.c.l.b16 %v1378
      %v4895 = vunpack.c.l.b16 %v1379
      %v4896 = vunpack.c.l.b16 %v1380
      %v4897 = vunpack.c.l.b16 %v1381
      %v4898 = vunpack.c.l.b16 %v1382
      %v4899 = vunpack.c.l.b16 %v1383
      %v4900 = vunpack.c.l.b16 %v1384
      %v4901 = vunpack.c.l.b16 %v1385
      %v4902 = vunpack.c.l.b16 %v1386
      %v4903 = vunpack.c.l.b16 %v1387
      %v4904 = vunpack.c.l.b16 %v1388
      %v4905 = vunpack.c.l.b16 %v1389
      %v4906 = vunpack.c.l.b16 %v1390
      %v4907 = vunpack.c.l.b16 %v1391
      %v4908 = vunpack.c.l.b16 %v1392
      %v4909 = vunpack.c.l.b16 %v1393
      %v4910 = vunpack.c.l.b16 %v1394
      %v4911 = vunpack.c.l.b16 %v1395
      %v4912 = vunpack.c.l.b16 %v1396
      %v4913 = vunpack.c.l.b16 %v1397
      %v4914 = vunpack.c.l.b16 %v1398
      %v4915 = vunpack.c.l.b16 %v1399
      %v4916 = vunpack.c.l.b16 %v1400
      %v4917 = vunpack.c.l.b16 %v1401
      %v4918 = vunpack.c.l.b16 %v1402
      %v4919 = vunpack.c.l.b16 %v1403
      %v4920 = vunpack.c.l.b16 %v1404
      %v4921 = vunpack.c.l.b16 %v1405
      %v4922 = vunpack.c.l.b16 %v1406
      %v4923 = vunpack.c.l.b16 %v1407
      %v4924 = vunpack.c.l.b16 %v1408
      %v4925 = vunpack.c.l.b16 %v1409
      %v4926 = vunpack.c.l.b16 %v1410
      %v4927 = vunpack.c.l.b16 %v1411
      %v4928 = vunpack.c.l.b16 %v1412
      %v4929 = vunpack.c.l.b16 %v1413
      %v4930 = vunpack.c.l.b16 %v1414
      %v4931 = vunpack.c.l.b16 %v1415
      %v4932 = vunpack.c.l.b16 %v1416
      %v4933 = vunpack.c.l.b16 %v1417
      %v4934 = vunpack.c.l.b16 %v1418
      %v4935 = vunpack.c.l.b16 %v1419
      %v4936 = vunpack.c.l.b16 %v1420
      %v4937 = vunpack.c.l.b16 %v1421
      %v4938 = vunpack.c.l.b16 %v1422
      %v4939 = vunpack.c.l.b16 %v1423
      %v4940 = vunpack.c.l.b16 %v1424
      %v4941 = vunpack.c.l.b16 %v1425
      %v4942 = vunpack.c.l.b16 %v1426
      %v4943 = vunpack.c.l.b16 %v1427
      %v4944 = vunpack.c.l.b16 %v1428
      %v4945 = vunpack.c.l.b16 %v1429
      %v4946 = vunpack.c.l.b16 %v1430
      %v4947 = vunpack.c.l.b16 %v1431
      %v4948 = vunpack.c.l.b16 %v1432
      %v4949 = vunpack.c.l.b16 %v1433
      %v4950 = vunpack.c.l.b16 %v1434
      %v4951 = vunpack.c.l.b16 %v1435
      %v4952 = vunpack.c.l.b16 %v1436
      %v4953 = vunpack.c.l.b16 %v1437
      %v4954 = vunpack.c.l.b16 %v1438
      %v4955 = vunpack.c.l.b16 %v1439
      %v4956 = vunpack.c.l.b16 %v1440
      %v4957 = vunpack.c.l.b16 %v1441
      %v4958 = vunpack.c.l.b16 %v1442
      %v4959 = vunpack.c.l.b16 %v1443
      %v4960 = vunpack.c.l.b16 %v1444
      %v4961 = vunpack.c.l.b16 %v1445
      %v4962 = vunpack.c.l.b16 %v1446
      %v4963 = vunpack.c.l.b16 %v1447
      %v4964 = vunpack.c.l.b16 %v1448
      %v4965 = vunpack.c.l.b16 %v1449
      %v4966 = vunpack.c.l.b16 %v1450
      %v4967 = vunpack.c.l.b16 %v1451
      %v4968 = vunpack.c.l.b16 %v1452
      %v4969 = vunpack.c.l.b16 %v1453
      %v4970 = vunpack.c.l.b16 %v1454
      %v4971 = vunpack.c.l.b16 %v1455
      %v4972 = vunpack.c.l.b16 %v1456
      %v4973 = vunpack.c.l.b16 %v1457
      %v4974 = vunpack.c.l.b16 %v1458
      %v4975 = vunpack.c.l.b16 %v1459
      %v4976 = vunpack.c.l.b16 %v1460
      %v4977 = vunpack.c.l.b16 %v1461
      %v4978 = vunpack.c.l.b16 %v1462
      %v4979 = vunpack.c.l.b16 %v1463
      %v4980 = vunpack.c.l.b16 %v1464
      %v4981 = vunpack.c.l.b16 %v1465
      %v4982 = vunpack.c.l.b16 %v1466
      %v4983 = vunpack.c.l.b16 %v1467
      %v4984 = vunpack.c.l.b16 %v1468
      %v4985 = vunpack.c.l.b16 %v1469
      %v4986 = vunpack.c.l.b16 %v1470
      %v4987 = vunpack.c.l.b16 %v1471
      %v4988 = vunpack.c.l.b16 %v1472
      %v4989 = vunpack.c.l.b16 %v1473
      %v4990 = vunpack.c.l.b16 %v1474
      %v4991 = vunpack.c.l.b16 %v1475
      %v4992 = vunpack.c.l.b16 %v1476
      %v4993 = vunpack.c.l.b16 %v1477
      %v4994 = vunpack.c.l.b16 %v1478
      %v4995 = vunpack.c.l.b16 %v1479
      %v4996 = vunpack.c.l.b16 %v1480
      %v4997 = vunpack.c.l.b16 %v1481
      %v4998 = vunpack.c.l.b16 %v1482
      %v4999 = vunpack.c.l.b16 %v1483
      %v5000 = vunpack.c.l.b16 %v1484
      %v5001 = vunpack.c.l.b16 %v1485
      %v5002 = vunpack.c.l.b16 %v1486
      %v5003 = vunpack.c.l.b16 %v1487
      %v5004 = vunpack.c.l.b16 %v1488
      %v5005 = vunpack.c.l.b16 %v1489
      %v5006 = vpack.c.b16 %v4815, %v4814
      %v5007 = vpack.c.b16 %v4817, %v4816
      %v5008 = vpack.c.b16 %v4819, %v4818
      %v5009 = vpack.c.b16 %v4821, %v4820
      %v5010 = vpack.c.b16 %v4823, %v4822
      %v5011 = vpack.c.b16 %v4825, %v4824
      %v5012 = vpack.c.b16 %v4827, %v4826
      %v5013 = vpack.c.b16 %v4829, %v4828
      %v5014 = vpack.c.b16 %v4831, %v4830
      %v5015 = vpack.c.b16 %v4833, %v4832
      %v5016 = vpack.c.b16 %v4835, %v4834
      %v5017 = vpack.c.b16 %v4837, %v4836
      %v5018 = vpack.c.b16 %v4839, %v4838
      %v5019 = vpack.c.b16 %v4841, %v4840
      %v5020 = vpack.c.b16 %v4843, %v4842
      %v5021 = vpack.c.b16 %v4845, %v4844
      %v5022 = vpack.c.b16 %v4847, %v4846
      %v5023 = vpack.c.b16 %v4849, %v4848
      %v5024 = vpack.c.b16 %v4851, %v4850
      %v5025 = vpack.c.b16 %v4853, %v4852
      %v5026 = vpack.c.b16 %v4855, %v4854
      %v5027 = vpack.c.b16 %v4857, %v4856
      %v5028 = vpack.c.b16 %v4859, %v4858
      %v5029 = vpack.c.b16 %v4861, %v4860
      %v5030 = vpack.c.b16 %v4863, %v4862
      %v5031 = vpack.c.b16 %v4865, %v4864
      %v5032 = vpack.c.b16 %v4867, %v4866
      %v5033 = vpack.c.b16 %v4869, %v4868
      %v5034 = vpack.c.b16 %v4871, %v4870
      %v5035 = vpack.c.b16 %v4873, %v4872
      %v5036 = vpack.c.b16 %v4875, %v4874
      %v5037 = vpack.c.b16 %v4877, %v4876
      %v5038 = vpack.c.b16 %v4879, %v4878
      %v5039 = vpack.c.b16 %v4881, %v4880
      %v5040 = vpack.c.b16 %v4883, %v4882
      %v5041 = vpack.c.b16 %v4885, %v4884
      %v5042 = vpack.c.b16 %v4887, %v4886
      %v5043 = vpack.c.b16 %v4889, %v4888
      %v5044 = vpack.c.b16 %v4891, %v4890
      %v5045 = vpack.c.b16 %v4893, %v4892
      %v5046 = vpack.c.b16 %v4895, %v4894
      %v5047 = vpack.c.b16 %v4897, %v4896
      %v5048 = vpack.c.b16 %v4899, %v4898
      %v5049 = vpack.c.b16 %v4901, %v4900
      %v5050 = vpack.c.b16 %v4903, %v4902
      %v5051 = vpack.c.b16 %v4905, %v4904
      %v5052 = vpack.c.b16 %v4907, %v4906
      %v5053 = vpack.c.b16 %v4909, %v4908
      %v5054 = vpack.c.b16 %v4911, %v4910
      %v5055 = vpack.c.b16 %v4913, %v4912
      %v5056 = vpack.c.b16 %v4915, %v4914
      %v5057 = vpack.c.b16 %v4917, %v4916
      %v5058 = vpack.c.b16 %v4919, %v4918
      %v5059 = vpack.c.b16 %v4921, %v4920
      %v5060 = vpack.c.b16 %v4923, %v4922
      %v5061 = vpack.c.b16 %v4925, %v4924
      %v5062 = vpack.c.b16 %v4927, %v4926
      %v5063 = vpack.c.b16 %v4929, %v4928
      %v5064 = vpack.c.b16 %v4931, %v4930
      %v5065 = vpack.c.b16 %v4933, %v4932
      %v5066 = vpack.c.b16 %v4935, %v4934
      %v5067 = vpack.c.b16 %v4937, %v4936
      %v5068 = vpack.c.b16 %v4939, %v4938
      %v5069 = vpack.c.b16 %v4941, %v4940
      %v5070 = vpack.c.b16 %v4943, %v4942
      %v5071 = vpack.c.b16 %v4945, %v4944
      %v5072 = vpack.c.b16 %v4947, %v4946
      %v5073 = vpack.c.b16 %v4949, %v4948
      %v5074 = vpack.c.b16 %v4951, %v4950
      %v5075 = vpack.c.b16 %v4953, %v4952
      %v5076 = vpack.c.b16 %v4955, %v4954
      %v5077 = vpack.c.b16 %v4957, %v4956
      %v5078 = vpack.c.b16 %v4959, %v4958
      %v5079 = vpack.c.b16 %v4961, %v4960
      %v5080 = vpack.c.b16 %v4963, %v4962
      %v5081 = vpack.c.b16 %v4965, %v4964
      %v5082 = vpack.c.b16 %v4967, %v4966
      %v5083 = vpack.c.b16 %v4969, %v4968
      %v5084 = vpack.c.b16 %v4971, %v4970
      %v5085 = vpack.c.b16 %v4973, %v4972
      %v5086 = vpack.c.b16 %v4975, %v4974
      %v5087 = vpack.c.b16 %v4977, %v4976
      %v5088 = vpack.c.b16 %v4979, %v4978
      %v5089 = vpack.c.b16 %v4981, %v4980
      %v5090 = vpack.c.b16 %v4983, %v4982
      %v5091 = vpack.c.b16 %v4985, %v4984
      %v5092 = vpack.c.b16 %v4987, %v4986
      %v5093 = vpack.c.b16 %v4989, %v4988
      %v5094 = vpack.c.b16 %v4991, %v4990
      %v5095 = vpack.c.b16 %v4993, %v4992
      %v5096 = vpack.c.b16 %v4995, %v4994
      %v5097 = vpack.c.b16 %v4997, %v4996
      %v5098 = vpack.c.b16 %v4999, %v4998
      %v5099 = vpack.c.b16 %v5001, %v5000
      %v5100 = vpack.c.b16 %v5003, %v5002
      %v5101 = vpack.c.b16 %v5005, %v5004
      %5198 = vmatprep.subr.bf16.mxu0 0
      %5199 = vmatpush1.bf16.msra.mxu0 %v5006
      %5200 = vmatprep.subr.bf16.mxu0 0
      %5201 = vmatpush1.bf16.msra.mxu0 %v5007
      %5202 = vmatprep.subr.bf16.mxu0 0
      %5203 = vmatpush1.bf16.msra.mxu0 %v5008
      %5204 = vmatprep.subr.bf16.mxu0 0
      %5205 = vmatpush1.bf16.msra.mxu0 %v5009
      %5206 = vmatprep.subr.bf16.mxu0 0
      %5207 = vmatpush1.bf16.msra.mxu0 %v5010
      %5208 = vmatprep.subr.bf16.mxu0 0
      %5209 = vmatpush1.bf16.msra.mxu0 %v5011
      %5210 = vmatprep.subr.bf16.mxu0 0
      %5211 = vmatpush1.bf16.msra.mxu0 %v5012
      %5212 = vmatprep.subr.bf16.mxu0 0
      %5213 = vmatpush1.bf16.msra.mxu0 %v5013
      %5214 = vmatprep.subr.bf16.mxu0 0
      %5215 = vmatpush1.bf16.msra.mxu0 %v5014
      %5216 = vmatprep.subr.bf16.mxu0 0
      %5217 = vmatpush1.bf16.msra.mxu0 %v5015
      %5218 = vmatprep.subr.bf16.mxu0 0
      %5219 = vmatpush1.bf16.msra.mxu0 %v5016
      %5220 = vmatprep.subr.bf16.mxu0 0
      %5221 = vmatpush1.bf16.msra.mxu0 %v5017
      %5222 = vmatprep.subr.bf16.mxu0 0
      %5223 = vmatpush1.bf16.msra.mxu0 %v5018
      %5224 = vmatprep.subr.bf16.mxu0 0
      %5225 = vmatpush1.bf16.msra.mxu0 %v5019
      %5226 = vmatprep.subr.bf16.mxu0 0
      %5227 = vmatpush1.bf16.msra.mxu0 %v5020
      %5228 = vmatprep.subr.bf16.mxu0 0
      %5229 = vmatpush1.bf16.msra.mxu0 %v5021
      %5230 = vmatprep.mubr.bf16.mxu0 %v2725
      %5231 = vmatmul.mubr.bf16.gmra.mrb[0].mxu0 %v2724
      %v5232 = vpop.f32.mrb[0].mxu0
      %v5233 = vadd.f32 0.0, %v5232
      %v5234 = vpop.f32.mrb[0].mxu0
      %v5235 = vpop.f32.mrb[0].mxu0
      %v5236 = vadd.f32 0.0, %v5235
      %v5237 = vpop.f32.mrb[0].mxu0
      %5238 = vdwg.mxu0
      %5239 = vmatprep.subr.bf16.mxu0 0
      %5240 = vmatpush1.bf16.msra.mxu0 %v5022
      %5241 = vmatprep.subr.bf16.mxu0 0
      %5242 = vmatpush1.bf16.msra.mxu0 %v5023
      %5243 = vmatprep.subr.bf16.mxu0 0
      %5244 = vmatpush1.bf16.msra.mxu0 %v5024
      %5245 = vmatprep.subr.bf16.mxu0 0
      %5246 = vmatpush1.bf16.msra.mxu0 %v5025
      %5247 = vmatprep.subr.bf16.mxu0 0
      %5248 = vmatpush1.bf16.msra.mxu0 %v5026
      %5249 = vmatprep.subr.bf16.mxu0 0
      %5250 = vmatpush1.bf16.msra.mxu0 %v5027
      %5251 = vmatprep.subr.bf16.mxu0 0
      %5252 = vmatpush1.bf16.msra.mxu0 %v5028
      %5253 = vmatprep.subr.bf16.mxu0 0
      %5254 = vmatpush1.bf16.msra.mxu0 %v5029
      %5255 = vmatprep.subr.bf16.mxu0 0
      %5256 = vmatpush1.bf16.msra.mxu0 %v5030
      %5257 = vmatprep.subr.bf16.mxu0 0
      %5258 = vmatpush1.bf16.msra.mxu0 %v5031
      %5259 = vmatprep.subr.bf16.mxu0 0
      %5260 = vmatpush1.bf16.msra.mxu0 %v5032
      %5261 = vmatprep.subr.bf16.mxu0 0
      %5262 = vmatpush1.bf16.msra.mxu0 %v5033
      %5263 = vmatprep.subr.bf16.mxu0 0
      %5264 = vmatpush1.bf16.msra.mxu0 %v5034
      %5265 = vmatprep.subr.bf16.mxu0 0
      %5266 = vmatpush1.bf16.msra.mxu0 %v5035
      %5267 = vmatprep.subr.bf16.mxu0 0
      %5268 = vmatpush1.bf16.msra.mxu0 %v5036
      %5269 = vmatprep.subr.bf16.mxu0 0
      %5270 = vmatpush1.bf16.msra.mxu0 %v5037
      %5271 = vmatprep.mubr.bf16.mxu0 %v2727
      %5272 = vmatmul.mubr.bf16.gmra.mrb[0].mxu0 %v2726
      %v5273 = vpop.f32.mrb[0].mxu0
      %v5274 = vadd.f32 %v5233, %v5273
      %v5275 = vpop.f32.mrb[0].mxu0
      %v5276 = vpop.f32.mrb[0].mxu0
      %v5277 = vadd.f32 %v5236, %v5276
      %v5278 = vpop.f32.mrb[0].mxu0
      %5279 = vdwg.mxu0
      %5280 = vmatprep.subr.bf16.mxu0 0
      %5281 = vmatpush1.bf16.msra.mxu0 %v5038
      %5282 = vmatprep.subr.bf16.mxu0 0
      %5283 = vmatpush1.bf16.msra.mxu0 %v5039
      %5284 = vmatprep.subr.bf16.mxu0 0
      %5285 = vmatpush1.bf16.msra.mxu0 %v5040
      %5286 = vmatprep.subr.bf16.mxu0 0
      %5287 = vmatpush1.bf16.msra.mxu0 %v5041
      %5288 = vmatprep.subr.bf16.mxu0 0
      %5289 = vmatpush1.bf16.msra.mxu0 %v5042
      %5290 = vmatprep.subr.bf16.mxu0 0
      %5291 = vmatpush1.bf16.msra.mxu0 %v5043
      %5292 = vmatprep.subr.bf16.mxu0 0
      %5293 = vmatpush1.bf16.msra.mxu0 %v5044
      %5294 = vmatprep.subr.bf16.mxu0 0
      %5295 = vmatpush1.bf16.msra.mxu0 %v5045
      %5296 = vmatprep.subr.bf16.mxu0 0
      %5297 = vmatpush1.bf16.msra.mxu0 %v5046
      %5298 = vmatprep.subr.bf16.mxu0 0
      %5299 = vmatpush1.bf16.msra.mxu0 %v5047
      %5300 = vmatprep.subr.bf16.mxu0 0
      %5301 = vmatpush1.bf16.msra.mxu0 %v5048
      %5302 = vmatprep.subr.bf16.mxu0 0
      %5303 = vmatpush1.bf16.msra.mxu0 %v5049
      %5304 = vmatprep.subr.bf16.mxu0 0
      %5305 = vmatpush1.bf16.msra.mxu0 %v5050
      %5306 = vmatprep.subr.bf16.mxu0 0
      %5307 = vmatpush1.bf16.msra.mxu0 %v5051
      %5308 = vmatprep.subr.bf16.mxu0 0
      %5309 = vmatpush1.bf16.msra.mxu0 %v5052
      %5310 = vmatprep.subr.bf16.mxu0 0
      %5311 = vmatpush1.bf16.msra.mxu0 %v5053
      %5312 = vmatprep.mubr.bf16.mxu0 %v4569
      %5313 = vmatmul.mubr.bf16.gmra.mrb[0].mxu0 %v4557
      %v5314 = vpop.f32.mrb[0].mxu0
      %v5315 = vadd.f32 %v5274, %v5314
      %v5316 = vpop.f32.mrb[0].mxu0
      %v5317 = vpop.f32.mrb[0].mxu0
      %v5318 = vadd.f32 %v5277, %v5317
      %v5319 = vpop.f32.mrb[0].mxu0
      %5320 = vdwg.mxu0
      %5321 = vmatprep.subr.bf16.mxu0 0
      %5322 = vmatpush1.bf16.msra.mxu0 %v5054
      %5323 = vmatprep.subr.bf16.mxu0 0
      %5324 = vmatpush1.bf16.msra.mxu0 %v5055
      %5325 = vmatprep.subr.bf16.mxu0 0
      %5326 = vmatpush1.bf16.msra.mxu0 %v5056
      %5327 = vmatprep.subr.bf16.mxu0 0
      %5328 = vmatpush1.bf16.msra.mxu0 %v5057
      %5329 = vmatprep.subr.bf16.mxu0 0
      %5330 = vmatpush1.bf16.msra.mxu0 %v5058
      %5331 = vmatprep.subr.bf16.mxu0 0
      %5332 = vmatpush1.bf16.msra.mxu0 %v5059
      %5333 = vmatprep.subr.bf16.mxu0 0
      %5334 = vmatpush1.bf16.msra.mxu0 %v5060
      %5335 = vmatprep.subr.bf16.mxu0 0
      %5336 = vmatpush1.bf16.msra.mxu0 %v5061
      %5337 = vmatprep.subr.bf16.mxu0 0
      %5338 = vmatpush1.bf16.msra.mxu0 %v5062
      %5339 = vmatprep.subr.bf16.mxu0 0
      %5340 = vmatpush1.bf16.msra.mxu0 %v5063
      %5341 = vmatprep.subr.bf16.mxu0 0
      %5342 = vmatpush1.bf16.msra.mxu0 %v5064
      %5343 = vmatprep.subr.bf16.mxu0 0
      %5344 = vmatpush1.bf16.msra.mxu0 %v5065
      %5345 = vmatprep.subr.bf16.mxu0 0
      %5346 = vmatpush1.bf16.msra.mxu0 %v5066
      %5347 = vmatprep.subr.bf16.mxu0 0
      %5348 = vmatpush1.bf16.msra.mxu0 %v5067
      %5349 = vmatprep.subr.bf16.mxu0 0
      %5350 = vmatpush1.bf16.msra.mxu0 %v5068
      %5351 = vmatprep.subr.bf16.mxu0 0
      %5352 = vmatpush1.bf16.msra.mxu0 %v5069
      %5353 = vmatprep.mubr.bf16.mxu0 %v4593
      %5354 = vmatmul.mubr.bf16.gmra.mrb[0].mxu0 %v4581
      %v5355 = vpop.f32.mrb[0].mxu0
      %v5356 = vadd.f32 %v5315, %v5355
      %v5357 = vpop.f32.mrb[0].mxu0
      %v5358 = vpop.f32.mrb[0].mxu0
      %v5359 = vadd.f32 %v5318, %v5358
      %v5360 = vpop.f32.mrb[0].mxu0
      %5361 = vdwg.mxu0
      %5362 = vmatprep.subr.bf16.mxu0 0
      %5363 = vmatpush1.bf16.msra.mxu0 %v5070
      %5364 = vmatprep.subr.bf16.mxu0 0
      %5365 = vmatpush1.bf16.msra.mxu0 %v5071
      %5366 = vmatprep.subr.bf16.mxu0 0
      %5367 = vmatpush1.bf16.msra.mxu0 %v5072
      %5368 = vmatprep.subr.bf16.mxu0 0
      %5369 = vmatpush1.bf16.msra.mxu0 %v5073
      %5370 = vmatprep.subr.bf16.mxu0 0
      %5371 = vmatpush1.bf16.msra.mxu0 %v5074
      %5372 = vmatprep.subr.bf16.mxu0 0
      %5373 = vmatpush1.bf16.msra.mxu0 %v5075
      %5374 = vmatprep.subr.bf16.mxu0 0
      %5375 = vmatpush1.bf16.msra.mxu0 %v5076
      %5376 = vmatprep.subr.bf16.mxu0 0
      %5377 = vmatpush1.bf16.msra.mxu0 %v5077
      %5378 = vmatprep.subr.bf16.mxu0 0
      %5379 = vmatpush1.bf16.msra.mxu0 %v5078
      %5380 = vmatprep.subr.bf16.mxu0 0
      %5381 = vmatpush1.bf16.msra.mxu0 %v5079
      %5382 = vmatprep.subr.bf16.mxu0 0
      %5383 = vmatpush1.bf16.msra.mxu0 %v5080
      %5384 = vmatprep.subr.bf16.mxu0 0
      %5385 = vmatpush1.bf16.msra.mxu0 %v5081
      %5386 = vmatprep.subr.bf16.mxu0 0
      %5387 = vmatpush1.bf16.msra.mxu0 %v5082
      %5388 = vmatprep.subr.bf16.mxu0 0
      %5389 = vmatpush1.bf16.msra.mxu0 %v5083
      %5390 = vmatprep.subr.bf16.mxu0 0
      %5391 = vmatpush1.bf16.msra.mxu0 %v5084
      %5392 = vmatprep.subr.bf16.mxu0 0
      %5393 = vmatpush1.bf16.msra.mxu0 %v5085
      %5394 = vmatprep.mubr.bf16.mxu0 %v4611
      %5395 = vmatmul.mubr.bf16.gmra.mrb[0].mxu0 %v4608
      %v5396 = vpop.f32.mrb[0].mxu0
      %v5397 = vadd.f32 %v5356, %v5396
      %v5398 = vpop.f32.mrb[0].mxu0
      %v5399 = vpop.f32.mrb[0].mxu0
      %v5400 = vadd.f32 %v5359, %v5399
      %v5401 = vpop.f32.mrb[0].mxu0
      %5402 = vdwg.mxu0
      %5403 = vmatprep.subr.bf16.mxu0 0
      %5404 = vmatpush1.bf16.msra.mxu0 %v5086
      %5405 = vmatprep.subr.bf16.mxu0 0
      %5406 = vmatpush1.bf16.msra.mxu0 %v5087
      %5407 = vmatprep.subr.bf16.mxu0 0
      %5408 = vmatpush1.bf16.msra.mxu0 %v5088
      %5409 = vmatprep.subr.bf16.mxu0 0
      %5410 = vmatpush1.bf16.msra.mxu0 %v5089
      %5411 = vmatprep.subr.bf16.mxu0 0
      %5412 = vmatpush1.bf16.msra.mxu0 %v5090
      %5413 = vmatprep.subr.bf16.mxu0 0
      %5414 = vmatpush1.bf16.msra.mxu0 %v5091
      %5415 = vmatprep.subr.bf16.mxu0 0
      %5416 = vmatpush1.bf16.msra.mxu0 %v5092
      %5417 = vmatprep.subr.bf16.mxu0 0
      %5418 = vmatpush1.bf16.msra.mxu0 %v5093
      %5419 = vmatprep.subr.bf16.mxu0 0
      %5420 = vmatpush1.bf16.msra.mxu0 %v5094
      %5421 = vmatprep.subr.bf16.mxu0 0
      %5422 = vmatpush1.bf16.msra.mxu0 %v5095
      %5423 = vmatprep.subr.bf16.mxu0 0
      %5424 = vmatpush1.bf16.msra.mxu0 %v5096
      %5425 = vmatprep.subr.bf16.mxu0 0
      %5426 = vmatpush1.bf16.msra.mxu0 %v5097
      %5427 = vmatprep.subr.bf16.mxu0 0
      %5428 = vmatpush1.bf16.msra.mxu0 %v5098
      %5429 = vmatprep.subr.bf16.mxu0 0
      %5430 = vmatpush1.bf16.msra.mxu0 %v5099
      %5431 = vmatprep.subr.bf16.mxu0 0
      %5432 = vmatpush1.bf16.msra.mxu0 %v5100
      %5433 = vmatprep.subr.bf16.mxu0 0
      %5434 = vmatpush1.bf16.msra.mxu0 %v5101
      %5435 = vmatprep.mubr.bf16.mxu0 %v4617
      %5436 = vmatmul.mubr.bf16.gmra.mrb[0].mxu0 %v4614
      %v5437 = vpop.f32.mrb[0].mxu0
      %v5438 = vadd.f32 %v5397, %v5437
      %v5439 = vpop.f32.mrb[0].mxu0
      %v5440 = vpop.f32.mrb[0].mxu0
      %v5441 = vadd.f32 %v5400, %v5440
      %v5442 = vpop.f32.mrb[0].mxu0
      %5443 = vdwg.mxu0
      %v5445 = vshrl.u32 %v2728, 16
      %v5447 = vshll.u32 %v2728, 16
      %v5449 = vrot.slane %v5447, 1
      %v5450 = vor.u32 %v5445, %v5449
      %v5452 = vshll.u32 %v2744, 16
      %v5454 = vrot.slane %v5452, 1
      %v5455 = vsel %vm2748, %v5450, %v5454
      %v5457 = vshrl.u32 %v2729, 16
      %v5459 = vshll.u32 %v2729, 16
      %v5461 = vrot.slane %v5459, 1
      %v5462 = vor.u32 %v5457, %v5461
      %v5464 = vshll.u32 %v2745, 16
      %v5466 = vrot.slane %v5464, 1
      %v5467 = vsel %vm2748, %v5462, %v5466
      %v5469 = vshrl.u32 %v2730, 16
      %v5471 = vshll.u32 %v2730, 16
      %v5473 = vrot.slane %v5471, 1
      %v5474 = vor.u32 %v5469, %v5473
      %v5476 = vshll.u32 %v2746, 16
      %v5478 = vrot.slane %v5476, 1
      %v5479 = vsel %vm2748, %v5474, %v5478
      %v5481 = vshrl.u32 %v2731, 16
      %v5483 = vshll.u32 %v2731, 16
      %v5485 = vrot.slane %v5483, 1
      %v5486 = vor.u32 %v5481, %v5485
      %v5488 = vshll.u32 %v2747, 16
      %v5490 = vrot.slane %v5488, 1
      %v5491 = vsel %vm2748, %v5486, %v5490
      %v5504 = vrot.slane %v2728, 1
      %v5505 = vrot.slane %v2744, 1
      %v5506 = vsel %vm2809, %v5504, %v5505
      %v5507 = vrot.slane %v2729, 1
      %v5508 = vrot.slane %v2745, 1
      %v5509 = vsel %vm2809, %v5507, %v5508
      %v5510 = vrot.slane %v2730, 1
      %v5511 = vrot.slane %v2746, 1
      %v5512 = vsel %vm2809, %v5510, %v5511
      %v5513 = vrot.slane %v2731, 1
      %v5514 = vrot.slane %v2747, 1
      %v5515 = vsel %vm2809, %v5513, %v5514
      %v5712 = vunpack.c.l.b16 %v1490
      %v5713 = vunpack.c.l.b16 %v1491
      %v5714 = vunpack.c.l.b16 %v1492
      %v5715 = vunpack.c.l.b16 %v1493
      %v5716 = vunpack.c.l.b16 %v1494
      %v5717 = vunpack.c.l.b16 %v1495
      %v5718 = vunpack.c.l.b16 %v1496
      %v5719 = vunpack.c.l.b16 %v1497
      %v5720 = vunpack.c.l.b16 %v1498
      %v5721 = vunpack.c.l.b16 %v1499
      %v5722 = vunpack.c.l.b16 %v1500
      %v5723 = vunpack.c.l.b16 %v1501
      %v5724 = vunpack.c.l.b16 %v1502
      %v5725 = vunpack.c.l.b16 %v1503
      %v5726 = vunpack.c.l.b16 %v1504
      %v5727 = vunpack.c.l.b16 %v1505
      %v5728 = vunpack.c.l.b16 %v1506
      %v5729 = vunpack.c.l.b16 %v1507
      %v5730 = vunpack.c.l.b16 %v1508
      %v5731 = vunpack.c.l.b16 %v1509
      %v5732 = vunpack.c.l.b16 %v1510
      %v5733 = vunpack.c.l.b16 %v1511
      %v5734 = vunpack.c.l.b16 %v1512
      %v5735 = vunpack.c.l.b16 %v1513
      %v5736 = vunpack.c.l.b16 %v1514
      %v5737 = vunpack.c.l.b16 %v1515
      %v5738 = vunpack.c.l.b16 %v1516
      %v5739 = vunpack.c.l.b16 %v1517
      %v5740 = vunpack.c.l.b16 %v1518
      %v5741 = vunpack.c.l.b16 %v1519
      %v5742 = vunpack.c.l.b16 %v1520
      %v5743 = vunpack.c.l.b16 %v1521
      %v5744 = vunpack.c.l.b16 %v1522
      %v5745 = vunpack.c.l.b16 %v1523
      %v5746 = vunpack.c.l.b16 %v1524
      %v5747 = vunpack.c.l.b16 %v1525
      %v5748 = vunpack.c.l.b16 %v1526
      %v5749 = vunpack.c.l.b16 %v1527
      %v5750 = vunpack.c.l.b16 %v1528
      %v5751 = vunpack.c.l.b16 %v1529
      %v5752 = vunpack.c.l.b16 %v1530
      %v5753 = vunpack.c.l.b16 %v1531
      %v5754 = vunpack.c.l.b16 %v1532
      %v5755 = vunpack.c.l.b16 %v1533
      %v5756 = vunpack.c.l.b16 %v1534
      %v5757 = vunpack.c.l.b16 %v1535
      %v5758 = vunpack.c.l.b16 %v1536
      %v5759 = vunpack.c.l.b16 %v1537
      %v5760 = vunpack.c.l.b16 %v1538
      %v5761 = vunpack.c.l.b16 %v1539
      %v5762 = vunpack.c.l.b16 %v1540
      %v5763 = vunpack.c.l.b16 %v1541
      %v5764 = vunpack.c.l.b16 %v1542
      %v5765 = vunpack.c.l.b16 %v1543
      %v5766 = vunpack.c.l.b16 %v1544
      %v5767 = vunpack.c.l.b16 %v1545
      %v5768 = vunpack.c.l.b16 %v1546
      %v5769 = vunpack.c.l.b16 %v1547
      %v5770 = vunpack.c.l.b16 %v1548
      %v5771 = vunpack.c.l.b16 %v1549
      %v5772 = vunpack.c.l.b16 %v1550
      %v5773 = vunpack.c.l.b16 %v1551
      %v5774 = vunpack.c.l.b16 %v1552
      %v5775 = vunpack.c.l.b16 %v1553
      %v5776 = vunpack.c.l.b16 %v1554
      %v5777 = vunpack.c.l.b16 %v1555
      %v5778 = vunpack.c.l.b16 %v1556
      %v5779 = vunpack.c.l.b16 %v1557
      %v5780 = vunpack.c.l.b16 %v1558
      %v5781 = vunpack.c.l.b16 %v1559
      %v5782 = vunpack.c.l.b16 %v1560
      %v5783 = vunpack.c.l.b16 %v1561
      %v5784 = vunpack.c.l.b16 %v1562
      %v5785 = vunpack.c.l.b16 %v1563
      %v5786 = vunpack.c.l.b16 %v1564
      %v5787 = vunpack.c.l.b16 %v1565
      %v5788 = vunpack.c.l.b16 %v1566
      %v5789 = vunpack.c.l.b16 %v1567
      %v5790 = vunpack.c.l.b16 %v1568
      %v5791 = vunpack.c.l.b16 %v1569
      %v5792 = vunpack.c.l.b16 %v1570
      %v5793 = vunpack.c.l.b16 %v1571
      %v5794 = vunpack.c.l.b16 %v1572
      %v5795 = vunpack.c.l.b16 %v1573
      %v5796 = vunpack.c.l.b16 %v1574
      %v5797 = vunpack.c.l.b16 %v1575
      %v5798 = vunpack.c.l.b16 %v1576
      %v5799 = vunpack.c.l.b16 %v1577
      %v5800 = vunpack.c.l.b16 %v1578
      %v5801 = vunpack.c.l.b16 %v1579
      %v5802 = vunpack.c.l.b16 %v1580
      %v5803 = vunpack.c.l.b16 %v1581
      %v5804 = vunpack.c.l.b16 %v1582
      %v5805 = vunpack.c.l.b16 %v1583
      %v5806 = vunpack.c.l.b16 %v1584
      %v5807 = vunpack.c.l.b16 %v1585
      %v5808 = vunpack.c.l.b16 %v1586
      %v5809 = vunpack.c.l.b16 %v1587
      %v5810 = vunpack.c.l.b16 %v1588
      %v5811 = vunpack.c.l.b16 %v1589
      %v5812 = vunpack.c.l.b16 %v1590
      %v5813 = vunpack.c.l.b16 %v1591
      %v5814 = vunpack.c.l.b16 %v1592
      %v5815 = vunpack.c.l.b16 %v1593
      %v5816 = vunpack.c.l.b16 %v1594
      %v5817 = vunpack.c.l.b16 %v1595
      %v5818 = vunpack.c.l.b16 %v1596
      %v5819 = vunpack.c.l.b16 %v1597
      %v5820 = vunpack.c.l.b16 %v1598
      %v5821 = vunpack.c.l.b16 %v1599
      %v5822 = vunpack.c.l.b16 %v1600
      %v5823 = vunpack.c.l.b16 %v1601
      %v5824 = vunpack.c.l.b16 %v1602
      %v5825 = vunpack.c.l.b16 %v1603
      %v5826 = vunpack.c.l.b16 %v1604
      %v5827 = vunpack.c.l.b16 %v1605
      %v5828 = vunpack.c.l.b16 %v1606
      %v5829 = vunpack.c.l.b16 %v1607
      %v5830 = vunpack.c.l.b16 %v1608
      %v5831 = vunpack.c.l.b16 %v1609
      %v5832 = vunpack.c.l.b16 %v1610
      %v5833 = vunpack.c.l.b16 %v1611
      %v5834 = vunpack.c.l.b16 %v1612
      %v5835 = vunpack.c.l.b16 %v1613
      %v5836 = vunpack.c.l.b16 %v1614
      %v5837 = vunpack.c.l.b16 %v1615
      %v5838 = vunpack.c.l.b16 %v1616
      %v5839 = vunpack.c.l.b16 %v1617
      %v5840 = vunpack.c.l.b16 %v1618
      %v5841 = vunpack.c.l.b16 %v1619
      %v5842 = vunpack.c.l.b16 %v1620
      %v5843 = vunpack.c.l.b16 %v1621
      %v5844 = vunpack.c.l.b16 %v1622
      %v5845 = vunpack.c.l.b16 %v1623
      %v5846 = vunpack.c.l.b16 %v1624
      %v5847 = vunpack.c.l.b16 %v1625
      %v5848 = vunpack.c.l.b16 %v1626
      %v5849 = vunpack.c.l.b16 %v1627
      %v5850 = vunpack.c.l.b16 %v1628
      %v5851 = vunpack.c.l.b16 %v1629
      %v5852 = vunpack.c.l.b16 %v1630
      %v5853 = vunpack.c.l.b16 %v1631
      %v5854 = vunpack.c.l.b16 %v1632
      %v5855 = vunpack.c.l.b16 %v1633
      %v5856 = vunpack.c.l.b16 %v1634
      %v5857 = vunpack.c.l.b16 %v1635
      %v5858 = vunpack.c.l.b16 %v1636
      %v5859 = vunpack.c.l.b16 %v1637
      %v5860 = vunpack.c.l.b16 %v1638
      %v5861 = vunpack.c.l.b16 %v1639
      %v5862 = vunpack.c.l.b16 %v1640
      %v5863 = vunpack.c.l.b16 %v1641
      %v5864 = vunpack.c.l.b16 %v1642
      %v5865 = vunpack.c.l.b16 %v1643
      %v5866 = vunpack.c.l.b16 %v1644
      %v5867 = vunpack.c.l.b16 %v1645
      %v5868 = vunpack.c.l.b16 %v1646
      %v5869 = vunpack.c.l.b16 %v1647
      %v5870 = vunpack.c.l.b16 %v1648
      %v5871 = vunpack.c.l.b16 %v1649
      %v5872 = vunpack.c.l.b16 %v1650
      %v5873 = vunpack.c.l.b16 %v1651
      %v5874 = vunpack.c.l.b16 %v1652
      %v5875 = vunpack.c.l.b16 %v1653
      %v5876 = vunpack.c.l.b16 %v1654
      %v5877 = vunpack.c.l.b16 %v1655
      %v5878 = vunpack.c.l.b16 %v1656
      %v5879 = vunpack.c.l.b16 %v1657
      %v5880 = vunpack.c.l.b16 %v1658
      %v5881 = vunpack.c.l.b16 %v1659
      %v5882 = vunpack.c.l.b16 %v1660
      %v5883 = vunpack.c.l.b16 %v1661
      %v5884 = vunpack.c.l.b16 %v1662
      %v5885 = vunpack.c.l.b16 %v1663
      %v5886 = vunpack.c.l.b16 %v1664
      %v5887 = vunpack.c.l.b16 %v1665
      %v5888 = vunpack.c.l.b16 %v1666
      %v5889 = vunpack.c.l.b16 %v1667
      %v5890 = vunpack.c.l.b16 %v1668
      %v5891 = vunpack.c.l.b16 %v1669
      %v5892 = vunpack.c.l.b16 %v1670
      %v5893 = vunpack.c.l.b16 %v1671
      %v5894 = vunpack.c.l.b16 %v1672
      %v5895 = vunpack.c.l.b16 %v1673
      %v5896 = vunpack.c.l.b16 %v1674
      %v5897 = vunpack.c.l.b16 %v1675
      %v5898 = vunpack.c.l.b16 %v1676
      %v5899 = vunpack.c.l.b16 %v1677
      %v5900 = vunpack.c.l.b16 %v1678
      %v5901 = vunpack.c.l.b16 %v1679
      %v5902 = vunpack.c.l.b16 %v1680
      %v5903 = vunpack.c.l.b16 %v1681
      %v5904 = vpack.c.b16 %v5713, %v5712
      %v5905 = vpack.c.b16 %v5715, %v5714
      %v5906 = vpack.c.b16 %v5717, %v5716
      %v5907 = vpack.c.b16 %v5719, %v5718
      %v5908 = vpack.c.b16 %v5721, %v5720
      %v5909 = vpack.c.b16 %v5723, %v5722
      %v5910 = vpack.c.b16 %v5725, %v5724
      %v5911 = vpack.c.b16 %v5727, %v5726
      %v5912 = vpack.c.b16 %v5729, %v5728
      %v5913 = vpack.c.b16 %v5731, %v5730
      %v5914 = vpack.c.b16 %v5733, %v5732
      %v5915 = vpack.c.b16 %v5735, %v5734
      %v5916 = vpack.c.b16 %v5737, %v5736
      %v5917 = vpack.c.b16 %v5739, %v5738
      %v5918 = vpack.c.b16 %v5741, %v5740
      %v5919 = vpack.c.b16 %v5743, %v5742
      %v5920 = vpack.c.b16 %v5745, %v5744
      %v5921 = vpack.c.b16 %v5747, %v5746
      %v5922 = vpack.c.b16 %v5749, %v5748
      %v5923 = vpack.c.b16 %v5751, %v5750
      %v5924 = vpack.c.b16 %v5753, %v5752
      %v5925 = vpack.c.b16 %v5755, %v5754
      %v5926 = vpack.c.b16 %v5757, %v5756
      %v5927 = vpack.c.b16 %v5759, %v5758
      %v5928 = vpack.c.b16 %v5761, %v5760
      %v5929 = vpack.c.b16 %v5763, %v5762
      %v5930 = vpack.c.b16 %v5765, %v5764
      %v5931 = vpack.c.b16 %v5767, %v5766
      %v5932 = vpack.c.b16 %v5769, %v5768
      %v5933 = vpack.c.b16 %v5771, %v5770
      %v5934 = vpack.c.b16 %v5773, %v5772
      %v5935 = vpack.c.b16 %v5775, %v5774
      %v5936 = vpack.c.b16 %v5777, %v5776
      %v5937 = vpack.c.b16 %v5779, %v5778
      %v5938 = vpack.c.b16 %v5781, %v5780
      %v5939 = vpack.c.b16 %v5783, %v5782
      %v5940 = vpack.c.b16 %v5785, %v5784
      %v5941 = vpack.c.b16 %v5787, %v5786
      %v5942 = vpack.c.b16 %v5789, %v5788
      %v5943 = vpack.c.b16 %v5791, %v5790
      %v5944 = vpack.c.b16 %v5793, %v5792
      %v5945 = vpack.c.b16 %v5795, %v5794
      %v5946 = vpack.c.b16 %v5797, %v5796
      %v5947 = vpack.c.b16 %v5799, %v5798
      %v5948 = vpack.c.b16 %v5801, %v5800
      %v5949 = vpack.c.b16 %v5803, %v5802
      %v5950 = vpack.c.b16 %v5805, %v5804
      %v5951 = vpack.c.b16 %v5807, %v5806
      %v5952 = vpack.c.b16 %v5809, %v5808
      %v5953 = vpack.c.b16 %v5811, %v5810
      %v5954 = vpack.c.b16 %v5813, %v5812
      %v5955 = vpack.c.b16 %v5815, %v5814
      %v5956 = vpack.c.b16 %v5817, %v5816
      %v5957 = vpack.c.b16 %v5819, %v5818
      %v5958 = vpack.c.b16 %v5821, %v5820
      %v5959 = vpack.c.b16 %v5823, %v5822
      %v5960 = vpack.c.b16 %v5825, %v5824
      %v5961 = vpack.c.b16 %v5827, %v5826
      %v5962 = vpack.c.b16 %v5829, %v5828
      %v5963 = vpack.c.b16 %v5831, %v5830
      %v5964 = vpack.c.b16 %v5833, %v5832
      %v5965 = vpack.c.b16 %v5835, %v5834
      %v5966 = vpack.c.b16 %v5837, %v5836
      %v5967 = vpack.c.b16 %v5839, %v5838
      %v5968 = vpack.c.b16 %v5841, %v5840
      %v5969 = vpack.c.b16 %v5843, %v5842
      %v5970 = vpack.c.b16 %v5845, %v5844
      %v5971 = vpack.c.b16 %v5847, %v5846
      %v5972 = vpack.c.b16 %v5849, %v5848
      %v5973 = vpack.c.b16 %v5851, %v5850
      %v5974 = vpack.c.b16 %v5853, %v5852
      %v5975 = vpack.c.b16 %v5855, %v5854
      %v5976 = vpack.c.b16 %v5857, %v5856
      %v5977 = vpack.c.b16 %v5859, %v5858
      %v5978 = vpack.c.b16 %v5861, %v5860
      %v5979 = vpack.c.b16 %v5863, %v5862
      %v5980 = vpack.c.b16 %v5865, %v5864
      %v5981 = vpack.c.b16 %v5867, %v5866
      %v5982 = vpack.c.b16 %v5869, %v5868
      %v5983 = vpack.c.b16 %v5871, %v5870
      %v5984 = vpack.c.b16 %v5873, %v5872
      %v5985 = vpack.c.b16 %v5875, %v5874
      %v5986 = vpack.c.b16 %v5877, %v5876
      %v5987 = vpack.c.b16 %v5879, %v5878
      %v5988 = vpack.c.b16 %v5881, %v5880
      %v5989 = vpack.c.b16 %v5883, %v5882
      %v5990 = vpack.c.b16 %v5885, %v5884
      %v5991 = vpack.c.b16 %v5887, %v5886
      %v5992 = vpack.c.b16 %v5889, %v5888
      %v5993 = vpack.c.b16 %v5891, %v5890
      %v5994 = vpack.c.b16 %v5893, %v5892
      %v5995 = vpack.c.b16 %v5895, %v5894
      %v5996 = vpack.c.b16 %v5897, %v5896
      %v5997 = vpack.c.b16 %v5899, %v5898
      %v5998 = vpack.c.b16 %v5901, %v5900
      %v5999 = vpack.c.b16 %v5903, %v5902
      %6096 = vmatprep.subr.bf16.mxu0 0
      %6097 = vmatpush1.bf16.msra.mxu0 %v5904
      %6098 = vmatprep.subr.bf16.mxu0 0
      %6099 = vmatpush1.bf16.msra.mxu0 %v5905
      %6100 = vmatprep.subr.bf16.mxu0 0
      %6101 = vmatpush1.bf16.msra.mxu0 %v5906
      %6102 = vmatprep.subr.bf16.mxu0 0
      %6103 = vmatpush1.bf16.msra.mxu0 %v5907
      %6104 = vmatprep.subr.bf16.mxu0 0
      %6105 = vmatpush1.bf16.msra.mxu0 %v5908
      %6106 = vmatprep.subr.bf16.mxu0 0
      %6107 = vmatpush1.bf16.msra.mxu0 %v5909
      %6108 = vmatprep.subr.bf16.mxu0 0
      %6109 = vmatpush1.bf16.msra.mxu0 %v5910
      %6110 = vmatprep.subr.bf16.mxu0 0
      %6111 = vmatpush1.bf16.msra.mxu0 %v5911
      %6112 = vmatprep.subr.bf16.mxu0 0
      %6113 = vmatpush1.bf16.msra.mxu0 %v5912
      %6114 = vmatprep.subr.bf16.mxu0 0
      %6115 = vmatpush1.bf16.msra.mxu0 %v5913
      %6116 = vmatprep.subr.bf16.mxu0 0
      %6117 = vmatpush1.bf16.msra.mxu0 %v5914
      %6118 = vmatprep.subr.bf16.mxu0 0
      %6119 = vmatpush1.bf16.msra.mxu0 %v5915
      %6120 = vmatprep.subr.bf16.mxu0 0
      %6121 = vmatpush1.bf16.msra.mxu0 %v5916
      %6122 = vmatprep.subr.bf16.mxu0 0
      %6123 = vmatpush1.bf16.msra.mxu0 %v5917
      %6124 = vmatprep.subr.bf16.mxu0 0
      %6125 = vmatpush1.bf16.msra.mxu0 %v5918
      %6126 = vmatprep.subr.bf16.mxu0 0
      %6127 = vmatpush1.bf16.msra.mxu0 %v5919
      %6128 = vmatprep.mubr.bf16.mxu0 %v2729
      %6129 = vmatmul.mubr.bf16.gmra.mrb[0].mxu0 %v2728
      %v6130 = vpop.f32.mrb[0].mxu0
      %v6131 = vadd.f32 0.0, %v6130
      %v6132 = vpop.f32.mrb[0].mxu0
      %v6133 = vpop.f32.mrb[0].mxu0
      %v6134 = vadd.f32 0.0, %v6133
      %v6135 = vpop.f32.mrb[0].mxu0
      %6136 = vdwg.mxu0
      %6137 = vmatprep.subr.bf16.mxu0 0
      %6138 = vmatpush1.bf16.msra.mxu0 %v5920
      %6139 = vmatprep.subr.bf16.mxu0 0
      %6140 = vmatpush1.bf16.msra.mxu0 %v5921
      %6141 = vmatprep.subr.bf16.mxu0 0
      %6142 = vmatpush1.bf16.msra.mxu0 %v5922
      %6143 = vmatprep.subr.bf16.mxu0 0
      %6144 = vmatpush1.bf16.msra.mxu0 %v5923
      %6145 = vmatprep.subr.bf16.mxu0 0
      %6146 = vmatpush1.bf16.msra.mxu0 %v5924
      %6147 = vmatprep.subr.bf16.mxu0 0
      %6148 = vmatpush1.bf16.msra.mxu0 %v5925
      %6149 = vmatprep.subr.bf16.mxu0 0
      %6150 = vmatpush1.bf16.msra.mxu0 %v5926
      %6151 = vmatprep.subr.bf16.mxu0 0
      %6152 = vmatpush1.bf16.msra.mxu0 %v5927
      %6153 = vmatprep.subr.bf16.mxu0 0
      %6154 = vmatpush1.bf16.msra.mxu0 %v5928
      %6155 = vmatprep.subr.bf16.mxu0 0
      %6156 = vmatpush1.bf16.msra.mxu0 %v5929
      %6157 = vmatprep.subr.bf16.mxu0 0
      %6158 = vmatpush1.bf16.msra.mxu0 %v5930
      %6159 = vmatprep.subr.bf16.mxu0 0
      %6160 = vmatpush1.bf16.msra.mxu0 %v5931
      %6161 = vmatprep.subr.bf16.mxu0 0
      %6162 = vmatpush1.bf16.msra.mxu0 %v5932
      %6163 = vmatprep.subr.bf16.mxu0 0
      %6164 = vmatpush1.bf16.msra.mxu0 %v5933
      %6165 = vmatprep.subr.bf16.mxu0 0
      %6166 = vmatpush1.bf16.msra.mxu0 %v5934
      %6167 = vmatprep.subr.bf16.mxu0 0
      %6168 = vmatpush1.bf16.msra.mxu0 %v5935
      %6169 = vmatprep.mubr.bf16.mxu0 %v2731
      %6170 = vmatmul.mubr.bf16.gmra.mrb[0].mxu0 %v2730
      %v6171 = vpop.f32.mrb[0].mxu0
      %v6172 = vadd.f32 %v6131, %v6171
      %v6173 = vpop.f32.mrb[0].mxu0
      %v6174 = vpop.f32.mrb[0].mxu0
      %v6175 = vadd.f32 %v6134, %v6174
      %v6176 = vpop.f32.mrb[0].mxu0
      %6177 = vdwg.mxu0
      %6178 = vmatprep.subr.bf16.mxu0 0
      %6179 = vmatpush1.bf16.msra.mxu0 %v5936
      %6180 = vmatprep.subr.bf16.mxu0 0
      %6181 = vmatpush1.bf16.msra.mxu0 %v5937
      %6182 = vmatprep.subr.bf16.mxu0 0
      %6183 = vmatpush1.bf16.msra.mxu0 %v5938
      %6184 = vmatprep.subr.bf16.mxu0 0
      %6185 = vmatpush1.bf16.msra.mxu0 %v5939
      %6186 = vmatprep.subr.bf16.mxu0 0
      %6187 = vmatpush1.bf16.msra.mxu0 %v5940
      %6188 = vmatprep.subr.bf16.mxu0 0
      %6189 = vmatpush1.bf16.msra.mxu0 %v5941
      %6190 = vmatprep.subr.bf16.mxu0 0
      %6191 = vmatpush1.bf16.msra.mxu0 %v5942
      %6192 = vmatprep.subr.bf16.mxu0 0
      %6193 = vmatpush1.bf16.msra.mxu0 %v5943
      %6194 = vmatprep.subr.bf16.mxu0 0
      %6195 = vmatpush1.bf16.msra.mxu0 %v5944
      %6196 = vmatprep.subr.bf16.mxu0 0
      %6197 = vmatpush1.bf16.msra.mxu0 %v5945
      %6198 = vmatprep.subr.bf16.mxu0 0
      %6199 = vmatpush1.bf16.msra.mxu0 %v5946
      %6200 = vmatprep.subr.bf16.mxu0 0
      %6201 = vmatpush1.bf16.msra.mxu0 %v5947
      %6202 = vmatprep.subr.bf16.mxu0 0
      %6203 = vmatpush1.bf16.msra.mxu0 %v5948
      %6204 = vmatprep.subr.bf16.mxu0 0
      %6205 = vmatpush1.bf16.msra.mxu0 %v5949
      %6206 = vmatprep.subr.bf16.mxu0 0
      %6207 = vmatpush1.bf16.msra.mxu0 %v5950
      %6208 = vmatprep.subr.bf16.mxu0 0
      %6209 = vmatpush1.bf16.msra.mxu0 %v5951
      %6210 = vmatprep.mubr.bf16.mxu0 %v5467
      %6211 = vmatmul.mubr.bf16.gmra.mrb[0].mxu0 %v5455
      %v6212 = vpop.f32.mrb[0].mxu0
      %v6213 = vadd.f32 %v6172, %v6212
      %v6214 = vpop.f32.mrb[0].mxu0
      %v6215 = vpop.f32.mrb[0].mxu0
      %v6216 = vadd.f32 %v6175, %v6215
      %v6217 = vpop.f32.mrb[0].mxu0
      %6218 = vdwg.mxu0
      %6219 = vmatprep.subr.bf16.mxu0 0
      %6220 = vmatpush1.bf16.msra.mxu0 %v5952
      %6221 = vmatprep.subr.bf16.mxu0 0
      %6222 = vmatpush1.bf16.msra.mxu0 %v5953
      %6223 = vmatprep.subr.bf16.mxu0 0
      %6224 = vmatpush1.bf16.msra.mxu0 %v5954
      %6225 = vmatprep.subr.bf16.mxu0 0
      %6226 = vmatpush1.bf16.msra.mxu0 %v5955
      %6227 = vmatprep.subr.bf16.mxu0 0
      %6228 = vmatpush1.bf16.msra.mxu0 %v5956
      %6229 = vmatprep.subr.bf16.mxu0 0
      %6230 = vmatpush1.bf16.msra.mxu0 %v5957
      %6231 = vmatprep.subr.bf16.mxu0 0
      %6232 = vmatpush1.bf16.msra.mxu0 %v5958
      %6233 = vmatprep.subr.bf16.mxu0 0
      %6234 = vmatpush1.bf16.msra.mxu0 %v5959
      %6235 = vmatprep.subr.bf16.mxu0 0
      %6236 = vmatpush1.bf16.msra.mxu0 %v5960
      %6237 = vmatprep.subr.bf16.mxu0 0
      %6238 = vmatpush1.bf16.msra.mxu0 %v5961
      %6239 = vmatprep.subr.bf16.mxu0 0
      %6240 = vmatpush1.bf16.msra.mxu0 %v5962
      %6241 = vmatprep.subr.bf16.mxu0 0
      %6242 = vmatpush1.bf16.msra.mxu0 %v5963
      %6243 = vmatprep.subr.bf16.mxu0 0
      %6244 = vmatpush1.bf16.msra.mxu0 %v5964
      %6245 = vmatprep.subr.bf16.mxu0 0
      %6246 = vmatpush1.bf16.msra.mxu0 %v5965
      %6247 = vmatprep.subr.bf16.mxu0 0
      %6248 = vmatpush1.bf16.msra.mxu0 %v5966
      %6249 = vmatprep.subr.bf16.mxu0 0
      %6250 = vmatpush1.bf16.msra.mxu0 %v5967
      %6251 = vmatprep.mubr.bf16.mxu0 %v5491
      %6252 = vmatmul.mubr.bf16.gmra.mrb[0].mxu0 %v5479
      %v6253 = vpop.f32.mrb[0].mxu0
      %v6254 = vadd.f32 %v6213, %v6253
      %v6255 = vpop.f32.mrb[0].mxu0
      %v6256 = vpop.f32.mrb[0].mxu0
      %v6257 = vadd.f32 %v6216, %v6256
      %v6258 = vpop.f32.mrb[0].mxu0
      %6259 = vdwg.mxu0
      %6260 = vmatprep.subr.bf16.mxu0 0
      %6261 = vmatpush1.bf16.msra.mxu0 %v5968
      %6262 = vmatprep.subr.bf16.mxu0 0
      %6263 = vmatpush1.bf16.msra.mxu0 %v5969
      %6264 = vmatprep.subr.bf16.mxu0 0
      %6265 = vmatpush1.bf16.msra.mxu0 %v5970
      %6266 = vmatprep.subr.bf16.mxu0 0
      %6267 = vmatpush1.bf16.msra.mxu0 %v5971
      %6268 = vmatprep.subr.bf16.mxu0 0
      %6269 = vmatpush1.bf16.msra.mxu0 %v5972
      %6270 = vmatprep.subr.bf16.mxu0 0
      %6271 = vmatpush1.bf16.msra.mxu0 %v5973
      %6272 = vmatprep.subr.bf16.mxu0 0
      %6273 = vmatpush1.bf16.msra.mxu0 %v5974
      %6274 = vmatprep.subr.bf16.mxu0 0
      %6275 = vmatpush1.bf16.msra.mxu0 %v5975
      %6276 = vmatprep.subr.bf16.mxu0 0
      %6277 = vmatpush1.bf16.msra.mxu0 %v5976
      %6278 = vmatprep.subr.bf16.mxu0 0
      %6279 = vmatpush1.bf16.msra.mxu0 %v5977
      %6280 = vmatprep.subr.bf16.mxu0 0
      %6281 = vmatpush1.bf16.msra.mxu0 %v5978
      %6282 = vmatprep.subr.bf16.mxu0 0
      %6283 = vmatpush1.bf16.msra.mxu0 %v5979
      %6284 = vmatprep.subr.bf16.mxu0 0
      %6285 = vmatpush1.bf16.msra.mxu0 %v5980
      %6286 = vmatprep.subr.bf16.mxu0 0
      %6287 = vmatpush1.bf16.msra.mxu0 %v5981
      %6288 = vmatprep.subr.bf16.mxu0 0
      %6289 = vmatpush1.bf16.msra.mxu0 %v5982
      %6290 = vmatprep.subr.bf16.mxu0 0
      %6291 = vmatpush1.bf16.msra.mxu0 %v5983
      %6292 = vmatprep.mubr.bf16.mxu0 %v5509
      %6293 = vmatmul.mubr.bf16.gmra.mrb[0].mxu0 %v5506
      %v6294 = vpop.f32.mrb[0].mxu0
      %v6295 = vadd.f32 %v6254, %v6294
      %v6296 = vpop.f32.mrb[0].mxu0
      %v6297 = vpop.f32.mrb[0].mxu0
      %v6298 = vadd.f32 %v6257, %v6297
      %v6299 = vpop.f32.mrb[0].mxu0
      %6300 = vdwg.mxu0
      %6301 = vmatprep.subr.bf16.mxu0 0
      %6302 = vmatpush1.bf16.msra.mxu0 %v5984
      %6303 = vmatprep.subr.bf16.mxu0 0
      %6304 = vmatpush1.bf16.msra.mxu0 %v5985
      %6305 = vmatprep.subr.bf16.mxu0 0
      %6306 = vmatpush1.bf16.msra.mxu0 %v5986
      %6307 = vmatprep.subr.bf16.mxu0 0
      %6308 = vmatpush1.bf16.msra.mxu0 %v5987
      %6309 = vmatprep.subr.bf16.mxu0 0
      %6310 = vmatpush1.bf16.msra.mxu0 %v5988
      %6311 = vmatprep.subr.bf16.mxu0 0
      %6312 = vmatpush1.bf16.msra.mxu0 %v5989
      %6313 = vmatprep.subr.bf16.mxu0 0
      %6314 = vmatpush1.bf16.msra.mxu0 %v5990
      %6315 = vmatprep.subr.bf16.mxu0 0
      %6316 = vmatpush1.bf16.msra.mxu0 %v5991
      %6317 = vmatprep.subr.bf16.mxu0 0
      %6318 = vmatpush1.bf16.msra.mxu0 %v5992
      %6319 = vmatprep.subr.bf16.mxu0 0
      %6320 = vmatpush1.bf16.msra.mxu0 %v5993
      %6321 = vmatprep.subr.bf16.mxu0 0
      %6322 = vmatpush1.bf16.msra.mxu0 %v5994
      %6323 = vmatprep.subr.bf16.mxu0 0
      %6324 = vmatpush1.bf16.msra.mxu0 %v5995
      %6325 = vmatprep.subr.bf16.mxu0 0
      %6326 = vmatpush1.bf16.msra.mxu0 %v5996
      %6327 = vmatprep.subr.bf16.mxu0 0
      %6328 = vmatpush1.bf16.msra.mxu0 %v5997
      %6329 = vmatprep.subr.bf16.mxu0 0
      %6330 = vmatpush1.bf16.msra.mxu0 %v5998
      %6331 = vmatprep.subr.bf16.mxu0 0
      %6332 = vmatpush1.bf16.msra.mxu0 %v5999
      %6333 = vmatprep.mubr.bf16.mxu0 %v5515
      %6334 = vmatmul.mubr.bf16.gmra.mrb[0].mxu0 %v5512
      %v6335 = vpop.f32.mrb[0].mxu0
      %v6336 = vadd.f32 %v6295, %v6335
      %v6337 = vpop.f32.mrb[0].mxu0
      %v6338 = vpop.f32.mrb[0].mxu0
      %v6339 = vadd.f32 %v6298, %v6338
      %v6340 = vpop.f32.mrb[0].mxu0
      %6341 = vdwg.mxu0
      %6344 = vrot.lane.b32.xlu0 %v4540, 64
      %v6345 = vpop.permute.xlu0 %6344
      %6346 = vrot.lane.b32.xlu0 %v4543, 64
      %v6347 = vpop.permute.xlu0 %6346
      %6352 = vrot.lane.b32.xlu0 %v6336, 64
      %v6353 = vpop.permute.xlu0 %6352
      %6354 = vrot.lane.b32.xlu0 %v6339, 64
      %v6355 = vpop.permute.xlu0 %6354
      %vm6358 = vcmask 523264
      %v6359 = vsel %vm6358, %v3642, %v6345
      %v6360 = vsel %vm6358, %v3645, %v6347
      %v6361 = vsel %vm6358, %v5438, %v6353
      %v6362 = vsel %vm6358, %v5441, %v6355
      %v6364 = vlaneseq
      %v6365 = vshrl.u32 %v6364, 7
      %v6366 = vsub.s32 0, %v6365
      %v6367 = vrot.slane %v1682, %v6366
      %v6368 = vlaneseq
      %v6369 = vshrl.u32 %v6368, 7
      %v6370 = vsub.s32 1, %v6369
      %v6371 = vrot.slane %v1682, %v6370
      %v6374 = vadd.f32 %v6359, %v6367
      %v6375 = vadd.f32 %v6361, %v6371
      %v6376 = vadd.f32 %v6360, %v6367
      %v6377 = vadd.f32 %v6362, %v6371
      %v6378 = vmax.f32 %v6374, 0.0
      %v6379 = vmax.f32 %v6375, 0.0
      %v6380 = vmax.f32 %v6376, 0.0
      %v6381 = vmax.f32 %v6377, 0.0
      %v6382 = vld [vmem:[%s3] sm:$0xf]
      %v6383 = vld [vmem:[%s3 + $0x4] sm:$0xf]
      %v6384 = vld [vmem:[%s3 + $0x8] sm:$0xf]
      %v6385 = vld [vmem:[%s3 + $0xc] sm:$0xf]
      %v6386 = vld [vmem:[%s3 + $0x10] sm:$0xf]
      %v6387 = vld [vmem:[%s3 + $0x14] sm:$0xf]
      %v6388 = vld [vmem:[%s3 + $0x18] sm:$0xf]
      %v6389 = vld [vmem:[%s3 + $0x1c] sm:$0xf]
      %v6390 = vld [vmem:[%s3 + $0x20] sm:$0xf]
      %v6391 = vld [vmem:[%s3 + $0x24] sm:$0xf]
      %v6392 = vld [vmem:[%s3 + $0x28] sm:$0xf]
      %v6393 = vld [vmem:[%s3 + $0x2c] sm:$0xf]
      %v6394 = vld [vmem:[%s3 + $0x30] sm:$0xf]
      %v6395 = vld [vmem:[%s3 + $0x34] sm:$0xf]
      %v6396 = vld [vmem:[%s3 + $0x38] sm:$0xf]
      %v6397 = vld [vmem:[%s3 + $0x3c] sm:$0xf]
      %v6398 = vld [vmem:[%s3 + $0x40] sm:$0xf]
      %v6399 = vld [vmem:[%s3 + $0x44] sm:$0xf]
      %v6400 = vld [vmem:[%s3 + $0x48] sm:$0xf]
      %v6401 = vld [vmem:[%s3 + $0x4c] sm:$0xf]
      %v6402 = vld [vmem:[%s3 + $0x50] sm:$0xf]
      %v6403 = vld [vmem:[%s3 + $0x54] sm:$0xf]
      %v6404 = vld [vmem:[%s3 + $0x58] sm:$0xf]
      %v6405 = vld [vmem:[%s3 + $0x5c] sm:$0xf]
      %v6406 = vld [vmem:[%s3 + $0x60] sm:$0xf]
      %v6407 = vld [vmem:[%s3 + $0x64] sm:$0xf]
      %v6408 = vld [vmem:[%s3 + $0x68] sm:$0xf]
      %v6409 = vld [vmem:[%s3 + $0x6c] sm:$0xf]
      %v6410 = vld [vmem:[%s3 + $0x70] sm:$0xf]
      %v6411 = vld [vmem:[%s3 + $0x74] sm:$0xf]
      %v6412 = vld [vmem:[%s3 + $0x78] sm:$0xf]
      %v6413 = vld [vmem:[%s3 + $0x7c] sm:$0xf]
      %v6414 = vld [vmem:[%s4] sm:$0xf]
      %v6415 = vld [vmem:[%s4 + $0x4] sm:$0xf]
      %v6416 = vld [vmem:[%s4 + $0x8] sm:$0xf]
      %v6417 = vld [vmem:[%s4 + $0xc] sm:$0xf]
      %v6418 = vld [vmem:[%s4 + $0x10] sm:$0xf]
      %v6419 = vld [vmem:[%s4 + $0x14] sm:$0xf]
      %v6420 = vld [vmem:[%s4 + $0x18] sm:$0xf]
      %v6421 = vld [vmem:[%s4 + $0x1c] sm:$0xf]
      %v6422 = vld [vmem:[%s4 + $0x20] sm:$0xf]
      %v6423 = vld [vmem:[%s4 + $0x24] sm:$0xf]
      %v6424 = vld [vmem:[%s4 + $0x28] sm:$0xf]
      %v6425 = vld [vmem:[%s4 + $0x2c] sm:$0xf]
      %v6426 = vld [vmem:[%s4 + $0x30] sm:$0xf]
      %v6427 = vld [vmem:[%s4 + $0x34] sm:$0xf]
      %v6428 = vld [vmem:[%s4 + $0x38] sm:$0xf]
      %v6429 = vld [vmem:[%s4 + $0x3c] sm:$0xf]
      %v6430 = vld [vmem:[%s4 + $0x40] sm:$0xf]
      %v6431 = vld [vmem:[%s4 + $0x44] sm:$0xf]
      %v6432 = vld [vmem:[%s4 + $0x48] sm:$0xf]
      %v6433 = vld [vmem:[%s4 + $0x4c] sm:$0xf]
      %v6434 = vld [vmem:[%s4 + $0x50] sm:$0xf]
      %v6435 = vld [vmem:[%s4 + $0x54] sm:$0xf]
      %v6436 = vld [vmem:[%s4 + $0x58] sm:$0xf]
      %v6437 = vld [vmem:[%s4 + $0x5c] sm:$0xf]
      %v6438 = vld [vmem:[%s4 + $0x60] sm:$0xf]
      %v6439 = vld [vmem:[%s4 + $0x64] sm:$0xf]
      %v6440 = vld [vmem:[%s4 + $0x68] sm:$0xf]
      %v6441 = vld [vmem:[%s4 + $0x6c] sm:$0xf]
      %v6442 = vld [vmem:[%s4 + $0x70] sm:$0xf]
      %v6443 = vld [vmem:[%s4 + $0x74] sm:$0xf]
      %v6444 = vld [vmem:[%s4 + $0x78] sm:$0xf]
      %v6445 = vld [vmem:[%s4 + $0x7c] sm:$0xf]
      %v6446 = vld [vmem:[%s5] sm:$0x1]
      %v6447 = vld [vmem:[%s6] sm:$0xf]
      %v6448 = vld [vmem:[%s6 + $0x4] sm:$0xf]
      %v6449 = vld [vmem:[%s6 + $0x8] sm:$0xf]
      %v6450 = vld [vmem:[%s6 + $0xc] sm:$0xf]
      %v6451 = vld [vmem:[%s6 + $0x10] sm:$0xf]
      %v6452 = vld [vmem:[%s6 + $0x14] sm:$0xf]
      %v6453 = vld [vmem:[%s6 + $0x18] sm:$0xf]
      %v6454 = vld [vmem:[%s6 + $0x1c] sm:$0xf]
      %v6455 = vld [vmem:[%s6 + $0x20] sm:$0xf]
      %v6456 = vld [vmem:[%s6 + $0x24] sm:$0xf]
      %v6457 = vld [vmem:[%s6 + $0x28] sm:$0xf]
      %v6458 = vld [vmem:[%s6 + $0x2c] sm:$0xf]
      %v6459 = vld [vmem:[%s6 + $0x30] sm:$0xf]
      %v6460 = vld [vmem:[%s6 + $0x34] sm:$0xf]
      %v6461 = vld [vmem:[%s6 + $0x38] sm:$0xf]
      %v6462 = vld [vmem:[%s6 + $0x3c] sm:$0xf]
      %v6463 = vld [vmem:[%s7] sm:$0x1]
      %v6464 = vld [vmem:[%s8] sm:$0xff]
      %v6465 = vld [vmem:[%s8 + $0x8] sm:$0xff]
      %v6466 = vld [vmem:[%s8 + $0x10] sm:$0xff]
      %v6467 = vld [vmem:[%s8 + $0x18] sm:$0xff]
      %v6468 = vld [vmem:[%s8 + $0x20] sm:$0xff]
      %v6469 = vld [vmem:[%s8 + $0x28] sm:$0xff]
      %v6470 = vld [vmem:[%s8 + $0x30] sm:$0xff]
      %v6471 = vld [vmem:[%s8 + $0x38] sm:$0xff]
      %v6472 = vld [vmem:[%s8 + $0x40] sm:$0xff]
      %v6473 = vld [vmem:[%s8 + $0x48] sm:$0xff]
      %v6474 = vld [vmem:[%s8 + $0x50] sm:$0xff]
      %v6475 = vld [vmem:[%s8 + $0x58] sm:$0xff]
      %v6476 = vld [vmem:[%s8 + $0x60] sm:$0xff]
      %v6477 = vld [vmem:[%s8 + $0x68] sm:$0xff]
      %v6478 = vld [vmem:[%s8 + $0x70] sm:$0xff]
      %v6479 = vld [vmem:[%s8 + $0x78] sm:$0xff]
      %v6480 = vld [vmem:[%s9] sm:$0x3]
      %v6481 = vld [vmem:[%s10] sm:$0xff]
      %v6482 = vld [vmem:[%s10 + $0x8] sm:$0xff]
      %v6483 = vld [vmem:[%s10 + $0x10] sm:$0xff]
      %v6484 = vld [vmem:[%s10 + $0x18] sm:$0xff]
      %v6485 = vld [vmem:[%s10 + $0x20] sm:$0xff]
      %v6486 = vld [vmem:[%s10 + $0x28] sm:$0xff]
      %v6487 = vld [vmem:[%s10 + $0x30] sm:$0xff]
      %v6488 = vld [vmem:[%s10 + $0x38] sm:$0xff]
      %v6489 = vld [vmem:[%s10 + $0x40] sm:$0xff]
      %v6490 = vld [vmem:[%s10 + $0x48] sm:$0xff]
      %v6491 = vld [vmem:[%s10 + $0x50] sm:$0xff]
      %v6492 = vld [vmem:[%s10 + $0x58] sm:$0xff]
      %v6493 = vld [vmem:[%s10 + $0x60] sm:$0xff]
      %v6494 = vld [vmem:[%s10 + $0x68] sm:$0xff]
      %v6495 = vld [vmem:[%s10 + $0x70] sm:$0xff]
      %v6496 = vld [vmem:[%s10 + $0x78] sm:$0xff]
      %v6497 = vld [vmem:[%s10 + $0x80] sm:$0xff]
      %v6498 = vld [vmem:[%s10 + $0x88] sm:$0xff]
      %v6499 = vld [vmem:[%s10 + $0x90] sm:$0xff]
      %v6500 = vld [vmem:[%s10 + $0x98] sm:$0xff]
      %v6501 = vld [vmem:[%s10 + $0xa0] sm:$0xff]
      %v6502 = vld [vmem:[%s10 + $0xa8] sm:$0xff]
      %v6503 = vld [vmem:[%s10 + $0xb0] sm:$0xff]
      %v6504 = vld [vmem:[%s10 + $0xb8] sm:$0xff]
      %v6505 = vld [vmem:[%s10 + $0xc0] sm:$0xff]
      %v6506 = vld [vmem:[%s10 + $0xc8] sm:$0xff]
      %v6507 = vld [vmem:[%s10 + $0xd0] sm:$0xff]
      %v6508 = vld [vmem:[%s10 + $0xd8] sm:$0xff]
      %v6509 = vld [vmem:[%s10 + $0xe0] sm:$0xff]
      %v6510 = vld [vmem:[%s10 + $0xe8] sm:$0xff]
      %v6511 = vld [vmem:[%s10 + $0xf0] sm:$0xff]
      %v6512 = vld [vmem:[%s10 + $0xf8] sm:$0xff]
      %v6513 = vld [vmem:[%s11] sm:$0x3]
      %v6514 = vpack.c.bf16 %v6380, %v6378
      %v6515 = vpack.c.bf16 %v6381, %v6379
      %6516 = vmatprep.subr.bf16.mxu0 %v6515
      %6517 = vmatpush1.bf16.xpose.msra.mxu0 %v6514
      %6518 = vmatprep.subr.bf16.mxu0 0
      %6519 = vmatpush1.bf16.xpose.msra.mxu0 0
      %6520 = vmatprep.subr.bf16.mxu0 0
      %6521 = vmatpush1.bf16.xpose.msra.mxu0 0
      %6522 = vmatprep.subr.bf16.mxu0 0
      %6523 = vmatpush1.bf16.xpose.msra.mxu0 0
      %6524 = vmatprep.subr.bf16.mxu0 0
      %6525 = vmatpush1.bf16.xpose.msra.mxu0 0
      %6526 = vmatprep.subr.bf16.mxu0 0
      %6527 = vmatpush1.bf16.xpose.msra.mxu0 0
      %6528 = vmatprep.subr.bf16.mxu0 0
      %6529 = vmatpush1.bf16.xpose.msra.mxu0 0
      %6530 = vmatprep.subr.bf16.mxu0 0
      %6531 = vmatpush1.bf16.xpose.msra.mxu0 0
      %6532 = vmatprep.subr.bf16.mxu0 0
      %6533 = vmatpush1.bf16.xpose.msra.mxu0 0
      %6534 = vmatprep.subr.bf16.mxu0 0
      %6535 = vmatpush1.bf16.xpose.msra.mxu0 0
      %6536 = vmatprep.subr.bf16.mxu0 0
      %6537 = vmatpush1.bf16.xpose.msra.mxu0 0
      %6538 = vmatprep.subr.bf16.mxu0 0
      %6539 = vmatpush1.bf16.xpose.msra.mxu0 0
      %6540 = vmatprep.subr.bf16.mxu0 0
      %6541 = vmatpush1.bf16.xpose.msra.mxu0 0
      %6542 = vmatprep.subr.bf16.mxu0 0
      %6543 = vmatpush1.bf16.xpose.msra.mxu0 0
      %6544 = vmatprep.subr.bf16.mxu0 0
      %6545 = vmatpush1.bf16.xpose.msra.mxu0 0
      %6546 = vmatprep.subr.bf16.mxu0 0
      %6547 = vmatpush1.bf16.xpose.msra.mxu0 0
      %6548 = vmatprep.mubr.bf16.mxu0 %v6515
      %6549 = vmatmul.mubr.bf16.gmra.mrb[0].mxu0 %v6514
      %v6550 = vpop.f32.mrb[0].mxu0
      %v6551 = vadd.f32 0.0, %v6550
      %v6552 = vpop.f32.mrb[0].mxu0
      %v6553 = vpop.f32.mrb[0].mxu0
      %v6554 = vadd.f32 0.0, %v6553
      %v6555 = vpop.f32.mrb[0].mxu0
      %6556 = vdwg.mxu0
      %v6557 = vsel %vm1688, %v6551, 0.0
      %v6558 = vsel %vm1689, %v6554, 0.0
      %v6559 = vsel %vm1823, %v6557, 0.0
      %v6560 = vsel %vm1823, %v6558, 0.0
      %v6561 = vadd.f32 %v6559, %v6560
      %v6562 = vrot.slane %v6561, 4
      %v6563 = vadd.f32 %v6561, %v6562
      %v6564 = vrot.slane %v6563, 2
      %v6565 = vadd.f32 %v6563, %v6564
      %v6566 = vrot.slane %v6565, 1
      %v6567 = vadd.f32 %v6565, %v6566
      %v6568 = vmul.f32 %v6551, 2.0
      %v6569 = vmul.f32 %v6554, 2.0
      %v6570 = vsub.f32 %v6568, %v6567
      %v6571 = vsub.f32 %v6569, %v6567
      %v6604 = vunpack.c.l.b16 %v6382
      %v6605 = vunpack.c.l.b16 %v6383
      %v6606 = vunpack.c.l.b16 %v6384
      %v6607 = vunpack.c.l.b16 %v6385
      %v6608 = vunpack.c.l.b16 %v6386
      %v6609 = vunpack.c.l.b16 %v6387
      %v6610 = vunpack.c.l.b16 %v6388
      %v6611 = vunpack.c.l.b16 %v6389
      %v6612 = vunpack.c.l.b16 %v6390
      %v6613 = vunpack.c.l.b16 %v6391
      %v6614 = vunpack.c.l.b16 %v6392
      %v6615 = vunpack.c.l.b16 %v6393
      %v6616 = vunpack.c.l.b16 %v6394
      %v6617 = vunpack.c.l.b16 %v6395
      %v6618 = vunpack.c.l.b16 %v6396
      %v6619 = vunpack.c.l.b16 %v6397
      %v6620 = vunpack.c.l.b16 %v6398
      %v6621 = vunpack.c.l.b16 %v6399
      %v6622 = vunpack.c.l.b16 %v6400
      %v6623 = vunpack.c.l.b16 %v6401
      %v6624 = vunpack.c.l.b16 %v6402
      %v6625 = vunpack.c.l.b16 %v6403
      %v6626 = vunpack.c.l.b16 %v6404
      %v6627 = vunpack.c.l.b16 %v6405
      %v6628 = vunpack.c.l.b16 %v6406
      %v6629 = vunpack.c.l.b16 %v6407
      %v6630 = vunpack.c.l.b16 %v6408
      %v6631 = vunpack.c.l.b16 %v6409
      %v6632 = vunpack.c.l.b16 %v6410
      %v6633 = vunpack.c.l.b16 %v6411
      %v6634 = vunpack.c.l.b16 %v6412
      %v6635 = vunpack.c.l.b16 %v6413
      %v6636 = vpack.c.b16 %v6605, %v6604
      %v6637 = vpack.c.b16 %v6607, %v6606
      %v6638 = vpack.c.b16 %v6609, %v6608
      %v6639 = vpack.c.b16 %v6611, %v6610
      %v6640 = vpack.c.b16 %v6613, %v6612
      %v6641 = vpack.c.b16 %v6615, %v6614
      %v6642 = vpack.c.b16 %v6617, %v6616
      %v6643 = vpack.c.b16 %v6619, %v6618
      %v6644 = vpack.c.b16 %v6621, %v6620
      %v6645 = vpack.c.b16 %v6623, %v6622
      %v6646 = vpack.c.b16 %v6625, %v6624
      %v6647 = vpack.c.b16 %v6627, %v6626
      %v6648 = vpack.c.b16 %v6629, %v6628
      %v6649 = vpack.c.b16 %v6631, %v6630
      %v6650 = vpack.c.b16 %v6633, %v6632
      %v6651 = vpack.c.b16 %v6635, %v6634
      %6668 = vmatprep.subr.bf16.mxu0 0
      %6669 = vmatpush1.bf16.msra.mxu0 %v6636
      %6670 = vmatprep.subr.bf16.mxu0 0
      %6671 = vmatpush1.bf16.msra.mxu0 %v6637
      %6672 = vmatprep.subr.bf16.mxu0 0
      %6673 = vmatpush1.bf16.msra.mxu0 %v6638
      %6674 = vmatprep.subr.bf16.mxu0 0
      %6675 = vmatpush1.bf16.msra.mxu0 %v6639
      %6676 = vmatprep.subr.bf16.mxu0 0
      %6677 = vmatpush1.bf16.msra.mxu0 %v6640
      %6678 = vmatprep.subr.bf16.mxu0 0
      %6679 = vmatpush1.bf16.msra.mxu0 %v6641
      %6680 = vmatprep.subr.bf16.mxu0 0
      %6681 = vmatpush1.bf16.msra.mxu0 %v6642
      %6682 = vmatprep.subr.bf16.mxu0 0
      %6683 = vmatpush1.bf16.msra.mxu0 %v6643
      %6684 = vmatprep.subr.bf16.mxu0 0
      %6685 = vmatpush1.bf16.msra.mxu0 %v6644
      %6686 = vmatprep.subr.bf16.mxu0 0
      %6687 = vmatpush1.bf16.msra.mxu0 %v6645
      %6688 = vmatprep.subr.bf16.mxu0 0
      %6689 = vmatpush1.bf16.msra.mxu0 %v6646
      %6690 = vmatprep.subr.bf16.mxu0 0
      %6691 = vmatpush1.bf16.msra.mxu0 %v6647
      %6692 = vmatprep.subr.bf16.mxu0 0
      %6693 = vmatpush1.bf16.msra.mxu0 %v6648
      %6694 = vmatprep.subr.bf16.mxu0 0
      %6695 = vmatpush1.bf16.msra.mxu0 %v6649
      %6696 = vmatprep.subr.bf16.mxu0 0
      %6697 = vmatpush1.bf16.msra.mxu0 %v6650
      %6698 = vmatprep.subr.bf16.mxu0 0
      %6699 = vmatpush1.bf16.msra.mxu0 %v6651
      %6700 = vmatprep.mubr.bf16.mxu0 %v6515
      %6701 = vmatmul.mubr.bf16.gmra.mrb[0].mxu0 %v6514
      %v6702 = vpop.f32.mrb[0].mxu0
      %v6703 = vadd.f32 0.0, %v6702
      %v6704 = vpop.f32.mrb[0].mxu0
      %v6705 = vpop.f32.mrb[0].mxu0
      %v6706 = vadd.f32 0.0, %v6705
      %v6707 = vpop.f32.mrb[0].mxu0
      %6708 = vdwg.mxu0
      %v6710 = vlaneseq
      %v6711 = vshrl.u32 %v6710, 7
      %v6712 = vsub.s32 0, %v6711
      %v6713 = vrot.slane %v6446, %v6712
      %v6747 = vunpack.c.l.b16 %v6414
      %v6748 = vunpack.c.l.b16 %v6415
      %v6749 = vunpack.c.l.b16 %v6416
      %v6750 = vunpack.c.l.b16 %v6417
      %v6751 = vunpack.c.l.b16 %v6418
      %v6752 = vunpack.c.l.b16 %v6419
      %v6753 = vunpack.c.l.b16 %v6420
      %v6754 = vunpack.c.l.b16 %v6421
      %v6755 = vunpack.c.l.b16 %v6422
      %v6756 = vunpack.c.l.b16 %v6423
      %v6757 = vunpack.c.l.b16 %v6424
      %v6758 = vunpack.c.l.b16 %v6425
      %v6759 = vunpack.c.l.b16 %v6426
      %v6760 = vunpack.c.l.b16 %v6427
      %v6761 = vunpack.c.l.b16 %v6428
      %v6762 = vunpack.c.l.b16 %v6429
      %v6763 = vunpack.c.l.b16 %v6430
      %v6764 = vunpack.c.l.b16 %v6431
      %v6765 = vunpack.c.l.b16 %v6432
      %v6766 = vunpack.c.l.b16 %v6433
      %v6767 = vunpack.c.l.b16 %v6434
      %v6768 = vunpack.c.l.b16 %v6435
      %v6769 = vunpack.c.l.b16 %v6436
      %v6770 = vunpack.c.l.b16 %v6437
      %v6771 = vunpack.c.l.b16 %v6438
      %v6772 = vunpack.c.l.b16 %v6439
      %v6773 = vunpack.c.l.b16 %v6440
      %v6774 = vunpack.c.l.b16 %v6441
      %v6775 = vunpack.c.l.b16 %v6442
      %v6776 = vunpack.c.l.b16 %v6443
      %v6777 = vunpack.c.l.b16 %v6444
      %v6778 = vunpack.c.l.b16 %v6445
      %v6779 = vpack.c.b16 %v6748, %v6747
      %v6780 = vpack.c.b16 %v6750, %v6749
      %v6781 = vpack.c.b16 %v6752, %v6751
      %v6782 = vpack.c.b16 %v6754, %v6753
      %v6783 = vpack.c.b16 %v6756, %v6755
      %v6784 = vpack.c.b16 %v6758, %v6757
      %v6785 = vpack.c.b16 %v6760, %v6759
      %v6786 = vpack.c.b16 %v6762, %v6761
      %v6787 = vpack.c.b16 %v6764, %v6763
      %v6788 = vpack.c.b16 %v6766, %v6765
      %v6789 = vpack.c.b16 %v6768, %v6767
      %v6790 = vpack.c.b16 %v6770, %v6769
      %v6791 = vpack.c.b16 %v6772, %v6771
      %v6792 = vpack.c.b16 %v6774, %v6773
      %v6793 = vpack.c.b16 %v6776, %v6775
      %v6794 = vpack.c.b16 %v6778, %v6777
      %6811 = vmatprep.subr.bf16.mxu0 0
      %6812 = vmatpush1.bf16.msra.mxu0 %v6779
      %6813 = vmatprep.subr.bf16.mxu0 0
      %6814 = vmatpush1.bf16.msra.mxu0 %v6780
      %6815 = vmatprep.subr.bf16.mxu0 0
      %6816 = vmatpush1.bf16.msra.mxu0 %v6781
      %6817 = vmatprep.subr.bf16.mxu0 0
      %6818 = vmatpush1.bf16.msra.mxu0 %v6782
      %6819 = vmatprep.subr.bf16.mxu0 0
      %6820 = vmatpush1.bf16.msra.mxu0 %v6783
      %6821 = vmatprep.subr.bf16.mxu0 0
      %6822 = vmatpush1.bf16.msra.mxu0 %v6784
      %6823 = vmatprep.subr.bf16.mxu0 0
      %6824 = vmatpush1.bf16.msra.mxu0 %v6785
      %6825 = vmatprep.subr.bf16.mxu0 0
      %6826 = vmatpush1.bf16.msra.mxu0 %v6786
      %6827 = vmatprep.subr.bf16.mxu0 0
      %6828 = vmatpush1.bf16.msra.mxu0 %v6787
      %6829 = vmatprep.subr.bf16.mxu0 0
      %6830 = vmatpush1.bf16.msra.mxu0 %v6788
      %6831 = vmatprep.subr.bf16.mxu0 0
      %6832 = vmatpush1.bf16.msra.mxu0 %v6789
      %6833 = vmatprep.subr.bf16.mxu0 0
      %6834 = vmatpush1.bf16.msra.mxu0 %v6790
      %6835 = vmatprep.subr.bf16.mxu0 0
      %6836 = vmatpush1.bf16.msra.mxu0 %v6791
      %6837 = vmatprep.subr.bf16.mxu0 0
      %6838 = vmatpush1.bf16.msra.mxu0 %v6792
      %6839 = vmatprep.subr.bf16.mxu0 0
      %6840 = vmatpush1.bf16.msra.mxu0 %v6793
      %6841 = vmatprep.subr.bf16.mxu0 0
      %6842 = vmatpush1.bf16.msra.mxu0 %v6794
      %6843 = vmatprep.mubr.bf16.mxu0 %v6515
      %6844 = vmatmul.mubr.bf16.gmra.mrb[0].mxu0 %v6514
      %v6845 = vpop.f32.mrb[0].mxu0
      %v6846 = vadd.f32 %v6713, %v6845
      %v6847 = vpop.f32.mrb[0].mxu0
      %v6848 = vpop.f32.mrb[0].mxu0
      %v6849 = vadd.f32 %v6713, %v6848
      %v6850 = vpop.f32.mrb[0].mxu0
      %6851 = vdwg.mxu0
      %v6852 = vsel %vm1823, %v6570, -inf
      %6853 = vmax.xlane.f32.xlu0 %v6852
      %v6854 = vpop.xlane.xlu0 %6853
      %v6855 = vsel %vm1823, %v6571, -inf
      %6856 = vmax.xlane.f32.xlu0 %v6855
      %v6857 = vpop.xlane.xlu0 %6856
      %vm6858 = vcmp.eq.f32.partialorder %v6570, %v6854
      %vm6859 = vcmp.eq.f32.partialorder %v6571, %v6857
      %v6860 = vsel %vm6858, %v1687, 16
      %v6861 = vsel %vm6859, %v1687, 16
      %v6862 = vsel %vm1823, %v6860, 2147483647
      %v6863 = vand.u32 %v6862, 65535
      %v6864 = vshra.s32 %v6862, 16
      %v6865 = vcvt.s32.f32 %v6863
      %v6866 = vcvt.s32.f32 %v6864
      %6867 = vmin.xlane.f32.xlu0 %v6866
      %v6868 = vpop.xlane.xlu0 %6867
      %vm6869 = vcmp.eq.f32.partialorder %v6866, %v6868
      %v6870 = vsel %vm6869, %v6865, inf
      %6871 = vmin.xlane.f32.xlu0 %v6870
      %v6872 = vpop.xlane.xlu0 %6871
      %v6873 = vcvt.f32.s32 %v6872
      %v6874 = vcvt.f32.s32 %v6868
      %v6875 = vshll.u32 %v6874, 16
      %v6876 = vadd.s32 %v6875, %v6873
      %v6877 = vsel %vm1823, %v6861, 2147483647
      %v6878 = vand.u32 %v6877, 65535
      %v6879 = vshra.s32 %v6877, 16
      %v6880 = vcvt.s32.f32 %v6878
      %v6881 = vcvt.s32.f32 %v6879
      %6882 = vmin.xlane.f32.xlu0 %v6881
      %v6883 = vpop.xlane.xlu0 %6882
      %vm6884 = vcmp.eq.f32.partialorder %v6881, %v6883
      %v6885 = vsel %vm6884, %v6880, inf
      %6886 = vmin.xlane.f32.xlu0 %v6885
      %v6887 = vpop.xlane.xlu0 %6886
      %v6888 = vcvt.f32.s32 %v6887
      %v6889 = vcvt.f32.s32 %v6883
      %v6890 = vshll.u32 %v6889, 16
      %v6891 = vadd.s32 %v6890, %v6888
      %vm6892 = vcmp.eq.s32.totalorder %v1687, %v6876
      %vm6893 = vcmp.eq.s32.totalorder %v1687, %v6891
      %v6894 = vsel %vm6892, 1, 0
      %v6895 = vsel %vm6893, 1, 0
      %v6896 = vcvt.s32.f32 %v6894
      %v6897 = vcvt.s32.f32 %v6895
      %v6898 = vsel %vm6892, -inf, %v6570
      %v6899 = vsel %vm6893, -inf, %v6571
      %v6900 = vsel %vm1823, %v6898, -inf
      %6901 = vmax.xlane.f32.xlu0 %v6900
      %v6902 = vpop.xlane.xlu0 %6901
      %v6903 = vsel %vm1823, %v6899, -inf
      %6904 = vmax.xlane.f32.xlu0 %v6903
      %v6905 = vpop.xlane.xlu0 %6904
      %vm6906 = vcmp.eq.f32.partialorder %v6898, %v6902
      %vm6907 = vcmp.eq.f32.partialorder %v6899, %v6905
      %v6908 = vsel %vm6906, %v1687, 16
      %v6909 = vsel %vm6907, %v1687, 16
      %v6910 = vsel %vm1823, %v6908, 2147483647
      %v6911 = vand.u32 %v6910, 65535
      %v6912 = vshra.s32 %v6910, 16
      %v6913 = vcvt.s32.f32 %v6911
      %v6914 = vcvt.s32.f32 %v6912
      %6915 = vmin.xlane.f32.xlu0 %v6914
      %v6916 = vpop.xlane.xlu0 %6915
      %vm6917 = vcmp.eq.f32.partialorder %v6914, %v6916
      %v6918 = vsel %vm6917, %v6913, inf
      %6919 = vmin.xlane.f32.xlu0 %v6918
      %v6920 = vpop.xlane.xlu0 %6919
      %v6921 = vcvt.f32.s32 %v6920
      %v6922 = vcvt.f32.s32 %v6916
      %v6923 = vshll.u32 %v6922, 16
      %v6924 = vadd.s32 %v6923, %v6921
      %v6925 = vsel %vm1823, %v6909, 2147483647
      %v6926 = vand.u32 %v6925, 65535
      %v6927 = vshra.s32 %v6925, 16
      %v6928 = vcvt.s32.f32 %v6926
      %v6929 = vcvt.s32.f32 %v6927
      %6930 = vmin.xlane.f32.xlu0 %v6929
      %v6931 = vpop.xlane.xlu0 %6930
      %vm6932 = vcmp.eq.f32.partialorder %v6929, %v6931
      %v6933 = vsel %vm6932, %v6928, inf
      %6934 = vmin.xlane.f32.xlu0 %v6933
      %v6935 = vpop.xlane.xlu0 %6934
      %v6936 = vcvt.f32.s32 %v6935
      %v6937 = vcvt.f32.s32 %v6931
      %v6938 = vshll.u32 %v6937, 16
      %v6939 = vadd.s32 %v6938, %v6936
      %vm6940 = vcmp.eq.s32.totalorder %v1687, %v6924
      %vm6941 = vcmp.eq.s32.totalorder %v1687, %v6939
      %v6942 = vsel %vm6940, 1, 0
      %v6943 = vsel %vm6941, 1, 0
      %v6944 = vcvt.s32.f32 %v6942
      %v6945 = vcvt.s32.f32 %v6943
      %v6946 = vsel %vm6940, -inf, %v6898
      %v6947 = vsel %vm6941, -inf, %v6899
      %v6948 = vsel %vm1823, %v6946, -inf
      %6949 = vmax.xlane.f32.xlu0 %v6948
      %v6950 = vpop.xlane.xlu0 %6949
      %v6951 = vsel %vm1823, %v6947, -inf
      %6952 = vmax.xlane.f32.xlu0 %v6951
      %v6953 = vpop.xlane.xlu0 %6952
      %vm6954 = vcmp.eq.f32.partialorder %v6946, %v6950
      %vm6955 = vcmp.eq.f32.partialorder %v6947, %v6953
      %v6956 = vsel %vm6954, %v1687, 16
      %v6957 = vsel %vm6955, %v1687, 16
      %v6958 = vsel %vm1823, %v6956, 2147483647
      %v6959 = vand.u32 %v6958, 65535
      %v6960 = vshra.s32 %v6958, 16
      %v6961 = vcvt.s32.f32 %v6959
      %v6962 = vcvt.s32.f32 %v6960
      %6963 = vmin.xlane.f32.xlu0 %v6962
      %v6964 = vpop.xlane.xlu0 %6963
      %vm6965 = vcmp.eq.f32.partialorder %v6962, %v6964
      %v6966 = vsel %vm6965, %v6961, inf
      %6967 = vmin.xlane.f32.xlu0 %v6966
      %v6968 = vpop.xlane.xlu0 %6967
      %v6969 = vcvt.f32.s32 %v6968
      %v6970 = vcvt.f32.s32 %v6964
      %v6971 = vshll.u32 %v6970, 16
      %v6972 = vadd.s32 %v6971, %v6969
      %v6973 = vsel %vm1823, %v6957, 2147483647
      %v6974 = vand.u32 %v6973, 65535
      %v6975 = vshra.s32 %v6973, 16
      %v6976 = vcvt.s32.f32 %v6974
      %v6977 = vcvt.s32.f32 %v6975
      %6978 = vmin.xlane.f32.xlu0 %v6977
      %v6979 = vpop.xlane.xlu0 %6978
      %vm6980 = vcmp.eq.f32.partialorder %v6977, %v6979
      %v6981 = vsel %vm6980, %v6976, inf
      %6982 = vmin.xlane.f32.xlu0 %v6981
      %v6983 = vpop.xlane.xlu0 %6982
      %v6984 = vcvt.f32.s32 %v6983
      %v6985 = vcvt.f32.s32 %v6979
      %v6986 = vshll.u32 %v6985, 16
      %v6987 = vadd.s32 %v6986, %v6984
      %vm6988 = vcmp.eq.s32.totalorder %v1687, %v6972
      %vm6989 = vcmp.eq.s32.totalorder %v1687, %v6987
      %v6990 = vsel %vm6988, 1, 0
      %v6991 = vsel %vm6989, 1, 0
      %v6992 = vcvt.s32.f32 %v6990
      %v6993 = vcvt.s32.f32 %v6991
      %v6994 = vpack.c.bf16 %v6897, %v6896
      %v6995 = vpack.c.bf16 %v6945, %v6944
      %v6996 = vpack.c.bf16 %v6993, %v6992
      %v6997 = vpack.c.bf16 %v6706, %v6703
      %v6999 = vsel %vm1823, %v6994, 0
      %v7002 = vsel %vm1823, %v6995, 0
      %v7005 = vsel %vm1823, %v6996, 0
      %7007 = vmatprep.subr.bf16.mxu0 0
      %7008 = vmatpush1.bf16.msra.mxu0 %v6997
      %7009 = vmatprep.subr.bf16.mxu0 0
      %7010 = vmatpush1.bf16.msra.mxu0 0
      %7011 = vmatprep.subr.bf16.mxu0 0
      %7012 = vmatpush1.bf16.msra.mxu0 0
      %7013 = vmatprep.subr.bf16.mxu0 0
      %7014 = vmatpush1.bf16.msra.mxu0 0
      %7015 = vmatprep.subr.bf16.mxu0 0
      %7016 = vmatpush1.bf16.msra.mxu0 0
      %7017 = vmatprep.subr.bf16.mxu0 0
      %7018 = vmatpush1.bf16.msra.mxu0 0
      %7019 = vmatprep.subr.bf16.mxu0 0
      %7020 = vmatpush1.bf16.msra.mxu0 0
      %7021 = vmatprep.subr.bf16.mxu0 0
      %7022 = vmatpush1.bf16.msra.mxu0 0
      %7023 = vmatprep.subr.bf16.mxu0 0
      %7024 = vmatpush1.bf16.msra.mxu0 0
      %7025 = vmatprep.subr.bf16.mxu0 0
      %7026 = vmatpush1.bf16.msra.mxu0 0
      %7027 = vmatprep.subr.bf16.mxu0 0
      %7028 = vmatpush1.bf16.msra.mxu0 0
      %7029 = vmatprep.subr.bf16.mxu0 0
      %7030 = vmatpush1.bf16.msra.mxu0 0
      %7031 = vmatprep.subr.bf16.mxu0 0
      %7032 = vmatpush1.bf16.msra.mxu0 0
      %7033 = vmatprep.subr.bf16.mxu0 0
      %7034 = vmatpush1.bf16.msra.mxu0 0
      %7035 = vmatprep.subr.bf16.mxu0 0
      %7036 = vmatpush1.bf16.msra.mxu0 0
      %7037 = vmatprep.subr.bf16.mxu0 0
      %7038 = vmatpush1.bf16.msra.mxu0 0
      %7039 = vmatprep.mubr.bf16.mxu0 0
      %7040 = vmatmul.mubr.bf16.gmra.mrb[0].mxu0 %v6999
      %v7041 = vpop.f32.mrb[0].mxu0
      %v7042 = vadd.f32 %v6846, %v7041
      %v7043 = vpop.f32.mrb[0].mxu0
      %v7044 = vpop.f32.mrb[0].mxu0
      %v7045 = vadd.f32 %v6849, %v7044
      %v7046 = vpop.f32.mrb[0].mxu0
      %7047 = vmatprep.mubr.bf16.mxu0 0
      %7048 = vmatmul.mubr.bf16.gmra.mrb[0].mxu0 %v7002
      %v7049 = vpop.f32.mrb[0].mxu0
      %v7050 = vadd.f32 %v6846, %v7049
      %v7051 = vpop.f32.mrb[0].mxu0
      %v7052 = vpop.f32.mrb[0].mxu0
      %v7053 = vadd.f32 %v6849, %v7052
      %v7054 = vpop.f32.mrb[0].mxu0
      %7055 = vmatprep.mubr.bf16.mxu0 0
      %7056 = vmatmul.mubr.bf16.gmra.mrb[0].mxu0 %v7005
      %v7057 = vpop.f32.mrb[0].mxu0
      %v7058 = vadd.f32 %v6846, %v7057
      %v7059 = vpop.f32.mrb[0].mxu0
      %v7060 = vpop.f32.mrb[0].mxu0
      %v7061 = vadd.f32 %v6849, %v7060
      %v7062 = vpop.f32.mrb[0].mxu0
      %7063 = vdwg.mxu0
      %v7064 = vmax.f32 %v7042, 0.0
      %v7065 = vmax.f32 %v7045, 0.0
      %v7066 = vmax.f32 %v7050, 0.0
      %v7067 = vmax.f32 %v7053, 0.0
      %v7068 = vmax.f32 %v7058, 0.0
      %v7069 = vmax.f32 %v7061, 0.0
      %v7070 = vpack.c.bf16 %v7065, %v7064
      %v7071 = vpack.c.bf16 %v7067, %v7066
      %v7072 = vpack.c.bf16 %v7069, %v7068
      %v7074 = vlaneseq
      %v7075 = vshrl.u32 %v7074, 7
      %v7076 = vsub.s32 0, %v7075
      %v7077 = vrot.slane %v6463, %v7076
      %v7095 = vunpack.c.l.b16 %v6447
      %v7096 = vunpack.c.l.b16 %v6448
      %v7097 = vunpack.c.l.b16 %v6449
      %v7098 = vunpack.c.l.b16 %v6450
      %v7099 = vunpack.c.l.b16 %v6451
      %v7100 = vunpack.c.l.b16 %v6452
      %v7101 = vunpack.c.l.b16 %v6453
      %v7102 = vunpack.c.l.b16 %v6454
      %v7103 = vunpack.c.l.b16 %v6455
      %v7104 = vunpack.c.l.b16 %v6456
      %v7105 = vunpack.c.l.b16 %v6457
      %v7106 = vunpack.c.l.b16 %v6458
      %v7107 = vunpack.c.l.b16 %v6459
      %v7108 = vunpack.c.l.b16 %v6460
      %v7109 = vunpack.c.l.b16 %v6461
      %v7110 = vunpack.c.l.b16 %v6462
      %v7111 = vpack.c.b16 %v7096, %v7095
      %v7112 = vpack.c.b16 %v7098, %v7097
      %v7113 = vpack.c.b16 %v7100, %v7099
      %v7114 = vpack.c.b16 %v7102, %v7101
      %v7115 = vpack.c.b16 %v7104, %v7103
      %v7116 = vpack.c.b16 %v7106, %v7105
      %v7117 = vpack.c.b16 %v7108, %v7107
      %v7118 = vpack.c.b16 %v7110, %v7109
      %7127 = vmatprep.subr.bf16.mxu0 0
      %7128 = vmatpush1.bf16.msra.mxu0 %v7111
      %7129 = vmatprep.subr.bf16.mxu0 0
      %7130 = vmatpush1.bf16.msra.mxu0 %v7112
      %7131 = vmatprep.subr.bf16.mxu0 0
      %7132 = vmatpush1.bf16.msra.mxu0 %v7113
      %7133 = vmatprep.subr.bf16.mxu0 0
      %7134 = vmatpush1.bf16.msra.mxu0 %v7114
      %7135 = vmatprep.subr.bf16.mxu0 0
      %7136 = vmatpush1.bf16.msra.mxu0 %v7115
      %7137 = vmatprep.subr.bf16.mxu0 0
      %7138 = vmatpush1.bf16.msra.mxu0 %v7116
      %7139 = vmatprep.subr.bf16.mxu0 0
      %7140 = vmatpush1.bf16.msra.mxu0 %v7117
      %7141 = vmatprep.subr.bf16.mxu0 0
      %7142 = vmatpush1.bf16.msra.mxu0 %v7118
      %7143 = vmatprep.subr.bf16.mxu0 0
      %7144 = vmatpush1.bf16.msra.mxu0 0
      %7145 = vmatprep.subr.bf16.mxu0 0
      %7146 = vmatpush1.bf16.msra.mxu0 0
      %7147 = vmatprep.subr.bf16.mxu0 0
      %7148 = vmatpush1.bf16.msra.mxu0 0
      %7149 = vmatprep.subr.bf16.mxu0 0
      %7150 = vmatpush1.bf16.msra.mxu0 0
      %7151 = vmatprep.subr.bf16.mxu0 0
      %7152 = vmatpush1.bf16.msra.mxu0 0
      %7153 = vmatprep.subr.bf16.mxu0 0
      %7154 = vmatpush1.bf16.msra.mxu0 0
      %7155 = vmatprep.subr.bf16.mxu0 0
      %7156 = vmatpush1.bf16.msra.mxu0 0
      %7157 = vmatprep.subr.bf16.mxu0 0
      %7158 = vmatpush1.bf16.msra.mxu0 0
      %7159 = vmatprep.mubr.bf16.mxu0 0
      %7160 = vmatmul.mubr.bf16.gmra.mrb[0].mxu0 %v7070
      %v7161 = vpop.f32.mrb[0].mxu0
      %v7162 = vadd.f32 %v7077, %v7161
      %v7163 = vpop.f32.mrb[0].mxu0
      %v7164 = vpop.f32.mrb[0].mxu0
      %v7165 = vadd.f32 %v7077, %v7164
      %v7166 = vpop.f32.mrb[0].mxu0
      %7167 = vmatprep.mubr.bf16.mxu0 0
      %7168 = vmatmul.mubr.bf16.gmra.mrb[0].mxu0 %v7071
      %v7169 = vpop.f32.mrb[0].mxu0
      %v7170 = vadd.f32 %v7077, %v7169
      %v7171 = vpop.f32.mrb[0].mxu0
      %v7172 = vpop.f32.mrb[0].mxu0
      %v7173 = vadd.f32 %v7077, %v7172
      %v7174 = vpop.f32.mrb[0].mxu0
      %7175 = vmatprep.mubr.bf16.mxu0 0
      %7176 = vmatmul.mubr.bf16.gmra.mrb[0].mxu0 %v7072
      %v7177 = vpop.f32.mrb[0].mxu0
      %v7178 = vadd.f32 %v7077, %v7177
      %v7179 = vpop.f32.mrb[0].mxu0
      %v7180 = vpop.f32.mrb[0].mxu0
      %v7181 = vadd.f32 %v7077, %v7180
      %v7182 = vpop.f32.mrb[0].mxu0
      %7183 = vdwg.mxu0
      %v7184 = vmax.f32 %v7162, 0.0
      %v7185 = vmax.f32 %v7165, 0.0
      %v7186 = vmax.f32 %v7170, 0.0
      %v7187 = vmax.f32 %v7173, 0.0
      %v7188 = vmax.f32 %v7178, 0.0
      %v7189 = vmax.f32 %v7181, 0.0
      %v7190 = vpack.c.bf16 %v7185, %v7184
      %v7191 = vpack.c.bf16 %v7187, %v7186
      %v7192 = vpack.c.bf16 %v7189, %v7188
      %v7194 = vlaneseq
      %v7195 = vshrl.u32 %v7194, 7
      %v7196 = vsub.s32 0, %v7195
      %v7197 = vrot.slane %v6480, %v7196
      %v7198 = vlaneseq
      %v7199 = vshrl.u32 %v7198, 7
      %v7200 = vsub.s32 1, %v7199
      %v7201 = vrot.slane %v6480, %v7200
      %v7220 = vunpack.c.l.b16 %v6464
      %v7221 = vunpack.c.h.b16 %v6464
      %v7222 = vunpack.c.l.b16 %v6465
      %v7223 = vunpack.c.h.b16 %v6465
      %v7224 = vunpack.c.l.b16 %v6466
      %v7225 = vunpack.c.h.b16 %v6466
      %v7226 = vunpack.c.l.b16 %v6467
      %v7227 = vunpack.c.h.b16 %v6467
      %v7228 = vunpack.c.l.b16 %v6468
      %v7229 = vunpack.c.h.b16 %v6468
      %v7230 = vunpack.c.l.b16 %v6469
      %v7231 = vunpack.c.h.b16 %v6469
      %v7232 = vunpack.c.l.b16 %v6470
      %v7233 = vunpack.c.h.b16 %v6470
      %v7234 = vunpack.c.l.b16 %v6471
      %v7235 = vunpack.c.h.b16 %v6471
      %v7236 = vunpack.c.l.b16 %v6472
      %v7237 = vunpack.c.h.b16 %v6472
      %v7238 = vunpack.c.l.b16 %v6473
      %v7239 = vunpack.c.h.b16 %v6473
      %v7240 = vunpack.c.l.b16 %v6474
      %v7241 = vunpack.c.h.b16 %v6474
      %v7242 = vunpack.c.l.b16 %v6475
      %v7243 = vunpack.c.h.b16 %v6475
      %v7244 = vunpack.c.l.b16 %v6476
      %v7245 = vunpack.c.h.b16 %v6476
      %v7246 = vunpack.c.l.b16 %v6477
      %v7247 = vunpack.c.h.b16 %v6477
      %v7248 = vunpack.c.l.b16 %v6478
      %v7249 = vunpack.c.h.b16 %v6478
      %v7250 = vunpack.c.l.b16 %v6479
      %v7251 = vunpack.c.h.b16 %v6479
      %v7252 = vpack.c.b16 %v7222, %v7220
      %v7253 = vpack.c.b16 %v7223, %v7221
      %v7254 = vpack.c.b16 %v7226, %v7224
      %v7255 = vpack.c.b16 %v7227, %v7225
      %v7256 = vpack.c.b16 %v7230, %v7228
      %v7257 = vpack.c.b16 %v7231, %v7229
      %v7258 = vpack.c.b16 %v7234, %v7232
      %v7259 = vpack.c.b16 %v7235, %v7233
      %v7260 = vpack.c.b16 %v7238, %v7236
      %v7261 = vpack.c.b16 %v7239, %v7237
      %v7262 = vpack.c.b16 %v7242, %v7240
      %v7263 = vpack.c.b16 %v7243, %v7241
      %v7264 = vpack.c.b16 %v7246, %v7244
      %v7265 = vpack.c.b16 %v7247, %v7245
      %v7266 = vpack.c.b16 %v7250, %v7248
      %v7267 = vpack.c.b16 %v7251, %v7249
      %7284 = vmatprep.subr.bf16.mxu0 %v7253
      %7285 = vmatpush1.bf16.msra.mxu0 %v7252
      %7286 = vmatprep.subr.bf16.mxu0 %v7255
      %7287 = vmatpush1.bf16.msra.mxu0 %v7254
      %7288 = vmatprep.subr.bf16.mxu0 %v7257
      %7289 = vmatpush1.bf16.msra.mxu0 %v7256
      %7290 = vmatprep.subr.bf16.mxu0 %v7259
      %7291 = vmatpush1.bf16.msra.mxu0 %v7258
      %7292 = vmatprep.subr.bf16.mxu0 %v7261
      %7293 = vmatpush1.bf16.msra.mxu0 %v7260
      %7294 = vmatprep.subr.bf16.mxu0 %v7263
      %7295 = vmatpush1.bf16.msra.mxu0 %v7262
      %7296 = vmatprep.subr.bf16.mxu0 %v7265
      %7297 = vmatpush1.bf16.msra.mxu0 %v7264
      %7298 = vmatprep.subr.bf16.mxu0 %v7267
      %7299 = vmatpush1.bf16.msra.mxu0 %v7266
      %7300 = vmatprep.subr.bf16.mxu0 0
      %7301 = vmatpush1.bf16.msra.mxu0 0
      %7302 = vmatprep.subr.bf16.mxu0 0
      %7303 = vmatpush1.bf16.msra.mxu0 0
      %7304 = vmatprep.subr.bf16.mxu0 0
      %7305 = vmatpush1.bf16.msra.mxu0 0
      %7306 = vmatprep.subr.bf16.mxu0 0
      %7307 = vmatpush1.bf16.msra.mxu0 0
      %7308 = vmatprep.subr.bf16.mxu0 0
      %7309 = vmatpush1.bf16.msra.mxu0 0
      %7310 = vmatprep.subr.bf16.mxu0 0
      %7311 = vmatpush1.bf16.msra.mxu0 0
      %7312 = vmatprep.subr.bf16.mxu0 0
      %7313 = vmatpush1.bf16.msra.mxu0 0
      %7314 = vmatprep.subr.bf16.mxu0 0
      %7315 = vmatpush1.bf16.msra.mxu0 0
      %7316 = vmatprep.mubr.bf16.mxu0 0
      %7317 = vmatmul.mubr.bf16.gmra.mrb[0].mxu0 %v7190
      %v7318 = vpop.f32.mrb[0].mxu0
      %v7319 = vadd.f32 %v7197, %v7318
      %v7320 = vpop.f32.mrb[0].mxu0
      %v7321 = vadd.f32 %v7201, %v7320
      %v7322 = vpop.f32.mrb[0].mxu0
      %v7323 = vadd.f32 %v7197, %v7322
      %v7324 = vpop.f32.mrb[0].mxu0
      %v7325 = vadd.f32 %v7201, %v7324
      %7326 = vmatprep.mubr.bf16.mxu0 0
      %7327 = vmatmul.mubr.bf16.gmra.mrb[0].mxu0 %v7191
      %v7328 = vpop.f32.mrb[0].mxu0
      %v7329 = vadd.f32 %v7197, %v7328
      %v7330 = vpop.f32.mrb[0].mxu0
      %v7331 = vadd.f32 %v7201, %v7330
      %v7332 = vpop.f32.mrb[0].mxu0
      %v7333 = vadd.f32 %v7197, %v7332
      %v7334 = vpop.f32.mrb[0].mxu0
      %v7335 = vadd.f32 %v7201, %v7334
      %7336 = vmatprep.mubr.bf16.mxu0 0
      %7337 = vmatmul.mubr.bf16.gmra.mrb[0].mxu0 %v7192
      %v7338 = vpop.f32.mrb[0].mxu0
      %v7339 = vadd.f32 %v7197, %v7338
      %v7340 = vpop.f32.mrb[0].mxu0
      %v7341 = vadd.f32 %v7201, %v7340
      %v7342 = vpop.f32.mrb[0].mxu0
      %v7343 = vadd.f32 %v7197, %v7342
      %v7344 = vpop.f32.mrb[0].mxu0
      %v7345 = vadd.f32 %v7201, %v7344
      %7346 = vdwg.mxu0
      %v7347 = vmax.f32 %v7319, 0.0
      %v7348 = vmax.f32 %v7321, 0.0
      %v7349 = vmax.f32 %v7323, 0.0
      %v7350 = vmax.f32 %v7325, 0.0
      %v7351 = vmax.f32 %v7329, 0.0
      %v7352 = vmax.f32 %v7331, 0.0
      %v7353 = vmax.f32 %v7333, 0.0
      %v7354 = vmax.f32 %v7335, 0.0
      %v7355 = vmax.f32 %v7339, 0.0
      %v7356 = vmax.f32 %v7341, 0.0
      %v7357 = vmax.f32 %v7343, 0.0
      %v7358 = vmax.f32 %v7345, 0.0
      %v7359 = vmax.f32 %v7347, %v7351
      %v7360 = vmax.f32 %v7348, %v7352
      %v7361 = vmax.f32 %v7349, %v7353
      %v7362 = vmax.f32 %v7350, %v7354
      %v7363 = vmax.f32 %v7359, %v7355
      %v7364 = vmax.f32 %v7360, %v7356
      %v7365 = vmax.f32 %v7361, %v7357
      %v7366 = vmax.f32 %v7362, %v7358
      %v7367 = vadd.f32 %v6378, %v7363
      %v7368 = vadd.f32 %v6379, %v7364
      %v7369 = vadd.f32 %v6380, %v7365
      %v7370 = vadd.f32 %v6381, %v7366
      %v7371 = vpack.c.bf16 %v7369, %v7367
      %v7372 = vpack.c.bf16 %v7370, %v7368
      %v7374 = vlaneseq
      %v7375 = vshrl.u32 %v7374, 7
      %v7376 = vsub.s32 0, %v7375
      %v7377 = vrot.slane %v6513, %v7376
      %v7378 = vlaneseq
      %v7379 = vshrl.u32 %v7378, 7
      %v7380 = vsub.s32 1, %v7379
      %v7381 = vrot.slane %v6513, %v7380
      %v7416 = vunpack.c.l.b16 %v6481
      %v7417 = vunpack.c.h.b16 %v6481
      %v7418 = vunpack.c.l.b16 %v6482
      %v7419 = vunpack.c.h.b16 %v6482
      %v7420 = vunpack.c.l.b16 %v6483
      %v7421 = vunpack.c.h.b16 %v6483
      %v7422 = vunpack.c.l.b16 %v6484
      %v7423 = vunpack.c.h.b16 %v6484
      %v7424 = vunpack.c.l.b16 %v6485
      %v7425 = vunpack.c.h.b16 %v6485
      %v7426 = vunpack.c.l.b16 %v6486
      %v7427 = vunpack.c.h.b16 %v6486
      %v7428 = vunpack.c.l.b16 %v6487
      %v7429 = vunpack.c.h.b16 %v6487
      %v7430 = vunpack.c.l.b16 %v6488
      %v7431 = vunpack.c.h.b16 %v6488
      %v7432 = vunpack.c.l.b16 %v6489
      %v7433 = vunpack.c.h.b16 %v6489
      %v7434 = vunpack.c.l.b16 %v6490
      %v7435 = vunpack.c.h.b16 %v6490
      %v7436 = vunpack.c.l.b16 %v6491
      %v7437 = vunpack.c.h.b16 %v6491
      %v7438 = vunpack.c.l.b16 %v6492
      %v7439 = vunpack.c.h.b16 %v6492
      %v7440 = vunpack.c.l.b16 %v6493
      %v7441 = vunpack.c.h.b16 %v6493
      %v7442 = vunpack.c.l.b16 %v6494
      %v7443 = vunpack.c.h.b16 %v6494
      %v7444 = vunpack.c.l.b16 %v6495
      %v7445 = vunpack.c.h.b16 %v6495
      %v7446 = vunpack.c.l.b16 %v6496
      %v7447 = vunpack.c.h.b16 %v6496
      %v7448 = vunpack.c.l.b16 %v6497
      %v7449 = vunpack.c.h.b16 %v6497
      %v7450 = vunpack.c.l.b16 %v6498
      %v7451 = vunpack.c.h.b16 %v6498
      %v7452 = vunpack.c.l.b16 %v6499
      %v7453 = vunpack.c.h.b16 %v6499
      %v7454 = vunpack.c.l.b16 %v6500
      %v7455 = vunpack.c.h.b16 %v6500
      %v7456 = vunpack.c.l.b16 %v6501
      %v7457 = vunpack.c.h.b16 %v6501
      %v7458 = vunpack.c.l.b16 %v6502
      %v7459 = vunpack.c.h.b16 %v6502
      %v7460 = vunpack.c.l.b16 %v6503
      %v7461 = vunpack.c.h.b16 %v6503
      %v7462 = vunpack.c.l.b16 %v6504
      %v7463 = vunpack.c.h.b16 %v6504
      %v7464 = vunpack.c.l.b16 %v6505
      %v7465 = vunpack.c.h.b16 %v6505
      %v7466 = vunpack.c.l.b16 %v6506
      %v7467 = vunpack.c.h.b16 %v6506
      %v7468 = vunpack.c.l.b16 %v6507
      %v7469 = vunpack.c.h.b16 %v6507
      %v7470 = vunpack.c.l.b16 %v6508
      %v7471 = vunpack.c.h.b16 %v6508
      %v7472 = vunpack.c.l.b16 %v6509
      %v7473 = vunpack.c.h.b16 %v6509
      %v7474 = vunpack.c.l.b16 %v6510
      %v7475 = vunpack.c.h.b16 %v6510
      %v7476 = vunpack.c.l.b16 %v6511
      %v7477 = vunpack.c.h.b16 %v6511
      %v7478 = vunpack.c.l.b16 %v6512
      %v7479 = vunpack.c.h.b16 %v6512
      %v7480 = vpack.c.b16 %v7418, %v7416
      %v7481 = vpack.c.b16 %v7419, %v7417
      %v7482 = vpack.c.b16 %v7422, %v7420
      %v7483 = vpack.c.b16 %v7423, %v7421
      %v7484 = vpack.c.b16 %v7426, %v7424
      %v7485 = vpack.c.b16 %v7427, %v7425
      %v7486 = vpack.c.b16 %v7430, %v7428
      %v7487 = vpack.c.b16 %v7431, %v7429
      %v7488 = vpack.c.b16 %v7434, %v7432
      %v7489 = vpack.c.b16 %v7435, %v7433
      %v7490 = vpack.c.b16 %v7438, %v7436
      %v7491 = vpack.c.b16 %v7439, %v7437
      %v7492 = vpack.c.b16 %v7442, %v7440
      %v7493 = vpack.c.b16 %v7443, %v7441
      %v7494 = vpack.c.b16 %v7446, %v7444
      %v7495 = vpack.c.b16 %v7447, %v7445
      %v7496 = vpack.c.b16 %v7450, %v7448
      %v7497 = vpack.c.b16 %v7451, %v7449
      %v7498 = vpack.c.b16 %v7454, %v7452
      %v7499 = vpack.c.b16 %v7455, %v7453
      %v7500 = vpack.c.b16 %v7458, %v7456
      %v7501 = vpack.c.b16 %v7459, %v7457
      %v7502 = vpack.c.b16 %v7462, %v7460
      %v7503 = vpack.c.b16 %v7463, %v7461
      %v7504 = vpack.c.b16 %v7466, %v7464
      %v7505 = vpack.c.b16 %v7467, %v7465
      %v7506 = vpack.c.b16 %v7470, %v7468
      %v7507 = vpack.c.b16 %v7471, %v7469
      %v7508 = vpack.c.b16 %v7474, %v7472
      %v7509 = vpack.c.b16 %v7475, %v7473
      %v7510 = vpack.c.b16 %v7478, %v7476
      %v7511 = vpack.c.b16 %v7479, %v7477
      %7544 = vmatprep.subr.bf16.mxu0 %v7481
      %7545 = vmatpush1.bf16.xpose.msra.mxu0 %v7480
      %7546 = vmatprep.subr.bf16.mxu0 %v7483
      %7547 = vmatpush1.bf16.xpose.msra.mxu0 %v7482
      %7548 = vmatprep.subr.bf16.mxu0 %v7485
      %7549 = vmatpush1.bf16.xpose.msra.mxu0 %v7484
      %7550 = vmatprep.subr.bf16.mxu0 %v7487
      %7551 = vmatpush1.bf16.xpose.msra.mxu0 %v7486
      %7552 = vmatprep.subr.bf16.mxu0 %v7489
      %7553 = vmatpush1.bf16.xpose.msra.mxu0 %v7488
      %7554 = vmatprep.subr.bf16.mxu0 %v7491
      %7555 = vmatpush1.bf16.xpose.msra.mxu0 %v7490
      %7556 = vmatprep.subr.bf16.mxu0 %v7493
      %7557 = vmatpush1.bf16.xpose.msra.mxu0 %v7492
      %7558 = vmatprep.subr.bf16.mxu0 %v7495
      %7559 = vmatpush1.bf16.xpose.msra.mxu0 %v7494
      %7560 = vmatprep.subr.bf16.mxu0 %v7497
      %7561 = vmatpush1.bf16.xpose.msra.mxu0 %v7496
      %7562 = vmatprep.subr.bf16.mxu0 %v7499
      %7563 = vmatpush1.bf16.xpose.msra.mxu0 %v7498
      %7564 = vmatprep.subr.bf16.mxu0 %v7501
      %7565 = vmatpush1.bf16.xpose.msra.mxu0 %v7500
      %7566 = vmatprep.subr.bf16.mxu0 %v7503
      %7567 = vmatpush1.bf16.xpose.msra.mxu0 %v7502
      %7568 = vmatprep.subr.bf16.mxu0 %v7505
      %7569 = vmatpush1.bf16.xpose.msra.mxu0 %v7504
      %7570 = vmatprep.subr.bf16.mxu0 %v7507
      %7571 = vmatpush1.bf16.xpose.msra.mxu0 %v7506
      %7572 = vmatprep.subr.bf16.mxu0 %v7509
      %7573 = vmatpush1.bf16.xpose.msra.mxu0 %v7508
      %7574 = vmatprep.subr.bf16.mxu0 %v7511
      %7575 = vmatpush1.bf16.xpose.msra.mxu0 %v7510
      %7576 = vmatprep.mubr.bf16.mxu0 %v7372
      %7577 = vmatmul.mubr.bf16.gmra.mrb[0].mxu0 %v7371
      %v7578 = vpop.f32.mrb[0].mxu0
      %v7579 = vadd.f32 %v7377, %v7578
      %v7580 = vpop.f32.mrb[0].mxu0
      %v7581 = vadd.f32 %v7381, %v7580
      %v7582 = vpop.f32.mrb[0].mxu0
      %v7583 = vadd.f32 %v7377, %v7582
      %v7584 = vpop.f32.mrb[0].mxu0
      %v7585 = vadd.f32 %v7381, %v7584
      %7586 = vdwg.mxu0
      %v7587 = vmax.f32 %v7579, 0.0
      %v7588 = vmax.f32 %v7581, 0.0
      %v7589 = vmax.f32 %v7583, 0.0
      %v7590 = vmax.f32 %v7585, 0.0
      %v7591 = vld [vmem:[%s12] sm:$0xf]
      %v7592 = vld [vmem:[%s12 + $0x4] sm:$0xf]
      %v7593 = vld [vmem:[%s12 + $0x8] sm:$0xf]
      %v7594 = vld [vmem:[%s12 + $0xc] sm:$0xf]
      %v7595 = vld [vmem:[%s12 + $0x10] sm:$0xf]
      %v7596 = vld [vmem:[%s12 + $0x14] sm:$0xf]
      %v7597 = vld [vmem:[%s12 + $0x18] sm:$0xf]
      %v7598 = vld [vmem:[%s12 + $0x1c] sm:$0xf]
      %v7599 = vld [vmem:[%s12 + $0x20] sm:$0xf]
      %v7600 = vld [vmem:[%s12 + $0x24] sm:$0xf]
      %v7601 = vld [vmem:[%s12 + $0x28] sm:$0xf]
      %v7602 = vld [vmem:[%s12 + $0x2c] sm:$0xf]
      %v7603 = vld [vmem:[%s12 + $0x30] sm:$0xf]
      %v7604 = vld [vmem:[%s12 + $0x34] sm:$0xf]
      %v7605 = vld [vmem:[%s12 + $0x38] sm:$0xf]
      %v7606 = vld [vmem:[%s12 + $0x3c] sm:$0xf]
      %v7607 = vld [vmem:[%s12 + $0x40] sm:$0xf]
      %v7608 = vld [vmem:[%s12 + $0x44] sm:$0xf]
      %v7609 = vld [vmem:[%s12 + $0x48] sm:$0xf]
      %v7610 = vld [vmem:[%s12 + $0x4c] sm:$0xf]
      %v7611 = vld [vmem:[%s12 + $0x50] sm:$0xf]
      %v7612 = vld [vmem:[%s12 + $0x54] sm:$0xf]
      %v7613 = vld [vmem:[%s12 + $0x58] sm:$0xf]
      %v7614 = vld [vmem:[%s12 + $0x5c] sm:$0xf]
      %v7615 = vld [vmem:[%s12 + $0x60] sm:$0xf]
      %v7616 = vld [vmem:[%s12 + $0x64] sm:$0xf]
      %v7617 = vld [vmem:[%s12 + $0x68] sm:$0xf]
      %v7618 = vld [vmem:[%s12 + $0x6c] sm:$0xf]
      %v7619 = vld [vmem:[%s12 + $0x70] sm:$0xf]
      %v7620 = vld [vmem:[%s12 + $0x74] sm:$0xf]
      %v7621 = vld [vmem:[%s12 + $0x78] sm:$0xf]
      %v7622 = vld [vmem:[%s12 + $0x7c] sm:$0xf]
      %v7623 = vld [vmem:[%s13] sm:$0xf]
      %v7624 = vld [vmem:[%s13 + $0x4] sm:$0xf]
      %v7625 = vld [vmem:[%s13 + $0x8] sm:$0xf]
      %v7626 = vld [vmem:[%s13 + $0xc] sm:$0xf]
      %v7627 = vld [vmem:[%s13 + $0x10] sm:$0xf]
      %v7628 = vld [vmem:[%s13 + $0x14] sm:$0xf]
      %v7629 = vld [vmem:[%s13 + $0x18] sm:$0xf]
      %v7630 = vld [vmem:[%s13 + $0x1c] sm:$0xf]
      %v7631 = vld [vmem:[%s13 + $0x20] sm:$0xf]
      %v7632 = vld [vmem:[%s13 + $0x24] sm:$0xf]
      %v7633 = vld [vmem:[%s13 + $0x28] sm:$0xf]
      %v7634 = vld [vmem:[%s13 + $0x2c] sm:$0xf]
      %v7635 = vld [vmem:[%s13 + $0x30] sm:$0xf]
      %v7636 = vld [vmem:[%s13 + $0x34] sm:$0xf]
      %v7637 = vld [vmem:[%s13 + $0x38] sm:$0xf]
      %v7638 = vld [vmem:[%s13 + $0x3c] sm:$0xf]
      %v7639 = vld [vmem:[%s13 + $0x40] sm:$0xf]
      %v7640 = vld [vmem:[%s13 + $0x44] sm:$0xf]
      %v7641 = vld [vmem:[%s13 + $0x48] sm:$0xf]
      %v7642 = vld [vmem:[%s13 + $0x4c] sm:$0xf]
      %v7643 = vld [vmem:[%s13 + $0x50] sm:$0xf]
      %v7644 = vld [vmem:[%s13 + $0x54] sm:$0xf]
      %v7645 = vld [vmem:[%s13 + $0x58] sm:$0xf]
      %v7646 = vld [vmem:[%s13 + $0x5c] sm:$0xf]
      %v7647 = vld [vmem:[%s13 + $0x60] sm:$0xf]
      %v7648 = vld [vmem:[%s13 + $0x64] sm:$0xf]
      %v7649 = vld [vmem:[%s13 + $0x68] sm:$0xf]
      %v7650 = vld [vmem:[%s13 + $0x6c] sm:$0xf]
      %v7651 = vld [vmem:[%s13 + $0x70] sm:$0xf]
      %v7652 = vld [vmem:[%s13 + $0x74] sm:$0xf]
      %v7653 = vld [vmem:[%s13 + $0x78] sm:$0xf]
      %v7654 = vld [vmem:[%s13 + $0x7c] sm:$0xf]
      %v7655 = vld [vmem:[%s14] sm:$0x1]
      %v7656 = vld [vmem:[%s15] sm:$0xf]
      %v7657 = vld [vmem:[%s15 + $0x4] sm:$0xf]
      %v7658 = vld [vmem:[%s15 + $0x8] sm:$0xf]
      %v7659 = vld [vmem:[%s15 + $0xc] sm:$0xf]
      %v7660 = vld [vmem:[%s15 + $0x10] sm:$0xf]
      %v7661 = vld [vmem:[%s15 + $0x14] sm:$0xf]
      %v7662 = vld [vmem:[%s15 + $0x18] sm:$0xf]
      %v7663 = vld [vmem:[%s15 + $0x1c] sm:$0xf]
      %v7664 = vld [vmem:[%s15 + $0x20] sm:$0xf]
      %v7665 = vld [vmem:[%s15 + $0x24] sm:$0xf]
      %v7666 = vld [vmem:[%s15 + $0x28] sm:$0xf]
      %v7667 = vld [vmem:[%s15 + $0x2c] sm:$0xf]
      %v7668 = vld [vmem:[%s15 + $0x30] sm:$0xf]
      %v7669 = vld [vmem:[%s15 + $0x34] sm:$0xf]
      %v7670 = vld [vmem:[%s15 + $0x38] sm:$0xf]
      %v7671 = vld [vmem:[%s15 + $0x3c] sm:$0xf]
      %v7672 = vld [vmem:[%s16] sm:$0x1]
      %v7673 = vld [vmem:[%s17] sm:$0xff]
      %v7674 = vld [vmem:[%s17 + $0x8] sm:$0xff]
      %v7675 = vld [vmem:[%s17 + $0x10] sm:$0xff]
      %v7676 = vld [vmem:[%s17 + $0x18] sm:$0xff]
      %v7677 = vld [vmem:[%s17 + $0x20] sm:$0xff]
      %v7678 = vld [vmem:[%s17 + $0x28] sm:$0xff]
      %v7679 = vld [vmem:[%s17 + $0x30] sm:$0xff]
      %v7680 = vld [vmem:[%s17 + $0x38] sm:$0xff]
      %v7681 = vld [vmem:[%s17 + $0x40] sm:$0xff]
      %v7682 = vld [vmem:[%s17 + $0x48] sm:$0xff]
      %v7683 = vld [vmem:[%s17 + $0x50] sm:$0xff]
      %v7684 = vld [vmem:[%s17 + $0x58] sm:$0xff]
      %v7685 = vld [vmem:[%s17 + $0x60] sm:$0xff]
      %v7686 = vld [vmem:[%s17 + $0x68] sm:$0xff]
      %v7687 = vld [vmem:[%s17 + $0x70] sm:$0xff]
      %v7688 = vld [vmem:[%s17 + $0x78] sm:$0xff]
      %v7689 = vld [vmem:[%s18] sm:$0x3]
      %v7690 = vld [vmem:[%s19] sm:$0xff]
      %v7691 = vld [vmem:[%s19 + $0x8] sm:$0xff]
      %v7692 = vld [vmem:[%s19 + $0x10] sm:$0xff]
      %v7693 = vld [vmem:[%s19 + $0x18] sm:$0xff]
      %v7694 = vld [vmem:[%s19 + $0x20] sm:$0xff]
      %v7695 = vld [vmem:[%s19 + $0x28] sm:$0xff]
      %v7696 = vld [vmem:[%s19 + $0x30] sm:$0xff]
      %v7697 = vld [vmem:[%s19 + $0x38] sm:$0xff]
      %v7698 = vld [vmem:[%s19 + $0x40] sm:$0xff]
      %v7699 = vld [vmem:[%s19 + $0x48] sm:$0xff]
      %v7700 = vld [vmem:[%s19 + $0x50] sm:$0xff]
      %v7701 = vld [vmem:[%s19 + $0x58] sm:$0xff]
      %v7702 = vld [vmem:[%s19 + $0x60] sm:$0xff]
      %v7703 = vld [vmem:[%s19 + $0x68] sm:$0xff]
      %v7704 = vld [vmem:[%s19 + $0x70] sm:$0xff]
      %v7705 = vld [vmem:[%s19 + $0x78] sm:$0xff]
      %v7706 = vld [vmem:[%s19 + $0x80] sm:$0xff]
      %v7707 = vld [vmem:[%s19 + $0x88] sm:$0xff]
      %v7708 = vld [vmem:[%s19 + $0x90] sm:$0xff]
      %v7709 = vld [vmem:[%s19 + $0x98] sm:$0xff]
      %v7710 = vld [vmem:[%s19 + $0xa0] sm:$0xff]
      %v7711 = vld [vmem:[%s19 + $0xa8] sm:$0xff]
      %v7712 = vld [vmem:[%s19 + $0xb0] sm:$0xff]
      %v7713 = vld [vmem:[%s19 + $0xb8] sm:$0xff]
      %v7714 = vld [vmem:[%s19 + $0xc0] sm:$0xff]
      %v7715 = vld [vmem:[%s19 + $0xc8] sm:$0xff]
      %v7716 = vld [vmem:[%s19 + $0xd0] sm:$0xff]
      %v7717 = vld [vmem:[%s19 + $0xd8] sm:$0xff]
      %v7718 = vld [vmem:[%s19 + $0xe0] sm:$0xff]
      %v7719 = vld [vmem:[%s19 + $0xe8] sm:$0xff]
      %v7720 = vld [vmem:[%s19 + $0xf0] sm:$0xff]
      %v7721 = vld [vmem:[%s19 + $0xf8] sm:$0xff]
      %v7722 = vld [vmem:[%s20] sm:$0xff]
      %v7723 = vld [vmem:[%s20 + $0x8] sm:$0xff]
      %v7724 = vld [vmem:[%s20 + $0x10] sm:$0xff]
      %v7725 = vld [vmem:[%s20 + $0x18] sm:$0xff]
      %v7726 = vld [vmem:[%s20 + $0x20] sm:$0xff]
      %v7727 = vld [vmem:[%s20 + $0x28] sm:$0xff]
      %v7728 = vld [vmem:[%s20 + $0x30] sm:$0xff]
      %v7729 = vld [vmem:[%s20 + $0x38] sm:$0xff]
      %v7730 = vld [vmem:[%s20 + $0x40] sm:$0xff]
      %v7731 = vld [vmem:[%s20 + $0x48] sm:$0xff]
      %v7732 = vld [vmem:[%s20 + $0x50] sm:$0xff]
      %v7733 = vld [vmem:[%s20 + $0x58] sm:$0xff]
      %v7734 = vld [vmem:[%s20 + $0x60] sm:$0xff]
      %v7735 = vld [vmem:[%s20 + $0x68] sm:$0xff]
      %v7736 = vld [vmem:[%s20 + $0x70] sm:$0xff]
      %v7737 = vld [vmem:[%s20 + $0x78] sm:$0xff]
      %v7738 = vld [vmem:[%s20 + $0x80] sm:$0xff]
      %v7739 = vld [vmem:[%s20 + $0x88] sm:$0xff]
      %v7740 = vld [vmem:[%s20 + $0x90] sm:$0xff]
      %v7741 = vld [vmem:[%s20 + $0x98] sm:$0xff]
      %v7742 = vld [vmem:[%s20 + $0xa0] sm:$0xff]
      %v7743 = vld [vmem:[%s20 + $0xa8] sm:$0xff]
      %v7744 = vld [vmem:[%s20 + $0xb0] sm:$0xff]
      %v7745 = vld [vmem:[%s20 + $0xb8] sm:$0xff]
      %v7746 = vld [vmem:[%s20 + $0xc0] sm:$0xff]
      %v7747 = vld [vmem:[%s20 + $0xc8] sm:$0xff]
      %v7748 = vld [vmem:[%s20 + $0xd0] sm:$0xff]
      %v7749 = vld [vmem:[%s20 + $0xd8] sm:$0xff]
      %v7750 = vld [vmem:[%s20 + $0xe0] sm:$0xff]
      %v7751 = vld [vmem:[%s20 + $0xe8] sm:$0xff]
      %v7752 = vld [vmem:[%s20 + $0xf0] sm:$0xff]
      %v7753 = vld [vmem:[%s20 + $0xf8] sm:$0xff]
      %v7754 = vpack.c.bf16 %v7589, %v7587
      %v7755 = vpack.c.bf16 %v7590, %v7588
      %7756 = vmatprep.subr.bf16.mxu0 %v7755
      %7757 = vmatpush1.bf16.xpose.msra.mxu0 %v7754
      %7758 = vmatprep.subr.bf16.mxu0 0
      %7759 = vmatpush1.bf16.xpose.msra.mxu0 0
      %7760 = vmatprep.subr.bf16.mxu0 0
      %7761 = vmatpush1.bf16.xpose.msra.mxu0 0
      %7762 = vmatprep.subr.bf16.mxu0 0
      %7763 = vmatpush1.bf16.xpose.msra.mxu0 0
      %7764 = vmatprep.subr.bf16.mxu0 0
      %7765 = vmatpush1.bf16.xpose.msra.mxu0 0
      %7766 = vmatprep.subr.bf16.mxu0 0
      %7767 = vmatpush1.bf16.xpose.msra.mxu0 0
      %7768 = vmatprep.subr.bf16.mxu0 0
      %7769 = vmatpush1.bf16.xpose.msra.mxu0 0
      %7770 = vmatprep.subr.bf16.mxu0 0
      %7771 = vmatpush1.bf16.xpose.msra.mxu0 0
      %7772 = vmatprep.subr.bf16.mxu0 0
      %7773 = vmatpush1.bf16.xpose.msra.mxu0 0
      %7774 = vmatprep.subr.bf16.mxu0 0
      %7775 = vmatpush1.bf16.xpose.msra.mxu0 0
      %7776 = vmatprep.subr.bf16.mxu0 0
      %7777 = vmatpush1.bf16.xpose.msra.mxu0 0
      %7778 = vmatprep.subr.bf16.mxu0 0
      %7779 = vmatpush1.bf16.xpose.msra.mxu0 0
      %7780 = vmatprep.subr.bf16.mxu0 0
      %7781 = vmatpush1.bf16.xpose.msra.mxu0 0
      %7782 = vmatprep.subr.bf16.mxu0 0
      %7783 = vmatpush1.bf16.xpose.msra.mxu0 0
      %7784 = vmatprep.subr.bf16.mxu0 0
      %7785 = vmatpush1.bf16.xpose.msra.mxu0 0
      %7786 = vmatprep.subr.bf16.mxu0 0
      %7787 = vmatpush1.bf16.xpose.msra.mxu0 0
      %7788 = vmatprep.mubr.bf16.mxu0 %v7755
      %7789 = vmatmul.mubr.bf16.gmra.mrb[0].mxu0 %v7754
      %v7790 = vpop.f32.mrb[0].mxu0
      %v7791 = vadd.f32 0.0, %v7790
      %v7792 = vpop.f32.mrb[0].mxu0
      %v7793 = vpop.f32.mrb[0].mxu0
      %v7794 = vadd.f32 0.0, %v7793
      %v7795 = vpop.f32.mrb[0].mxu0
      %7796 = vdwg.mxu0
      %v7797 = vsel %vm1688, %v7791, 0.0
      %v7798 = vsel %vm1689, %v7794, 0.0
      %v7799 = vsel %vm1823, %v7797, 0.0
      %v7800 = vsel %vm1823, %v7798, 0.0
      %v7801 = vadd.f32 %v7799, %v7800
      %v7802 = vrot.slane %v7801, 4
      %v7803 = vadd.f32 %v7801, %v7802
      %v7804 = vrot.slane %v7803, 2
      %v7805 = vadd.f32 %v7803, %v7804
      %v7806 = vrot.slane %v7805, 1
      %v7807 = vadd.f32 %v7805, %v7806
      %v7808 = vmul.f32 %v7791, 2.0
      %v7809 = vmul.f32 %v7794, 2.0
      %v7810 = vsub.f32 %v7808, %v7807
      %v7811 = vsub.f32 %v7809, %v7807
      %v7844 = vunpack.c.l.b16 %v7591
      %v7845 = vunpack.c.l.b16 %v7592
      %v7846 = vunpack.c.l.b16 %v7593
      %v7847 = vunpack.c.l.b16 %v7594
      %v7848 = vunpack.c.l.b16 %v7595
      %v7849 = vunpack.c.l.b16 %v7596
      %v7850 = vunpack.c.l.b16 %v7597
      %v7851 = vunpack.c.l.b16 %v7598
      %v7852 = vunpack.c.l.b16 %v7599
      %v7853 = vunpack.c.l.b16 %v7600
      %v7854 = vunpack.c.l.b16 %v7601
      %v7855 = vunpack.c.l.b16 %v7602
      %v7856 = vunpack.c.l.b16 %v7603
      %v7857 = vunpack.c.l.b16 %v7604
      %v7858 = vunpack.c.l.b16 %v7605
      %v7859 = vunpack.c.l.b16 %v7606
      %v7860 = vunpack.c.l.b16 %v7607
      %v7861 = vunpack.c.l.b16 %v7608
      %v7862 = vunpack.c.l.b16 %v7609
      %v7863 = vunpack.c.l.b16 %v7610
      %v7864 = vunpack.c.l.b16 %v7611
      %v7865 = vunpack.c.l.b16 %v7612
      %v7866 = vunpack.c.l.b16 %v7613
      %v7867 = vunpack.c.l.b16 %v7614
      %v7868 = vunpack.c.l.b16 %v7615
      %v7869 = vunpack.c.l.b16 %v7616
      %v7870 = vunpack.c.l.b16 %v7617
      %v7871 = vunpack.c.l.b16 %v7618
      %v7872 = vunpack.c.l.b16 %v7619
      %v7873 = vunpack.c.l.b16 %v7620
      %v7874 = vunpack.c.l.b16 %v7621
      %v7875 = vunpack.c.l.b16 %v7622
      %v7876 = vpack.c.b16 %v7845, %v7844
      %v7877 = vpack.c.b16 %v7847, %v7846
      %v7878 = vpack.c.b16 %v7849, %v7848
      %v7879 = vpack.c.b16 %v7851, %v7850
      %v7880 = vpack.c.b16 %v7853, %v7852
      %v7881 = vpack.c.b16 %v7855, %v7854
      %v7882 = vpack.c.b16 %v7857, %v7856
      %v7883 = vpack.c.b16 %v7859, %v7858
      %v7884 = vpack.c.b16 %v7861, %v7860
      %v7885 = vpack.c.b16 %v7863, %v7862
      %v7886 = vpack.c.b16 %v7865, %v7864
      %v7887 = vpack.c.b16 %v7867, %v7866
      %v7888 = vpack.c.b16 %v7869, %v7868
      %v7889 = vpack.c.b16 %v7871, %v7870
      %v7890 = vpack.c.b16 %v7873, %v7872
      %v7891 = vpack.c.b16 %v7875, %v7874
      %7908 = vmatprep.subr.bf16.mxu0 0
      %7909 = vmatpush1.bf16.msra.mxu0 %v7876
      %7910 = vmatprep.subr.bf16.mxu0 0
      %7911 = vmatpush1.bf16.msra.mxu0 %v7877
      %7912 = vmatprep.subr.bf16.mxu0 0
      %7913 = vmatpush1.bf16.msra.mxu0 %v7878
      %7914 = vmatprep.subr.bf16.mxu0 0
      %7915 = vmatpush1.bf16.msra.mxu0 %v7879
      %7916 = vmatprep.subr.bf16.mxu0 0
      %7917 = vmatpush1.bf16.msra.mxu0 %v7880
      %7918 = vmatprep.subr.bf16.mxu0 0
      %7919 = vmatpush1.bf16.msra.mxu0 %v7881
      %7920 = vmatprep.subr.bf16.mxu0 0
      %7921 = vmatpush1.bf16.msra.mxu0 %v7882
      %7922 = vmatprep.subr.bf16.mxu0 0
      %7923 = vmatpush1.bf16.msra.mxu0 %v7883
      %7924 = vmatprep.subr.bf16.mxu0 0
      %7925 = vmatpush1.bf16.msra.mxu0 %v7884
      %7926 = vmatprep.subr.bf16.mxu0 0
      %7927 = vmatpush1.bf16.msra.mxu0 %v7885
      %7928 = vmatprep.subr.bf16.mxu0 0
      %7929 = vmatpush1.bf16.msra.mxu0 %v7886
      %7930 = vmatprep.subr.bf16.mxu0 0
      %7931 = vmatpush1.bf16.msra.mxu0 %v7887
      %7932 = vmatprep.subr.bf16.mxu0 0
      %7933 = vmatpush1.bf16.msra.mxu0 %v7888
      %7934 = vmatprep.subr.bf16.mxu0 0
      %7935 = vmatpush1.bf16.msra.mxu0 %v7889
      %7936 = vmatprep.subr.bf16.mxu0 0
      %7937 = vmatpush1.bf16.msra.mxu0 %v7890
      %7938 = vmatprep.subr.bf16.mxu0 0
      %7939 = vmatpush1.bf16.msra.mxu0 %v7891
      %7940 = vmatprep.mubr.bf16.mxu0 %v7755
      %7941 = vmatmul.mubr.bf16.gmra.mrb[0].mxu0 %v7754
      %v7942 = vpop.f32.mrb[0].mxu0
      %v7943 = vadd.f32 0.0, %v7942
      %v7944 = vpop.f32.mrb[0].mxu0
      %v7945 = vpop.f32.mrb[0].mxu0
      %v7946 = vadd.f32 0.0, %v7945
      %v7947 = vpop.f32.mrb[0].mxu0
      %7948 = vdwg.mxu0
      %v7950 = vlaneseq
      %v7951 = vshrl.u32 %v7950, 7
      %v7952 = vsub.s32 0, %v7951
      %v7953 = vrot.slane %v7655, %v7952
      %v7987 = vunpack.c.l.b16 %v7623
      %v7988 = vunpack.c.l.b16 %v7624
      %v7989 = vunpack.c.l.b16 %v7625
      %v7990 = vunpack.c.l.b16 %v7626
      %v7991 = vunpack.c.l.b16 %v7627
      %v7992 = vunpack.c.l.b16 %v7628
      %v7993 = vunpack.c.l.b16 %v7629
      %v7994 = vunpack.c.l.b16 %v7630
      %v7995 = vunpack.c.l.b16 %v7631
      %v7996 = vunpack.c.l.b16 %v7632
      %v7997 = vunpack.c.l.b16 %v7633
      %v7998 = vunpack.c.l.b16 %v7634
      %v7999 = vunpack.c.l.b16 %v7635
      %v8000 = vunpack.c.l.b16 %v7636
      %v8001 = vunpack.c.l.b16 %v7637
      %v8002 = vunpack.c.l.b16 %v7638
      %v8003 = vunpack.c.l.b16 %v7639
      %v8004 = vunpack.c.l.b16 %v7640
      %v8005 = vunpack.c.l.b16 %v7641
      %v8006 = vunpack.c.l.b16 %v7642
      %v8007 = vunpack.c.l.b16 %v7643
      %v8008 = vunpack.c.l.b16 %v7644
      %v8009 = vunpack.c.l.b16 %v7645
      %v8010 = vunpack.c.l.b16 %v7646
      %v8011 = vunpack.c.l.b16 %v7647
      %v8012 = vunpack.c.l.b16 %v7648
      %v8013 = vunpack.c.l.b16 %v7649
      %v8014 = vunpack.c.l.b16 %v7650
      %v8015 = vunpack.c.l.b16 %v7651
      %v8016 = vunpack.c.l.b16 %v7652
      %v8017 = vunpack.c.l.b16 %v7653
      %v8018 = vunpack.c.l.b16 %v7654
      %v8019 = vpack.c.b16 %v7988, %v7987
      %v8020 = vpack.c.b16 %v7990, %v7989
      %v8021 = vpack.c.b16 %v7992, %v7991
      %v8022 = vpack.c.b16 %v7994, %v7993
      %v8023 = vpack.c.b16 %v7996, %v7995
      %v8024 = vpack.c.b16 %v7998, %v7997
      %v8025 = vpack.c.b16 %v8000, %v7999
      %v8026 = vpack.c.b16 %v8002, %v8001
      %v8027 = vpack.c.b16 %v8004, %v8003
      %v8028 = vpack.c.b16 %v8006, %v8005
      %v8029 = vpack.c.b16 %v8008, %v8007
      %v8030 = vpack.c.b16 %v8010, %v8009
      %v8031 = vpack.c.b16 %v8012, %v8011
      %v8032 = vpack.c.b16 %v8014, %v8013
      %v8033 = vpack.c.b16 %v8016, %v8015
      %v8034 = vpack.c.b16 %v8018, %v8017
      %8051 = vmatprep.subr.bf16.mxu0 0
      %8052 = vmatpush1.bf16.msra.mxu0 %v8019
      %8053 = vmatprep.subr.bf16.mxu0 0
      %8054 = vmatpush1.bf16.msra.mxu0 %v8020
      %8055 = vmatprep.subr.bf16.mxu0 0
      %8056 = vmatpush1.bf16.msra.mxu0 %v8021
      %8057 = vmatprep.subr.bf16.mxu0 0
      %8058 = vmatpush1.bf16.msra.mxu0 %v8022
      %8059 = vmatprep.subr.bf16.mxu0 0
      %8060 = vmatpush1.bf16.msra.mxu0 %v8023
      %8061 = vmatprep.subr.bf16.mxu0 0
      %8062 = vmatpush1.bf16.msra.mxu0 %v8024
      %8063 = vmatprep.subr.bf16.mxu0 0
      %8064 = vmatpush1.bf16.msra.mxu0 %v8025
      %8065 = vmatprep.subr.bf16.mxu0 0
      %8066 = vmatpush1.bf16.msra.mxu0 %v8026
      %8067 = vmatprep.subr.bf16.mxu0 0
      %8068 = vmatpush1.bf16.msra.mxu0 %v8027
      %8069 = vmatprep.subr.bf16.mxu0 0
      %8070 = vmatpush1.bf16.msra.mxu0 %v8028
      %8071 = vmatprep.subr.bf16.mxu0 0
      %8072 = vmatpush1.bf16.msra.mxu0 %v8029
      %8073 = vmatprep.subr.bf16.mxu0 0
      %8074 = vmatpush1.bf16.msra.mxu0 %v8030
      %8075 = vmatprep.subr.bf16.mxu0 0
      %8076 = vmatpush1.bf16.msra.mxu0 %v8031
      %8077 = vmatprep.subr.bf16.mxu0 0
      %8078 = vmatpush1.bf16.msra.mxu0 %v8032
      %8079 = vmatprep.subr.bf16.mxu0 0
      %8080 = vmatpush1.bf16.msra.mxu0 %v8033
      %8081 = vmatprep.subr.bf16.mxu0 0
      %8082 = vmatpush1.bf16.msra.mxu0 %v8034
      %8083 = vmatprep.mubr.bf16.mxu0 %v7755
      %8084 = vmatmul.mubr.bf16.gmra.mrb[0].mxu0 %v7754
      %v8085 = vpop.f32.mrb[0].mxu0
      %v8086 = vadd.f32 %v7953, %v8085
      %v8087 = vpop.f32.mrb[0].mxu0
      %v8088 = vpop.f32.mrb[0].mxu0
      %v8089 = vadd.f32 %v7953, %v8088
      %v8090 = vpop.f32.mrb[0].mxu0
      %8091 = vdwg.mxu0
      %v8092 = vsel %vm1823, %v7810, -inf
      %8093 = vmax.xlane.f32.xlu0 %v8092
      %v8094 = vpop.xlane.xlu0 %8093
      %v8095 = vsel %vm1823, %v7811, -inf
      %8096 = vmax.xlane.f32.xlu0 %v8095
      %v8097 = vpop.xlane.xlu0 %8096
      %vm8098 = vcmp.eq.f32.partialorder %v7810, %v8094
      %vm8099 = vcmp.eq.f32.partialorder %v7811, %v8097
      %v8100 = vsel %vm8098, %v1687, 16
      %v8101 = vsel %vm8099, %v1687, 16
      %v8102 = vsel %vm1823, %v8100, 2147483647
      %v8103 = vand.u32 %v8102, 65535
      %v8104 = vshra.s32 %v8102, 16
      %v8105 = vcvt.s32.f32 %v8103
      %v8106 = vcvt.s32.f32 %v8104
      %8107 = vmin.xlane.f32.xlu0 %v8106
      %v8108 = vpop.xlane.xlu0 %8107
      %vm8109 = vcmp.eq.f32.partialorder %v8106, %v8108
      %v8110 = vsel %vm8109, %v8105, inf
      %8111 = vmin.xlane.f32.xlu0 %v8110
      %v8112 = vpop.xlane.xlu0 %8111
      %v8113 = vcvt.f32.s32 %v8112
      %v8114 = vcvt.f32.s32 %v8108
      %v8115 = vshll.u32 %v8114, 16
      %v8116 = vadd.s32 %v8115, %v8113
      %v8117 = vsel %vm1823, %v8101, 2147483647
      %v8118 = vand.u32 %v8117, 65535
      %v8119 = vshra.s32 %v8117, 16
      %v8120 = vcvt.s32.f32 %v8118
      %v8121 = vcvt.s32.f32 %v8119
      %8122 = vmin.xlane.f32.xlu0 %v8121
      %v8123 = vpop.xlane.xlu0 %8122
      %vm8124 = vcmp.eq.f32.partialorder %v8121, %v8123
      %v8125 = vsel %vm8124, %v8120, inf
      %8126 = vmin.xlane.f32.xlu0 %v8125
      %v8127 = vpop.xlane.xlu0 %8126
      %v8128 = vcvt.f32.s32 %v8127
      %v8129 = vcvt.f32.s32 %v8123
      %v8130 = vshll.u32 %v8129, 16
      %v8131 = vadd.s32 %v8130, %v8128
      %vm8132 = vcmp.eq.s32.totalorder %v1687, %v8116
      %vm8133 = vcmp.eq.s32.totalorder %v1687, %v8131
      %v8134 = vsel %vm8132, 1, 0
      %v8135 = vsel %vm8133, 1, 0
      %v8136 = vcvt.s32.f32 %v8134
      %v8137 = vcvt.s32.f32 %v8135
      %v8138 = vsel %vm8132, -inf, %v7810
      %v8139 = vsel %vm8133, -inf, %v7811
      %v8140 = vsel %vm1823, %v8138, -inf
      %8141 = vmax.xlane.f32.xlu0 %v8140
      %v8142 = vpop.xlane.xlu0 %8141
      %v8143 = vsel %vm1823, %v8139, -inf
      %8144 = vmax.xlane.f32.xlu0 %v8143
      %v8145 = vpop.xlane.xlu0 %8144
      %vm8146 = vcmp.eq.f32.partialorder %v8138, %v8142
      %vm8147 = vcmp.eq.f32.partialorder %v8139, %v8145
      %v8148 = vsel %vm8146, %v1687, 16
      %v8149 = vsel %vm8147, %v1687, 16
      %v8150 = vsel %vm1823, %v8148, 2147483647
      %v8151 = vand.u32 %v8150, 65535
      %v8152 = vshra.s32 %v8150, 16
      %v8153 = vcvt.s32.f32 %v8151
      %v8154 = vcvt.s32.f32 %v8152
      %8155 = vmin.xlane.f32.xlu0 %v8154
      %v8156 = vpop.xlane.xlu0 %8155
      %vm8157 = vcmp.eq.f32.partialorder %v8154, %v8156
      %v8158 = vsel %vm8157, %v8153, inf
      %8159 = vmin.xlane.f32.xlu0 %v8158
      %v8160 = vpop.xlane.xlu0 %8159
      %v8161 = vcvt.f32.s32 %v8160
      %v8162 = vcvt.f32.s32 %v8156
      %v8163 = vshll.u32 %v8162, 16
      %v8164 = vadd.s32 %v8163, %v8161
      %v8165 = vsel %vm1823, %v8149, 2147483647
      %v8166 = vand.u32 %v8165, 65535
      %v8167 = vshra.s32 %v8165, 16
      %v8168 = vcvt.s32.f32 %v8166
      %v8169 = vcvt.s32.f32 %v8167
      %8170 = vmin.xlane.f32.xlu0 %v8169
      %v8171 = vpop.xlane.xlu0 %8170
      %vm8172 = vcmp.eq.f32.partialorder %v8169, %v8171
      %v8173 = vsel %vm8172, %v8168, inf
      %8174 = vmin.xlane.f32.xlu0 %v8173
      %v8175 = vpop.xlane.xlu0 %8174
      %v8176 = vcvt.f32.s32 %v8175
      %v8177 = vcvt.f32.s32 %v8171
      %v8178 = vshll.u32 %v8177, 16
      %v8179 = vadd.s32 %v8178, %v8176
      %vm8180 = vcmp.eq.s32.totalorder %v1687, %v8164
      %vm8181 = vcmp.eq.s32.totalorder %v1687, %v8179
      %v8182 = vsel %vm8180, 1, 0
      %v8183 = vsel %vm8181, 1, 0
      %v8184 = vcvt.s32.f32 %v8182
      %v8185 = vcvt.s32.f32 %v8183
      %v8186 = vsel %vm8180, -inf, %v8138
      %v8187 = vsel %vm8181, -inf, %v8139
      %v8188 = vsel %vm1823, %v8186, -inf
      %8189 = vmax.xlane.f32.xlu0 %v8188
      %v8190 = vpop.xlane.xlu0 %8189
      %v8191 = vsel %vm1823, %v8187, -inf
      %8192 = vmax.xlane.f32.xlu0 %v8191
      %v8193 = vpop.xlane.xlu0 %8192
      %vm8194 = vcmp.eq.f32.partialorder %v8186, %v8190
      %vm8195 = vcmp.eq.f32.partialorder %v8187, %v8193
      %v8196 = vsel %vm8194, %v1687, 16
      %v8197 = vsel %vm8195, %v1687, 16
      %v8198 = vsel %vm1823, %v8196, 2147483647
      %v8199 = vand.u32 %v8198, 65535
      %v8200 = vshra.s32 %v8198, 16
      %v8201 = vcvt.s32.f32 %v8199
      %v8202 = vcvt.s32.f32 %v8200
      %8203 = vmin.xlane.f32.xlu0 %v8202
      %v8204 = vpop.xlane.xlu0 %8203
      %vm8205 = vcmp.eq.f32.partialorder %v8202, %v8204
      %v8206 = vsel %vm8205, %v8201, inf
      %8207 = vmin.xlane.f32.xlu0 %v8206
      %v8208 = vpop.xlane.xlu0 %8207
      %v8209 = vcvt.f32.s32 %v8208
      %v8210 = vcvt.f32.s32 %v8204
      %v8211 = vshll.u32 %v8210, 16
      %v8212 = vadd.s32 %v8211, %v8209
      %v8213 = vsel %vm1823, %v8197, 2147483647
      %v8214 = vand.u32 %v8213, 65535
      %v8215 = vshra.s32 %v8213, 16
      %v8216 = vcvt.s32.f32 %v8214
      %v8217 = vcvt.s32.f32 %v8215
      %8218 = vmin.xlane.f32.xlu0 %v8217
      %v8219 = vpop.xlane.xlu0 %8218
      %vm8220 = vcmp.eq.f32.partialorder %v8217, %v8219
      %v8221 = vsel %vm8220, %v8216, inf
      %8222 = vmin.xlane.f32.xlu0 %v8221
      %v8223 = vpop.xlane.xlu0 %8222
      %v8224 = vcvt.f32.s32 %v8223
      %v8225 = vcvt.f32.s32 %v8219
      %v8226 = vshll.u32 %v8225, 16
      %v8227 = vadd.s32 %v8226, %v8224
      %vm8228 = vcmp.eq.s32.totalorder %v1687, %v8212
      %vm8229 = vcmp.eq.s32.totalorder %v1687, %v8227
      %v8230 = vsel %vm8228, 1, 0
      %v8231 = vsel %vm8229, 1, 0
      %v8232 = vcvt.s32.f32 %v8230
      %v8233 = vcvt.s32.f32 %v8231
      %v8234 = vpack.c.bf16 %v8137, %v8136
      %v8235 = vpack.c.bf16 %v8185, %v8184
      %v8236 = vpack.c.bf16 %v8233, %v8232
      %v8237 = vpack.c.bf16 %v7946, %v7943
      %v8239 = vsel %vm1823, %v8234, 0
      %v8242 = vsel %vm1823, %v8235, 0
      %v8245 = vsel %vm1823, %v8236, 0
      %8247 = vmatprep.subr.bf16.mxu0 0
      %8248 = vmatpush1.bf16.msra.mxu0 %v8237
      %8249 = vmatprep.subr.bf16.mxu0 0
      %8250 = vmatpush1.bf16.msra.mxu0 0
      %8251 = vmatprep.subr.bf16.mxu0 0
      %8252 = vmatpush1.bf16.msra.mxu0 0
      %8253 = vmatprep.subr.bf16.mxu0 0
      %8254 = vmatpush1.bf16.msra.mxu0 0
      %8255 = vmatprep.subr.bf16.mxu0 0
      %8256 = vmatpush1.bf16.msra.mxu0 0
      %8257 = vmatprep.subr.bf16.mxu0 0
      %8258 = vmatpush1.bf16.msra.mxu0 0
      %8259 = vmatprep.subr.bf16.mxu0 0
      %8260 = vmatpush1.bf16.msra.mxu0 0
      %8261 = vmatprep.subr.bf16.mxu0 0
      %8262 = vmatpush1.bf16.msra.mxu0 0
      %8263 = vmatprep.subr.bf16.mxu0 0
      %8264 = vmatpush1.bf16.msra.mxu0 0
      %8265 = vmatprep.subr.bf16.mxu0 0
      %8266 = vmatpush1.bf16.msra.mxu0 0
      %8267 = vmatprep.subr.bf16.mxu0 0
      %8268 = vmatpush1.bf16.msra.mxu0 0
      %8269 = vmatprep.subr.bf16.mxu0 0
      %8270 = vmatpush1.bf16.msra.mxu0 0
      %8271 = vmatprep.subr.bf16.mxu0 0
      %8272 = vmatpush1.bf16.msra.mxu0 0
      %8273 = vmatprep.subr.bf16.mxu0 0
      %8274 = vmatpush1.bf16.msra.mxu0 0
      %8275 = vmatprep.subr.bf16.mxu0 0
      %8276 = vmatpush1.bf16.msra.mxu0 0
      %8277 = vmatprep.subr.bf16.mxu0 0
      %8278 = vmatpush1.bf16.msra.mxu0 0
      %8279 = vmatprep.mubr.bf16.mxu0 0
      %8280 = vmatmul.mubr.bf16.gmra.mrb[0].mxu0 %v8239
      %v8281 = vpop.f32.mrb[0].mxu0
      %v8282 = vadd.f32 %v8086, %v8281
      %v8283 = vpop.f32.mrb[0].mxu0
      %v8284 = vpop.f32.mrb[0].mxu0
      %v8285 = vadd.f32 %v8089, %v8284
      %v8286 = vpop.f32.mrb[0].mxu0
      %8287 = vmatprep.mubr.bf16.mxu0 0
      %8288 = vmatmul.mubr.bf16.gmra.mrb[0].mxu0 %v8242
      %v8289 = vpop.f32.mrb[0].mxu0
      %v8290 = vadd.f32 %v8086, %v8289
      %v8291 = vpop.f32.mrb[0].mxu0
      %v8292 = vpop.f32.mrb[0].mxu0
      %v8293 = vadd.f32 %v8089, %v8292
      %v8294 = vpop.f32.mrb[0].mxu0
      %8295 = vmatprep.mubr.bf16.mxu0 0
      %8296 = vmatmul.mubr.bf16.gmra.mrb[0].mxu0 %v8245
      %v8297 = vpop.f32.mrb[0].mxu0
      %v8298 = vadd.f32 %v8086, %v8297
      %v8299 = vpop.f32.mrb[0].mxu0
      %v8300 = vpop.f32.mrb[0].mxu0
      %v8301 = vadd.f32 %v8089, %v8300
      %v8302 = vpop.f32.mrb[0].mxu0
      %8303 = vdwg.mxu0
      %v8304 = vmax.f32 %v8282, 0.0
      %v8305 = vmax.f32 %v8285, 0.0
      %v8306 = vmax.f32 %v8290, 0.0
      %v8307 = vmax.f32 %v8293, 0.0
      %v8308 = vmax.f32 %v8298, 0.0
      %v8309 = vmax.f32 %v8301, 0.0
      %v8310 = vpack.c.bf16 %v8305, %v8304
      %v8311 = vpack.c.bf16 %v8307, %v8306
      %v8312 = vpack.c.bf16 %v8309, %v8308
      %v8314 = vlaneseq
      %v8315 = vshrl.u32 %v8314, 7
      %v8316 = vsub.s32 0, %v8315
      %v8317 = vrot.slane %v7672, %v8316
      %v8335 = vunpack.c.l.b16 %v7656
      %v8336 = vunpack.c.l.b16 %v7657
      %v8337 = vunpack.c.l.b16 %v7658
      %v8338 = vunpack.c.l.b16 %v7659
      %v8339 = vunpack.c.l.b16 %v7660
      %v8340 = vunpack.c.l.b16 %v7661
      %v8341 = vunpack.c.l.b16 %v7662
      %v8342 = vunpack.c.l.b16 %v7663
      %v8343 = vunpack.c.l.b16 %v7664
      %v8344 = vunpack.c.l.b16 %v7665
      %v8345 = vunpack.c.l.b16 %v7666
      %v8346 = vunpack.c.l.b16 %v7667
      %v8347 = vunpack.c.l.b16 %v7668
      %v8348 = vunpack.c.l.b16 %v7669
      %v8349 = vunpack.c.l.b16 %v7670
      %v8350 = vunpack.c.l.b16 %v7671
      %v8351 = vpack.c.b16 %v8336, %v8335
      %v8352 = vpack.c.b16 %v8338, %v8337
      %v8353 = vpack.c.b16 %v8340, %v8339
      %v8354 = vpack.c.b16 %v8342, %v8341
      %v8355 = vpack.c.b16 %v8344, %v8343
      %v8356 = vpack.c.b16 %v8346, %v8345
      %v8357 = vpack.c.b16 %v8348, %v8347
      %v8358 = vpack.c.b16 %v8350, %v8349
      %8367 = vmatprep.subr.bf16.mxu0 0
      %8368 = vmatpush1.bf16.msra.mxu0 %v8351
      %8369 = vmatprep.subr.bf16.mxu0 0
      %8370 = vmatpush1.bf16.msra.mxu0 %v8352
      %8371 = vmatprep.subr.bf16.mxu0 0
      %8372 = vmatpush1.bf16.msra.mxu0 %v8353
      %8373 = vmatprep.subr.bf16.mxu0 0
      %8374 = vmatpush1.bf16.msra.mxu0 %v8354
      %8375 = vmatprep.subr.bf16.mxu0 0
      %8376 = vmatpush1.bf16.msra.mxu0 %v8355
      %8377 = vmatprep.subr.bf16.mxu0 0
      %8378 = vmatpush1.bf16.msra.mxu0 %v8356
      %8379 = vmatprep.subr.bf16.mxu0 0
      %8380 = vmatpush1.bf16.msra.mxu0 %v8357
      %8381 = vmatprep.subr.bf16.mxu0 0
      %8382 = vmatpush1.bf16.msra.mxu0 %v8358
      %8383 = vmatprep.subr.bf16.mxu0 0
      %8384 = vmatpush1.bf16.msra.mxu0 0
      %8385 = vmatprep.subr.bf16.mxu0 0
      %8386 = vmatpush1.bf16.msra.mxu0 0
      %8387 = vmatprep.subr.bf16.mxu0 0
      %8388 = vmatpush1.bf16.msra.mxu0 0
      %8389 = vmatprep.subr.bf16.mxu0 0
      %8390 = vmatpush1.bf16.msra.mxu0 0
      %8391 = vmatprep.subr.bf16.mxu0 0
      %8392 = vmatpush1.bf16.msra.mxu0 0
      %8393 = vmatprep.subr.bf16.mxu0 0
      %8394 = vmatpush1.bf16.msra.mxu0 0
      %8395 = vmatprep.subr.bf16.mxu0 0
      %8396 = vmatpush1.bf16.msra.mxu0 0
      %8397 = vmatprep.subr.bf16.mxu0 0
      %8398 = vmatpush1.bf16.msra.mxu0 0
      %8399 = vmatprep.mubr.bf16.mxu0 0
      %8400 = vmatmul.mubr.bf16.gmra.mrb[0].mxu0 %v8310
      %v8401 = vpop.f32.mrb[0].mxu0
      %v8402 = vadd.f32 %v8317, %v8401
      %v8403 = vpop.f32.mrb[0].mxu0
      %v8404 = vpop.f32.mrb[0].mxu0
      %v8405 = vadd.f32 %v8317, %v8404
      %v8406 = vpop.f32.mrb[0].mxu0
      %8407 = vmatprep.mubr.bf16.mxu0 0
      %8408 = vmatmul.mubr.bf16.gmra.mrb[0].mxu0 %v8311
      %v8409 = vpop.f32.mrb[0].mxu0
      %v8410 = vadd.f32 %v8317, %v8409
      %v8411 = vpop.f32.mrb[0].mxu0
      %v8412 = vpop.f32.mrb[0].mxu0
      %v8413 = vadd.f32 %v8317, %v8412
      %v8414 = vpop.f32.mrb[0].mxu0
      %8415 = vmatprep.mubr.bf16.mxu0 0
      %8416 = vmatmul.mubr.bf16.gmra.mrb[0].mxu0 %v8312
      %v8417 = vpop.f32.mrb[0].mxu0
      %v8418 = vadd.f32 %v8317, %v8417
      %v8419 = vpop.f32.mrb[0].mxu0
      %v8420 = vpop.f32.mrb[0].mxu0
      %v8421 = vadd.f32 %v8317, %v8420
      %v8422 = vpop.f32.mrb[0].mxu0
      %8423 = vdwg.mxu0
      %v8424 = vmax.f32 %v8402, 0.0
      %v8425 = vmax.f32 %v8405, 0.0
      %v8426 = vmax.f32 %v8410, 0.0
      %v8427 = vmax.f32 %v8413, 0.0
      %v8428 = vmax.f32 %v8418, 0.0
      %v8429 = vmax.f32 %v8421, 0.0
      %v8430 = vpack.c.bf16 %v8425, %v8424
      %v8431 = vpack.c.bf16 %v8427, %v8426
      %v8432 = vpack.c.bf16 %v8429, %v8428
      %v8434 = vlaneseq
      %v8435 = vshrl.u32 %v8434, 7
      %v8436 = vsub.s32 0, %v8435
      %v8437 = vrot.slane %v7689, %v8436
      %v8438 = vlaneseq
      %v8439 = vshrl.u32 %v8438, 7
      %v8440 = vsub.s32 1, %v8439
      %v8441 = vrot.slane %v7689, %v8440
      %v8460 = vunpack.c.l.b16 %v7673
      %v8461 = vunpack.c.h.b16 %v7673
      %v8462 = vunpack.c.l.b16 %v7674
      %v8463 = vunpack.c.h.b16 %v7674
      %v8464 = vunpack.c.l.b16 %v7675
      %v8465 = vunpack.c.h.b16 %v7675
      %v8466 = vunpack.c.l.b16 %v7676
      %v8467 = vunpack.c.h.b16 %v7676
      %v8468 = vunpack.c.l.b16 %v7677
      %v8469 = vunpack.c.h.b16 %v7677
      %v8470 = vunpack.c.l.b16 %v7678
      %v8471 = vunpack.c.h.b16 %v7678
      %v8472 = vunpack.c.l.b16 %v7679
      %v8473 = vunpack.c.h.b16 %v7679
      %v8474 = vunpack.c.l.b16 %v7680
      %v8475 = vunpack.c.h.b16 %v7680
      %v8476 = vunpack.c.l.b16 %v7681
      %v8477 = vunpack.c.h.b16 %v7681
      %v8478 = vunpack.c.l.b16 %v7682
      %v8479 = vunpack.c.h.b16 %v7682
      %v8480 = vunpack.c.l.b16 %v7683
      %v8481 = vunpack.c.h.b16 %v7683
      %v8482 = vunpack.c.l.b16 %v7684
      %v8483 = vunpack.c.h.b16 %v7684
      %v8484 = vunpack.c.l.b16 %v7685
      %v8485 = vunpack.c.h.b16 %v7685
      %v8486 = vunpack.c.l.b16 %v7686
      %v8487 = vunpack.c.h.b16 %v7686
      %v8488 = vunpack.c.l.b16 %v7687
      %v8489 = vunpack.c.h.b16 %v7687
      %v8490 = vunpack.c.l.b16 %v7688
      %v8491 = vunpack.c.h.b16 %v7688
      %v8492 = vpack.c.b16 %v8462, %v8460
      %v8493 = vpack.c.b16 %v8463, %v8461
      %v8494 = vpack.c.b16 %v8466, %v8464
      %v8495 = vpack.c.b16 %v8467, %v8465
      %v8496 = vpack.c.b16 %v8470, %v8468
      %v8497 = vpack.c.b16 %v8471, %v8469
      %v8498 = vpack.c.b16 %v8474, %v8472
      %v8499 = vpack.c.b16 %v8475, %v8473
      %v8500 = vpack.c.b16 %v8478, %v8476
      %v8501 = vpack.c.b16 %v8479, %v8477
      %v8502 = vpack.c.b16 %v8482, %v8480
      %v8503 = vpack.c.b16 %v8483, %v8481
      %v8504 = vpack.c.b16 %v8486, %v8484
      %v8505 = vpack.c.b16 %v8487, %v8485
      %v8506 = vpack.c.b16 %v8490, %v8488
      %v8507 = vpack.c.b16 %v8491, %v8489
      %8524 = vmatprep.subr.bf16.mxu0 %v8493
      %8525 = vmatpush1.bf16.msra.mxu0 %v8492
      %8526 = vmatprep.subr.bf16.mxu0 %v8495
      %8527 = vmatpush1.bf16.msra.mxu0 %v8494
      %8528 = vmatprep.subr.bf16.mxu0 %v8497
      %8529 = vmatpush1.bf16.msra.mxu0 %v8496
      %8530 = vmatprep.subr.bf16.mxu0 %v8499
      %8531 = vmatpush1.bf16.msra.mxu0 %v8498
      %8532 = vmatprep.subr.bf16.mxu0 %v8501
      %8533 = vmatpush1.bf16.msra.mxu0 %v8500
      %8534 = vmatprep.subr.bf16.mxu0 %v8503
      %8535 = vmatpush1.bf16.msra.mxu0 %v8502
      %8536 = vmatprep.subr.bf16.mxu0 %v8505
      %8537 = vmatpush1.bf16.msra.mxu0 %v8504
      %8538 = vmatprep.subr.bf16.mxu0 %v8507
      %8539 = vmatpush1.bf16.msra.mxu0 %v8506
      %8540 = vmatprep.subr.bf16.mxu0 0
      %8541 = vmatpush1.bf16.msra.mxu0 0
      %8542 = vmatprep.subr.bf16.mxu0 0
      %8543 = vmatpush1.bf16.msra.mxu0 0
      %8544 = vmatprep.subr.bf16.mxu0 0
      %8545 = vmatpush1.bf16.msra.mxu0 0
      %8546 = vmatprep.subr.bf16.mxu0 0
      %8547 = vmatpush1.bf16.msra.mxu0 0
      %8548 = vmatprep.subr.bf16.mxu0 0
      %8549 = vmatpush1.bf16.msra.mxu0 0
      %8550 = vmatprep.subr.bf16.mxu0 0
      %8551 = vmatpush1.bf16.msra.mxu0 0
      %8552 = vmatprep.subr.bf16.mxu0 0
      %8553 = vmatpush1.bf16.msra.mxu0 0
      %8554 = vmatprep.subr.bf16.mxu0 0
      %8555 = vmatpush1.bf16.msra.mxu0 0
      %8556 = vmatprep.mubr.bf16.mxu0 0
      %8557 = vmatmul.mubr.bf16.gmra.mrb[0].mxu0 %v8430
      %v8558 = vpop.f32.mrb[0].mxu0
      %v8559 = vadd.f32 %v8437, %v8558
      %v8560 = vpop.f32.mrb[0].mxu0
      %v8561 = vadd.f32 %v8441, %v8560
      %v8562 = vpop.f32.mrb[0].mxu0
      %v8563 = vadd.f32 %v8437, %v8562
      %v8564 = vpop.f32.mrb[0].mxu0
      %v8565 = vadd.f32 %v8441, %v8564
      %8566 = vmatprep.mubr.bf16.mxu0 0
      %8567 = vmatmul.mubr.bf16.gmra.mrb[0].mxu0 %v8431
      %v8568 = vpop.f32.mrb[0].mxu0
      %v8569 = vadd.f32 %v8437, %v8568
      %v8570 = vpop.f32.mrb[0].mxu0
      %v8571 = vadd.f32 %v8441, %v8570
      %v8572 = vpop.f32.mrb[0].mxu0
      %v8573 = vadd.f32 %v8437, %v8572
      %v8574 = vpop.f32.mrb[0].mxu0
      %v8575 = vadd.f32 %v8441, %v8574
      %8576 = vmatprep.mubr.bf16.mxu0 0
      %8577 = vmatmul.mubr.bf16.gmra.mrb[0].mxu0 %v8432
      %v8578 = vpop.f32.mrb[0].mxu0
      %v8579 = vadd.f32 %v8437, %v8578
      %v8580 = vpop.f32.mrb[0].mxu0
      %v8581 = vadd.f32 %v8441, %v8580
      %v8582 = vpop.f32.mrb[0].mxu0
      %v8583 = vadd.f32 %v8437, %v8582
      %v8584 = vpop.f32.mrb[0].mxu0
      %v8585 = vadd.f32 %v8441, %v8584
      %8586 = vdwg.mxu0
      %v8587 = vmax.f32 %v8559, 0.0
      %v8588 = vmax.f32 %v8561, 0.0
      %v8589 = vmax.f32 %v8563, 0.0
      %v8590 = vmax.f32 %v8565, 0.0
      %v8591 = vmax.f32 %v8569, 0.0
      %v8592 = vmax.f32 %v8571, 0.0
      %v8593 = vmax.f32 %v8573, 0.0
      %v8594 = vmax.f32 %v8575, 0.0
      %v8595 = vmax.f32 %v8579, 0.0
      %v8596 = vmax.f32 %v8581, 0.0
      %v8597 = vmax.f32 %v8583, 0.0
      %v8598 = vmax.f32 %v8585, 0.0
      %v8599 = vmax.f32 %v8587, %v8591
      %v8600 = vmax.f32 %v8588, %v8592
      %v8601 = vmax.f32 %v8589, %v8593
      %v8602 = vmax.f32 %v8590, %v8594
      %v8603 = vmax.f32 %v8599, %v8595
      %v8604 = vmax.f32 %v8600, %v8596
      %v8605 = vmax.f32 %v8601, %v8597
      %v8606 = vmax.f32 %v8602, %v8598
      %v8607 = vadd.f32 %v7587, %v8603
      %v8608 = vadd.f32 %v7588, %v8604
      %v8609 = vadd.f32 %v7589, %v8605
      %v8610 = vadd.f32 %v7590, %v8606
      %v8611 = vpack.c.bf16 %v8609, %v8607
      %v8612 = vpack.c.bf16 %v8610, %v8608
      %8614 = vset.pattern.permute.xlu0 0
      %8615 = vperm.xlu0 %8614, %v7722
      %v8616 = vpop.permute.xlu0 %8615
      %8619 = vset.pattern.permute.xlu0 0
      %8620 = vperm.xlu0 %8619, %v7723
      %v8621 = vpop.permute.xlu0 %8620
      %8624 = vset.pattern.permute.xlu0 0
      %8625 = vperm.xlu0 %8624, %v7724
      %v8626 = vpop.permute.xlu0 %8625
      %8629 = vset.pattern.permute.xlu0 0
      %8630 = vperm.xlu0 %8629, %v7725
      %v8631 = vpop.permute.xlu0 %8630
      %8634 = vset.pattern.permute.xlu0 0
      %8635 = vperm.xlu0 %8634, %v7726
      %v8636 = vpop.permute.xlu0 %8635
      %8639 = vset.pattern.permute.xlu0 0
      %8640 = vperm.xlu0 %8639, %v7727
      %v8641 = vpop.permute.xlu0 %8640
      %8644 = vset.pattern.permute.xlu0 0
      %8645 = vperm.xlu0 %8644, %v7728
      %v8646 = vpop.permute.xlu0 %8645
      %8649 = vset.pattern.permute.xlu0 0
      %8650 = vperm.xlu0 %8649, %v7729
      %v8651 = vpop.permute.xlu0 %8650
      %8654 = vset.pattern.permute.xlu0 0
      %8655 = vperm.xlu0 %8654, %v7730
      %v8656 = vpop.permute.xlu0 %8655
      %8659 = vset.pattern.permute.xlu0 0
      %8660 = vperm.xlu0 %8659, %v7731
      %v8661 = vpop.permute.xlu0 %8660
      %8664 = vset.pattern.permute.xlu0 0
      %8665 = vperm.xlu0 %8664, %v7732
      %v8666 = vpop.permute.xlu0 %8665
      %8669 = vset.pattern.permute.xlu0 0
      %8670 = vperm.xlu0 %8669, %v7733
      %v8671 = vpop.permute.xlu0 %8670
      %8674 = vset.pattern.permute.xlu0 0
      %8675 = vperm.xlu0 %8674, %v7734
      %v8676 = vpop.permute.xlu0 %8675
      %8679 = vset.pattern.permute.xlu0 0
      %8680 = vperm.xlu0 %8679, %v7735
      %v8681 = vpop.permute.xlu0 %8680
      %8684 = vset.pattern.permute.xlu0 0
      %8685 = vperm.xlu0 %8684, %v7736
      %v8686 = vpop.permute.xlu0 %8685
      %8689 = vset.pattern.permute.xlu0 0
      %8690 = vperm.xlu0 %8689, %v7737
      %v8691 = vpop.permute.xlu0 %8690
      %8694 = vset.pattern.permute.xlu0 0
      %8695 = vperm.xlu0 %8694, %v7738
      %v8696 = vpop.permute.xlu0 %8695
      %8699 = vset.pattern.permute.xlu0 0
      %8700 = vperm.xlu0 %8699, %v7739
      %v8701 = vpop.permute.xlu0 %8700
      %8704 = vset.pattern.permute.xlu0 0
      %8705 = vperm.xlu0 %8704, %v7740
      %v8706 = vpop.permute.xlu0 %8705
      %8709 = vset.pattern.permute.xlu0 0
      %8710 = vperm.xlu0 %8709, %v7741
      %v8711 = vpop.permute.xlu0 %8710
      %8714 = vset.pattern.permute.xlu0 0
      %8715 = vperm.xlu0 %8714, %v7742
      %v8716 = vpop.permute.xlu0 %8715
      %8719 = vset.pattern.permute.xlu0 0
      %8720 = vperm.xlu0 %8719, %v7743
      %v8721 = vpop.permute.xlu0 %8720
      %8724 = vset.pattern.permute.xlu0 0
      %8725 = vperm.xlu0 %8724, %v7744
      %v8726 = vpop.permute.xlu0 %8725
      %8729 = vset.pattern.permute.xlu0 0
      %8730 = vperm.xlu0 %8729, %v7745
      %v8731 = vpop.permute.xlu0 %8730
      %8734 = vset.pattern.permute.xlu0 0
      %8735 = vperm.xlu0 %8734, %v7746
      %v8736 = vpop.permute.xlu0 %8735
      %8739 = vset.pattern.permute.xlu0 0
      %8740 = vperm.xlu0 %8739, %v7747
      %v8741 = vpop.permute.xlu0 %8740
      %8744 = vset.pattern.permute.xlu0 0
      %8745 = vperm.xlu0 %8744, %v7748
      %v8746 = vpop.permute.xlu0 %8745
      %8749 = vset.pattern.permute.xlu0 0
      %8750 = vperm.xlu0 %8749, %v7749
      %v8751 = vpop.permute.xlu0 %8750
      %8754 = vset.pattern.permute.xlu0 0
      %8755 = vperm.xlu0 %8754, %v7750
      %v8756 = vpop.permute.xlu0 %8755
      %8759 = vset.pattern.permute.xlu0 0
      %8760 = vperm.xlu0 %8759, %v7751
      %v8761 = vpop.permute.xlu0 %8760
      %8764 = vset.pattern.permute.xlu0 0
      %8765 = vperm.xlu0 %8764, %v7752
      %v8766 = vpop.permute.xlu0 %8765
      %8769 = vset.pattern.permute.xlu0 0
      %8770 = vperm.xlu0 %8769, %v7753
      %v8771 = vpop.permute.xlu0 %8770
      %v8805 = vunpack.c.l.b16 %v7690
      %v8806 = vunpack.c.h.b16 %v7690
      %v8807 = vunpack.c.l.b16 %v7691
      %v8808 = vunpack.c.h.b16 %v7691
      %v8809 = vunpack.c.l.b16 %v7692
      %v8810 = vunpack.c.h.b16 %v7692
      %v8811 = vunpack.c.l.b16 %v7693
      %v8812 = vunpack.c.h.b16 %v7693
      %v8813 = vunpack.c.l.b16 %v7694
      %v8814 = vunpack.c.h.b16 %v7694
      %v8815 = vunpack.c.l.b16 %v7695
      %v8816 = vunpack.c.h.b16 %v7695
      %v8817 = vunpack.c.l.b16 %v7696
      %v8818 = vunpack.c.h.b16 %v7696
      %v8819 = vunpack.c.l.b16 %v7697
      %v8820 = vunpack.c.h.b16 %v7697
      %v8821 = vunpack.c.l.b16 %v7698
      %v8822 = vunpack.c.h.b16 %v7698
      %v8823 = vunpack.c.l.b16 %v7699
      %v8824 = vunpack.c.h.b16 %v7699
      %v8825 = vunpack.c.l.b16 %v7700
      %v8826 = vunpack.c.h.b16 %v7700
      %v8827 = vunpack.c.l.b16 %v7701
      %v8828 = vunpack.c.h.b16 %v7701
      %v8829 = vunpack.c.l.b16 %v7702
      %v8830 = vunpack.c.h.b16 %v7702
      %v8831 = vunpack.c.l.b16 %v7703
      %v8832 = vunpack.c.h.b16 %v7703
      %v8833 = vunpack.c.l.b16 %v7704
      %v8834 = vunpack.c.h.b16 %v7704
      %v8835 = vunpack.c.l.b16 %v7705
      %v8836 = vunpack.c.h.b16 %v7705
      %v8837 = vunpack.c.l.b16 %v7706
      %v8838 = vunpack.c.h.b16 %v7706
      %v8839 = vunpack.c.l.b16 %v7707
      %v8840 = vunpack.c.h.b16 %v7707
      %v8841 = vunpack.c.l.b16 %v7708
      %v8842 = vunpack.c.h.b16 %v7708
      %v8843 = vunpack.c.l.b16 %v7709
      %v8844 = vunpack.c.h.b16 %v7709
      %v8845 = vunpack.c.l.b16 %v7710
      %v8846 = vunpack.c.h.b16 %v7710
      %v8847 = vunpack.c.l.b16 %v7711
      %v8848 = vunpack.c.h.b16 %v7711
      %v8849 = vunpack.c.l.b16 %v7712
      %v8850 = vunpack.c.h.b16 %v7712
      %v8851 = vunpack.c.l.b16 %v7713
      %v8852 = vunpack.c.h.b16 %v7713
      %v8853 = vunpack.c.l.b16 %v7714
      %v8854 = vunpack.c.h.b16 %v7714
      %v8855 = vunpack.c.l.b16 %v7715
      %v8856 = vunpack.c.h.b16 %v7715
      %v8857 = vunpack.c.l.b16 %v7716
      %v8858 = vunpack.c.h.b16 %v7716
      %v8859 = vunpack.c.l.b16 %v7717
      %v8860 = vunpack.c.h.b16 %v7717
      %v8861 = vunpack.c.l.b16 %v7718
      %v8862 = vunpack.c.h.b16 %v7718
      %v8863 = vunpack.c.l.b16 %v7719
      %v8864 = vunpack.c.h.b16 %v7719
      %v8865 = vunpack.c.l.b16 %v7720
      %v8866 = vunpack.c.h.b16 %v7720
      %v8867 = vunpack.c.l.b16 %v7721
      %v8868 = vunpack.c.h.b16 %v7721
      %v8869 = vpack.c.b16 %v8807, %v8805
      %v8870 = vpack.c.b16 %v8808, %v8806
      %v8871 = vpack.c.b16 %v8811, %v8809
      %v8872 = vpack.c.b16 %v8812, %v8810
      %v8873 = vpack.c.b16 %v8815, %v8813
      %v8874 = vpack.c.b16 %v8816, %v8814
      %v8875 = vpack.c.b16 %v8819, %v8817
      %v8876 = vpack.c.b16 %v8820, %v8818
      %v8877 = vpack.c.b16 %v8823, %v8821
      %v8878 = vpack.c.b16 %v8824, %v8822
      %v8879 = vpack.c.b16 %v8827, %v8825
      %v8880 = vpack.c.b16 %v8828, %v8826
      %v8881 = vpack.c.b16 %v8831, %v8829
      %v8882 = vpack.c.b16 %v8832, %v8830
      %v8883 = vpack.c.b16 %v8835, %v8833
      %v8884 = vpack.c.b16 %v8836, %v8834
      %v8885 = vpack.c.b16 %v8839, %v8837
      %v8886 = vpack.c.b16 %v8840, %v8838
      %v8887 = vpack.c.b16 %v8843, %v8841
      %v8888 = vpack.c.b16 %v8844, %v8842
      %v8889 = vpack.c.b16 %v8847, %v8845
      %v8890 = vpack.c.b16 %v8848, %v8846
      %v8891 = vpack.c.b16 %v8851, %v8849
      %v8892 = vpack.c.b16 %v8852, %v8850
      %v8893 = vpack.c.b16 %v8855, %v8853
      %v8894 = vpack.c.b16 %v8856, %v8854
      %v8895 = vpack.c.b16 %v8859, %v8857
      %v8896 = vpack.c.b16 %v8860, %v8858
      %v8897 = vpack.c.b16 %v8863, %v8861
      %v8898 = vpack.c.b16 %v8864, %v8862
      %v8899 = vpack.c.b16 %v8867, %v8865
      %v8900 = vpack.c.b16 %v8868, %v8866
      %8933 = vmatprep.subr.bf16.mxu0 %v8612
      %8934 = vmatpush1.bf16.xpose.msra.mxu0 %v8611
      %8935 = vmatprep.subr.bf16.mxu0 0
      %8936 = vmatpush1.bf16.xpose.msra.mxu0 0
      %8937 = vmatprep.subr.bf16.mxu0 0
      %8938 = vmatpush1.bf16.xpose.msra.mxu0 0
      %8939 = vmatprep.subr.bf16.mxu0 0
      %8940 = vmatpush1.bf16.xpose.msra.mxu0 0
      %8941 = vmatprep.subr.bf16.mxu0 0
      %8942 = vmatpush1.bf16.xpose.msra.mxu0 0
      %8943 = vmatprep.subr.bf16.mxu0 0
      %8944 = vmatpush1.bf16.xpose.msra.mxu0 0
      %8945 = vmatprep.subr.bf16.mxu0 0
      %8946 = vmatpush1.bf16.xpose.msra.mxu0 0
      %8947 = vmatprep.subr.bf16.mxu0 0
      %8948 = vmatpush1.bf16.xpose.msra.mxu0 0
      %8949 = vmatprep.subr.bf16.mxu0 0
      %8950 = vmatpush1.bf16.xpose.msra.mxu0 0
      %8951 = vmatprep.subr.bf16.mxu0 0
      %8952 = vmatpush1.bf16.xpose.msra.mxu0 0
      %8953 = vmatprep.subr.bf16.mxu0 0
      %8954 = vmatpush1.bf16.xpose.msra.mxu0 0
      %8955 = vmatprep.subr.bf16.mxu0 0
      %8956 = vmatpush1.bf16.xpose.msra.mxu0 0
      %8957 = vmatprep.subr.bf16.mxu0 0
      %8958 = vmatpush1.bf16.xpose.msra.mxu0 0
      %8959 = vmatprep.subr.bf16.mxu0 0
      %8960 = vmatpush1.bf16.xpose.msra.mxu0 0
      %8961 = vmatprep.subr.bf16.mxu0 0
      %8962 = vmatpush1.bf16.xpose.msra.mxu0 0
      %8963 = vmatprep.subr.bf16.mxu0 0
      %8964 = vmatpush1.bf16.xpose.msra.mxu0 0
      %8965 = vmatprep.mubr.bf16.mxu0 %v8870
      %8966 = vmatmul.mubr.bf16.gmra.mrb[0].mxu0 %v8869
      %v8967 = vpop.f32.mrb[0].mxu0
      %v8968 = vadd.f32 %v8616, %v8967
      %v8969 = vpop.f32.mrb[0].mxu0
      %v8970 = vpop.f32.mrb[0].mxu0
      %v8971 = vadd.f32 %v8621, %v8970
      %v8972 = vpop.f32.mrb[0].mxu0
      %8973 = vmatprep.mubr.bf16.mxu0 %v8872
      %8974 = vmatmul.mubr.bf16.gmra.mrb[0].mxu0 %v8871
      %v8975 = vpop.f32.mrb[0].mxu0
      %v8976 = vadd.f32 %v8626, %v8975
      %v8977 = vpop.f32.mrb[0].mxu0
      %v8978 = vpop.f32.mrb[0].mxu0
      %v8979 = vadd.f32 %v8631, %v8978
      %v8980 = vpop.f32.mrb[0].mxu0
      %8981 = vmatprep.mubr.bf16.mxu0 %v8874
      %8982 = vmatmul.mubr.bf16.gmra.mrb[0].mxu0 %v8873
      %v8983 = vpop.f32.mrb[0].mxu0
      %v8984 = vadd.f32 %v8636, %v8983
      %v8985 = vpop.f32.mrb[0].mxu0
      %v8986 = vpop.f32.mrb[0].mxu0
      %v8987 = vadd.f32 %v8641, %v8986
      %v8988 = vpop.f32.mrb[0].mxu0
      %8989 = vmatprep.mubr.bf16.mxu0 %v8876
      %8990 = vmatmul.mubr.bf16.gmra.mrb[0].mxu0 %v8875
      %v8991 = vpop.f32.mrb[0].mxu0
      %v8992 = vadd.f32 %v8646, %v8991
      %v8993 = vpop.f32.mrb[0].mxu0
      %v8994 = vpop.f32.mrb[0].mxu0
      %v8995 = vadd.f32 %v8651, %v8994
      %v8996 = vpop.f32.mrb[0].mxu0
      %8997 = vmatprep.mubr.bf16.mxu0 %v8878
      %8998 = vmatmul.mubr.bf16.gmra.mrb[0].mxu0 %v8877
      %v8999 = vpop.f32.mrb[0].mxu0
      %v9000 = vadd.f32 %v8656, %v8999
      %v9001 = vpop.f32.mrb[0].mxu0
      %v9002 = vpop.f32.mrb[0].mxu0
      %v9003 = vadd.f32 %v8661, %v9002
      %v9004 = vpop.f32.mrb[0].mxu0
      %9005 = vmatprep.mubr.bf16.mxu0 %v8880
      %9006 = vmatmul.mubr.bf16.gmra.mrb[0].mxu0 %v8879
      %v9007 = vpop.f32.mrb[0].mxu0
      %v9008 = vadd.f32 %v8666, %v9007
      %v9009 = vpop.f32.mrb[0].mxu0
      %v9010 = vpop.f32.mrb[0].mxu0
      %v9011 = vadd.f32 %v8671, %v9010
      %v9012 = vpop.f32.mrb[0].mxu0
      %9013 = vmatprep.mubr.bf16.mxu0 %v8882
      %9014 = vmatmul.mubr.bf16.gmra.mrb[0].mxu0 %v8881
      %v9015 = vpop.f32.mrb[0].mxu0
      %v9016 = vadd.f32 %v8676, %v9015
      %v9017 = vpop.f32.mrb[0].mxu0
      %v9018 = vpop.f32.mrb[0].mxu0
      %v9019 = vadd.f32 %v8681, %v9018
      %v9020 = vpop.f32.mrb[0].mxu0
      %9021 = vmatprep.mubr.bf16.mxu0 %v8884
      %9022 = vmatmul.mubr.bf16.gmra.mrb[0].mxu0 %v8883
      %v9023 = vpop.f32.mrb[0].mxu0
      %v9024 = vadd.f32 %v8686, %v9023
      %v9025 = vpop.f32.mrb[0].mxu0
      %v9026 = vpop.f32.mrb[0].mxu0
      %v9027 = vadd.f32 %v8691, %v9026
      %v9028 = vpop.f32.mrb[0].mxu0
      %9029 = vmatprep.mubr.bf16.mxu0 %v8886
      %9030 = vmatmul.mubr.bf16.gmra.mrb[0].mxu0 %v8885
      %v9031 = vpop.f32.mrb[0].mxu0
      %v9032 = vadd.f32 %v8696, %v9031
      %v9033 = vpop.f32.mrb[0].mxu0
      %v9034 = vpop.f32.mrb[0].mxu0
      %v9035 = vadd.f32 %v8701, %v9034
      %v9036 = vpop.f32.mrb[0].mxu0
      %9037 = vmatprep.mubr.bf16.mxu0 %v8888
      %9038 = vmatmul.mubr.bf16.gmra.mrb[0].mxu0 %v8887
      %v9039 = vpop.f32.mrb[0].mxu0
      %v9040 = vadd.f32 %v8706, %v9039
      %v9041 = vpop.f32.mrb[0].mxu0
      %v9042 = vpop.f32.mrb[0].mxu0
      %v9043 = vadd.f32 %v8711, %v9042
      %v9044 = vpop.f32.mrb[0].mxu0
      %9045 = vmatprep.mubr.bf16.mxu0 %v8890
      %9046 = vmatmul.mubr.bf16.gmra.mrb[0].mxu0 %v8889
      %v9047 = vpop.f32.mrb[0].mxu0
      %v9048 = vadd.f32 %v8716, %v9047
      %v9049 = vpop.f32.mrb[0].mxu0
      %v9050 = vpop.f32.mrb[0].mxu0
      %v9051 = vadd.f32 %v8721, %v9050
      %v9052 = vpop.f32.mrb[0].mxu0
      %9053 = vmatprep.mubr.bf16.mxu0 %v8892
      %9054 = vmatmul.mubr.bf16.gmra.mrb[0].mxu0 %v8891
      %v9055 = vpop.f32.mrb[0].mxu0
      %v9056 = vadd.f32 %v8726, %v9055
      %v9057 = vpop.f32.mrb[0].mxu0
      %v9058 = vpop.f32.mrb[0].mxu0
      %v9059 = vadd.f32 %v8731, %v9058
      %v9060 = vpop.f32.mrb[0].mxu0
      %9061 = vmatprep.mubr.bf16.mxu0 %v8894
      %9062 = vmatmul.mubr.bf16.gmra.mrb[0].mxu0 %v8893
      %v9063 = vpop.f32.mrb[0].mxu0
      %v9064 = vadd.f32 %v8736, %v9063
      %v9065 = vpop.f32.mrb[0].mxu0
      %v9066 = vpop.f32.mrb[0].mxu0
      %v9067 = vadd.f32 %v8741, %v9066
      %v9068 = vpop.f32.mrb[0].mxu0
      %9069 = vmatprep.mubr.bf16.mxu0 %v8896
      %9070 = vmatmul.mubr.bf16.gmra.mrb[0].mxu0 %v8895
      %v9071 = vpop.f32.mrb[0].mxu0
      %v9072 = vadd.f32 %v8746, %v9071
      %v9073 = vpop.f32.mrb[0].mxu0
      %v9074 = vpop.f32.mrb[0].mxu0
      %v9075 = vadd.f32 %v8751, %v9074
      %v9076 = vpop.f32.mrb[0].mxu0
      %9077 = vmatprep.mubr.bf16.mxu0 %v8898
      %9078 = vmatmul.mubr.bf16.gmra.mrb[0].mxu0 %v8897
      %v9079 = vpop.f32.mrb[0].mxu0
      %v9080 = vadd.f32 %v8756, %v9079
      %v9081 = vpop.f32.mrb[0].mxu0
      %v9082 = vpop.f32.mrb[0].mxu0
      %v9083 = vadd.f32 %v8761, %v9082
      %v9084 = vpop.f32.mrb[0].mxu0
      %9085 = vmatprep.mubr.bf16.mxu0 %v8900
      %9086 = vmatmul.mubr.bf16.gmra.mrb[0].mxu0 %v8899
      %v9087 = vpop.f32.mrb[0].mxu0
      %v9088 = vadd.f32 %v8766, %v9087
      %v9089 = vpop.f32.mrb[0].mxu0
      %v9090 = vpop.f32.mrb[0].mxu0
      %v9091 = vadd.f32 %v8771, %v9090
      %v9092 = vpop.f32.mrb[0].mxu0
      %9093 = vdwg.mxu0
      %v9094 = vmax.f32 %v8968, 0.0
      %v9095 = vmax.f32 %v8971, 0.0
      %v9096 = vmax.f32 %v8976, 0.0
      %v9097 = vmax.f32 %v8979, 0.0
      %v9098 = vmax.f32 %v8984, 0.0
      %v9099 = vmax.f32 %v8987, 0.0
      %v9100 = vmax.f32 %v8992, 0.0
      %v9101 = vmax.f32 %v8995, 0.0
      %v9102 = vmax.f32 %v9000, 0.0
      %v9103 = vmax.f32 %v9003, 0.0
      %v9104 = vmax.f32 %v9008, 0.0
      %v9105 = vmax.f32 %v9011, 0.0
      %v9106 = vmax.f32 %v9016, 0.0
      %v9107 = vmax.f32 %v9019, 0.0
      %v9108 = vmax.f32 %v9024, 0.0
      %v9109 = vmax.f32 %v9027, 0.0
      %v9110 = vmax.f32 %v9032, 0.0
      %v9111 = vmax.f32 %v9035, 0.0
      %v9112 = vmax.f32 %v9040, 0.0
      %v9113 = vmax.f32 %v9043, 0.0
      %v9114 = vmax.f32 %v9048, 0.0
      %v9115 = vmax.f32 %v9051, 0.0
      %v9116 = vmax.f32 %v9056, 0.0
      %v9117 = vmax.f32 %v9059, 0.0
      %v9118 = vmax.f32 %v9064, 0.0
      %v9119 = vmax.f32 %v9067, 0.0
      %v9120 = vmax.f32 %v9072, 0.0
      %v9121 = vmax.f32 %v9075, 0.0
      %v9122 = vmax.f32 %v9080, 0.0
      %v9123 = vmax.f32 %v9083, 0.0
      %v9124 = vmax.f32 %v9088, 0.0
      %v9125 = vmax.f32 %v9091, 0.0
      %9126 = vst.msk [vmem:[%s656] sm:$0xff] %vm1823, %v9094
      %9127 = vst.msk [vmem:[%s656 + $0x8] sm:$0xff] %vm1823, %v9095
      %9128 = vst.msk [vmem:[%s656 + $0x10] sm:$0xff] %vm1823, %v9096
      %9129 = vst.msk [vmem:[%s656 + $0x18] sm:$0xff] %vm1823, %v9097
      %9130 = vst.msk [vmem:[%s656 + $0x20] sm:$0xff] %vm1823, %v9098
      %9131 = vst.msk [vmem:[%s656 + $0x28] sm:$0xff] %vm1823, %v9099
      %9132 = vst.msk [vmem:[%s656 + $0x30] sm:$0xff] %vm1823, %v9100
      %9133 = vst.msk [vmem:[%s656 + $0x38] sm:$0xff] %vm1823, %v9101
      %9134 = vst.msk [vmem:[%s656 + $0x40] sm:$0xff] %vm1823, %v9102
      %9135 = vst.msk [vmem:[%s656 + $0x48] sm:$0xff] %vm1823, %v9103
      %9136 = vst.msk [vmem:[%s656 + $0x50] sm:$0xff] %vm1823, %v9104
      %9137 = vst.msk [vmem:[%s656 + $0x58] sm:$0xff] %vm1823, %v9105
      %9138 = vst.msk [vmem:[%s656 + $0x60] sm:$0xff] %vm1823, %v9106
      %9139 = vst.msk [vmem:[%s656 + $0x68] sm:$0xff] %vm1823, %v9107
      %9140 = vst.msk [vmem:[%s656 + $0x70] sm:$0xff] %vm1823, %v9108
      %9141 = vst.msk [vmem:[%s656 + $0x78] sm:$0xff] %vm1823, %v9109
      %9142 = vst.msk [vmem:[%s656 + $0x80] sm:$0xff] %vm1823, %v9110
      %9143 = vst.msk [vmem:[%s656 + $0x88] sm:$0xff] %vm1823, %v9111
      %9144 = vst.msk [vmem:[%s656 + $0x90] sm:$0xff] %vm1823, %v9112
      %9145 = vst.msk [vmem:[%s656 + $0x98] sm:$0xff] %vm1823, %v9113
      %9146 = vst.msk [vmem:[%s656 + $0xa0] sm:$0xff] %vm1823, %v9114
      %9147 = vst.msk [vmem:[%s656 + $0xa8] sm:$0xff] %vm1823, %v9115
      %9148 = vst.msk [vmem:[%s656 + $0xb0] sm:$0xff] %vm1823, %v9116
      %9149 = vst.msk [vmem:[%s656 + $0xb8] sm:$0xff] %vm1823, %v9117
      %9150 = vst.msk [vmem:[%s656 + $0xc0] sm:$0xff] %vm1823, %v9118
      %9151 = vst.msk [vmem:[%s656 + $0xc8] sm:$0xff] %vm1823, %v9119
      %9152 = vst.msk [vmem:[%s656 + $0xd0] sm:$0xff] %vm1823, %v9120
      %9153 = vst.msk [vmem:[%s656 + $0xd8] sm:$0xff] %vm1823, %v9121
      %9154 = vst.msk [vmem:[%s656 + $0xe0] sm:$0xff] %vm1823, %v9122
      %9155 = vst.msk [vmem:[%s656 + $0xe8] sm:$0xff] %vm1823, %v9123
      %9156 = vst.msk [vmem:[%s656 + $0xf0] sm:$0xff] %vm1823, %v9124
      %9157 = vst.msk [vmem:[%s656 + $0xf8] sm:$0xff] %vm1823, %v9125
      %p9158 = scmp.lt.s32.totalorder %s32, 1
      %s9159 = scalar_select %p9158, %s32, 1
      %s9160 = smul.addr %s9159, 32
      %s9161 = smul.addr %s9160, 8
      %s9162 = scalar_lea.vmem %s21, %s9161
      // Predicated region
      $region105: #{tpu_custom_call.1} parent=103 // pred_check
        %p9163 = pneg %p496
      $region106: #{tpu_custom_call.1} parent=103 // pred_check_branch
        %9165 = sbr.rel (%p9163) target = $region108
      $region107: #{tpu_custom_call.1} parent=103 // pred_region
        _
      $region108: #{tpu_custom_call.1} parent=103 // pred_fallthru
        _
    $region104: #{tpu_custom_call.1} parent=5 // pred_fallthru
      _
    %p9166 = scmp.le.s32.totalorder 2, %s27
    // Predicated region
    $region109: #{tpu_custom_call.1} parent=5 // pred_check
      %p9167 = pneg %p9166
    $region110: #{tpu_custom_call.1} parent=5 // pred_check_branch
      %9169 = sbr.rel (%p9167) target = $region112
    $region111: #{tpu_custom_call.1} parent=5 // pred_region
      %s9170 = ssub.s32 %s27, 2
      // Predicated region
      $region113: #{tpu_custom_call.1} parent=111 // pred_check
        %p9171 = pneg %p502
      $region114: #{tpu_custom_call.1} parent=111 // pred_check_branch
        %9173 = sbr.rel (%p9171) target = $region116
      $region115: #{tpu_custom_call.1} parent=111 // pred_region
        %p9174 = scmp.lt.s32.totalorder %s33, 1
        %s9175 = scalar_select %p9174, %s33, 1
        %s9176 = smul.addr %s9175, 32
        %s9177 = smul.addr %s9176, 8
        %s9178 = scalar_lea.vmem %s21, %s9177
      $region116: #{tpu_custom_call.1} parent=111 // pred_fallthru
        _
    $region112: #{tpu_custom_call.1} parent=5 // pred_fallthru
      _
  $region6: #{tpu_custom_call.1} parent=0 // loop_footer
    %s31 = sadd.s32 1, %s27
  $region7: #{tpu_custom_call.1} parent=0 // loop_footer_branch
    %26 = sbr.rel target = $region3
  $region8: #{tpu_custom_call.1} parent=0 // loop_exit
    _

</llo_original>
